<compile_context>
chip_gen: v7x
topology: tpu7x:2x2x1
jax: 0.10.0
libtpu: 0.0.40
codegen_flags: <defaults>
</compile_context>

<pallas_src>
import jax
import jax.numpy as jnp
from jax.experimental import pallas as pl
from jax.experimental.pallas import tpu as pltpu


# ----------------------------------------------------------------------------
# Kernel: grid = (batch_blocks, time_chunks); time axis is "arbitrary"
# ----------------------------------------------------------------------------
def bilstm_kernel(xf_ref, xb_ref, mf_ref, mb_ref, lastmask_ref,
                  w_f_ref, b_f_ref, w_b_ref, b_b_ref,
                  wfc_f_ref, wfc_b_ref, bfc_ref,
                  out_ref,
                  hf_ref, cf_ref, hb_ref, cb_ref, xhf_ref, xhb_ref):
    """One batch-block, one time-chunk per invocation (both directions).

    xf_ref/xb_ref : (CHUNK, Bb, E) bf16  forward / time-reversed chunk of x
    mf_ref/mb_ref : (CHUNK, Bb, 1) f32   matching validity masks
    lastmask_ref  : (Bb, 1) f32          1.0 where len == max(len)
    w_*_ref       : (E+H, 4H) bf16       fused [W_ih ; W_hh] per direction
    b_*_ref       : (1, 4H) f32
    wfc_*_ref     : (H, C) bf16, bfc_ref : (1, C) f32
    out_ref       : (Bb, C) f32          logits (written at last chunk)
    hf/cf/hb/cb   : (Bb, H) f32          persistent recurrent state
    xhf/xhb       : (Bb, E+H) bf16       persistent fused-matmul input slabs
    """
    chunk, _, E = xf_ref.shape
    H = hf_ref.shape[1]
    s = pl.program_id(1)
    nc = pl.num_programs(1)

    @pl.when(s == 0)
    def _init():
        z = jnp.zeros(hf_ref.shape, hf_ref.dtype)
        hf_ref[...] = z
        cf_ref[...] = z
        hb_ref[...] = z
        cb_ref[...] = z

    def lstm_step(xt, m, h, c, xh_ref, w_ref, b_ref):
        # Fused [x_t ; h_{t-1}] @ [W_ih ; W_hh]: one MXU push per step/direction.
        # E is a multiple of 128, so both stores are lane-aligned.
        xh_ref[:, 0:E] = xt
        xh_ref[:, E:E + H] = h.astype(xh_ref.dtype)
        gates = (jnp.dot(xh_ref[...], w_ref[...],
                         preferred_element_type=jnp.float32)
                 + b_ref[...])                                # (Bb, 4H) f32
        i = jax.nn.sigmoid(gates[:, 0:H])
        f = jax.nn.sigmoid(gates[:, H:2 * H])
        g = jnp.tanh(gates[:, 2 * H:3 * H])
        o = jax.nn.sigmoid(gates[:, 3 * H:4 * H])
        c_new = f * c + i * g
        h_new = o * jnp.tanh(c_new)
        # Masked update (pack_padded semantics): padded steps leave state alone.
        h = h + m * (h_new - h)
        c = c + m * (c_new - c)
        return h, c

    h_f = hf_ref[...]
    c_f = cf_ref[...]
    h_b = hb_ref[...]
    c_b = cb_ref[...]

    # Fully unrolled chunk loop (static indices). The fwd and bwd step of each
    # iteration are independent, so the scheduler can overlap the two
    # MXU / EUP chains and hide per-step latency.
    for t in range(chunk):
        h_f, c_f = lstm_step(xf_ref[t], mf_ref[t], h_f, c_f,
                             xhf_ref, w_f_ref, b_f_ref)
        tb = chunk - 1 - t                      # global bwd time decreases by 1
        h_b, c_b = lstm_step(xb_ref[tb], mb_ref[tb], h_b, c_b,
                             xhb_ref, w_b_ref, b_b_ref)

    hf_ref[...] = h_f
    cf_ref[...] = c_f
    hb_ref[...] = h_b
    cb_ref[...] = c_b

    @pl.when(s == nc - 1)
    def _finalize():
        # x_f = padded forward output at t = max(len)-1 (zero unless len==max);
        # x_b = backward output at t = 0 = backward final hidden.
        # Concat avoided: FC split into two lane-aligned matmuls.
        x_f = h_f * lastmask_ref[...]
        logits = (jnp.dot(x_f.astype(jnp.bfloat16), wfc_f_ref[...],
                          preferred_element_type=jnp.float32)
                  + jnp.dot(h_b.astype(jnp.bfloat16), wfc_b_ref[...],
                            preferred_element_type=jnp.float32)
                  + bfc_ref[...])
        out_ref[...] = logits


# ----------------------------------------------------------------------------
# Wrapper
# ----------------------------------------------------------------------------
def bilstm_classifier_forward(tokens, len_x, params, *, chunk=8):
    """tokens: (B, T) int32, len_x: (B,) int32 (sorted descending) -> (B, C)."""
    emb_tbl = params["emb"]
    E = emb_tbl.shape[1]
    H = params["whh_f"].shape[0]
    C = params["wfc"].shape[1]
    assert E % 128 == 0, "pad emb_dim to a multiple of 128 (lane width)"
    assert (4 * H) % 128 == 0, "pad hidden_dim so 4H is lane aligned"

    B, T = tokens.shape

    def rup(v, m):
        return (v + m - 1) // m * m

    # Pad time to a chunk multiple and batch to a sublane-friendly tile.
    T_pad = rup(T, chunk)
    B_pad = rup(B, 8)
    if B_pad > 128:
        B_pad = rup(B, 128)
        b_blk = 128
    else:
        b_blk = B_pad
    nb = B_pad // b_blk
    nc = T_pad // chunk

    tok_p = jnp.zeros((B_pad, T_pad), jnp.int32).at[:B, :T].set(tokens)
    len_p = jnp.zeros((B_pad,), jnp.int32).at[:B].set(len_x)

    # Time-major embedding gather (gather the small token matrix transposed
    # instead of transposing the big activation). Emb dropout: identity.
    x_tm = emb_tbl[tok_p.T].astype(jnp.bfloat16)              # (T_pad, B_pad, E)

    t_idx = jnp.arange(T_pad, dtype=jnp.int32)[:, None]       # (T_pad, 1)
    mask = (t_idx < len_p[None, :]).astype(jnp.float32)[:, :, None]  # (T,B,1)
    maxlen = jnp.max(len_x)
    lastmask = (len_p == maxlen).astype(jnp.float32)[:, None]        # (B_pad,1)

    # Fused LSTM weights (bf16 MXU inputs), biases stay f32, FC split in two.
    w_f = jnp.concatenate([params["wih_f"], params["whh_f"]],
                          axis=0).astype(jnp.bfloat16)        # (E+H, 4H)
    w_b = jnp.concatenate([params["wih_b"], params["whh_b"]],
                          axis=0).astype(jnp.bfloat16)
    b_f = params["b_f"].astype(jnp.float32)
    b_b = params["b_b"].astype(jnp.float32)
    wfc_f = params["wfc"][:H].astype(jnp.bfloat16)            # (H, C)
    wfc_b = params["wfc"][H:].astype(jnp.bfloat16)            # (H, C)
    bfc = params["bfc"].astype(jnp.float32)

    # Grid: (batch blocks ["parallel" -> megacore shardable], time chunks).
    grid = (nb, nc)
    x_spec_f = pl.BlockSpec((chunk, b_blk, E), lambda b, s: (s, b, 0))
    x_spec_b = pl.BlockSpec((chunk, b_blk, E), lambda b, s: (nc - 1 - s, b, 0))
    m_spec_f = pl.BlockSpec((chunk, b_blk, 1), lambda b, s: (s, b, 0))
    m_spec_b = pl.BlockSpec((chunk, b_blk, 1), lambda b, s: (nc - 1 - s, b, 0))

    def resident_spec(shape):          # weights: same block every grid step
        return pl.BlockSpec(shape, lambda b, s: (0, 0))

    in_specs = [
        x_spec_f, x_spec_b, m_spec_f, m_spec_b,
        pl.BlockSpec((b_blk, 1), lambda b, s: (b, 0)),        # lastmask
        resident_spec((E + H, 4 * H)), resident_spec((1, 4 * H)),
        resident_spec((E + H, 4 * H)), resident_spec((1, 4 * H)),
        resident_spec((H, C)), resident_spec((H, C)), resident_spec((1, C)),
    ]
    out_spec = pl.BlockSpec((b_blk, C), lambda b, s: (b, 0))
    scratch = [
        pltpu.VMEM((b_blk, H), jnp.float32),          # h_f
        pltpu.VMEM((b_blk, H), jnp.float32),          # c_f
        pltpu.VMEM((b_blk, H), jnp.float32),          # h_b
        pltpu.VMEM((b_blk, H), jnp.float32),          # c_b
        pltpu.VMEM((b_blk, E + H), jnp.bfloat16),     # xh_f
        pltpu.VMEM((b_blk, E + H), jnp.bfloat16),     # xh_b
    ]

    # Rough resident-set estimate for the scoped VMEM limit; cap well under
    # v7x's 64 MiB physical VMEM.
    resident_bytes = (
        2 * 2 * chunk * b_blk * (E * 2 + 4)              # streamed x+mask, 2 dirs, 2 bufs
        + 2 * 2 * ((E + H) * 4 * H * 2 + 4 * H * 4)      # fused LSTM weights + biases
        + 2 * (2 * H * C * 2 + C * 4 + b_blk * 4)        # FC weights/bias, lastmask
        + 4 * b_blk * H * 4 + 2 * b_blk * (E + H) * 2    # h/c + xh scratch
        + 2 * b_blk * C * 4)                             # output block
    vmem_limit = int(min(48 * 1024 * 1024,
                         max(2 * resident_bytes, 16 * 1024 * 1024)))

    out = pl.pallas_call(
        bilstm_kernel,
        out_shape=jax.ShapeDtypeStruct((B_pad, C), jnp.float32),
        grid_spec=pltpu.PrefetchScalarGridSpec(
            num_scalar_prefetch=0,
            grid=grid,
            in_specs=in_specs,
            out_specs=out_spec,
            scratch_shapes=scratch),
        compiler_params=pltpu.CompilerParams(
            dimension_semantics=("parallel", "arbitrary"),
            vmem_limit_bytes=vmem_limit),
    )(x_tm, x_tm, mask, mask, lastmask,
      w_f, b_f, w_b, b_b, wfc_f, wfc_b, bfc)
    # lstm dropout: identity (see TODO at top); fc already applied in-kernel.
    return out[:B]


# ----------------------------------------------------------------------------
# Params + pure-JAX reference (for a sanity check)
# ----------------------------------------------------------------------------
def init_params(key, vocab_size, emb_dim, hidden_dim, n_classes):
    keys = jax.random.split(key, 9)
    H = hidden_dim
    s = float(H) ** -0.5
    u = lambda k, shape: jax.random.uniform(k, shape, jnp.float32, -s, s)
    return {
        "emb":   jax.random.normal(keys[0], (vocab_size, emb_dim), jnp.float32),
        "wih_f": u(keys[1], (emb_dim, 4 * H)),
        "whh_f": u(keys[2], (H, 4 * H)),
        "b_f":   u(keys[3], (1, 4 * H)),    # bias_ih + bias_hh combined
        "wih_b": u(keys[4], (emb_dim, 4 * H)),
        "whh_b": u(keys[5], (H, 4 * H)),
        "b_b":   u(keys[6], (1, 4 * H)),
        "wfc":   u(keys[7], (2 * H, n_classes)),
        "bfc":   u(keys[8], (1, n_classes)),
    }


def bilstm_reference(tokens, len_x, params):
    emb = params["emb"][tokens]                                # (B, T, E) f32
    B, T, _ = emb.shape
    H = params["whh_f"].shape[0]
    mask = (jnp.arange(T)[None, :] < len_x[:, None]).astype(jnp.float32)

    def direction(x_seq, m_seq, wih, whh, b):
        def step(carry, inp):
            h, c = carry
            xt, m = inp
            g = xt @ wih + h @ whh + b
            i = jax.nn.sigmoid(g[:, :H])
            f = jax.nn.sigmoid(g[:, H:2 * H])
            gg = jnp.tanh(g[:, 2 * H:3 * H])
            o = jax.nn.sigmoid(g[:, 3 * H:])
            c_new = f * c + i * gg
            h_new = o * jnp.tanh(c_new)
            h = m * h_new + (1.0 - m) * h
            c = m * c_new + (1.0 - m) * c
            return (h, c), None
        h0 = jnp.zeros((B, H), jnp.float32)
        (h, _), _ = jax.lax.scan(step, (h0, h0), (x_seq, m_seq))
        return h

    x_tm = jnp.transpose(emb, (1, 0, 2))
    m_tm = mask.T[:, :, None]
    h_f = direction(x_tm, m_tm, params["wih_f"], params["whh_f"], params["b_f"])
    h_b = direction(x_tm[::-1], m_tm[::-1],
                    params["wih_b"], params["whh_b"], params["b_b"])
    maxlen = jnp.max(len_x)
    x_f = h_f * (len_x == maxlen).astype(jnp.float32)[:, None]
    feat = jnp.concatenate([x_f, h_b], axis=1)
    return feat @ params["wfc"] + params["bfc"]


if __name__ == "__main__":
    # Lane/sublane friendly small shapes: E, H multiples of 128, batch >= 8.
    vocab_size, emb_dim, hidden_dim, n_classes = 64, 128, 128, 4
    B, T = 8, 16

    key = jax.random.PRNGKey(0)
    k_params, k_tok = jax.random.split(key)
    params = init_params(k_params, vocab_size, emb_dim, hidden_dim, n_classes)

    tokens = jax.random.randint(k_tok, (B, T), 0, vocab_size, dtype=jnp.int32)
    # pack_padded_sequence requires lengths sorted descending (enforce_sorted)
    len_x = jnp.array([16, 15, 13, 12, 9, 7, 4, 2], dtype=jnp.int32)

    logits = bilstm_classifier_forward(tokens, len_x, params, chunk=8)
    logits = jax.block_until_ready(logits)
    assert logits.shape == (B, n_classes)

    ref = bilstm_reference(tokens, len_x, params)
    max_err = float(jnp.max(jnp.abs(logits - ref)))
    assert max_err < 0.1, f"mismatch vs f32 reference: {max_err}"

    print("KERNEL_OK")
</pallas_src>

<mosaic_0001>
module attributes {stable_mosaic.version = 11 : i64} {
  func.func @bilstm_kernel(%arg0: i32, %arg1: i32, %arg2: memref<8x8x128xbf16, #tpu.memory_space<vmem>>, %arg3: memref<8x8x128xbf16, #tpu.memory_space<vmem>>, %arg4: memref<8x8x1xf32, #tpu.memory_space<vmem>>, %arg5: memref<8x8x1xf32, #tpu.memory_space<vmem>>, %arg6: memref<8x1xf32, #tpu.memory_space<vmem>>, %arg7: memref<256x512xbf16, #tpu.memory_space<vmem>>, %arg8: memref<1x512xf32, #tpu.memory_space<vmem>>, %arg9: memref<256x512xbf16, #tpu.memory_space<vmem>>, %arg10: memref<1x512xf32, #tpu.memory_space<vmem>>, %arg11: memref<128x4xbf16, #tpu.memory_space<vmem>>, %arg12: memref<128x4xbf16, #tpu.memory_space<vmem>>, %arg13: memref<1x4xf32, #tpu.memory_space<vmem>>, %arg14: memref<8x4xf32, #tpu.memory_space<vmem>>, %arg15: memref<8x128xf32, #tpu.memory_space<vmem>>, %arg16: memref<8x128xf32, #tpu.memory_space<vmem>>, %arg17: memref<8x128xf32, #tpu.memory_space<vmem>>, %arg18: memref<8x128xf32, #tpu.memory_space<vmem>>, %arg19: memref<8x256xbf16, #tpu.memory_space<vmem>>, %arg20: memref<8x256xbf16, #tpu.memory_space<vmem>>) attributes {dimension_semantics = [#tpu.dimension_semantics<parallel>, #tpu.dimension_semantics<arbitrary>], iteration_bounds = array<i64: 1, 2>, scalar_prefetch = 0 : i64, scratch_operands = 6 : i64, tpu.core_type = #tpu.core_type<tc>, window_params = [{transform_indices = @transform_0, window_bounds = array<i64: 8, 8, 128>}, {transform_indices = @transform_1, window_bounds = array<i64: 8, 8, 128>}, {transform_indices = @transform_2, window_bounds = array<i64: 8, 8, 1>}, {transform_indices = @transform_3, window_bounds = array<i64: 8, 8, 1>}, {transform_indices = @transform_4, window_bounds = array<i64: 8, 1>}, {pipeline_mode = #tpu.pipeline_mode<synchronous>, transform_indices = @transform_5, window_bounds = array<i64: 256, 512>}, {pipeline_mode = #tpu.pipeline_mode<synchronous>, transform_indices = @transform_6, window_bounds = array<i64: 1, 512>}, {pipeline_mode = #tpu.pipeline_mode<synchronous>, transform_indices = @transform_7, window_bounds = array<i64: 256, 512>}, {pipeline_mode = #tpu.pipeline_mode<synchronous>, transform_indices = @transform_8, window_bounds = array<i64: 1, 512>}, {pipeline_mode = #tpu.pipeline_mode<synchronous>, transform_indices = @transform_9, window_bounds = array<i64: 128, 4>}, {pipeline_mode = #tpu.pipeline_mode<synchronous>, transform_indices = @transform_10, window_bounds = array<i64: 128, 4>}, {pipeline_mode = #tpu.pipeline_mode<synchronous>, transform_indices = @transform_11, window_bounds = array<i64: 1, 4>}, {transform_indices = @transform_12, window_bounds = array<i64: 8, 4>}]} {
    %c0_i32 = arith.constant 0 : i32
    %0 = arith.cmpi eq, %arg1, %c0_i32 : i32
    %1 = arith.extui %0 : i1 to i32
    %c0_i32_0 = arith.constant 0 : i32
    %2 = arith.cmpi ne, %1, %c0_i32_0 : i32
    scf.if %2 {
      %cst_328 = arith.constant 0.000000e+00 : f32
      %750 = vector.broadcast %cst_328 : f32 to vector<8x128xf32>
      %c0_329 = arith.constant 0 : index
      %c0_330 = arith.constant 0 : index
      %751 = vector.load %arg15[%c0_329, %c0_330] : memref<8x128xf32, #tpu.memory_space<vmem>>, vector<8x128xf32>
      tpu.vector_store %arg15[%c0_329, %c0_330], %750 {strides = array<i32>} : memref<8x128xf32, #tpu.memory_space<vmem>>, vector<8x128xf32>,
      %c0_331 = arith.constant 0 : index
      %c0_332 = arith.constant 0 : index
      %752 = vector.load %arg16[%c0_331, %c0_332] : memref<8x128xf32, #tpu.memory_space<vmem>>, vector<8x128xf32>
      tpu.vector_store %arg16[%c0_331, %c0_332], %750 {strides = array<i32>} : memref<8x128xf32, #tpu.memory_space<vmem>>, vector<8x128xf32>,
      %c0_333 = arith.constant 0 : index
      %c0_334 = arith.constant 0 : index
      %753 = vector.load %arg17[%c0_333, %c0_334] : memref<8x128xf32, #tpu.memory_space<vmem>>, vector<8x128xf32>
      tpu.vector_store %arg17[%c0_333, %c0_334], %750 {strides = array<i32>} : memref<8x128xf32, #tpu.memory_space<vmem>>, vector<8x128xf32>,
      %c0_335 = arith.constant 0 : index
      %c0_336 = arith.constant 0 : index
      %754 = vector.load %arg18[%c0_335, %c0_336] : memref<8x128xf32, #tpu.memory_space<vmem>>, vector<8x128xf32>
      tpu.vector_store %arg18[%c0_335, %c0_336], %750 {strides = array<i32>} : memref<8x128xf32, #tpu.memory_space<vmem>>, vector<8x128xf32>,
    } else {
    }
    %c0 = arith.constant 0 : index
    %c0_1 = arith.constant 0 : index
    %3 = vector.load %arg15[%c0, %c0_1] : memref<8x128xf32, #tpu.memory_space<vmem>>, vector<8x128xf32>
    %c0_2 = arith.constant 0 : index
    %c0_3 = arith.constant 0 : index
    %4 = vector.load %arg16[%c0_2, %c0_3] : memref<8x128xf32, #tpu.memory_space<vmem>>, vector<8x128xf32>
    %c0_4 = arith.constant 0 : index
    %c0_5 = arith.constant 0 : index
    %5 = vector.load %arg17[%c0_4, %c0_5] : memref<8x128xf32, #tpu.memory_space<vmem>>, vector<8x128xf32>
    %c0_6 = arith.constant 0 : index
    %c0_7 = arith.constant 0 : index
    %6 = vector.load %arg18[%c0_6, %c0_7] : memref<8x128xf32, #tpu.memory_space<vmem>>, vector<8x128xf32>
    %c0_8 = arith.constant 0 : index
    %c0_9 = arith.constant 0 : index
    %c0_10 = arith.constant 0 : index
    %7 = vector.load %arg2[%c0_8, %c0_9, %c0_10] : memref<8x8x128xbf16, #tpu.memory_space<vmem>>, vector<1x8x128xbf16>
    %8 = vector.shape_cast %7 : vector<1x8x128xbf16> to vector<8x128xbf16>
    %c0_11 = arith.constant 0 : index
    %c0_12 = arith.constant 0 : index
    %c0_13 = arith.constant 0 : index
    %9 = vector.load %arg4[%c0_11, %c0_12, %c0_13] : memref<8x8x1xf32, #tpu.memory_space<vmem>>, vector<1x8x1xf32>
    %10 = vector.shape_cast %9 : vector<1x8x1xf32> to vector<8x1xf32>
    %c0_14 = arith.constant 0 : index
    %c0_15 = arith.constant 0 : index
    %11 = vector.load %arg19[%c0_14, %c0_15] : memref<8x256xbf16, #tpu.memory_space<vmem>>, vector<8x128xbf16>
    tpu.vector_store %arg19[%c0_14, %c0_15], %8 {strides = array<i32>} : memref<8x256xbf16, #tpu.memory_space<vmem>>, vector<8x128xbf16>,
    %12 = arith.truncf %3 : vector<8x128xf32> to vector<8x128xbf16>
    %c0_16 = arith.constant 0 : index
    %c128 = arith.constant 128 : index
    %13 = vector.load %arg19[%c0_16, %c128] : memref<8x256xbf16, #tpu.memory_space<vmem>>, vector<8x128xbf16>
    tpu.vector_store %arg19[%c0_16, %c128], %12 {strides = array<i32>} : memref<8x256xbf16, #tpu.memory_space<vmem>>, vector<8x128xbf16>,
    %c0_17 = arith.constant 0 : index
    %c0_18 = arith.constant 0 : index
    %14 = vector.load %arg19[%c0_17, %c0_18] : memref<8x256xbf16, #tpu.memory_space<vmem>>, vector<8x256xbf16>
    %c0_19 = arith.constant 0 : index
    %c0_20 = arith.constant 0 : index
    %15 = vector.load %arg7[%c0_19, %c0_20] : memref<256x512xbf16, #tpu.memory_space<vmem>>, vector<256x512xbf16>
    %cst = arith.constant dense<0.000000e+00> : vector<8x512xf32>
    %16 = tpu.matmul %14, %15, %cst {dimension_numbers = #tpu.dot_dimension_numbers<[1], [0], [0], [1], [0, 0, 1, 1], [], []>} : vector<8x256xbf16>, vector<256x512xbf16>, vector<8x512xf32> -> vector<8x512xf32>
    %c0_21 = arith.constant 0 : index
    %c0_22 = arith.constant 0 : index
    %17 = vector.load %arg8[%c0_21, %c0_22] : memref<1x512xf32, #tpu.memory_space<vmem>>, vector<1x512xf32>
    %18 = vector.broadcast %17 : vector<1x512xf32> to vector<8x512xf32>
    %19 = arith.addf %16, %18 : vector<8x512xf32>
    %20 = vector.extract_strided_slice %19 {offsets = [0, 0], sizes = [8, 128], strides = [1, 1]} : vector<8x512xf32> to vector<8x128xf32>
    %21 = arith.negf %20 : vector<8x128xf32>
    %22 = math.exp %21 : vector<8x128xf32>
    %cst_23 = arith.constant 1.000000e+00 : f32
    %23 = vector.broadcast %cst_23 : f32 to vector<8x128xf32>
    %24 = arith.addf %23, %22 : vector<8x128xf32>
    %25 = arith.divf %23, %24 : vector<8x128xf32>
    %26 = vector.extract_strided_slice %19 {offsets = [0, 128], sizes = [8, 128], strides = [1, 1]} : vector<8x512xf32> to vector<8x128xf32>
    %27 = arith.negf %26 : vector<8x128xf32>
    %28 = math.exp %27 : vector<8x128xf32>
    %cst_24 = arith.constant 1.000000e+00 : f32
    %29 = vector.broadcast %cst_24 : f32 to vector<8x128xf32>
    %30 = arith.addf %29, %28 : vector<8x128xf32>
    %31 = arith.divf %29, %30 : vector<8x128xf32>
    %32 = vector.extract_strided_slice %19 {offsets = [0, 256], sizes = [8, 128], strides = [1, 1]} : vector<8x512xf32> to vector<8x128xf32>
    %33 = math.tanh %32 : vector<8x128xf32>
    %34 = vector.extract_strided_slice %19 {offsets = [0, 384], sizes = [8, 128], strides = [1, 1]} : vector<8x512xf32> to vector<8x128xf32>
    %35 = arith.negf %34 : vector<8x128xf32>
    %36 = math.exp %35 : vector<8x128xf32>
    %cst_25 = arith.constant 1.000000e+00 : f32
    %37 = vector.broadcast %cst_25 : f32 to vector<8x128xf32>
    %38 = arith.addf %37, %36 : vector<8x128xf32>
    %39 = arith.divf %37, %38 : vector<8x128xf32>
    %40 = arith.mulf %31, %4 : vector<8x128xf32>
    %41 = arith.mulf %25, %33 : vector<8x128xf32>
    %42 = arith.addf %40, %41 : vector<8x128xf32>
    %43 = math.tanh %42 : vector<8x128xf32>
    %44 = arith.mulf %39, %43 : vector<8x128xf32>
    %45 = arith.subf %44, %3 : vector<8x128xf32>
    %46 = vector.broadcast %10 : vector<8x1xf32> to vector<8x128xf32>
    %47 = arith.mulf %46, %45 : vector<8x128xf32>
    %48 = arith.addf %3, %47 : vector<8x128xf32>
    %49 = arith.subf %42, %4 : vector<8x128xf32>
    %50 = vector.broadcast %10 : vector<8x1xf32> to vector<8x128xf32>
    %51 = arith.mulf %50, %49 : vector<8x128xf32>
    %52 = arith.addf %4, %51 : vector<8x128xf32>
    %c7 = arith.constant 7 : index
    %c0_26 = arith.constant 0 : index
    %c0_27 = arith.constant 0 : index
    %53 = vector.load %arg3[%c7, %c0_26, %c0_27] : memref<8x8x128xbf16, #tpu.memory_space<vmem>>, vector<1x8x128xbf16>
    %54 = vector.shape_cast %53 : vector<1x8x128xbf16> to vector<8x128xbf16>
    %c7_28 = arith.constant 7 : index
    %c0_29 = arith.constant 0 : index
    %c0_30 = arith.constant 0 : index
    %55 = vector.load %arg5[%c7_28, %c0_29, %c0_30] : memref<8x8x1xf32, #tpu.memory_space<vmem>>, vector<1x8x1xf32>
    %56 = vector.shape_cast %55 : vector<1x8x1xf32> to vector<8x1xf32>
    %c0_31 = arith.constant 0 : index
    %c0_32 = arith.constant 0 : index
    %57 = vector.load %arg20[%c0_31, %c0_32] : memref<8x256xbf16, #tpu.memory_space<vmem>>, vector<8x128xbf16>
    tpu.vector_store %arg20[%c0_31, %c0_32], %54 {strides = array<i32>} : memref<8x256xbf16, #tpu.memory_space<vmem>>, vector<8x128xbf16>,
    %58 = arith.truncf %5 : vector<8x128xf32> to vector<8x128xbf16>
    %c0_33 = arith.constant 0 : index
    %c128_34 = arith.constant 128 : index
    %59 = vector.load %arg20[%c0_33, %c128_34] : memref<8x256xbf16, #tpu.memory_space<vmem>>, vector<8x128xbf16>
    tpu.vector_store %arg20[%c0_33, %c128_34], %58 {strides = array<i32>} : memref<8x256xbf16, #tpu.memory_space<vmem>>, vector<8x128xbf16>,
    %c0_35 = arith.constant 0 : index
    %c0_36 = arith.constant 0 : index
    %60 = vector.load %arg20[%c0_35, %c0_36] : memref<8x256xbf16, #tpu.memory_space<vmem>>, vector<8x256xbf16>
    %c0_37 = arith.constant 0 : index
    %c0_38 = arith.constant 0 : index
    %61 = vector.load %arg9[%c0_37, %c0_38] : memref<256x512xbf16, #tpu.memory_space<vmem>>, vector<256x512xbf16>
    %cst_39 = arith.constant dense<0.000000e+00> : vector<8x512xf32>
    %62 = tpu.matmul %60, %61, %cst_39 {dimension_numbers = #tpu.dot_dimension_numbers<[1], [0], [0], [1], [0, 0, 1, 1], [], []>} : vector<8x256xbf16>, vector<256x512xbf16>, vector<8x512xf32> -> vector<8x512xf32>
    %c0_40 = arith.constant 0 : index
    %c0_41 = arith.constant 0 : index
    %63 = vector.load %arg10[%c0_40, %c0_41] : memref<1x512xf32, #tpu.memory_space<vmem>>, vector<1x512xf32>
    %64 = vector.broadcast %63 : vector<1x512xf32> to vector<8x512xf32>
    %65 = arith.addf %62, %64 : vector<8x512xf32>
    %66 = vector.extract_strided_slice %65 {offsets = [0, 0], sizes = [8, 128], strides = [1, 1]} : vector<8x512xf32> to vector<8x128xf32>
    %67 = arith.negf %66 : vector<8x128xf32>
    %68 = math.exp %67 : vector<8x128xf32>
    %cst_42 = arith.constant 1.000000e+00 : f32
    %69 = vector.broadcast %cst_42 : f32 to vector<8x128xf32>
    %70 = arith.addf %69, %68 : vector<8x128xf32>
    %71 = arith.divf %69, %70 : vector<8x128xf32>
    %72 = vector.extract_strided_slice %65 {offsets = [0, 128], sizes = [8, 128], strides = [1, 1]} : vector<8x512xf32> to vector<8x128xf32>
    %73 = arith.negf %72 : vector<8x128xf32>
    %74 = math.exp %73 : vector<8x128xf32>
    %cst_43 = arith.constant 1.000000e+00 : f32
    %75 = vector.broadcast %cst_43 : f32 to vector<8x128xf32>
    %76 = arith.addf %75, %74 : vector<8x128xf32>
    %77 = arith.divf %75, %76 : vector<8x128xf32>
    %78 = vector.extract_strided_slice %65 {offsets = [0, 256], sizes = [8, 128], strides = [1, 1]} : vector<8x512xf32> to vector<8x128xf32>
    %79 = math.tanh %78 : vector<8x128xf32>
    %80 = vector.extract_strided_slice %65 {offsets = [0, 384], sizes = [8, 128], strides = [1, 1]} : vector<8x512xf32> to vector<8x128xf32>
    %81 = arith.negf %80 : vector<8x128xf32>
    %82 = math.exp %81 : vector<8x128xf32>
    %cst_44 = arith.constant 1.000000e+00 : f32
    %83 = vector.broadcast %cst_44 : f32 to vector<8x128xf32>
    %84 = arith.addf %83, %82 : vector<8x128xf32>
    %85 = arith.divf %83, %84 : vector<8x128xf32>
    %86 = arith.mulf %77, %6 : vector<8x128xf32>
    %87 = arith.mulf %71, %79 : vector<8x128xf32>
    %88 = arith.addf %86, %87 : vector<8x128xf32>
    %89 = math.tanh %88 : vector<8x128xf32>
    %90 = arith.mulf %85, %89 : vector<8x128xf32>
    %91 = arith.subf %90, %5 : vector<8x128xf32>
    %92 = vector.broadcast %56 : vector<8x1xf32> to vector<8x128xf32>
    %93 = arith.mulf %92, %91 : vector<8x128xf32>
    %94 = arith.addf %5, %93 : vector<8x128xf32>
    %95 = arith.subf %88, %6 : vector<8x128xf32>
    %96 = vector.broadcast %56 : vector<8x1xf32> to vector<8x128xf32>
    %97 = arith.mulf %96, %95 : vector<8x128xf32>
    %98 = arith.addf %6, %97 : vector<8x128xf32>
    %c1 = arith.constant 1 : index
    %c0_45 = arith.constant 0 : index
    %c0_46 = arith.constant 0 : index
    %99 = vector.load %arg2[%c1, %c0_45, %c0_46] : memref<8x8x128xbf16, #tpu.memory_space<vmem>>, vector<1x8x128xbf16>
    %100 = vector.shape_cast %99 : vector<1x8x128xbf16> to vector<8x128xbf16>
    %c1_47 = arith.constant 1 : index
    %c0_48 = arith.constant 0 : index
    %c0_49 = arith.constant 0 : index
    %101 = vector.load %arg4[%c1_47, %c0_48, %c0_49] : memref<8x8x1xf32, #tpu.memory_space<vmem>>, vector<1x8x1xf32>
    %102 = vector.shape_cast %101 : vector<1x8x1xf32> to vector<8x1xf32>
    %c0_50 = arith.constant 0 : index
    %c0_51 = arith.constant 0 : index
    %103 = vector.load %arg19[%c0_50, %c0_51] : memref<8x256xbf16, #tpu.memory_space<vmem>>, vector<8x128xbf16>
    tpu.vector_store %arg19[%c0_50, %c0_51], %100 {strides = array<i32>} : memref<8x256xbf16, #tpu.memory_space<vmem>>, vector<8x128xbf16>,
    %104 = arith.truncf %48 : vector<8x128xf32> to vector<8x128xbf16>
    %c0_52 = arith.constant 0 : index
    %c128_53 = arith.constant 128 : index
    %105 = vector.load %arg19[%c0_52, %c128_53] : memref<8x256xbf16, #tpu.memory_space<vmem>>, vector<8x128xbf16>
    tpu.vector_store %arg19[%c0_52, %c128_53], %104 {strides = array<i32>} : memref<8x256xbf16, #tpu.memory_space<vmem>>, vector<8x128xbf16>,
    %c0_54 = arith.constant 0 : index
    %c0_55 = arith.constant 0 : index
    %106 = vector.load %arg19[%c0_54, %c0_55] : memref<8x256xbf16, #tpu.memory_space<vmem>>, vector<8x256xbf16>
    %c0_56 = arith.constant 0 : index
    %c0_57 = arith.constant 0 : index
    %107 = vector.load %arg7[%c0_56, %c0_57] : memref<256x512xbf16, #tpu.memory_space<vmem>>, vector<256x512xbf16>
    %cst_58 = arith.constant dense<0.000000e+00> : vector<8x512xf32>
    %108 = tpu.matmul %106, %107, %cst_58 {dimension_numbers = #tpu.dot_dimension_numbers<[1], [0], [0], [1], [0, 0, 1, 1], [], []>} : vector<8x256xbf16>, vector<256x512xbf16>, vector<8x512xf32> -> vector<8x512xf32>
    %c0_59 = arith.constant 0 : index
    %c0_60 = arith.constant 0 : index
    %109 = vector.load %arg8[%c0_59, %c0_60] : memref<1x512xf32, #tpu.memory_space<vmem>>, vector<1x512xf32>
    %110 = vector.broadcast %109 : vector<1x512xf32> to vector<8x512xf32>
    %111 = arith.addf %108, %110 : vector<8x512xf32>
    %112 = vector.extract_strided_slice %111 {offsets = [0, 0], sizes = [8, 128], strides = [1, 1]} : vector<8x512xf32> to vector<8x128xf32>
    %113 = arith.negf %112 : vector<8x128xf32>
    %114 = math.exp %113 : vector<8x128xf32>
    %cst_61 = arith.constant 1.000000e+00 : f32
    %115 = vector.broadcast %cst_61 : f32 to vector<8x128xf32>
    %116 = arith.addf %115, %114 : vector<8x128xf32>
    %117 = arith.divf %115, %116 : vector<8x128xf32>
    %118 = vector.extract_strided_slice %111 {offsets = [0, 128], sizes = [8, 128], strides = [1, 1]} : vector<8x512xf32> to vector<8x128xf32>
    %119 = arith.negf %118 : vector<8x128xf32>
    %120 = math.exp %119 : vector<8x128xf32>
    %cst_62 = arith.constant 1.000000e+00 : f32
    %121 = vector.broadcast %cst_62 : f32 to vector<8x128xf32>
    %122 = arith.addf %121, %120 : vector<8x128xf32>
    %123 = arith.divf %121, %122 : vector<8x128xf32>
    %124 = vector.extract_strided_slice %111 {offsets = [0, 256], sizes = [8, 128], strides = [1, 1]} : vector<8x512xf32> to vector<8x128xf32>
    %125 = math.tanh %124 : vector<8x128xf32>
    %126 = vector.extract_strided_slice %111 {offsets = [0, 384], sizes = [8, 128], strides = [1, 1]} : vector<8x512xf32> to vector<8x128xf32>
    %127 = arith.negf %126 : vector<8x128xf32>
    %128 = math.exp %127 : vector<8x128xf32>
    %cst_63 = arith.constant 1.000000e+00 : f32
    %129 = vector.broadcast %cst_63 : f32 to vector<8x128xf32>
    %130 = arith.addf %129, %128 : vector<8x128xf32>
    %131 = arith.divf %129, %130 : vector<8x128xf32>
    %132 = arith.mulf %123, %52 : vector<8x128xf32>
    %133 = arith.mulf %117, %125 : vector<8x128xf32>
    %134 = arith.addf %132, %133 : vector<8x128xf32>
    %135 = math.tanh %134 : vector<8x128xf32>
    %136 = arith.mulf %131, %135 : vector<8x128xf32>
    %137 = arith.subf %136, %48 : vector<8x128xf32>
    %138 = vector.broadcast %102 : vector<8x1xf32> to vector<8x128xf32>
    %139 = arith.mulf %138, %137 : vector<8x128xf32>
    %140 = arith.addf %48, %139 : vector<8x128xf32>
    %141 = arith.subf %134, %52 : vector<8x128xf32>
    %142 = vector.broadcast %102 : vector<8x1xf32> to vector<8x128xf32>
    %143 = arith.mulf %142, %141 : vector<8x128xf32>
    %144 = arith.addf %52, %143 : vector<8x128xf32>
    %c6 = arith.constant 6 : index
    %c0_64 = arith.constant 0 : index
    %c0_65 = arith.constant 0 : index
    %145 = vector.load %arg3[%c6, %c0_64, %c0_65] : memref<8x8x128xbf16, #tpu.memory_space<vmem>>, vector<1x8x128xbf16>
    %146 = vector.shape_cast %145 : vector<1x8x128xbf16> to vector<8x128xbf16>
    %c6_66 = arith.constant 6 : index
    %c0_67 = arith.constant 0 : index
    %c0_68 = arith.constant 0 : index
    %147 = vector.load %arg5[%c6_66, %c0_67, %c0_68] : memref<8x8x1xf32, #tpu.memory_space<vmem>>, vector<1x8x1xf32>
    %148 = vector.shape_cast %147 : vector<1x8x1xf32> to vector<8x1xf32>
    %c0_69 = arith.constant 0 : index
    %c0_70 = arith.constant 0 : index
    %149 = vector.load %arg20[%c0_69, %c0_70] : memref<8x256xbf16, #tpu.memory_space<vmem>>, vector<8x128xbf16>
    tpu.vector_store %arg20[%c0_69, %c0_70], %146 {strides = array<i32>} : memref<8x256xbf16, #tpu.memory_space<vmem>>, vector<8x128xbf16>,
    %150 = arith.truncf %94 : vector<8x128xf32> to vector<8x128xbf16>
    %c0_71 = arith.constant 0 : index
    %c128_72 = arith.constant 128 : index
    %151 = vector.load %arg20[%c0_71, %c128_72] : memref<8x256xbf16, #tpu.memory_space<vmem>>, vector<8x128xbf16>
    tpu.vector_store %arg20[%c0_71, %c128_72], %150 {strides = array<i32>} : memref<8x256xbf16, #tpu.memory_space<vmem>>, vector<8x128xbf16>,
    %c0_73 = arith.constant 0 : index
    %c0_74 = arith.constant 0 : index
    %152 = vector.load %arg20[%c0_73, %c0_74] : memref<8x256xbf16, #tpu.memory_space<vmem>>, vector<8x256xbf16>
    %c0_75 = arith.constant 0 : index
    %c0_76 = arith.constant 0 : index
    %153 = vector.load %arg9[%c0_75, %c0_76] : memref<256x512xbf16, #tpu.memory_space<vmem>>, vector<256x512xbf16>
    %cst_77 = arith.constant dense<0.000000e+00> : vector<8x512xf32>
    %154 = tpu.matmul %152, %153, %cst_77 {dimension_numbers = #tpu.dot_dimension_numbers<[1], [0], [0], [1], [0, 0, 1, 1], [], []>} : vector<8x256xbf16>, vector<256x512xbf16>, vector<8x512xf32> -> vector<8x512xf32>
    %c0_78 = arith.constant 0 : index
    %c0_79 = arith.constant 0 : index
    %155 = vector.load %arg10[%c0_78, %c0_79] : memref<1x512xf32, #tpu.memory_space<vmem>>, vector<1x512xf32>
    %156 = vector.broadcast %155 : vector<1x512xf32> to vector<8x512xf32>
    %157 = arith.addf %154, %156 : vector<8x512xf32>
    %158 = vector.extract_strided_slice %157 {offsets = [0, 0], sizes = [8, 128], strides = [1, 1]} : vector<8x512xf32> to vector<8x128xf32>
    %159 = arith.negf %158 : vector<8x128xf32>
    %160 = math.exp %159 : vector<8x128xf32>
    %cst_80 = arith.constant 1.000000e+00 : f32
    %161 = vector.broadcast %cst_80 : f32 to vector<8x128xf32>
    %162 = arith.addf %161, %160 : vector<8x128xf32>
    %163 = arith.divf %161, %162 : vector<8x128xf32>
    %164 = vector.extract_strided_slice %157 {offsets = [0, 128], sizes = [8, 128], strides = [1, 1]} : vector<8x512xf32> to vector<8x128xf32>
    %165 = arith.negf %164 : vector<8x128xf32>
    %166 = math.exp %165 : vector<8x128xf32>
    %cst_81 = arith.constant 1.000000e+00 : f32
    %167 = vector.broadcast %cst_81 : f32 to vector<8x128xf32>
    %168 = arith.addf %167, %166 : vector<8x128xf32>
    %169 = arith.divf %167, %168 : vector<8x128xf32>
    %170 = vector.extract_strided_slice %157 {offsets = [0, 256], sizes = [8, 128], strides = [1, 1]} : vector<8x512xf32> to vector<8x128xf32>
    %171 = math.tanh %170 : vector<8x128xf32>
    %172 = vector.extract_strided_slice %157 {offsets = [0, 384], sizes = [8, 128], strides = [1, 1]} : vector<8x512xf32> to vector<8x128xf32>
    %173 = arith.negf %172 : vector<8x128xf32>
    %174 = math.exp %173 : vector<8x128xf32>
    %cst_82 = arith.constant 1.000000e+00 : f32
    %175 = vector.broadcast %cst_82 : f32 to vector<8x128xf32>
    %176 = arith.addf %175, %174 : vector<8x128xf32>
    %177 = arith.divf %175, %176 : vector<8x128xf32>
    %178 = arith.mulf %169, %98 : vector<8x128xf32>
    %179 = arith.mulf %163, %171 : vector<8x128xf32>
    %180 = arith.addf %178, %179 : vector<8x128xf32>
    %181 = math.tanh %180 : vector<8x128xf32>
    %182 = arith.mulf %177, %181 : vector<8x128xf32>
    %183 = arith.subf %182, %94 : vector<8x128xf32>
    %184 = vector.broadcast %148 : vector<8x1xf32> to vector<8x128xf32>
    %185 = arith.mulf %184, %183 : vector<8x128xf32>
    %186 = arith.addf %94, %185 : vector<8x128xf32>
    %187 = arith.subf %180, %98 : vector<8x128xf32>
    %188 = vector.broadcast %148 : vector<8x1xf32> to vector<8x128xf32>
    %189 = arith.mulf %188, %187 : vector<8x128xf32>
    %190 = arith.addf %98, %189 : vector<8x128xf32>
    %c2 = arith.constant 2 : index
    %c0_83 = arith.constant 0 : index
    %c0_84 = arith.constant 0 : index
    %191 = vector.load %arg2[%c2, %c0_83, %c0_84] : memref<8x8x128xbf16, #tpu.memory_space<vmem>>, vector<1x8x128xbf16>
    %192 = vector.shape_cast %191 : vector<1x8x128xbf16> to vector<8x128xbf16>
    %c2_85 = arith.constant 2 : index
    %c0_86 = arith.constant 0 : index
    %c0_87 = arith.constant 0 : index
    %193 = vector.load %arg4[%c2_85, %c0_86, %c0_87] : memref<8x8x1xf32, #tpu.memory_space<vmem>>, vector<1x8x1xf32>
    %194 = vector.shape_cast %193 : vector<1x8x1xf32> to vector<8x1xf32>
    %c0_88 = arith.constant 0 : index
    %c0_89 = arith.constant 0 : index
    %195 = vector.load %arg19[%c0_88, %c0_89] : memref<8x256xbf16, #tpu.memory_space<vmem>>, vector<8x128xbf16>
    tpu.vector_store %arg19[%c0_88, %c0_89], %192 {strides = array<i32>} : memref<8x256xbf16, #tpu.memory_space<vmem>>, vector<8x128xbf16>,
    %196 = arith.truncf %140 : vector<8x128xf32> to vector<8x128xbf16>
    %c0_90 = arith.constant 0 : index
    %c128_91 = arith.constant 128 : index
    %197 = vector.load %arg19[%c0_90, %c128_91] : memref<8x256xbf16, #tpu.memory_space<vmem>>, vector<8x128xbf16>
    tpu.vector_store %arg19[%c0_90, %c128_91], %196 {strides = array<i32>} : memref<8x256xbf16, #tpu.memory_space<vmem>>, vector<8x128xbf16>,
    %c0_92 = arith.constant 0 : index
    %c0_93 = arith.constant 0 : index
    %198 = vector.load %arg19[%c0_92, %c0_93] : memref<8x256xbf16, #tpu.memory_space<vmem>>, vector<8x256xbf16>
    %c0_94 = arith.constant 0 : index
    %c0_95 = arith.constant 0 : index
    %199 = vector.load %arg7[%c0_94, %c0_95] : memref<256x512xbf16, #tpu.memory_space<vmem>>, vector<256x512xbf16>
    %cst_96 = arith.constant dense<0.000000e+00> : vector<8x512xf32>
    %200 = tpu.matmul %198, %199, %cst_96 {dimension_numbers = #tpu.dot_dimension_numbers<[1], [0], [0], [1], [0, 0, 1, 1], [], []>} : vector<8x256xbf16>, vector<256x512xbf16>, vector<8x512xf32> -> vector<8x512xf32>
    %c0_97 = arith.constant 0 : index
    %c0_98 = arith.constant 0 : index
    %201 = vector.load %arg8[%c0_97, %c0_98] : memref<1x512xf32, #tpu.memory_space<vmem>>, vector<1x512xf32>
    %202 = vector.broadcast %201 : vector<1x512xf32> to vector<8x512xf32>
    %203 = arith.addf %200, %202 : vector<8x512xf32>
    %204 = vector.extract_strided_slice %203 {offsets = [0, 0], sizes = [8, 128], strides = [1, 1]} : vector<8x512xf32> to vector<8x128xf32>
    %205 = arith.negf %204 : vector<8x128xf32>
    %206 = math.exp %205 : vector<8x128xf32>
    %cst_99 = arith.constant 1.000000e+00 : f32
    %207 = vector.broadcast %cst_99 : f32 to vector<8x128xf32>
    %208 = arith.addf %207, %206 : vector<8x128xf32>
    %209 = arith.divf %207, %208 : vector<8x128xf32>
    %210 = vector.extract_strided_slice %203 {offsets = [0, 128], sizes = [8, 128], strides = [1, 1]} : vector<8x512xf32> to vector<8x128xf32>
    %211 = arith.negf %210 : vector<8x128xf32>
    %212 = math.exp %211 : vector<8x128xf32>
    %cst_100 = arith.constant 1.000000e+00 : f32
    %213 = vector.broadcast %cst_100 : f32 to vector<8x128xf32>
    %214 = arith.addf %213, %212 : vector<8x128xf32>
    %215 = arith.divf %213, %214 : vector<8x128xf32>
    %216 = vector.extract_strided_slice %203 {offsets = [0, 256], sizes = [8, 128], strides = [1, 1]} : vector<8x512xf32> to vector<8x128xf32>
    %217 = math.tanh %216 : vector<8x128xf32>
    %218 = vector.extract_strided_slice %203 {offsets = [0, 384], sizes = [8, 128], strides = [1, 1]} : vector<8x512xf32> to vector<8x128xf32>
    %219 = arith.negf %218 : vector<8x128xf32>
    %220 = math.exp %219 : vector<8x128xf32>
    %cst_101 = arith.constant 1.000000e+00 : f32
    %221 = vector.broadcast %cst_101 : f32 to vector<8x128xf32>
    %222 = arith.addf %221, %220 : vector<8x128xf32>
    %223 = arith.divf %221, %222 : vector<8x128xf32>
    %224 = arith.mulf %215, %144 : vector<8x128xf32>
    %225 = arith.mulf %209, %217 : vector<8x128xf32>
    %226 = arith.addf %224, %225 : vector<8x128xf32>
    %227 = math.tanh %226 : vector<8x128xf32>
    %228 = arith.mulf %223, %227 : vector<8x128xf32>
    %229 = arith.subf %228, %140 : vector<8x128xf32>
    %230 = vector.broadcast %194 : vector<8x1xf32> to vector<8x128xf32>
    %231 = arith.mulf %230, %229 : vector<8x128xf32>
    %232 = arith.addf %140, %231 : vector<8x128xf32>
    %233 = arith.subf %226, %144 : vector<8x128xf32>
    %234 = vector.broadcast %194 : vector<8x1xf32> to vector<8x128xf32>
    %235 = arith.mulf %234, %233 : vector<8x128xf32>
    %236 = arith.addf %144, %235 : vector<8x128xf32>
    %c5 = arith.constant 5 : index
    %c0_102 = arith.constant 0 : index
    %c0_103 = arith.constant 0 : index
    %237 = vector.load %arg3[%c5, %c0_102, %c0_103] : memref<8x8x128xbf16, #tpu.memory_space<vmem>>, vector<1x8x128xbf16>
    %238 = vector.shape_cast %237 : vector<1x8x128xbf16> to vector<8x128xbf16>
    %c5_104 = arith.constant 5 : index
    %c0_105 = arith.constant 0 : index
    %c0_106 = arith.constant 0 : index
    %239 = vector.load %arg5[%c5_104, %c0_105, %c0_106] : memref<8x8x1xf32, #tpu.memory_space<vmem>>, vector<1x8x1xf32>
    %240 = vector.shape_cast %239 : vector<1x8x1xf32> to vector<8x1xf32>
    %c0_107 = arith.constant 0 : index
    %c0_108 = arith.constant 0 : index
    %241 = vector.load %arg20[%c0_107, %c0_108] : memref<8x256xbf16, #tpu.memory_space<vmem>>, vector<8x128xbf16>
    tpu.vector_store %arg20[%c0_107, %c0_108], %238 {strides = array<i32>} : memref<8x256xbf16, #tpu.memory_space<vmem>>, vector<8x128xbf16>,
    %242 = arith.truncf %186 : vector<8x128xf32> to vector<8x128xbf16>
    %c0_109 = arith.constant 0 : index
    %c128_110 = arith.constant 128 : index
    %243 = vector.load %arg20[%c0_109, %c128_110] : memref<8x256xbf16, #tpu.memory_space<vmem>>, vector<8x128xbf16>
    tpu.vector_store %arg20[%c0_109, %c128_110], %242 {strides = array<i32>} : memref<8x256xbf16, #tpu.memory_space<vmem>>, vector<8x128xbf16>,
    %c0_111 = arith.constant 0 : index
    %c0_112 = arith.constant 0 : index
    %244 = vector.load %arg20[%c0_111, %c0_112] : memref<8x256xbf16, #tpu.memory_space<vmem>>, vector<8x256xbf16>
    %c0_113 = arith.constant 0 : index
    %c0_114 = arith.constant 0 : index
    %245 = vector.load %arg9[%c0_113, %c0_114] : memref<256x512xbf16, #tpu.memory_space<vmem>>, vector<256x512xbf16>
    %cst_115 = arith.constant dense<0.000000e+00> : vector<8x512xf32>
    %246 = tpu.matmul %244, %245, %cst_115 {dimension_numbers = #tpu.dot_dimension_numbers<[1], [0], [0], [1], [0, 0, 1, 1], [], []>} : vector<8x256xbf16>, vector<256x512xbf16>, vector<8x512xf32> -> vector<8x512xf32>
    %c0_116 = arith.constant 0 : index
    %c0_117 = arith.constant 0 : index
    %247 = vector.load %arg10[%c0_116, %c0_117] : memref<1x512xf32, #tpu.memory_space<vmem>>, vector<1x512xf32>
    %248 = vector.broadcast %247 : vector<1x512xf32> to vector<8x512xf32>
    %249 = arith.addf %246, %248 : vector<8x512xf32>
    %250 = vector.extract_strided_slice %249 {offsets = [0, 0], sizes = [8, 128], strides = [1, 1]} : vector<8x512xf32> to vector<8x128xf32>
    %251 = arith.negf %250 : vector<8x128xf32>
    %252 = math.exp %251 : vector<8x128xf32>
    %cst_118 = arith.constant 1.000000e+00 : f32
    %253 = vector.broadcast %cst_118 : f32 to vector<8x128xf32>
    %254 = arith.addf %253, %252 : vector<8x128xf32>
    %255 = arith.divf %253, %254 : vector<8x128xf32>
    %256 = vector.extract_strided_slice %249 {offsets = [0, 128], sizes = [8, 128], strides = [1, 1]} : vector<8x512xf32> to vector<8x128xf32>
    %257 = arith.negf %256 : vector<8x128xf32>
    %258 = math.exp %257 : vector<8x128xf32>
    %cst_119 = arith.constant 1.000000e+00 : f32
    %259 = vector.broadcast %cst_119 : f32 to vector<8x128xf32>
    %260 = arith.addf %259, %258 : vector<8x128xf32>
    %261 = arith.divf %259, %260 : vector<8x128xf32>
    %262 = vector.extract_strided_slice %249 {offsets = [0, 256], sizes = [8, 128], strides = [1, 1]} : vector<8x512xf32> to vector<8x128xf32>
    %263 = math.tanh %262 : vector<8x128xf32>
    %264 = vector.extract_strided_slice %249 {offsets = [0, 384], sizes = [8, 128], strides = [1, 1]} : vector<8x512xf32> to vector<8x128xf32>
    %265 = arith.negf %264 : vector<8x128xf32>
    %266 = math.exp %265 : vector<8x128xf32>
    %cst_120 = arith.constant 1.000000e+00 : f32
    %267 = vector.broadcast %cst_120 : f32 to vector<8x128xf32>
    %268 = arith.addf %267, %266 : vector<8x128xf32>
    %269 = arith.divf %267, %268 : vector<8x128xf32>
    %270 = arith.mulf %261, %190 : vector<8x128xf32>
    %271 = arith.mulf %255, %263 : vector<8x128xf32>
    %272 = arith.addf %270, %271 : vector<8x128xf32>
    %273 = math.tanh %272 : vector<8x128xf32>
    %274 = arith.mulf %269, %273 : vector<8x128xf32>
    %275 = arith.subf %274, %186 : vector<8x128xf32>
    %276 = vector.broadcast %240 : vector<8x1xf32> to vector<8x128xf32>
    %277 = arith.mulf %276, %275 : vector<8x128xf32>
    %278 = arith.addf %186, %277 : vector<8x128xf32>
    %279 = arith.subf %272, %190 : vector<8x128xf32>
    %280 = vector.broadcast %240 : vector<8x1xf32> to vector<8x128xf32>
    %281 = arith.mulf %280, %279 : vector<8x128xf32>
    %282 = arith.addf %190, %281 : vector<8x128xf32>
    %c3 = arith.constant 3 : index
    %c0_121 = arith.constant 0 : index
    %c0_122 = arith.constant 0 : index
    %283 = vector.load %arg2[%c3, %c0_121, %c0_122] : memref<8x8x128xbf16, #tpu.memory_space<vmem>>, vector<1x8x128xbf16>
    %284 = vector.shape_cast %283 : vector<1x8x128xbf16> to vector<8x128xbf16>
    %c3_123 = arith.constant 3 : index
    %c0_124 = arith.constant 0 : index
    %c0_125 = arith.constant 0 : index
    %285 = vector.load %arg4[%c3_123, %c0_124, %c0_125] : memref<8x8x1xf32, #tpu.memory_space<vmem>>, vector<1x8x1xf32>
    %286 = vector.shape_cast %285 : vector<1x8x1xf32> to vector<8x1xf32>
    %c0_126 = arith.constant 0 : index
    %c0_127 = arith.constant 0 : index
    %287 = vector.load %arg19[%c0_126, %c0_127] : memref<8x256xbf16, #tpu.memory_space<vmem>>, vector<8x128xbf16>
    tpu.vector_store %arg19[%c0_126, %c0_127], %284 {strides = array<i32>} : memref<8x256xbf16, #tpu.memory_space<vmem>>, vector<8x128xbf16>,
    %288 = arith.truncf %232 : vector<8x128xf32> to vector<8x128xbf16>
    %c0_128 = arith.constant 0 : index
    %c128_129 = arith.constant 128 : index
    %289 = vector.load %arg19[%c0_128, %c128_129] : memref<8x256xbf16, #tpu.memory_space<vmem>>, vector<8x128xbf16>
    tpu.vector_store %arg19[%c0_128, %c128_129], %288 {strides = array<i32>} : memref<8x256xbf16, #tpu.memory_space<vmem>>, vector<8x128xbf16>,
    %c0_130 = arith.constant 0 : index
    %c0_131 = arith.constant 0 : index
    %290 = vector.load %arg19[%c0_130, %c0_131] : memref<8x256xbf16, #tpu.memory_space<vmem>>, vector<8x256xbf16>
    %c0_132 = arith.constant 0 : index
    %c0_133 = arith.constant 0 : index
    %291 = vector.load %arg7[%c0_132, %c0_133] : memref<256x512xbf16, #tpu.memory_space<vmem>>, vector<256x512xbf16>
    %cst_134 = arith.constant dense<0.000000e+00> : vector<8x512xf32>
    %292 = tpu.matmul %290, %291, %cst_134 {dimension_numbers = #tpu.dot_dimension_numbers<[1], [0], [0], [1], [0, 0, 1, 1], [], []>} : vector<8x256xbf16>, vector<256x512xbf16>, vector<8x512xf32> -> vector<8x512xf32>
    %c0_135 = arith.constant 0 : index
    %c0_136 = arith.constant 0 : index
    %293 = vector.load %arg8[%c0_135, %c0_136] : memref<1x512xf32, #tpu.memory_space<vmem>>, vector<1x512xf32>
    %294 = vector.broadcast %293 : vector<1x512xf32> to vector<8x512xf32>
    %295 = arith.addf %292, %294 : vector<8x512xf32>
    %296 = vector.extract_strided_slice %295 {offsets = [0, 0], sizes = [8, 128], strides = [1, 1]} : vector<8x512xf32> to vector<8x128xf32>
    %297 = arith.negf %296 : vector<8x128xf32>
    %298 = math.exp %297 : vector<8x128xf32>
    %cst_137 = arith.constant 1.000000e+00 : f32
    %299 = vector.broadcast %cst_137 : f32 to vector<8x128xf32>
    %300 = arith.addf %299, %298 : vector<8x128xf32>
    %301 = arith.divf %299, %300 : vector<8x128xf32>
    %302 = vector.extract_strided_slice %295 {offsets = [0, 128], sizes = [8, 128], strides = [1, 1]} : vector<8x512xf32> to vector<8x128xf32>
    %303 = arith.negf %302 : vector<8x128xf32>
    %304 = math.exp %303 : vector<8x128xf32>
    %cst_138 = arith.constant 1.000000e+00 : f32
    %305 = vector.broadcast %cst_138 : f32 to vector<8x128xf32>
    %306 = arith.addf %305, %304 : vector<8x128xf32>
    %307 = arith.divf %305, %306 : vector<8x128xf32>
    %308 = vector.extract_strided_slice %295 {offsets = [0, 256], sizes = [8, 128], strides = [1, 1]} : vector<8x512xf32> to vector<8x128xf32>
    %309 = math.tanh %308 : vector<8x128xf32>
    %310 = vector.extract_strided_slice %295 {offsets = [0, 384], sizes = [8, 128], strides = [1, 1]} : vector<8x512xf32> to vector<8x128xf32>
    %311 = arith.negf %310 : vector<8x128xf32>
    %312 = math.exp %311 : vector<8x128xf32>
    %cst_139 = arith.constant 1.000000e+00 : f32
    %313 = vector.broadcast %cst_139 : f32 to vector<8x128xf32>
    %314 = arith.addf %313, %312 : vector<8x128xf32>
    %315 = arith.divf %313, %314 : vector<8x128xf32>
    %316 = arith.mulf %307, %236 : vector<8x128xf32>
    %317 = arith.mulf %301, %309 : vector<8x128xf32>
    %318 = arith.addf %316, %317 : vector<8x128xf32>
    %319 = math.tanh %318 : vector<8x128xf32>
    %320 = arith.mulf %315, %319 : vector<8x128xf32>
    %321 = arith.subf %320, %232 : vector<8x128xf32>
    %322 = vector.broadcast %286 : vector<8x1xf32> to vector<8x128xf32>
    %323 = arith.mulf %322, %321 : vector<8x128xf32>
    %324 = arith.addf %232, %323 : vector<8x128xf32>
    %325 = arith.subf %318, %236 : vector<8x128xf32>
    %326 = vector.broadcast %286 : vector<8x1xf32> to vector<8x128xf32>
    %327 = arith.mulf %326, %325 : vector<8x128xf32>
    %328 = arith.addf %236, %327 : vector<8x128xf32>
    %c4 = arith.constant 4 : index
    %c0_140 = arith.constant 0 : index
    %c0_141 = arith.constant 0 : index
    %329 = vector.load %arg3[%c4, %c0_140, %c0_141] : memref<8x8x128xbf16, #tpu.memory_space<vmem>>, vector<1x8x128xbf16>
    %330 = vector.shape_cast %329 : vector<1x8x128xbf16> to vector<8x128xbf16>
    %c4_142 = arith.constant 4 : index
    %c0_143 = arith.constant 0 : index
    %c0_144 = arith.constant 0 : index
    %331 = vector.load %arg5[%c4_142, %c0_143, %c0_144] : memref<8x8x1xf32, #tpu.memory_space<vmem>>, vector<1x8x1xf32>
    %332 = vector.shape_cast %331 : vector<1x8x1xf32> to vector<8x1xf32>
    %c0_145 = arith.constant 0 : index
    %c0_146 = arith.constant 0 : index
    %333 = vector.load %arg20[%c0_145, %c0_146] : memref<8x256xbf16, #tpu.memory_space<vmem>>, vector<8x128xbf16>
    tpu.vector_store %arg20[%c0_145, %c0_146], %330 {strides = array<i32>} : memref<8x256xbf16, #tpu.memory_space<vmem>>, vector<8x128xbf16>,
    %334 = arith.truncf %278 : vector<8x128xf32> to vector<8x128xbf16>
    %c0_147 = arith.constant 0 : index
    %c128_148 = arith.constant 128 : index
    %335 = vector.load %arg20[%c0_147, %c128_148] : memref<8x256xbf16, #tpu.memory_space<vmem>>, vector<8x128xbf16>
    tpu.vector_store %arg20[%c0_147, %c128_148], %334 {strides = array<i32>} : memref<8x256xbf16, #tpu.memory_space<vmem>>, vector<8x128xbf16>,
    %c0_149 = arith.constant 0 : index
    %c0_150 = arith.constant 0 : index
    %336 = vector.load %arg20[%c0_149, %c0_150] : memref<8x256xbf16, #tpu.memory_space<vmem>>, vector<8x256xbf16>
    %c0_151 = arith.constant 0 : index
    %c0_152 = arith.constant 0 : index
    %337 = vector.load %arg9[%c0_151, %c0_152] : memref<256x512xbf16, #tpu.memory_space<vmem>>, vector<256x512xbf16>
    %cst_153 = arith.constant dense<0.000000e+00> : vector<8x512xf32>
    %338 = tpu.matmul %336, %337, %cst_153 {dimension_numbers = #tpu.dot_dimension_numbers<[1], [0], [0], [1], [0, 0, 1, 1], [], []>} : vector<8x256xbf16>, vector<256x512xbf16>, vector<8x512xf32> -> vector<8x512xf32>
    %c0_154 = arith.constant 0 : index
    %c0_155 = arith.constant 0 : index
    %339 = vector.load %arg10[%c0_154, %c0_155] : memref<1x512xf32, #tpu.memory_space<vmem>>, vector<1x512xf32>
    %340 = vector.broadcast %339 : vector<1x512xf32> to vector<8x512xf32>
    %341 = arith.addf %338, %340 : vector<8x512xf32>
    %342 = vector.extract_strided_slice %341 {offsets = [0, 0], sizes = [8, 128], strides = [1, 1]} : vector<8x512xf32> to vector<8x128xf32>
    %343 = arith.negf %342 : vector<8x128xf32>
    %344 = math.exp %343 : vector<8x128xf32>
    %cst_156 = arith.constant 1.000000e+00 : f32
    %345 = vector.broadcast %cst_156 : f32 to vector<8x128xf32>
    %346 = arith.addf %345, %344 : vector<8x128xf32>
    %347 = arith.divf %345, %346 : vector<8x128xf32>
    %348 = vector.extract_strided_slice %341 {offsets = [0, 128], sizes = [8, 128], strides = [1, 1]} : vector<8x512xf32> to vector<8x128xf32>
    %349 = arith.negf %348 : vector<8x128xf32>
    %350 = math.exp %349 : vector<8x128xf32>
    %cst_157 = arith.constant 1.000000e+00 : f32
    %351 = vector.broadcast %cst_157 : f32 to vector<8x128xf32>
    %352 = arith.addf %351, %350 : vector<8x128xf32>
    %353 = arith.divf %351, %352 : vector<8x128xf32>
    %354 = vector.extract_strided_slice %341 {offsets = [0, 256], sizes = [8, 128], strides = [1, 1]} : vector<8x512xf32> to vector<8x128xf32>
    %355 = math.tanh %354 : vector<8x128xf32>
    %356 = vector.extract_strided_slice %341 {offsets = [0, 384], sizes = [8, 128], strides = [1, 1]} : vector<8x512xf32> to vector<8x128xf32>
    %357 = arith.negf %356 : vector<8x128xf32>
    %358 = math.exp %357 : vector<8x128xf32>
    %cst_158 = arith.constant 1.000000e+00 : f32
    %359 = vector.broadcast %cst_158 : f32 to vector<8x128xf32>
    %360 = arith.addf %359, %358 : vector<8x128xf32>
    %361 = arith.divf %359, %360 : vector<8x128xf32>
    %362 = arith.mulf %353, %282 : vector<8x128xf32>
    %363 = arith.mulf %347, %355 : vector<8x128xf32>
    %364 = arith.addf %362, %363 : vector<8x128xf32>
    %365 = math.tanh %364 : vector<8x128xf32>
    %366 = arith.mulf %361, %365 : vector<8x128xf32>
    %367 = arith.subf %366, %278 : vector<8x128xf32>
    %368 = vector.broadcast %332 : vector<8x1xf32> to vector<8x128xf32>
    %369 = arith.mulf %368, %367 : vector<8x128xf32>
    %370 = arith.addf %278, %369 : vector<8x128xf32>
    %371 = arith.subf %364, %282 : vector<8x128xf32>
    %372 = vector.broadcast %332 : vector<8x1xf32> to vector<8x128xf32>
    %373 = arith.mulf %372, %371 : vector<8x128xf32>
    %374 = arith.addf %282, %373 : vector<8x128xf32>
    %c4_159 = arith.constant 4 : index
    %c0_160 = arith.constant 0 : index
    %c0_161 = arith.constant 0 : index
    %375 = vector.load %arg2[%c4_159, %c0_160, %c0_161] : memref<8x8x128xbf16, #tpu.memory_space<vmem>>, vector<1x8x128xbf16>
    %376 = vector.shape_cast %375 : vector<1x8x128xbf16> to vector<8x128xbf16>
    %c4_162 = arith.constant 4 : index
    %c0_163 = arith.constant 0 : index
    %c0_164 = arith.constant 0 : index
    %377 = vector.load %arg4[%c4_162, %c0_163, %c0_164] : memref<8x8x1xf32, #tpu.memory_space<vmem>>, vector<1x8x1xf32>
    %378 = vector.shape_cast %377 : vector<1x8x1xf32> to vector<8x1xf32>
    %c0_165 = arith.constant 0 : index
    %c0_166 = arith.constant 0 : index
    %379 = vector.load %arg19[%c0_165, %c0_166] : memref<8x256xbf16, #tpu.memory_space<vmem>>, vector<8x128xbf16>
    tpu.vector_store %arg19[%c0_165, %c0_166], %376 {strides = array<i32>} : memref<8x256xbf16, #tpu.memory_space<vmem>>, vector<8x128xbf16>,
    %380 = arith.truncf %324 : vector<8x128xf32> to vector<8x128xbf16>
    %c0_167 = arith.constant 0 : index
    %c128_168 = arith.constant 128 : index
    %381 = vector.load %arg19[%c0_167, %c128_168] : memref<8x256xbf16, #tpu.memory_space<vmem>>, vector<8x128xbf16>
    tpu.vector_store %arg19[%c0_167, %c128_168], %380 {strides = array<i32>} : memref<8x256xbf16, #tpu.memory_space<vmem>>, vector<8x128xbf16>,
    %c0_169 = arith.constant 0 : index
    %c0_170 = arith.constant 0 : index
    %382 = vector.load %arg19[%c0_169, %c0_170] : memref<8x256xbf16, #tpu.memory_space<vmem>>, vector<8x256xbf16>
    %c0_171 = arith.constant 0 : index
    %c0_172 = arith.constant 0 : index
    %383 = vector.load %arg7[%c0_171, %c0_172] : memref<256x512xbf16, #tpu.memory_space<vmem>>, vector<256x512xbf16>
    %cst_173 = arith.constant dense<0.000000e+00> : vector<8x512xf32>
    %384 = tpu.matmul %382, %383, %cst_173 {dimension_numbers = #tpu.dot_dimension_numbers<[1], [0], [0], [1], [0, 0, 1, 1], [], []>} : vector<8x256xbf16>, vector<256x512xbf16>, vector<8x512xf32> -> vector<8x512xf32>
    %c0_174 = arith.constant 0 : index
    %c0_175 = arith.constant 0 : index
    %385 = vector.load %arg8[%c0_174, %c0_175] : memref<1x512xf32, #tpu.memory_space<vmem>>, vector<1x512xf32>
    %386 = vector.broadcast %385 : vector<1x512xf32> to vector<8x512xf32>
    %387 = arith.addf %384, %386 : vector<8x512xf32>
    %388 = vector.extract_strided_slice %387 {offsets = [0, 0], sizes = [8, 128], strides = [1, 1]} : vector<8x512xf32> to vector<8x128xf32>
    %389 = arith.negf %388 : vector<8x128xf32>
    %390 = math.exp %389 : vector<8x128xf32>
    %cst_176 = arith.constant 1.000000e+00 : f32
    %391 = vector.broadcast %cst_176 : f32 to vector<8x128xf32>
    %392 = arith.addf %391, %390 : vector<8x128xf32>
    %393 = arith.divf %391, %392 : vector<8x128xf32>
    %394 = vector.extract_strided_slice %387 {offsets = [0, 128], sizes = [8, 128], strides = [1, 1]} : vector<8x512xf32> to vector<8x128xf32>
    %395 = arith.negf %394 : vector<8x128xf32>
    %396 = math.exp %395 : vector<8x128xf32>
    %cst_177 = arith.constant 1.000000e+00 : f32
    %397 = vector.broadcast %cst_177 : f32 to vector<8x128xf32>
    %398 = arith.addf %397, %396 : vector<8x128xf32>
    %399 = arith.divf %397, %398 : vector<8x128xf32>
    %400 = vector.extract_strided_slice %387 {offsets = [0, 256], sizes = [8, 128], strides = [1, 1]} : vector<8x512xf32> to vector<8x128xf32>
    %401 = math.tanh %400 : vector<8x128xf32>
    %402 = vector.extract_strided_slice %387 {offsets = [0, 384], sizes = [8, 128], strides = [1, 1]} : vector<8x512xf32> to vector<8x128xf32>
    %403 = arith.negf %402 : vector<8x128xf32>
    %404 = math.exp %403 : vector<8x128xf32>
    %cst_178 = arith.constant 1.000000e+00 : f32
    %405 = vector.broadcast %cst_178 : f32 to vector<8x128xf32>
    %406 = arith.addf %405, %404 : vector<8x128xf32>
    %407 = arith.divf %405, %406 : vector<8x128xf32>
    %408 = arith.mulf %399, %328 : vector<8x128xf32>
    %409 = arith.mulf %393, %401 : vector<8x128xf32>
    %410 = arith.addf %408, %409 : vector<8x128xf32>
    %411 = math.tanh %410 : vector<8x128xf32>
    %412 = arith.mulf %407, %411 : vector<8x128xf32>
    %413 = arith.subf %412, %324 : vector<8x128xf32>
    %414 = vector.broadcast %378 : vector<8x1xf32> to vector<8x128xf32>
    %415 = arith.mulf %414, %413 : vector<8x128xf32>
    %416 = arith.addf %324, %415 : vector<8x128xf32>
    %417 = arith.subf %410, %328 : vector<8x128xf32>
    %418 = vector.broadcast %378 : vector<8x1xf32> to vector<8x128xf32>
    %419 = arith.mulf %418, %417 : vector<8x128xf32>
    %420 = arith.addf %328, %419 : vector<8x128xf32>
    %c3_179 = arith.constant 3 : index
    %c0_180 = arith.constant 0 : index
    %c0_181 = arith.constant 0 : index
    %421 = vector.load %arg3[%c3_179, %c0_180, %c0_181] : memref<8x8x128xbf16, #tpu.memory_space<vmem>>, vector<1x8x128xbf16>
    %422 = vector.shape_cast %421 : vector<1x8x128xbf16> to vector<8x128xbf16>
    %c3_182 = arith.constant 3 : index
    %c0_183 = arith.constant 0 : index
    %c0_184 = arith.constant 0 : index
    %423 = vector.load %arg5[%c3_182, %c0_183, %c0_184] : memref<8x8x1xf32, #tpu.memory_space<vmem>>, vector<1x8x1xf32>
    %424 = vector.shape_cast %423 : vector<1x8x1xf32> to vector<8x1xf32>
    %c0_185 = arith.constant 0 : index
    %c0_186 = arith.constant 0 : index
    %425 = vector.load %arg20[%c0_185, %c0_186] : memref<8x256xbf16, #tpu.memory_space<vmem>>, vector<8x128xbf16>
    tpu.vector_store %arg20[%c0_185, %c0_186], %422 {strides = array<i32>} : memref<8x256xbf16, #tpu.memory_space<vmem>>, vector<8x128xbf16>,
    %426 = arith.truncf %370 : vector<8x128xf32> to vector<8x128xbf16>
    %c0_187 = arith.constant 0 : index
    %c128_188 = arith.constant 128 : index
    %427 = vector.load %arg20[%c0_187, %c128_188] : memref<8x256xbf16, #tpu.memory_space<vmem>>, vector<8x128xbf16>
    tpu.vector_store %arg20[%c0_187, %c128_188], %426 {strides = array<i32>} : memref<8x256xbf16, #tpu.memory_space<vmem>>, vector<8x128xbf16>,
    %c0_189 = arith.constant 0 : index
    %c0_190 = arith.constant 0 : index
    %428 = vector.load %arg20[%c0_189, %c0_190] : memref<8x256xbf16, #tpu.memory_space<vmem>>, vector<8x256xbf16>
    %c0_191 = arith.constant 0 : index
    %c0_192 = arith.constant 0 : index
    %429 = vector.load %arg9[%c0_191, %c0_192] : memref<256x512xbf16, #tpu.memory_space<vmem>>, vector<256x512xbf16>
    %cst_193 = arith.constant dense<0.000000e+00> : vector<8x512xf32>
    %430 = tpu.matmul %428, %429, %cst_193 {dimension_numbers = #tpu.dot_dimension_numbers<[1], [0], [0], [1], [0, 0, 1, 1], [], []>} : vector<8x256xbf16>, vector<256x512xbf16>, vector<8x512xf32> -> vector<8x512xf32>
    %c0_194 = arith.constant 0 : index
    %c0_195 = arith.constant 0 : index
    %431 = vector.load %arg10[%c0_194, %c0_195] : memref<1x512xf32, #tpu.memory_space<vmem>>, vector<1x512xf32>
    %432 = vector.broadcast %431 : vector<1x512xf32> to vector<8x512xf32>
    %433 = arith.addf %430, %432 : vector<8x512xf32>
    %434 = vector.extract_strided_slice %433 {offsets = [0, 0], sizes = [8, 128], strides = [1, 1]} : vector<8x512xf32> to vector<8x128xf32>
    %435 = arith.negf %434 : vector<8x128xf32>
    %436 = math.exp %435 : vector<8x128xf32>
    %cst_196 = arith.constant 1.000000e+00 : f32
    %437 = vector.broadcast %cst_196 : f32 to vector<8x128xf32>
    %438 = arith.addf %437, %436 : vector<8x128xf32>
    %439 = arith.divf %437, %438 : vector<8x128xf32>
    %440 = vector.extract_strided_slice %433 {offsets = [0, 128], sizes = [8, 128], strides = [1, 1]} : vector<8x512xf32> to vector<8x128xf32>
    %441 = arith.negf %440 : vector<8x128xf32>
    %442 = math.exp %441 : vector<8x128xf32>
    %cst_197 = arith.constant 1.000000e+00 : f32
    %443 = vector.broadcast %cst_197 : f32 to vector<8x128xf32>
    %444 = arith.addf %443, %442 : vector<8x128xf32>
    %445 = arith.divf %443, %444 : vector<8x128xf32>
    %446 = vector.extract_strided_slice %433 {offsets = [0, 256], sizes = [8, 128], strides = [1, 1]} : vector<8x512xf32> to vector<8x128xf32>
    %447 = math.tanh %446 : vector<8x128xf32>
    %448 = vector.extract_strided_slice %433 {offsets = [0, 384], sizes = [8, 128], strides = [1, 1]} : vector<8x512xf32> to vector<8x128xf32>
    %449 = arith.negf %448 : vector<8x128xf32>
    %450 = math.exp %449 : vector<8x128xf32>
    %cst_198 = arith.constant 1.000000e+00 : f32
    %451 = vector.broadcast %cst_198 : f32 to vector<8x128xf32>
    %452 = arith.addf %451, %450 : vector<8x128xf32>
    %453 = arith.divf %451, %452 : vector<8x128xf32>
    %454 = arith.mulf %445, %374 : vector<8x128xf32>
    %455 = arith.mulf %439, %447 : vector<8x128xf32>
    %456 = arith.addf %454, %455 : vector<8x128xf32>
    %457 = math.tanh %456 : vector<8x128xf32>
    %458 = arith.mulf %453, %457 : vector<8x128xf32>
    %459 = arith.subf %458, %370 : vector<8x128xf32>
    %460 = vector.broadcast %424 : vector<8x1xf32> to vector<8x128xf32>
    %461 = arith.mulf %460, %459 : vector<8x128xf32>
    %462 = arith.addf %370, %461 : vector<8x128xf32>
    %463 = arith.subf %456, %374 : vector<8x128xf32>
    %464 = vector.broadcast %424 : vector<8x1xf32> to vector<8x128xf32>
    %465 = arith.mulf %464, %463 : vector<8x128xf32>
    %466 = arith.addf %374, %465 : vector<8x128xf32>
    %c5_199 = arith.constant 5 : index
    %c0_200 = arith.constant 0 : index
    %c0_201 = arith.constant 0 : index
    %467 = vector.load %arg2[%c5_199, %c0_200, %c0_201] : memref<8x8x128xbf16, #tpu.memory_space<vmem>>, vector<1x8x128xbf16>
    %468 = vector.shape_cast %467 : vector<1x8x128xbf16> to vector<8x128xbf16>
    %c5_202 = arith.constant 5 : index
    %c0_203 = arith.constant 0 : index
    %c0_204 = arith.constant 0 : index
    %469 = vector.load %arg4[%c5_202, %c0_203, %c0_204] : memref<8x8x1xf32, #tpu.memory_space<vmem>>, vector<1x8x1xf32>
    %470 = vector.shape_cast %469 : vector<1x8x1xf32> to vector<8x1xf32>
    %c0_205 = arith.constant 0 : index
    %c0_206 = arith.constant 0 : index
    %471 = vector.load %arg19[%c0_205, %c0_206] : memref<8x256xbf16, #tpu.memory_space<vmem>>, vector<8x128xbf16>
    tpu.vector_store %arg19[%c0_205, %c0_206], %468 {strides = array<i32>} : memref<8x256xbf16, #tpu.memory_space<vmem>>, vector<8x128xbf16>,
    %472 = arith.truncf %416 : vector<8x128xf32> to vector<8x128xbf16>
    %c0_207 = arith.constant 0 : index
    %c128_208 = arith.constant 128 : index
    %473 = vector.load %arg19[%c0_207, %c128_208] : memref<8x256xbf16, #tpu.memory_space<vmem>>, vector<8x128xbf16>
    tpu.vector_store %arg19[%c0_207, %c128_208], %472 {strides = array<i32>} : memref<8x256xbf16, #tpu.memory_space<vmem>>, vector<8x128xbf16>,
    %c0_209 = arith.constant 0 : index
    %c0_210 = arith.constant 0 : index
    %474 = vector.load %arg19[%c0_209, %c0_210] : memref<8x256xbf16, #tpu.memory_space<vmem>>, vector<8x256xbf16>
    %c0_211 = arith.constant 0 : index
    %c0_212 = arith.constant 0 : index
    %475 = vector.load %arg7[%c0_211, %c0_212] : memref<256x512xbf16, #tpu.memory_space<vmem>>, vector<256x512xbf16>
    %cst_213 = arith.constant dense<0.000000e+00> : vector<8x512xf32>
    %476 = tpu.matmul %474, %475, %cst_213 {dimension_numbers = #tpu.dot_dimension_numbers<[1], [0], [0], [1], [0, 0, 1, 1], [], []>} : vector<8x256xbf16>, vector<256x512xbf16>, vector<8x512xf32> -> vector<8x512xf32>
    %c0_214 = arith.constant 0 : index
    %c0_215 = arith.constant 0 : index
    %477 = vector.load %arg8[%c0_214, %c0_215] : memref<1x512xf32, #tpu.memory_space<vmem>>, vector<1x512xf32>
    %478 = vector.broadcast %477 : vector<1x512xf32> to vector<8x512xf32>
    %479 = arith.addf %476, %478 : vector<8x512xf32>
    %480 = vector.extract_strided_slice %479 {offsets = [0, 0], sizes = [8, 128], strides = [1, 1]} : vector<8x512xf32> to vector<8x128xf32>
    %481 = arith.negf %480 : vector<8x128xf32>
    %482 = math.exp %481 : vector<8x128xf32>
    %cst_216 = arith.constant 1.000000e+00 : f32
    %483 = vector.broadcast %cst_216 : f32 to vector<8x128xf32>
    %484 = arith.addf %483, %482 : vector<8x128xf32>
    %485 = arith.divf %483, %484 : vector<8x128xf32>
    %486 = vector.extract_strided_slice %479 {offsets = [0, 128], sizes = [8, 128], strides = [1, 1]} : vector<8x512xf32> to vector<8x128xf32>
    %487 = arith.negf %486 : vector<8x128xf32>
    %488 = math.exp %487 : vector<8x128xf32>
    %cst_217 = arith.constant 1.000000e+00 : f32
    %489 = vector.broadcast %cst_217 : f32 to vector<8x128xf32>
    %490 = arith.addf %489, %488 : vector<8x128xf32>
    %491 = arith.divf %489, %490 : vector<8x128xf32>
    %492 = vector.extract_strided_slice %479 {offsets = [0, 256], sizes = [8, 128], strides = [1, 1]} : vector<8x512xf32> to vector<8x128xf32>
    %493 = math.tanh %492 : vector<8x128xf32>
    %494 = vector.extract_strided_slice %479 {offsets = [0, 384], sizes = [8, 128], strides = [1, 1]} : vector<8x512xf32> to vector<8x128xf32>
    %495 = arith.negf %494 : vector<8x128xf32>
    %496 = math.exp %495 : vector<8x128xf32>
    %cst_218 = arith.constant 1.000000e+00 : f32
    %497 = vector.broadcast %cst_218 : f32 to vector<8x128xf32>
    %498 = arith.addf %497, %496 : vector<8x128xf32>
    %499 = arith.divf %497, %498 : vector<8x128xf32>
    %500 = arith.mulf %491, %420 : vector<8x128xf32>
    %501 = arith.mulf %485, %493 : vector<8x128xf32>
    %502 = arith.addf %500, %501 : vector<8x128xf32>
    %503 = math.tanh %502 : vector<8x128xf32>
    %504 = arith.mulf %499, %503 : vector<8x128xf32>
    %505 = arith.subf %504, %416 : vector<8x128xf32>
    %506 = vector.broadcast %470 : vector<8x1xf32> to vector<8x128xf32>
    %507 = arith.mulf %506, %505 : vector<8x128xf32>
    %508 = arith.addf %416, %507 : vector<8x128xf32>
    %509 = arith.subf %502, %420 : vector<8x128xf32>
    %510 = vector.broadcast %470 : vector<8x1xf32> to vector<8x128xf32>
    %511 = arith.mulf %510, %509 : vector<8x128xf32>
    %512 = arith.addf %420, %511 : vector<8x128xf32>
    %c2_219 = arith.constant 2 : index
    %c0_220 = arith.constant 0 : index
    %c0_221 = arith.constant 0 : index
    %513 = vector.load %arg3[%c2_219, %c0_220, %c0_221] : memref<8x8x128xbf16, #tpu.memory_space<vmem>>, vector<1x8x128xbf16>
    %514 = vector.shape_cast %513 : vector<1x8x128xbf16> to vector<8x128xbf16>
    %c2_222 = arith.constant 2 : index
    %c0_223 = arith.constant 0 : index
    %c0_224 = arith.constant 0 : index
    %515 = vector.load %arg5[%c2_222, %c0_223, %c0_224] : memref<8x8x1xf32, #tpu.memory_space<vmem>>, vector<1x8x1xf32>
    %516 = vector.shape_cast %515 : vector<1x8x1xf32> to vector<8x1xf32>
    %c0_225 = arith.constant 0 : index
    %c0_226 = arith.constant 0 : index
    %517 = vector.load %arg20[%c0_225, %c0_226] : memref<8x256xbf16, #tpu.memory_space<vmem>>, vector<8x128xbf16>
    tpu.vector_store %arg20[%c0_225, %c0_226], %514 {strides = array<i32>} : memref<8x256xbf16, #tpu.memory_space<vmem>>, vector<8x128xbf16>,
    %518 = arith.truncf %462 : vector<8x128xf32> to vector<8x128xbf16>
    %c0_227 = arith.constant 0 : index
    %c128_228 = arith.constant 128 : index
    %519 = vector.load %arg20[%c0_227, %c128_228] : memref<8x256xbf16, #tpu.memory_space<vmem>>, vector<8x128xbf16>
    tpu.vector_store %arg20[%c0_227, %c128_228], %518 {strides = array<i32>} : memref<8x256xbf16, #tpu.memory_space<vmem>>, vector<8x128xbf16>,
    %c0_229 = arith.constant 0 : index
    %c0_230 = arith.constant 0 : index
    %520 = vector.load %arg20[%c0_229, %c0_230] : memref<8x256xbf16, #tpu.memory_space<vmem>>, vector<8x256xbf16>
    %c0_231 = arith.constant 0 : index
    %c0_232 = arith.constant 0 : index
    %521 = vector.load %arg9[%c0_231, %c0_232] : memref<256x512xbf16, #tpu.memory_space<vmem>>, vector<256x512xbf16>
    %cst_233 = arith.constant dense<0.000000e+00> : vector<8x512xf32>
    %522 = tpu.matmul %520, %521, %cst_233 {dimension_numbers = #tpu.dot_dimension_numbers<[1], [0], [0], [1], [0, 0, 1, 1], [], []>} : vector<8x256xbf16>, vector<256x512xbf16>, vector<8x512xf32> -> vector<8x512xf32>
    %c0_234 = arith.constant 0 : index
    %c0_235 = arith.constant 0 : index
    %523 = vector.load %arg10[%c0_234, %c0_235] : memref<1x512xf32, #tpu.memory_space<vmem>>, vector<1x512xf32>
    %524 = vector.broadcast %523 : vector<1x512xf32> to vector<8x512xf32>
    %525 = arith.addf %522, %524 : vector<8x512xf32>
    %526 = vector.extract_strided_slice %525 {offsets = [0, 0], sizes = [8, 128], strides = [1, 1]} : vector<8x512xf32> to vector<8x128xf32>
    %527 = arith.negf %526 : vector<8x128xf32>
    %528 = math.exp %527 : vector<8x128xf32>
    %cst_236 = arith.constant 1.000000e+00 : f32
    %529 = vector.broadcast %cst_236 : f32 to vector<8x128xf32>
    %530 = arith.addf %529, %528 : vector<8x128xf32>
    %531 = arith.divf %529, %530 : vector<8x128xf32>
    %532 = vector.extract_strided_slice %525 {offsets = [0, 128], sizes = [8, 128], strides = [1, 1]} : vector<8x512xf32> to vector<8x128xf32>
    %533 = arith.negf %532 : vector<8x128xf32>
    %534 = math.exp %533 : vector<8x128xf32>
    %cst_237 = arith.constant 1.000000e+00 : f32
    %535 = vector.broadcast %cst_237 : f32 to vector<8x128xf32>
    %536 = arith.addf %535, %534 : vector<8x128xf32>
    %537 = arith.divf %535, %536 : vector<8x128xf32>
    %538 = vector.extract_strided_slice %525 {offsets = [0, 256], sizes = [8, 128], strides = [1, 1]} : vector<8x512xf32> to vector<8x128xf32>
    %539 = math.tanh %538 : vector<8x128xf32>
    %540 = vector.extract_strided_slice %525 {offsets = [0, 384], sizes = [8, 128], strides = [1, 1]} : vector<8x512xf32> to vector<8x128xf32>
    %541 = arith.negf %540 : vector<8x128xf32>
    %542 = math.exp %541 : vector<8x128xf32>
    %cst_238 = arith.constant 1.000000e+00 : f32
    %543 = vector.broadcast %cst_238 : f32 to vector<8x128xf32>
    %544 = arith.addf %543, %542 : vector<8x128xf32>
    %545 = arith.divf %543, %544 : vector<8x128xf32>
    %546 = arith.mulf %537, %466 : vector<8x128xf32>
    %547 = arith.mulf %531, %539 : vector<8x128xf32>
    %548 = arith.addf %546, %547 : vector<8x128xf32>
    %549 = math.tanh %548 : vector<8x128xf32>
    %550 = arith.mulf %545, %549 : vector<8x128xf32>
    %551 = arith.subf %550, %462 : vector<8x128xf32>
    %552 = vector.broadcast %516 : vector<8x1xf32> to vector<8x128xf32>
    %553 = arith.mulf %552, %551 : vector<8x128xf32>
    %554 = arith.addf %462, %553 : vector<8x128xf32>
    %555 = arith.subf %548, %466 : vector<8x128xf32>
    %556 = vector.broadcast %516 : vector<8x1xf32> to vector<8x128xf32>
    %557 = arith.mulf %556, %555 : vector<8x128xf32>
    %558 = arith.addf %466, %557 : vector<8x128xf32>
    %c6_239 = arith.constant 6 : index
    %c0_240 = arith.constant 0 : index
    %c0_241 = arith.constant 0 : index
    %559 = vector.load %arg2[%c6_239, %c0_240, %c0_241] : memref<8x8x128xbf16, #tpu.memory_space<vmem>>, vector<1x8x128xbf16>
    %560 = vector.shape_cast %559 : vector<1x8x128xbf16> to vector<8x128xbf16>
    %c6_242 = arith.constant 6 : index
    %c0_243 = arith.constant 0 : index
    %c0_244 = arith.constant 0 : index
    %561 = vector.load %arg4[%c6_242, %c0_243, %c0_244] : memref<8x8x1xf32, #tpu.memory_space<vmem>>, vector<1x8x1xf32>
    %562 = vector.shape_cast %561 : vector<1x8x1xf32> to vector<8x1xf32>
    %c0_245 = arith.constant 0 : index
    %c0_246 = arith.constant 0 : index
    %563 = vector.load %arg19[%c0_245, %c0_246] : memref<8x256xbf16, #tpu.memory_space<vmem>>, vector<8x128xbf16>
    tpu.vector_store %arg19[%c0_245, %c0_246], %560 {strides = array<i32>} : memref<8x256xbf16, #tpu.memory_space<vmem>>, vector<8x128xbf16>,
    %564 = arith.truncf %508 : vector<8x128xf32> to vector<8x128xbf16>
    %c0_247 = arith.constant 0 : index
    %c128_248 = arith.constant 128 : index
    %565 = vector.load %arg19[%c0_247, %c128_248] : memref<8x256xbf16, #tpu.memory_space<vmem>>, vector<8x128xbf16>
    tpu.vector_store %arg19[%c0_247, %c128_248], %564 {strides = array<i32>} : memref<8x256xbf16, #tpu.memory_space<vmem>>, vector<8x128xbf16>,
    %c0_249 = arith.constant 0 : index
    %c0_250 = arith.constant 0 : index
    %566 = vector.load %arg19[%c0_249, %c0_250] : memref<8x256xbf16, #tpu.memory_space<vmem>>, vector<8x256xbf16>
    %c0_251 = arith.constant 0 : index
    %c0_252 = arith.constant 0 : index
    %567 = vector.load %arg7[%c0_251, %c0_252] : memref<256x512xbf16, #tpu.memory_space<vmem>>, vector<256x512xbf16>
    %cst_253 = arith.constant dense<0.000000e+00> : vector<8x512xf32>
    %568 = tpu.matmul %566, %567, %cst_253 {dimension_numbers = #tpu.dot_dimension_numbers<[1], [0], [0], [1], [0, 0, 1, 1], [], []>} : vector<8x256xbf16>, vector<256x512xbf16>, vector<8x512xf32> -> vector<8x512xf32>
    %c0_254 = arith.constant 0 : index
    %c0_255 = arith.constant 0 : index
    %569 = vector.load %arg8[%c0_254, %c0_255] : memref<1x512xf32, #tpu.memory_space<vmem>>, vector<1x512xf32>
    %570 = vector.broadcast %569 : vector<1x512xf32> to vector<8x512xf32>
    %571 = arith.addf %568, %570 : vector<8x512xf32>
    %572 = vector.extract_strided_slice %571 {offsets = [0, 0], sizes = [8, 128], strides = [1, 1]} : vector<8x512xf32> to vector<8x128xf32>
    %573 = arith.negf %572 : vector<8x128xf32>
    %574 = math.exp %573 : vector<8x128xf32>
    %cst_256 = arith.constant 1.000000e+00 : f32
    %575 = vector.broadcast %cst_256 : f32 to vector<8x128xf32>
    %576 = arith.addf %575, %574 : vector<8x128xf32>
    %577 = arith.divf %575, %576 : vector<8x128xf32>
    %578 = vector.extract_strided_slice %571 {offsets = [0, 128], sizes = [8, 128], strides = [1, 1]} : vector<8x512xf32> to vector<8x128xf32>
    %579 = arith.negf %578 : vector<8x128xf32>
    %580 = math.exp %579 : vector<8x128xf32>
    %cst_257 = arith.constant 1.000000e+00 : f32
    %581 = vector.broadcast %cst_257 : f32 to vector<8x128xf32>
    %582 = arith.addf %581, %580 : vector<8x128xf32>
    %583 = arith.divf %581, %582 : vector<8x128xf32>
    %584 = vector.extract_strided_slice %571 {offsets = [0, 256], sizes = [8, 128], strides = [1, 1]} : vector<8x512xf32> to vector<8x128xf32>
    %585 = math.tanh %584 : vector<8x128xf32>
    %586 = vector.extract_strided_slice %571 {offsets = [0, 384], sizes = [8, 128], strides = [1, 1]} : vector<8x512xf32> to vector<8x128xf32>
    %587 = arith.negf %586 : vector<8x128xf32>
    %588 = math.exp %587 : vector<8x128xf32>
    %cst_258 = arith.constant 1.000000e+00 : f32
    %589 = vector.broadcast %cst_258 : f32 to vector<8x128xf32>
    %590 = arith.addf %589, %588 : vector<8x128xf32>
    %591 = arith.divf %589, %590 : vector<8x128xf32>
    %592 = arith.mulf %583, %512 : vector<8x128xf32>
    %593 = arith.mulf %577, %585 : vector<8x128xf32>
    %594 = arith.addf %592, %593 : vector<8x128xf32>
    %595 = math.tanh %594 : vector<8x128xf32>
    %596 = arith.mulf %591, %595 : vector<8x128xf32>
    %597 = arith.subf %596, %508 : vector<8x128xf32>
    %598 = vector.broadcast %562 : vector<8x1xf32> to vector<8x128xf32>
    %599 = arith.mulf %598, %597 : vector<8x128xf32>
    %600 = arith.addf %508, %599 : vector<8x128xf32>
    %601 = arith.subf %594, %512 : vector<8x128xf32>
    %602 = vector.broadcast %562 : vector<8x1xf32> to vector<8x128xf32>
    %603 = arith.mulf %602, %601 : vector<8x128xf32>
    %604 = arith.addf %512, %603 : vector<8x128xf32>
    %c1_259 = arith.constant 1 : index
    %c0_260 = arith.constant 0 : index
    %c0_261 = arith.constant 0 : index
    %605 = vector.load %arg3[%c1_259, %c0_260, %c0_261] : memref<8x8x128xbf16, #tpu.memory_space<vmem>>, vector<1x8x128xbf16>
    %606 = vector.shape_cast %605 : vector<1x8x128xbf16> to vector<8x128xbf16>
    %c1_262 = arith.constant 1 : index
    %c0_263 = arith.constant 0 : index
    %c0_264 = arith.constant 0 : index
    %607 = vector.load %arg5[%c1_262, %c0_263, %c0_264] : memref<8x8x1xf32, #tpu.memory_space<vmem>>, vector<1x8x1xf32>
    %608 = vector.shape_cast %607 : vector<1x8x1xf32> to vector<8x1xf32>
    %c0_265 = arith.constant 0 : index
    %c0_266 = arith.constant 0 : index
    %609 = vector.load %arg20[%c0_265, %c0_266] : memref<8x256xbf16, #tpu.memory_space<vmem>>, vector<8x128xbf16>
    tpu.vector_store %arg20[%c0_265, %c0_266], %606 {strides = array<i32>} : memref<8x256xbf16, #tpu.memory_space<vmem>>, vector<8x128xbf16>,
    %610 = arith.truncf %554 : vector<8x128xf32> to vector<8x128xbf16>
    %c0_267 = arith.constant 0 : index
    %c128_268 = arith.constant 128 : index
    %611 = vector.load %arg20[%c0_267, %c128_268] : memref<8x256xbf16, #tpu.memory_space<vmem>>, vector<8x128xbf16>
    tpu.vector_store %arg20[%c0_267, %c128_268], %610 {strides = array<i32>} : memref<8x256xbf16, #tpu.memory_space<vmem>>, vector<8x128xbf16>,
    %c0_269 = arith.constant 0 : index
    %c0_270 = arith.constant 0 : index
    %612 = vector.load %arg20[%c0_269, %c0_270] : memref<8x256xbf16, #tpu.memory_space<vmem>>, vector<8x256xbf16>
    %c0_271 = arith.constant 0 : index
    %c0_272 = arith.constant 0 : index
    %613 = vector.load %arg9[%c0_271, %c0_272] : memref<256x512xbf16, #tpu.memory_space<vmem>>, vector<256x512xbf16>
    %cst_273 = arith.constant dense<0.000000e+00> : vector<8x512xf32>
    %614 = tpu.matmul %612, %613, %cst_273 {dimension_numbers = #tpu.dot_dimension_numbers<[1], [0], [0], [1], [0, 0, 1, 1], [], []>} : vector<8x256xbf16>, vector<256x512xbf16>, vector<8x512xf32> -> vector<8x512xf32>
    %c0_274 = arith.constant 0 : index
    %c0_275 = arith.constant 0 : index
    %615 = vector.load %arg10[%c0_274, %c0_275] : memref<1x512xf32, #tpu.memory_space<vmem>>, vector<1x512xf32>
    %616 = vector.broadcast %615 : vector<1x512xf32> to vector<8x512xf32>
    %617 = arith.addf %614, %616 : vector<8x512xf32>
    %618 = vector.extract_strided_slice %617 {offsets = [0, 0], sizes = [8, 128], strides = [1, 1]} : vector<8x512xf32> to vector<8x128xf32>
    %619 = arith.negf %618 : vector<8x128xf32>
    %620 = math.exp %619 : vector<8x128xf32>
    %cst_276 = arith.constant 1.000000e+00 : f32
    %621 = vector.broadcast %cst_276 : f32 to vector<8x128xf32>
    %622 = arith.addf %621, %620 : vector<8x128xf32>
    %623 = arith.divf %621, %622 : vector<8x128xf32>
    %624 = vector.extract_strided_slice %617 {offsets = [0, 128], sizes = [8, 128], strides = [1, 1]} : vector<8x512xf32> to vector<8x128xf32>
    %625 = arith.negf %624 : vector<8x128xf32>
    %626 = math.exp %625 : vector<8x128xf32>
    %cst_277 = arith.constant 1.000000e+00 : f32
    %627 = vector.broadcast %cst_277 : f32 to vector<8x128xf32>
    %628 = arith.addf %627, %626 : vector<8x128xf32>
    %629 = arith.divf %627, %628 : vector<8x128xf32>
    %630 = vector.extract_strided_slice %617 {offsets = [0, 256], sizes = [8, 128], strides = [1, 1]} : vector<8x512xf32> to vector<8x128xf32>
    %631 = math.tanh %630 : vector<8x128xf32>
    %632 = vector.extract_strided_slice %617 {offsets = [0, 384], sizes = [8, 128], strides = [1, 1]} : vector<8x512xf32> to vector<8x128xf32>
    %633 = arith.negf %632 : vector<8x128xf32>
    %634 = math.exp %633 : vector<8x128xf32>
    %cst_278 = arith.constant 1.000000e+00 : f32
    %635 = vector.broadcast %cst_278 : f32 to vector<8x128xf32>
    %636 = arith.addf %635, %634 : vector<8x128xf32>
    %637 = arith.divf %635, %636 : vector<8x128xf32>
    %638 = arith.mulf %629, %558 : vector<8x128xf32>
    %639 = arith.mulf %623, %631 : vector<8x128xf32>
    %640 = arith.addf %638, %639 : vector<8x128xf32>
    %641 = math.tanh %640 : vector<8x128xf32>
    %642 = arith.mulf %637, %641 : vector<8x128xf32>
    %643 = arith.subf %642, %554 : vector<8x128xf32>
    %644 = vector.broadcast %608 : vector<8x1xf32> to vector<8x128xf32>
    %645 = arith.mulf %644, %643 : vector<8x128xf32>
    %646 = arith.addf %554, %645 : vector<8x128xf32>
    %647 = arith.subf %640, %558 : vector<8x128xf32>
    %648 = vector.broadcast %608 : vector<8x1xf32> to vector<8x128xf32>
    %649 = arith.mulf %648, %647 : vector<8x128xf32>
    %650 = arith.addf %558, %649 : vector<8x128xf32>
    %c7_279 = arith.constant 7 : index
    %c0_280 = arith.constant 0 : index
    %c0_281 = arith.constant 0 : index
    %651 = vector.load %arg2[%c7_279, %c0_280, %c0_281] : memref<8x8x128xbf16, #tpu.memory_space<vmem>>, vector<1x8x128xbf16>
    %652 = vector.shape_cast %651 : vector<1x8x128xbf16> to vector<8x128xbf16>
    %c7_282 = arith.constant 7 : index
    %c0_283 = arith.constant 0 : index
    %c0_284 = arith.constant 0 : index
    %653 = vector.load %arg4[%c7_282, %c0_283, %c0_284] : memref<8x8x1xf32, #tpu.memory_space<vmem>>, vector<1x8x1xf32>
    %654 = vector.shape_cast %653 : vector<1x8x1xf32> to vector<8x1xf32>
    %c0_285 = arith.constant 0 : index
    %c0_286 = arith.constant 0 : index
    %655 = vector.load %arg19[%c0_285, %c0_286] : memref<8x256xbf16, #tpu.memory_space<vmem>>, vector<8x128xbf16>
    tpu.vector_store %arg19[%c0_285, %c0_286], %652 {strides = array<i32>} : memref<8x256xbf16, #tpu.memory_space<vmem>>, vector<8x128xbf16>,
    %656 = arith.truncf %600 : vector<8x128xf32> to vector<8x128xbf16>
    %c0_287 = arith.constant 0 : index
    %c128_288 = arith.constant 128 : index
    %657 = vector.load %arg19[%c0_287, %c128_288] : memref<8x256xbf16, #tpu.memory_space<vmem>>, vector<8x128xbf16>
    tpu.vector_store %arg19[%c0_287, %c128_288], %656 {strides = array<i32>} : memref<8x256xbf16, #tpu.memory_space<vmem>>, vector<8x128xbf16>,
    %c0_289 = arith.constant 0 : index
    %c0_290 = arith.constant 0 : index
    %658 = vector.load %arg19[%c0_289, %c0_290] : memref<8x256xbf16, #tpu.memory_space<vmem>>, vector<8x256xbf16>
    %c0_291 = arith.constant 0 : index
    %c0_292 = arith.constant 0 : index
    %659 = vector.load %arg7[%c0_291, %c0_292] : memref<256x512xbf16, #tpu.memory_space<vmem>>, vector<256x512xbf16>
    %cst_293 = arith.constant dense<0.000000e+00> : vector<8x512xf32>
    %660 = tpu.matmul %658, %659, %cst_293 {dimension_numbers = #tpu.dot_dimension_numbers<[1], [0], [0], [1], [0, 0, 1, 1], [], []>} : vector<8x256xbf16>, vector<256x512xbf16>, vector<8x512xf32> -> vector<8x512xf32>
    %c0_294 = arith.constant 0 : index
    %c0_295 = arith.constant 0 : index
    %661 = vector.load %arg8[%c0_294, %c0_295] : memref<1x512xf32, #tpu.memory_space<vmem>>, vector<1x512xf32>
    %662 = vector.broadcast %661 : vector<1x512xf32> to vector<8x512xf32>
    %663 = arith.addf %660, %662 : vector<8x512xf32>
    %664 = vector.extract_strided_slice %663 {offsets = [0, 0], sizes = [8, 128], strides = [1, 1]} : vector<8x512xf32> to vector<8x128xf32>
    %665 = arith.negf %664 : vector<8x128xf32>
    %666 = math.exp %665 : vector<8x128xf32>
    %cst_296 = arith.constant 1.000000e+00 : f32
    %667 = vector.broadcast %cst_296 : f32 to vector<8x128xf32>
    %668 = arith.addf %667, %666 : vector<8x128xf32>
    %669 = arith.divf %667, %668 : vector<8x128xf32>
    %670 = vector.extract_strided_slice %663 {offsets = [0, 128], sizes = [8, 128], strides = [1, 1]} : vector<8x512xf32> to vector<8x128xf32>
    %671 = arith.negf %670 : vector<8x128xf32>
    %672 = math.exp %671 : vector<8x128xf32>
    %cst_297 = arith.constant 1.000000e+00 : f32
    %673 = vector.broadcast %cst_297 : f32 to vector<8x128xf32>
    %674 = arith.addf %673, %672 : vector<8x128xf32>
    %675 = arith.divf %673, %674 : vector<8x128xf32>
    %676 = vector.extract_strided_slice %663 {offsets = [0, 256], sizes = [8, 128], strides = [1, 1]} : vector<8x512xf32> to vector<8x128xf32>
    %677 = math.tanh %676 : vector<8x128xf32>
    %678 = vector.extract_strided_slice %663 {offsets = [0, 384], sizes = [8, 128], strides = [1, 1]} : vector<8x512xf32> to vector<8x128xf32>
    %679 = arith.negf %678 : vector<8x128xf32>
    %680 = math.exp %679 : vector<8x128xf32>
    %cst_298 = arith.constant 1.000000e+00 : f32
    %681 = vector.broadcast %cst_298 : f32 to vector<8x128xf32>
    %682 = arith.addf %681, %680 : vector<8x128xf32>
    %683 = arith.divf %681, %682 : vector<8x128xf32>
    %684 = arith.mulf %675, %604 : vector<8x128xf32>
    %685 = arith.mulf %669, %677 : vector<8x128xf32>
    %686 = arith.addf %684, %685 : vector<8x128xf32>
    %687 = math.tanh %686 : vector<8x128xf32>
    %688 = arith.mulf %683, %687 : vector<8x128xf32>
    %689 = arith.subf %688, %600 : vector<8x128xf32>
    %690 = vector.broadcast %654 : vector<8x1xf32> to vector<8x128xf32>
    %691 = arith.mulf %690, %689 : vector<8x128xf32>
    %692 = arith.addf %600, %691 : vector<8x128xf32>
    %693 = arith.subf %686, %604 : vector<8x128xf32>
    %694 = vector.broadcast %654 : vector<8x1xf32> to vector<8x128xf32>
    %695 = arith.mulf %694, %693 : vector<8x128xf32>
    %696 = arith.addf %604, %695 : vector<8x128xf32>
    %c0_299 = arith.constant 0 : index
    %c0_300 = arith.constant 0 : index
    %c0_301 = arith.constant 0 : index
    %697 = vector.load %arg3[%c0_299, %c0_300, %c0_301] : memref<8x8x128xbf16, #tpu.memory_space<vmem>>, vector<1x8x128xbf16>
    %698 = vector.shape_cast %697 : vector<1x8x128xbf16> to vector<8x128xbf16>
    %c0_302 = arith.constant 0 : index
    %c0_303 = arith.constant 0 : index
    %c0_304 = arith.constant 0 : index
    %699 = vector.load %arg5[%c0_302, %c0_303, %c0_304] : memref<8x8x1xf32, #tpu.memory_space<vmem>>, vector<1x8x1xf32>
    %700 = vector.shape_cast %699 : vector<1x8x1xf32> to vector<8x1xf32>
    %c0_305 = arith.constant 0 : index
    %c0_306 = arith.constant 0 : index
    %701 = vector.load %arg20[%c0_305, %c0_306] : memref<8x256xbf16, #tpu.memory_space<vmem>>, vector<8x128xbf16>
    tpu.vector_store %arg20[%c0_305, %c0_306], %698 {strides = array<i32>} : memref<8x256xbf16, #tpu.memory_space<vmem>>, vector<8x128xbf16>,
    %702 = arith.truncf %646 : vector<8x128xf32> to vector<8x128xbf16>
    %c0_307 = arith.constant 0 : index
    %c128_308 = arith.constant 128 : index
    %703 = vector.load %arg20[%c0_307, %c128_308] : memref<8x256xbf16, #tpu.memory_space<vmem>>, vector<8x128xbf16>
    tpu.vector_store %arg20[%c0_307, %c128_308], %702 {strides = array<i32>} : memref<8x256xbf16, #tpu.memory_space<vmem>>, vector<8x128xbf16>,
    %c0_309 = arith.constant 0 : index
    %c0_310 = arith.constant 0 : index
    %704 = vector.load %arg20[%c0_309, %c0_310] : memref<8x256xbf16, #tpu.memory_space<vmem>>, vector<8x256xbf16>
    %c0_311 = arith.constant 0 : index
    %c0_312 = arith.constant 0 : index
    %705 = vector.load %arg9[%c0_311, %c0_312] : memref<256x512xbf16, #tpu.memory_space<vmem>>, vector<256x512xbf16>
    %cst_313 = arith.constant dense<0.000000e+00> : vector<8x512xf32>
    %706 = tpu.matmul %704, %705, %cst_313 {dimension_numbers = #tpu.dot_dimension_numbers<[1], [0], [0], [1], [0, 0, 1, 1], [], []>} : vector<8x256xbf16>, vector<256x512xbf16>, vector<8x512xf32> -> vector<8x512xf32>
    %c0_314 = arith.constant 0 : index
    %c0_315 = arith.constant 0 : index
    %707 = vector.load %arg10[%c0_314, %c0_315] : memref<1x512xf32, #tpu.memory_space<vmem>>, vector<1x512xf32>
    %708 = vector.broadcast %707 : vector<1x512xf32> to vector<8x512xf32>
    %709 = arith.addf %706, %708 : vector<8x512xf32>
    %710 = vector.extract_strided_slice %709 {offsets = [0, 0], sizes = [8, 128], strides = [1, 1]} : vector<8x512xf32> to vector<8x128xf32>
    %711 = arith.negf %710 : vector<8x128xf32>
    %712 = math.exp %711 : vector<8x128xf32>
    %cst_316 = arith.constant 1.000000e+00 : f32
    %713 = vector.broadcast %cst_316 : f32 to vector<8x128xf32>
    %714 = arith.addf %713, %712 : vector<8x128xf32>
    %715 = arith.divf %713, %714 : vector<8x128xf32>
    %716 = vector.extract_strided_slice %709 {offsets = [0, 128], sizes = [8, 128], strides = [1, 1]} : vector<8x512xf32> to vector<8x128xf32>
    %717 = arith.negf %716 : vector<8x128xf32>
    %718 = math.exp %717 : vector<8x128xf32>
    %cst_317 = arith.constant 1.000000e+00 : f32
    %719 = vector.broadcast %cst_317 : f32 to vector<8x128xf32>
    %720 = arith.addf %719, %718 : vector<8x128xf32>
    %721 = arith.divf %719, %720 : vector<8x128xf32>
    %722 = vector.extract_strided_slice %709 {offsets = [0, 256], sizes = [8, 128], strides = [1, 1]} : vector<8x512xf32> to vector<8x128xf32>
    %723 = math.tanh %722 : vector<8x128xf32>
    %724 = vector.extract_strided_slice %709 {offsets = [0, 384], sizes = [8, 128], strides = [1, 1]} : vector<8x512xf32> to vector<8x128xf32>
    %725 = arith.negf %724 : vector<8x128xf32>
    %726 = math.exp %725 : vector<8x128xf32>
    %cst_318 = arith.constant 1.000000e+00 : f32
    %727 = vector.broadcast %cst_318 : f32 to vector<8x128xf32>
    %728 = arith.addf %727, %726 : vector<8x128xf32>
    %729 = arith.divf %727, %728 : vector<8x128xf32>
    %730 = arith.mulf %721, %650 : vector<8x128xf32>
    %731 = arith.mulf %715, %723 : vector<8x128xf32>
    %732 = arith.addf %730, %731 : vector<8x128xf32>
    %733 = math.tanh %732 : vector<8x128xf32>
    %734 = arith.mulf %729, %733 : vector<8x128xf32>
    %735 = arith.subf %734, %646 : vector<8x128xf32>
    %736 = vector.broadcast %700 : vector<8x1xf32> to vector<8x128xf32>
    %737 = arith.mulf %736, %735 : vector<8x128xf32>
    %738 = arith.addf %646, %737 : vector<8x128xf32>
    %739 = arith.subf %732, %650 : vector<8x128xf32>
    %740 = vector.broadcast %700 : vector<8x1xf32> to vector<8x128xf32>
    %741 = arith.mulf %740, %739 : vector<8x128xf32>
    %742 = arith.addf %650, %741 : vector<8x128xf32>
    %c0_319 = arith.constant 0 : index
    %c0_320 = arith.constant 0 : index
    %743 = vector.load %arg15[%c0_319, %c0_320] : memref<8x128xf32, #tpu.memory_space<vmem>>, vector<8x128xf32>
    tpu.vector_store %arg15[%c0_319, %c0_320], %692 {strides = array<i32>} : memref<8x128xf32, #tpu.memory_space<vmem>>, vector<8x128xf32>,
    %c0_321 = arith.constant 0 : index
    %c0_322 = arith.constant 0 : index
    %744 = vector.load %arg16[%c0_321, %c0_322] : memref<8x128xf32, #tpu.memory_space<vmem>>, vector<8x128xf32>
    tpu.vector_store %arg16[%c0_321, %c0_322], %696 {strides = array<i32>} : memref<8x128xf32, #tpu.memory_space<vmem>>, vector<8x128xf32>,
    %c0_323 = arith.constant 0 : index
    %c0_324 = arith.constant 0 : index
    %745 = vector.load %arg17[%c0_323, %c0_324] : memref<8x128xf32, #tpu.memory_space<vmem>>, vector<8x128xf32>
    tpu.vector_store %arg17[%c0_323, %c0_324], %738 {strides = array<i32>} : memref<8x128xf32, #tpu.memory_space<vmem>>, vector<8x128xf32>,
    %c0_325 = arith.constant 0 : index
    %c0_326 = arith.constant 0 : index
    %746 = vector.load %arg18[%c0_325, %c0_326] : memref<8x128xf32, #tpu.memory_space<vmem>>, vector<8x128xf32>
    tpu.vector_store %arg18[%c0_325, %c0_326], %742 {strides = array<i32>} : memref<8x128xf32, #tpu.memory_space<vmem>>, vector<8x128xf32>,
    %c1_i32 = arith.constant 1 : i32
    %747 = arith.cmpi eq, %arg1, %c1_i32 : i32
    %748 = arith.extui %747 : i1 to i32
    %c0_i32_327 = arith.constant 0 : i32
    %749 = arith.cmpi ne, %748, %c0_i32_327 : i32
    scf.if %749 {
      %c0_328 = arith.constant 0 : index
      %c0_329 = arith.constant 0 : index
      %750 = vector.load %arg6[%c0_328, %c0_329] : memref<8x1xf32, #tpu.memory_space<vmem>>, vector<8x1xf32>
      %751 = vector.broadcast %750 : vector<8x1xf32> to vector<8x128xf32>
      %752 = arith.mulf %692, %751 : vector<8x128xf32>
      %753 = arith.truncf %752 : vector<8x128xf32> to vector<8x128xbf16>
      %c0_330 = arith.constant 0 : index
      %c0_331 = arith.constant 0 : index
      %754 = vector.load %arg11[%c0_330, %c0_331] : memref<128x4xbf16, #tpu.memory_space<vmem>>, vector<128x4xbf16>
      %cst_332 = arith.constant dense<0.000000e+00> : vector<8x4xf32>
      %755 = tpu.matmul %753, %754, %cst_332 {dimension_numbers = #tpu.dot_dimension_numbers<[1], [0], [0], [1], [0, 0, 1, 1], [], []>} : vector<8x128xbf16>, vector<128x4xbf16>, vector<8x4xf32> -> vector<8x4xf32>
      %756 = arith.truncf %738 : vector<8x128xf32> to vector<8x128xbf16>
      %c0_333 = arith.constant 0 : index
      %c0_334 = arith.constant 0 : index
      %757 = vector.load %arg12[%c0_333, %c0_334] : memref<128x4xbf16, #tpu.memory_space<vmem>>, vector<128x4xbf16>
      %cst_335 = arith.constant dense<0.000000e+00> : vector<8x4xf32>
      %758 = tpu.matmul %756, %757, %cst_335 {dimension_numbers = #tpu.dot_dimension_numbers<[1], [0], [0], [1], [0, 0, 1, 1], [], []>} : vector<8x128xbf16>, vector<128x4xbf16>, vector<8x4xf32> -> vector<8x4xf32>
      %759 = arith.addf %755, %758 : vector<8x4xf32>
      %c0_336 = arith.constant 0 : index
      %c0_337 = arith.constant 0 : index
      %760 = vector.load %arg13[%c0_336, %c0_337] : memref<1x4xf32, #tpu.memory_space<vmem>>, vector<1x4xf32>
      %761 = vector.broadcast %760 : vector<1x4xf32> to vector<8x4xf32>
      %762 = arith.addf %759, %761 : vector<8x4xf32>
      %c0_338 = arith.constant 0 : index
      %c0_339 = arith.constant 0 : index
      %763 = vector.load %arg14[%c0_338, %c0_339] : memref<8x4xf32, #tpu.memory_space<vmem>>, vector<8x4xf32>
      tpu.vector_store %arg14[%c0_338, %c0_339], %762 {strides = array<i32>} : memref<8x4xf32, #tpu.memory_space<vmem>>, vector<8x4xf32>,
    } else {
    }
    return
  }
  func.func @transform_0(%arg0: i32, %arg1: i32) -> (i32, i32, i32) {
    %c0_i32 = arith.constant 0 : i32
    %c0_i32_0 = arith.constant 0 : i32
    return %arg1, %arg0, %c0_i32 : i32, i32, i32
  }
  func.func @transform_1(%arg0: i32, %arg1: i32) -> (i32, i32, i32) {
    %c1_i32 = arith.constant 1 : i32
    %0 = arith.subi %c1_i32, %arg1 : i32
    %c0_i32 = arith.constant 0 : i32
    %c0_i32_0 = arith.constant 0 : i32
    return %0, %arg0, %c0_i32 : i32, i32, i32
  }
  func.func @transform_2(%arg0: i32, %arg1: i32) -> (i32, i32, i32) {
    %c0_i32 = arith.constant 0 : i32
    %c0_i32_0 = arith.constant 0 : i32
    return %arg1, %arg0, %c0_i32 : i32, i32, i32
  }
  func.func @transform_3(%arg0: i32, %arg1: i32) -> (i32, i32, i32) {
    %c1_i32 = arith.constant 1 : i32
    %0 = arith.subi %c1_i32, %arg1 : i32
    %c0_i32 = arith.constant 0 : i32
    %c0_i32_0 = arith.constant 0 : i32
    return %0, %arg0, %c0_i32 : i32, i32, i32
  }
  func.func @transform_4(%arg0: i32, %arg1: i32) -> (i32, i32) {
    %c0_i32 = arith.constant 0 : i32
    %c0_i32_0 = arith.constant 0 : i32
    return %arg0, %c0_i32 : i32, i32
  }
  func.func @transform_5(%arg0: i32, %arg1: i32) -> (i32, i32) {
    %c0_i32 = arith.constant 0 : i32
    %c0_i32_0 = arith.constant 0 : i32
    %c0_i32_1 = arith.constant 0 : i32
    return %c0_i32, %c0_i32_0 : i32, i32
  }
  func.func @transform_6(%arg0: i32, %arg1: i32) -> (i32, i32) {
    %c0_i32 = arith.constant 0 : i32
    %c0_i32_0 = arith.constant 0 : i32
    %c0_i32_1 = arith.constant 0 : i32
    return %c0_i32, %c0_i32_0 : i32, i32
  }
  func.func @transform_7(%arg0: i32, %arg1: i32) -> (i32, i32) {
    %c0_i32 = arith.constant 0 : i32
    %c0_i32_0 = arith.constant 0 : i32
    %c0_i32_1 = arith.constant 0 : i32
    return %c0_i32, %c0_i32_0 : i32, i32
  }
  func.func @transform_8(%arg0: i32, %arg1: i32) -> (i32, i32) {
    %c0_i32 = arith.constant 0 : i32
    %c0_i32_0 = arith.constant 0 : i32
    %c0_i32_1 = arith.constant 0 : i32
    return %c0_i32, %c0_i32_0 : i32, i32
  }
  func.func @transform_9(%arg0: i32, %arg1: i32) -> (i32, i32) {
    %c0_i32 = arith.constant 0 : i32
    %c0_i32_0 = arith.constant 0 : i32
    %c0_i32_1 = arith.constant 0 : i32
    return %c0_i32, %c0_i32_0 : i32, i32
  }
  func.func @transform_10(%arg0: i32, %arg1: i32) -> (i32, i32) {
    %c0_i32 = arith.constant 0 : i32
    %c0_i32_0 = arith.constant 0 : i32
    %c0_i32_1 = arith.constant 0 : i32
    return %c0_i32, %c0_i32_0 : i32, i32
  }
  func.func @transform_11(%arg0: i32, %arg1: i32) -> (i32, i32) {
    %c0_i32 = arith.constant 0 : i32
    %c0_i32_0 = arith.constant 0 : i32
    %c0_i32_1 = arith.constant 0 : i32
    return %c0_i32, %c0_i32_0 : i32, i32
  }
  func.func @transform_12(%arg0: i32, %arg1: i32) -> (i32, i32) {
    %c0_i32 = arith.constant 0 : i32
    %c0_i32_0 = arith.constant 0 : i32
    return %arg0, %c0_i32 : i32, i32
  }
}

</mosaic_0001>

<llo_original>
// kernel: tpu_custom_call.1
$region0: #{tpu_custom_call.1}
  #allocation0 [shape = 'u32[]', space=smem, size = 0x4, offset = 0x4, fixed_abs, tag = 'smem constant byte address 0x4 - core index']
  #allocation1 [shape = 'u32[144,128]{1,0:T(1,128)}', space=vmem, size = 0x12000, scoped, tag = 'internal scratch']
  #allocation2 [shape = 'f32[8,128]{1,0:T(8,128)}', space=vmem, size = 0x1000, scoped, tag = 'scratch operand']
  #allocation3 [shape = 'f32[8,128]{1,0:T(8,128)}', space=vmem, size = 0x1000, scoped, tag = 'scratch operand']
  #allocation4 [shape = 'f32[8,128]{1,0:T(8,128)}', space=vmem, size = 0x1000, scoped, tag = 'scratch operand']
  #allocation5 [shape = 'f32[8,128]{1,0:T(8,128)}', space=vmem, size = 0x1000, scoped, tag = 'scratch operand']
  #allocation6 [shape = 'bf16[8,256]{1,0:T(8,128)(2,1)}', space=vmem, size = 0x1000, scoped, tag = 'scratch operand']
  #allocation7 [shape = 'bf16[8,256]{1,0:T(8,128)(2,1)}', space=vmem, size = 0x1000, scoped, tag = 'scratch operand']
  %s0 = inlined_call_operand.vmem [shape: bf16[16,8,128], index: 0, kind: input, shape index: {}]
  %s1 = inlined_call_operand.vmem [shape: bf16[16,8,128], index: 1, kind: input, shape index: {}]
  %s2 = inlined_call_operand.vmem [shape: f32[16,8,1], index: 2, kind: input, shape index: {}]
  %s3 = inlined_call_operand.vmem [shape: f32[16,8,1], index: 3, kind: input, shape index: {}]
  %s4 = inlined_call_operand.vmem [shape: f32[8,1], index: 4, kind: input, shape index: {}]
  %s5 = inlined_call_operand.hbm [shape: bf16[256,512], index: 5, kind: input, shape index: {}]
  %s6 = inlined_call_operand.vmem [shape: f32[1,512], index: 6, kind: input, shape index: {}]
  %s7 = inlined_call_operand.hbm [shape: bf16[256,512], index: 7, kind: input, shape index: {}]
  %s8 = inlined_call_operand.vmem [shape: f32[1,512], index: 8, kind: input, shape index: {}]
  %s9 = inlined_call_operand.vmem [shape: bf16[128,4], index: 9, kind: input, shape index: {}]
  %s10 = inlined_call_operand.vmem [shape: bf16[128,4], index: 10, kind: input, shape index: {}]
  %s11 = inlined_call_operand.vmem [shape: f32[1,4], index: 11, kind: input, shape index: {}]
  %s12 = inlined_call_operand.vmem [shape: f32[8,4], index: 12, kind: output, shape index: {}]
  %s13 = sld [smem:[#allocation0]]
  $region97: #{tpu_custom_call.1} parent=0
    _
  %s15 = ssub.s32 1, %s13
  %s16 = scalar_select 0, %s15, %s13
  $region1: #{tpu_custom_call.1} parent=0
    #allocation8 [shape = 'u8[262144]{0}', space=vmem, size = 0x40000, scoped, tag = 'input window, operand 5, single buffered']
    #allocation9 [shape = 's32[2]{0}', space=sflag, size = 0x8, scoped, tag = 'scoped memory for tpu_custom_call.1']
    #allocation10 [shape = 'u8[262144]{0}', space=vmem, size = 0x40000, scoped, tag = 'input window, operand 7, single buffered']
    #allocation11 [shape = 's32[1]{0}', space=sflag, size = 0x4, scoped, tag = 'scoped memory for tpu_custom_call.1']
    %17 = vsyncpa [#allocation9], 0
    %18 = vsyncpa [#allocation11], 0
    loop: start=0, step=1, limit=4
    $region2: #{tpu_custom_call.1} parent=1 // loop_pre_header
      _
    $region3: #{tpu_custom_call.1} parent=1 // loop_header
      %s20 = sphi 0, %s24
      %p21 = scmp.ge.s32.totalorder %s20, 4
      %s27 = sphi 0, %s39
      %s28 = sphi 0, %s35
      %s29 = sphi 0, %s27
      %s30 = sphi 0, %s28
      %s31 = sphi 0, %s29
      %s32 = sphi 0, %s30
      %s44 = sphi 0, %s46
      %s47 = sphi 0, %s44
      %s48 = sphi 0, %s47
      %s64 = sphi 0, %s48
      %s74 = sphi 0, %s76
      %s77 = sphi 0, %s74
      %s78 = sphi 0, %s77
      %s94 = sphi 0, %s78
      %s102 = sphi 0, %s104
      %s105 = sphi 0, %s102
      %s106 = sphi 0, %s105
      %s122 = sphi 0, %s106
      %s132 = sphi 0, %s134
      %s135 = sphi 0, %s132
      %s136 = sphi 0, %s135
      %s152 = sphi 0, %s136
      %s158 = sphi 0, %s160
      %s161 = sphi 0, %s158
      %s162 = sphi 0, %s161
      %s178 = sphi 0, %s162
      %s182 = sphi 0, %s182
      %s184 = sphi 0, %s182
      %s185 = sphi 0, %s184
      %s199 = sphi 0, %s185
      %s203 = sphi 0, %s203
      %s205 = sphi 0, %s203
      %s206 = sphi 0, %s205
      %s220 = sphi 0, %s206
      %s224 = sphi 0, %s224
      %s226 = sphi 0, %s224
      %s227 = sphi 0, %s226
      %s241 = sphi 0, %s227
      %s245 = sphi 0, %s245
      %s247 = sphi 0, %s245
      %s248 = sphi 0, %s247
      %s262 = sphi 0, %s248
      %s266 = sphi 0, %s266
      %s268 = sphi 0, %s266
      %s269 = sphi 0, %s268
      %s283 = sphi 0, %s269
      %s287 = sphi 0, %s287
      %s289 = sphi 0, %s287
      %s290 = sphi 0, %s289
      %s304 = sphi 0, %s290
      %s308 = sphi 0, %s308
      %s310 = sphi 0, %s308
      %s311 = sphi 0, %s310
      %s325 = sphi 0, %s311
      %s331 = sphi 0, %s333
      %s334 = sphi 0, %s331
      %s335 = sphi 0, %s334
      %s351 = sphi 0, %s335
    $region4: #{tpu_custom_call.1} parent=1 // loop_header_branch
      %23 = sbr.rel (%p21) target = $region8
    $region5: #{tpu_custom_call.1} parent=1 // loop_body
      %s25 = ssub.s32 %s20, 1
      %s26 = ssub.s32 %s20, 2
      %s33 = sadd.s32 1, %s28
      %p34 = scmp.ge.s32.totalorder %s33, 2
      %s35 = scalar_select %p34, 0, %s33
      %s36 = sadd.s32 1, %s27
      %s37 = scalar_select %p34, %s36, %s27
      %p38 = scmp.ge.s32.totalorder %s37, 1
      %s39 = scalar_select %p38, 0, %s37
      %s40 = ssub.s32 %s28, %s35
      %s41 = ssub.s32 %s27, %s39
      %s42 = sor.u32 %s40, %s41
      %p43 = scmp.eq.s32.totalorder %s42, 0
      %s45 = sadd.s32 %s44, 1
      %s46 = scalar_select %p43, %s44, %s45
      %p49 = pneg %p43
      %p50 = scmp.eq.s32.totalorder %s20, 1
      %p51 = por %p49, %p50
      %p52 = scmp.ne.s32.totalorder %s44, %s47
      %p53 = scmp.eq.s32.totalorder %s20, 0
      %p54 = por %p52, %p53
      %p55 = scmp.ne.s32.totalorder %s44, %s47
      %p56 = scmp.eq.s32.totalorder %s25, 1
      %p57 = por %p55, %p56
      %p58 = scmp.ne.s32.totalorder %s47, %s48
      %p59 = scmp.eq.s32.totalorder %s25, 0
      %p60 = por %p58, %p59
      %p61 = scmp.ne.s32.totalorder %s47, %s48
      %p62 = scmp.eq.s32.totalorder %s26, 1
      %p63 = por %p61, %p62
      %p65 = scmp.ne.s32.totalorder %s48, %s64
      %p66 = scmp.eq.s32.totalorder %s26, 0
      %p67 = por %p65, %p66
      %s68 = ssub.s32 1, %s28
      %s69 = ssub.s32 1, %s35
      %s70 = ssub.s32 %s68, %s69
      %s71 = ssub.s32 %s27, %s39
      %s72 = sor.u32 %s70, %s71
      %p73 = scmp.eq.s32.totalorder %s72, 0
      %s75 = sadd.s32 %s74, 1
      %s76 = scalar_select %p73, %s74, %s75
      %p79 = pneg %p73
      %p80 = scmp.eq.s32.totalorder %s20, 1
      %p81 = por %p79, %p80
      %p82 = scmp.ne.s32.totalorder %s74, %s77
      %p83 = scmp.eq.s32.totalorder %s20, 0
      %p84 = por %p82, %p83
      %p85 = scmp.ne.s32.totalorder %s74, %s77
      %p86 = scmp.eq.s32.totalorder %s25, 1
      %p87 = por %p85, %p86
      %p88 = scmp.ne.s32.totalorder %s77, %s78
      %p89 = scmp.eq.s32.totalorder %s25, 0
      %p90 = por %p88, %p89
      %p91 = scmp.ne.s32.totalorder %s77, %s78
      %p92 = scmp.eq.s32.totalorder %s26, 1
      %p93 = por %p91, %p92
      %p95 = scmp.ne.s32.totalorder %s78, %s94
      %p96 = scmp.eq.s32.totalorder %s26, 0
      %p97 = por %p95, %p96
      %s98 = ssub.s32 %s28, %s35
      %s99 = ssub.s32 %s27, %s39
      %s100 = sor.u32 %s98, %s99
      %p101 = scmp.eq.s32.totalorder %s100, 0
      %s103 = sadd.s32 %s102, 1
      %s104 = scalar_select %p101, %s102, %s103
      %p107 = pneg %p101
      %p108 = scmp.eq.s32.totalorder %s20, 1
      %p109 = por %p107, %p108
      %p110 = scmp.ne.s32.totalorder %s102, %s105
      %p111 = scmp.eq.s32.totalorder %s20, 0
      %p112 = por %p110, %p111
      %p113 = scmp.ne.s32.totalorder %s102, %s105
      %p114 = scmp.eq.s32.totalorder %s25, 1
      %p115 = por %p113, %p114
      %p116 = scmp.ne.s32.totalorder %s105, %s106
      %p117 = scmp.eq.s32.totalorder %s25, 0
      %p118 = por %p116, %p117
      %p119 = scmp.ne.s32.totalorder %s105, %s106
      %p120 = scmp.eq.s32.totalorder %s26, 1
      %p121 = por %p119, %p120
      %p123 = scmp.ne.s32.totalorder %s106, %s122
      %p124 = scmp.eq.s32.totalorder %s26, 0
      %p125 = por %p123, %p124
      %s126 = ssub.s32 1, %s28
      %s127 = ssub.s32 1, %s35
      %s128 = ssub.s32 %s126, %s127
      %s129 = ssub.s32 %s27, %s39
      %s130 = sor.u32 %s128, %s129
      %p131 = scmp.eq.s32.totalorder %s130, 0
      %s133 = sadd.s32 %s132, 1
      %s134 = scalar_select %p131, %s132, %s133
      %p137 = pneg %p131
      %p138 = scmp.eq.s32.totalorder %s20, 1
      %p139 = por %p137, %p138
      %p140 = scmp.ne.s32.totalorder %s132, %s135
      %p141 = scmp.eq.s32.totalorder %s20, 0
      %p142 = por %p140, %p141
      %p143 = scmp.ne.s32.totalorder %s132, %s135
      %p144 = scmp.eq.s32.totalorder %s25, 1
      %p145 = por %p143, %p144
      %p146 = scmp.ne.s32.totalorder %s135, %s136
      %p147 = scmp.eq.s32.totalorder %s25, 0
      %p148 = por %p146, %p147
      %p149 = scmp.ne.s32.totalorder %s135, %s136
      %p150 = scmp.eq.s32.totalorder %s26, 1
      %p151 = por %p149, %p150
      %p153 = scmp.ne.s32.totalorder %s136, %s152
      %p154 = scmp.eq.s32.totalorder %s26, 0
      %p155 = por %p153, %p154
      %s156 = ssub.s32 %s27, %s39
      %p157 = scmp.eq.s32.totalorder %s156, 0
      %s159 = sadd.s32 %s158, 1
      %s160 = scalar_select %p157, %s158, %s159
      %p163 = pneg %p157
      %p164 = scmp.eq.s32.totalorder %s20, 1
      %p165 = por %p163, %p164
      %p166 = scmp.ne.s32.totalorder %s158, %s161
      %p167 = scmp.eq.s32.totalorder %s20, 0
      %p168 = por %p166, %p167
      %p169 = scmp.ne.s32.totalorder %s158, %s161
      %p170 = scmp.eq.s32.totalorder %s25, 1
      %p171 = por %p169, %p170
      %p172 = scmp.ne.s32.totalorder %s161, %s162
      %p173 = scmp.eq.s32.totalorder %s25, 0
      %p174 = por %p172, %p173
      %p175 = scmp.ne.s32.totalorder %s161, %s162
      %p176 = scmp.eq.s32.totalorder %s26, 1
      %p177 = por %p175, %p176
      %p179 = scmp.ne.s32.totalorder %s162, %s178
      %p180 = scmp.eq.s32.totalorder %s26, 0
      %p181 = por %p179, %p180
      %s183 = sadd.s32 %s182, 1
      %p186 = scmp.eq.s32.totalorder %s20, 1
      %p187 = scmp.ne.s32.totalorder %s182, %s184
      %p188 = scmp.eq.s32.totalorder %s20, 0
      %p189 = por %p187, %p188
      %p190 = scmp.ne.s32.totalorder %s182, %s184
      %p191 = scmp.eq.s32.totalorder %s25, 1
      %p192 = por %p190, %p191
      %p193 = scmp.ne.s32.totalorder %s184, %s185
      %p194 = scmp.eq.s32.totalorder %s25, 0
      %p195 = por %p193, %p194
      %p196 = scmp.ne.s32.totalorder %s184, %s185
      %p197 = scmp.eq.s32.totalorder %s26, 1
      %p198 = por %p196, %p197
      %p200 = scmp.ne.s32.totalorder %s185, %s199
      %p201 = scmp.eq.s32.totalorder %s26, 0
      %p202 = por %p200, %p201
      %s204 = sadd.s32 %s203, 1
      %p207 = scmp.eq.s32.totalorder %s20, 1
      %p208 = scmp.ne.s32.totalorder %s203, %s205
      %p209 = scmp.eq.s32.totalorder %s20, 0
      %p210 = por %p208, %p209
      %p211 = scmp.ne.s32.totalorder %s203, %s205
      %p212 = scmp.eq.s32.totalorder %s25, 1
      %p213 = por %p211, %p212
      %p214 = scmp.ne.s32.totalorder %s205, %s206
      %p215 = scmp.eq.s32.totalorder %s25, 0
      %p216 = por %p214, %p215
      %p217 = scmp.ne.s32.totalorder %s205, %s206
      %p218 = scmp.eq.s32.totalorder %s26, 1
      %p219 = por %p217, %p218
      %p221 = scmp.ne.s32.totalorder %s206, %s220
      %p222 = scmp.eq.s32.totalorder %s26, 0
      %p223 = por %p221, %p222
      %s225 = sadd.s32 %s224, 1
      %p228 = scmp.eq.s32.totalorder %s20, 1
      %p229 = scmp.ne.s32.totalorder %s224, %s226
      %p230 = scmp.eq.s32.totalorder %s20, 0
      %p231 = por %p229, %p230
      %p232 = scmp.ne.s32.totalorder %s224, %s226
      %p233 = scmp.eq.s32.totalorder %s25, 1
      %p234 = por %p232, %p233
      %p235 = scmp.ne.s32.totalorder %s226, %s227
      %p236 = scmp.eq.s32.totalorder %s25, 0
      %p237 = por %p235, %p236
      %p238 = scmp.ne.s32.totalorder %s226, %s227
      %p239 = scmp.eq.s32.totalorder %s26, 1
      %p240 = por %p238, %p239
      %p242 = scmp.ne.s32.totalorder %s227, %s241
      %p243 = scmp.eq.s32.totalorder %s26, 0
      %p244 = por %p242, %p243
      %s246 = sadd.s32 %s245, 1
      %p249 = scmp.eq.s32.totalorder %s20, 1
      %p250 = scmp.ne.s32.totalorder %s245, %s247
      %p251 = scmp.eq.s32.totalorder %s20, 0
      %p252 = por %p250, %p251
      %p253 = scmp.ne.s32.totalorder %s245, %s247
      %p254 = scmp.eq.s32.totalorder %s25, 1
      %p255 = por %p253, %p254
      %p256 = scmp.ne.s32.totalorder %s247, %s248
      %p257 = scmp.eq.s32.totalorder %s25, 0
      %p258 = por %p256, %p257
      %p259 = scmp.ne.s32.totalorder %s247, %s248
      %p260 = scmp.eq.s32.totalorder %s26, 1
      %p261 = por %p259, %p260
      %p263 = scmp.ne.s32.totalorder %s248, %s262
      %p264 = scmp.eq.s32.totalorder %s26, 0
      %p265 = por %p263, %p264
      %s267 = sadd.s32 %s266, 1
      %p270 = scmp.eq.s32.totalorder %s20, 1
      %p271 = scmp.ne.s32.totalorder %s266, %s268
      %p272 = scmp.eq.s32.totalorder %s20, 0
      %p273 = por %p271, %p272
      %p274 = scmp.ne.s32.totalorder %s266, %s268
      %p275 = scmp.eq.s32.totalorder %s25, 1
      %p276 = por %p274, %p275
      %p277 = scmp.ne.s32.totalorder %s268, %s269
      %p278 = scmp.eq.s32.totalorder %s25, 0
      %p279 = por %p277, %p278
      %p280 = scmp.ne.s32.totalorder %s268, %s269
      %p281 = scmp.eq.s32.totalorder %s26, 1
      %p282 = por %p280, %p281
      %p284 = scmp.ne.s32.totalorder %s269, %s283
      %p285 = scmp.eq.s32.totalorder %s26, 0
      %p286 = por %p284, %p285
      %s288 = sadd.s32 %s287, 1
      %p291 = scmp.eq.s32.totalorder %s20, 1
      %p292 = scmp.ne.s32.totalorder %s287, %s289
      %p293 = scmp.eq.s32.totalorder %s20, 0
      %p294 = por %p292, %p293
      %p295 = scmp.ne.s32.totalorder %s287, %s289
      %p296 = scmp.eq.s32.totalorder %s25, 1
      %p297 = por %p295, %p296
      %p298 = scmp.ne.s32.totalorder %s289, %s290
      %p299 = scmp.eq.s32.totalorder %s25, 0
      %p300 = por %p298, %p299
      %p301 = scmp.ne.s32.totalorder %s289, %s290
      %p302 = scmp.eq.s32.totalorder %s26, 1
      %p303 = por %p301, %p302
      %p305 = scmp.ne.s32.totalorder %s290, %s304
      %p306 = scmp.eq.s32.totalorder %s26, 0
      %p307 = por %p305, %p306
      %s309 = sadd.s32 %s308, 1
      %p312 = scmp.eq.s32.totalorder %s20, 1
      %p313 = scmp.ne.s32.totalorder %s308, %s310
      %p314 = scmp.eq.s32.totalorder %s20, 0
      %p315 = por %p313, %p314
      %p316 = scmp.ne.s32.totalorder %s308, %s310
      %p317 = scmp.eq.s32.totalorder %s25, 1
      %p318 = por %p316, %p317
      %p319 = scmp.ne.s32.totalorder %s310, %s311
      %p320 = scmp.eq.s32.totalorder %s25, 0
      %p321 = por %p319, %p320
      %p322 = scmp.ne.s32.totalorder %s310, %s311
      %p323 = scmp.eq.s32.totalorder %s26, 1
      %p324 = por %p322, %p323
      %p326 = scmp.ne.s32.totalorder %s311, %s325
      %p327 = scmp.eq.s32.totalorder %s26, 0
      %p328 = por %p326, %p327
      %s329 = ssub.s32 %s27, %s39
      %p330 = scmp.eq.s32.totalorder %s329, 0
      %s332 = sadd.s32 %s331, 1
      %s333 = scalar_select %p330, %s331, %s332
      %p336 = pneg %p330
      %p337 = scmp.eq.s32.totalorder %s20, 1
      %p338 = por %p336, %p337
      %p339 = scmp.ne.s32.totalorder %s331, %s334
      %p340 = scmp.eq.s32.totalorder %s20, 0
      %p341 = por %p339, %p340
      %p342 = scmp.ne.s32.totalorder %s331, %s334
      %p343 = scmp.eq.s32.totalorder %s25, 1
      %p344 = por %p342, %p343
      %p345 = scmp.ne.s32.totalorder %s334, %s335
      %p346 = scmp.eq.s32.totalorder %s25, 0
      %p347 = por %p345, %p346
      %p348 = scmp.ne.s32.totalorder %s334, %s335
      %p349 = scmp.eq.s32.totalorder %s26, 1
      %p350 = por %p348, %p349
      %p352 = scmp.ne.s32.totalorder %s335, %s351
      %p353 = scmp.eq.s32.totalorder %s26, 0
      %p354 = por %p352, %p353
      %p355 = scmp.le.s32.totalorder 1, %s20
      %p356 = scmp.lt.s32.totalorder %s20, 3
      %p357 = pnand %p355, %p356
      %p358 = pneg %p357
      // Predicated region
      $region9: #{tpu_custom_call.1} parent=5 // pred_check
        _
      $region10: #{tpu_custom_call.1} parent=5 // pred_check_branch
        %360 = sbr.rel (%p357) target = $region12
      $region11: #{tpu_custom_call.1} parent=5 // pred_region
        %s361 = ssub.s32 %s20, 1
        // Predicated region
        $region13: #{tpu_custom_call.1} parent=11 // pred_check
          %p362 = pneg %p174
        $region14: #{tpu_custom_call.1} parent=11 // pred_check_branch
          %364 = sbr.rel (%p362) target = $region16
        $region15: #{tpu_custom_call.1} parent=11 // pred_region
          %p365 = scmp.lt.s32.totalorder %s29, 0
          %s366 = scalar_select %p365, %s29, 0
          %s367 = smul.addr %s366, 8
          %s368 = scalar_lea.vmem %s4, %s367
        $region16: #{tpu_custom_call.1} parent=11 // pred_fallthru
          _
        // Predicated region
        $region17: #{tpu_custom_call.1} parent=11 // pred_check
          %p369 = pneg %p195
        $region18: #{tpu_custom_call.1} parent=11 // pred_check_branch
          %371 = sbr.rel (%p369) target = $region20
        $region19: #{tpu_custom_call.1} parent=11 // pred_region
          %s373 = ssub.s32 8192, 8192
          %374 = vsyncadd [#allocation9], %s373
          %s375 = sshll.u32 [#allocation8], 4
          %s376 = int_to_ptr.vmem [resolvable:$true] %s375
          %381 = dma.hbm_to_vmem [thread:$0]  %s5, 8192, %s376, [#allocation9], 256, 256, 16
        $region20: #{tpu_custom_call.1} parent=11 // pred_fallthru
          _
        // Predicated region
        $region21: #{tpu_custom_call.1} parent=11 // pred_check
          %p382 = pneg %p216
        $region22: #{tpu_custom_call.1} parent=11 // pred_check_branch
          %384 = sbr.rel (%p382) target = $region24
        $region23: #{tpu_custom_call.1} parent=11 // pred_region
          _
        $region24: #{tpu_custom_call.1} parent=11 // pred_fallthru
          _
        // Predicated region
        $region25: #{tpu_custom_call.1} parent=11 // pred_check
          %p385 = pneg %p237
        $region26: #{tpu_custom_call.1} parent=11 // pred_check_branch
          %387 = sbr.rel (%p385) target = $region28
        $region27: #{tpu_custom_call.1} parent=11 // pred_region
          %s389 = ssub.s32 8192, 8192
          %390 = vsyncadd [#allocation11], %s389
          %s391 = sshll.u32 [#allocation10], 4
          %s392 = int_to_ptr.vmem [resolvable:$true] %s391
          %397 = dma.hbm_to_vmem [thread:$0]  %s7, 8192, %s392, [#allocation11], 256, 256, 16
        $region28: #{tpu_custom_call.1} parent=11 // pred_fallthru
          _
        // Predicated region
        $region29: #{tpu_custom_call.1} parent=11 // pred_check
          %p398 = pneg %p258
        $region30: #{tpu_custom_call.1} parent=11 // pred_check_branch
          %400 = sbr.rel (%p398) target = $region32
        $region31: #{tpu_custom_call.1} parent=11 // pred_region
          _
        $region32: #{tpu_custom_call.1} parent=11 // pred_fallthru
          _
        // Predicated region
        $region33: #{tpu_custom_call.1} parent=11 // pred_check
          %p401 = pneg %p279
        $region34: #{tpu_custom_call.1} parent=11 // pred_check_branch
          %403 = sbr.rel (%p401) target = $region36
        $region35: #{tpu_custom_call.1} parent=11 // pred_region
          _
        $region36: #{tpu_custom_call.1} parent=11 // pred_fallthru
          _
        // Predicated region
        $region37: #{tpu_custom_call.1} parent=11 // pred_check
          %p404 = pneg %p300
        $region38: #{tpu_custom_call.1} parent=11 // pred_check_branch
          %406 = sbr.rel (%p404) target = $region40
        $region39: #{tpu_custom_call.1} parent=11 // pred_region
          _
        $region40: #{tpu_custom_call.1} parent=11 // pred_fallthru
          _
        // Predicated region
        $region41: #{tpu_custom_call.1} parent=11 // pred_check
          %p407 = pneg %p321
        $region42: #{tpu_custom_call.1} parent=11 // pred_check_branch
          %409 = sbr.rel (%p407) target = $region44
        $region43: #{tpu_custom_call.1} parent=11 // pred_region
          _
        $region44: #{tpu_custom_call.1} parent=11 // pred_fallthru
          _
      $region12: #{tpu_custom_call.1} parent=5 // pred_fallthru
        _
      %p410 = scmp.lt.s32.totalorder %s20, 2
      // Predicated region
      $region45: #{tpu_custom_call.1} parent=5 // pred_check
        %p411 = pneg %p410
      $region46: #{tpu_custom_call.1} parent=5 // pred_check_branch
        %413 = sbr.rel (%p411) target = $region48
      $region47: #{tpu_custom_call.1} parent=5 // pred_region
        // Predicated region
        $region49: #{tpu_custom_call.1} parent=47 // pred_check
          %p414 = pneg %p54
        $region50: #{tpu_custom_call.1} parent=47 // pred_check_branch
          %416 = sbr.rel (%p414) target = $region52
        $region51: #{tpu_custom_call.1} parent=47 // pred_region
          %s417 = smul.u32 8, %s28
          %p418 = scmp.lt.s32.totalorder %s417, 15
          %s419 = scalar_select %p418, %s417, 15
          %p420 = scmp.lt.s32.totalorder %s27, 0
          %s421 = scalar_select %p420, %s27, 0
          %s422 = sadd.s32 %s421, %s419
          %s423 = smul.addr %s422, 4
          %s424 = scalar_lea.vmem %s0, %s423
          %s425 = smul.u32 8, %s28
        $region52: #{tpu_custom_call.1} parent=47 // pred_fallthru
          _
        // Predicated region
        $region53: #{tpu_custom_call.1} parent=47 // pred_check
          %p426 = pneg %p84
        $region54: #{tpu_custom_call.1} parent=47 // pred_check_branch
          %428 = sbr.rel (%p426) target = $region56
        $region55: #{tpu_custom_call.1} parent=47 // pred_region
          %s429 = ssub.s32 1, %s28
          %s430 = smul.u32 8, %s429
          %p431 = scmp.lt.s32.totalorder %s430, 15
          %s432 = scalar_select %p431, %s430, 15
          %p433 = scmp.lt.s32.totalorder %s27, 0
          %s434 = scalar_select %p433, %s27, 0
          %s435 = sadd.s32 %s434, %s432
          %s436 = smul.addr %s435, 4
          %s437 = scalar_lea.vmem %s1, %s436
          %s438 = ssub.s32 1, %s28
          %s439 = smul.u32 8, %s438
        $region56: #{tpu_custom_call.1} parent=47 // pred_fallthru
          _
        // Predicated region
        $region57: #{tpu_custom_call.1} parent=47 // pred_check
          %p440 = pneg %p112
        $region58: #{tpu_custom_call.1} parent=47 // pred_check_branch
          %442 = sbr.rel (%p440) target = $region60
        $region59: #{tpu_custom_call.1} parent=47 // pred_region
          %s443 = smul.u32 8, %s28
          %p444 = scmp.lt.s32.totalorder %s443, 15
          %s445 = scalar_select %p444, %s443, 15
          %p446 = scmp.lt.s32.totalorder %s27, 0
          %s447 = scalar_select %p446, %s27, 0
          %s448 = sadd.s32 %s447, %s445
          %s449 = smul.addr %s448, 8
          %s450 = scalar_lea.vmem %s2, %s449
          %s451 = smul.u32 8, %s28
        $region60: #{tpu_custom_call.1} parent=47 // pred_fallthru
          _
        // Predicated region
        $region61: #{tpu_custom_call.1} parent=47 // pred_check
          %p452 = pneg %p142
        $region62: #{tpu_custom_call.1} parent=47 // pred_check_branch
          %454 = sbr.rel (%p452) target = $region64
        $region63: #{tpu_custom_call.1} parent=47 // pred_region
          %s455 = ssub.s32 1, %s28
          %s456 = smul.u32 8, %s455
          %p457 = scmp.lt.s32.totalorder %s456, 15
          %s458 = scalar_select %p457, %s456, 15
          %p459 = scmp.lt.s32.totalorder %s27, 0
          %s460 = scalar_select %p459, %s27, 0
          %s461 = sadd.s32 %s460, %s458
          %s462 = smul.addr %s461, 8
          %s463 = scalar_lea.vmem %s3, %s462
          %s464 = ssub.s32 1, %s28
          %s465 = smul.u32 8, %s464
        $region64: #{tpu_custom_call.1} parent=47 // pred_fallthru
          _
      $region48: #{tpu_custom_call.1} parent=5 // pred_fallthru
        _
      %p466 = scmp.le.s32.totalorder 1, %s20
      %p467 = scmp.lt.s32.totalorder %s20, 3
      %p468 = pnand %p466, %p467
      %p469 = pneg %p468
      // Predicated region
      $region65: #{tpu_custom_call.1} parent=5 // pred_check
        _
      $region66: #{tpu_custom_call.1} parent=5 // pred_check_branch
        %471 = sbr.rel (%p468) target = $region68
      $region67: #{tpu_custom_call.1} parent=5 // pred_region
        %s472 = ssub.s32 %s20, 1
        // Predicated region
        $region69: #{tpu_custom_call.1} parent=67 // pred_check
          %p473 = pneg %p195
        $region70: #{tpu_custom_call.1} parent=67 // pred_check_branch
          %475 = sbr.rel (%p473) target = $region72
        $region71: #{tpu_custom_call.1} parent=67 // pred_region
          %476 = dma.done [#allocation9], 8192
        $region72: #{tpu_custom_call.1} parent=67 // pred_fallthru
          _
        // Predicated region
        $region73: #{tpu_custom_call.1} parent=67 // pred_check
          %p477 = pneg %p237
        $region74: #{tpu_custom_call.1} parent=67 // pred_check_branch
          %479 = sbr.rel (%p477) target = $region76
        $region75: #{tpu_custom_call.1} parent=67 // pred_region
          %480 = dma.done [#allocation11], 8192
        $region76: #{tpu_custom_call.1} parent=67 // pred_fallthru
          _
        %s481 = smul.u32 8, %s30
        %p482 = scmp.lt.s32.totalorder %s481, 15
        %s483 = scalar_select %p482, %s481, 15
        %p484 = scmp.lt.s32.totalorder %s29, 0
        %s485 = scalar_select %p484, %s29, 0
        %s486 = sadd.s32 %s485, %s483
        %s487 = smul.addr %s486, 4
        %s488 = scalar_lea.vmem %s0, %s487
        %p489 = pneg %p60
        %p490 = pneg %p57
        %s491 = ssub.s32 1, %s30
        %s492 = smul.u32 8, %s491
        %p493 = scmp.lt.s32.totalorder %s492, 15
        %s494 = scalar_select %p493, %s492, 15
        %p495 = scmp.lt.s32.totalorder %s29, 0
        %s496 = scalar_select %p495, %s29, 0
        %s497 = sadd.s32 %s496, %s494
        %s498 = smul.addr %s497, 4
        %s499 = scalar_lea.vmem %s1, %s498
        %p500 = pneg %p90
        %p501 = pneg %p87
        %s502 = smul.u32 8, %s30
        %p503 = scmp.lt.s32.totalorder %s502, 15
        %s504 = scalar_select %p503, %s502, 15
        %p505 = scmp.lt.s32.totalorder %s29, 0
        %s506 = scalar_select %p505, %s29, 0
        %s507 = sadd.s32 %s506, %s504
        %s508 = smul.addr %s507, 8
        %s509 = scalar_lea.vmem %s2, %s508
        %p510 = pneg %p118
        %p511 = pneg %p115
        %s512 = ssub.s32 1, %s30
        %s513 = smul.u32 8, %s512
        %p514 = scmp.lt.s32.totalorder %s513, 15
        %s515 = scalar_select %p514, %s513, 15
        %p516 = scmp.lt.s32.totalorder %s29, 0
        %s517 = scalar_select %p516, %s29, 0
        %s518 = sadd.s32 %s517, %s515
        %s519 = smul.addr %s518, 8
        %s520 = scalar_lea.vmem %s3, %s519
        %p521 = pneg %p148
        %p522 = pneg %p145
        %p523 = scmp.lt.s32.totalorder %s29, 0
        %s524 = scalar_select %p523, %s29, 0
        %s525 = smul.addr %s524, 8
        %s526 = scalar_lea.vmem %s4, %s525
        %p527 = pneg %p174
        %p528 = pneg %p171
        %p529 = pneg %p195
        %p530 = pneg %p192
        %p531 = pneg %p216
        %p532 = pneg %p213
        %p533 = pneg %p237
        %p534 = pneg %p234
        %p535 = pneg %p258
        %p536 = pneg %p255
        %p537 = pneg %p279
        %p538 = pneg %p276
        %p539 = pneg %p300
        %p540 = pneg %p297
        %p541 = pneg %p321
        %p542 = pneg %p318
        %p543 = pneg %p347
        %p544 = pneg %p344
        %p545 = scmp.lt.s32.totalorder %s29, 0
        %s546 = scalar_select %p545, %s29, 0
        %s547 = smul.addr %s546, 8
        %s548 = scalar_lea.vmem %s12, %s547
        %s549 = smul.u32 8, %s30
        %p550 = scmp.lt.s32.totalorder %s549, 15
        %s551 = scalar_select %p550, %s549, 15
        %p552 = scmp.lt.s32.totalorder %s29, 0
        %s553 = scalar_select %p552, %s29, 0
        %s554 = sadd.s32 %s553, %s551
        %s555 = smul.addr %s554, 4
        %s556 = scalar_lea.vmem %s0, %s555
        %s557 = smul.u32 8, %s30
        %s558 = ssub.s32 1, %s30
        %s559 = smul.u32 8, %s558
        %p560 = scmp.lt.s32.totalorder %s559, 15
        %s561 = scalar_select %p560, %s559, 15
        %p562 = scmp.lt.s32.totalorder %s29, 0
        %s563 = scalar_select %p562, %s29, 0
        %s564 = sadd.s32 %s563, %s561
        %s565 = smul.addr %s564, 4
        %s566 = scalar_lea.vmem %s1, %s565
        %s567 = ssub.s32 1, %s30
        %s568 = smul.u32 8, %s567
        %s569 = smul.u32 8, %s30
        %p570 = scmp.lt.s32.totalorder %s569, 15
        %s571 = scalar_select %p570, %s569, 15
        %p572 = scmp.lt.s32.totalorder %s29, 0
        %s573 = scalar_select %p572, %s29, 0
        %s574 = sadd.s32 %s573, %s571
        %s575 = smul.addr %s574, 8
        %s576 = scalar_lea.vmem %s2, %s575
        %s577 = smul.u32 8, %s30
        %s578 = ssub.s32 1, %s30
        %s579 = smul.u32 8, %s578
        %p580 = scmp.lt.s32.totalorder %s579, 15
        %s581 = scalar_select %p580, %s579, 15
        %p582 = scmp.lt.s32.totalorder %s29, 0
        %s583 = scalar_select %p582, %s29, 0
        %s584 = sadd.s32 %s583, %s581
        %s585 = smul.addr %s584, 8
        %s586 = scalar_lea.vmem %s3, %s585
        %s587 = ssub.s32 1, %s30
        %s588 = smul.u32 8, %s587
        %p589 = scmp.lt.s32.totalorder %s29, 0
        %s590 = scalar_select %p589, %s29, 0
        %s591 = smul.addr %s590, 8
        %s592 = scalar_lea.vmem %s4, %s591
        %p593 = scmp.lt.s32.totalorder %s29, 0
        %s594 = scalar_select %p593, %s29, 0
        %s595 = smul.addr %s594, 8
        %s596 = scalar_lea.vmem %s12, %s595
        %p598 = scmp.eq.s32.totalorder %s30, 0
        // Predicated region
        $region77: #{tpu_custom_call.1} parent=67 // pred_check
          %p599 = pneg %p598
        $region78: #{tpu_custom_call.1} parent=67 // pred_check_branch
          %601 = sbr.rel (%p599) target = $region80
        $region79: #{tpu_custom_call.1} parent=67 // pred_region
          %602 = vst [vmem:[#allocation2] sm:$0xff] 0.0
          %603 = vst [vmem:[#allocation3] sm:$0xff] 0.0
          %604 = vst [vmem:[#allocation4] sm:$0xff] 0.0
          %605 = vst [vmem:[#allocation5] sm:$0xff] 0.0
        $region80: #{tpu_custom_call.1} parent=67 // pred_fallthru
          _
        %v606 = vld [vmem:[#allocation2] sm:$0xff]
        %v607 = vld [vmem:[#allocation3] sm:$0xff]
        %v608 = vld [vmem:[#allocation4] sm:$0xff]
        %v609 = vld [vmem:[#allocation5] sm:$0xff]
        %v610 = vld [vmem:[%s556] sm:$0xf]
        %v611 = vld [vmem:[%s576] sm:$0xff]
        %612 = vst [vmem:[#allocation6] sm:$0xf] %v610
        %v613 = vpack.c.bf16 %v606, %v606
        %614 = vst [vmem:[#allocation6 + $0x4] sm:$0xf] %v613
        %v615 = vld [vmem:[#allocation6] sm:$0xff]
        %v616 = vld [vmem:[#allocation8] sm:$0xff]
        %v617 = vld [vmem:[#allocation8 + $0x8] sm:$0xff]
        %v618 = vld [vmem:[#allocation8 + $0x10] sm:$0xff]
        %v619 = vld [vmem:[#allocation8 + $0x18] sm:$0xff]
        %v620 = vld [vmem:[#allocation8 + $0x20] sm:$0xff]
        %v621 = vld [vmem:[#allocation8 + $0x28] sm:$0xff]
        %v622 = vld [vmem:[#allocation8 + $0x30] sm:$0xff]
        %v623 = vld [vmem:[#allocation8 + $0x38] sm:$0xff]
        %v624 = vld [vmem:[#allocation8 + $0x40] sm:$0xff]
        %v625 = vld [vmem:[#allocation8 + $0x48] sm:$0xff]
        %v626 = vld [vmem:[#allocation8 + $0x50] sm:$0xff]
        %v627 = vld [vmem:[#allocation8 + $0x58] sm:$0xff]
        %v628 = vld [vmem:[#allocation8 + $0x60] sm:$0xff]
        %v629 = vld [vmem:[#allocation8 + $0x68] sm:$0xff]
        %v630 = vld [vmem:[#allocation8 + $0x70] sm:$0xff]
        %v631 = vld [vmem:[#allocation8 + $0x78] sm:$0xff]
        %v632 = vld [vmem:[#allocation8 + $0x80] sm:$0xff]
        %v633 = vld [vmem:[#allocation8 + $0x88] sm:$0xff]
        %v634 = vld [vmem:[#allocation8 + $0x90] sm:$0xff]
        %v635 = vld [vmem:[#allocation8 + $0x98] sm:$0xff]
        %v636 = vld [vmem:[#allocation8 + $0xa0] sm:$0xff]
        %v637 = vld [vmem:[#allocation8 + $0xa8] sm:$0xff]
        %v638 = vld [vmem:[#allocation8 + $0xb0] sm:$0xff]
        %v639 = vld [vmem:[#allocation8 + $0xb8] sm:$0xff]
        %v640 = vld [vmem:[#allocation8 + $0xc0] sm:$0xff]
        %v641 = vld [vmem:[#allocation8 + $0xc8] sm:$0xff]
        %v642 = vld [vmem:[#allocation8 + $0xd0] sm:$0xff]
        %v643 = vld [vmem:[#allocation8 + $0xd8] sm:$0xff]
        %v644 = vld [vmem:[#allocation8 + $0xe0] sm:$0xff]
        %v645 = vld [vmem:[#allocation8 + $0xe8] sm:$0xff]
        %v646 = vld [vmem:[#allocation8 + $0xf0] sm:$0xff]
        %v647 = vld [vmem:[#allocation8 + $0xf8] sm:$0xff]
        %v648 = vld [vmem:[#allocation8 + $0x100] sm:$0xff]
        %v649 = vld [vmem:[#allocation8 + $0x108] sm:$0xff]
        %v650 = vld [vmem:[#allocation8 + $0x110] sm:$0xff]
        %v651 = vld [vmem:[#allocation8 + $0x118] sm:$0xff]
        %v652 = vld [vmem:[#allocation8 + $0x120] sm:$0xff]
        %v653 = vld [vmem:[#allocation8 + $0x128] sm:$0xff]
        %v654 = vld [vmem:[#allocation8 + $0x130] sm:$0xff]
        %v655 = vld [vmem:[#allocation8 + $0x138] sm:$0xff]
        %v656 = vld [vmem:[#allocation8 + $0x140] sm:$0xff]
        %v657 = vld [vmem:[#allocation8 + $0x148] sm:$0xff]
        %v658 = vld [vmem:[#allocation8 + $0x150] sm:$0xff]
        %v659 = vld [vmem:[#allocation8 + $0x158] sm:$0xff]
        %v660 = vld [vmem:[#allocation8 + $0x160] sm:$0xff]
        %v661 = vld [vmem:[#allocation8 + $0x168] sm:$0xff]
        %v662 = vld [vmem:[#allocation8 + $0x170] sm:$0xff]
        %v663 = vld [vmem:[#allocation8 + $0x178] sm:$0xff]
        %v664 = vld [vmem:[#allocation8 + $0x180] sm:$0xff]
        %v665 = vld [vmem:[#allocation8 + $0x188] sm:$0xff]
        %v666 = vld [vmem:[#allocation8 + $0x190] sm:$0xff]
        %v667 = vld [vmem:[#allocation8 + $0x198] sm:$0xff]
        %v668 = vld [vmem:[#allocation8 + $0x1a0] sm:$0xff]
        %v669 = vld [vmem:[#allocation8 + $0x1a8] sm:$0xff]
        %v670 = vld [vmem:[#allocation8 + $0x1b0] sm:$0xff]
        %v671 = vld [vmem:[#allocation8 + $0x1b8] sm:$0xff]
        %v672 = vld [vmem:[#allocation8 + $0x1c0] sm:$0xff]
        %v673 = vld [vmem:[#allocation8 + $0x1c8] sm:$0xff]
        %v674 = vld [vmem:[#allocation8 + $0x1d0] sm:$0xff]
        %v675 = vld [vmem:[#allocation8 + $0x1d8] sm:$0xff]
        %v676 = vld [vmem:[#allocation8 + $0x1e0] sm:$0xff]
        %v677 = vld [vmem:[#allocation8 + $0x1e8] sm:$0xff]
        %v678 = vld [vmem:[#allocation8 + $0x1f0] sm:$0xff]
        %v679 = vld [vmem:[#allocation8 + $0x1f8] sm:$0xff]
        %v680 = vld [vmem:[%s6] sm:$0xf]
        %v682 = vlaneseq
        %v683 = vshrl.u32 %v682, 7
        %v684 = vsub.s32 0, %v683
        %v685 = vrot.slane %v680, %v684
        %v686 = vlaneseq
        %v687 = vshrl.u32 %v686, 7
        %v688 = vsub.s32 1, %v687
        %v689 = vrot.slane %v680, %v688
        %v690 = vlaneseq
        %v691 = vshrl.u32 %v690, 7
        %v692 = vsub.s32 2, %v691
        %v693 = vrot.slane %v680, %v692
        %v694 = vlaneseq
        %v695 = vshrl.u32 %v694, 7
        %v696 = vsub.s32 3, %v695
        %v697 = vrot.slane %v680, %v696
        %v703 = vunpack.c.l.b16 %v615
        %v704 = vunpack.c.h.b16 %v615
        %v705 = vpack.c.b16 %v703, %v703
        %v706 = vpack.c.b16 %v704, %v704
        %v773 = vunpack.c.l.b16 %v616
        %v774 = vunpack.c.h.b16 %v616
        %v775 = vunpack.c.l.b16 %v617
        %v776 = vunpack.c.h.b16 %v617
        %v777 = vunpack.c.l.b16 %v618
        %v778 = vunpack.c.h.b16 %v618
        %v779 = vunpack.c.l.b16 %v619
        %v780 = vunpack.c.h.b16 %v619
        %v781 = vunpack.c.l.b16 %v620
        %v782 = vunpack.c.h.b16 %v620
        %v783 = vunpack.c.l.b16 %v621
        %v784 = vunpack.c.h.b16 %v621
        %v785 = vunpack.c.l.b16 %v622
        %v786 = vunpack.c.h.b16 %v622
        %v787 = vunpack.c.l.b16 %v623
        %v788 = vunpack.c.h.b16 %v623
        %v789 = vunpack.c.l.b16 %v624
        %v790 = vunpack.c.h.b16 %v624
        %v791 = vunpack.c.l.b16 %v625
        %v792 = vunpack.c.h.b16 %v625
        %v793 = vunpack.c.l.b16 %v626
        %v794 = vunpack.c.h.b16 %v626
        %v795 = vunpack.c.l.b16 %v627
        %v796 = vunpack.c.h.b16 %v627
        %v797 = vunpack.c.l.b16 %v628
        %v798 = vunpack.c.h.b16 %v628
        %v799 = vunpack.c.l.b16 %v629
        %v800 = vunpack.c.h.b16 %v629
        %v801 = vunpack.c.l.b16 %v630
        %v802 = vunpack.c.h.b16 %v630
        %v803 = vunpack.c.l.b16 %v631
        %v804 = vunpack.c.h.b16 %v631
        %v805 = vunpack.c.l.b16 %v632
        %v806 = vunpack.c.h.b16 %v632
        %v807 = vunpack.c.l.b16 %v633
        %v808 = vunpack.c.h.b16 %v633
        %v809 = vunpack.c.l.b16 %v634
        %v810 = vunpack.c.h.b16 %v634
        %v811 = vunpack.c.l.b16 %v635
        %v812 = vunpack.c.h.b16 %v635
        %v813 = vunpack.c.l.b16 %v636
        %v814 = vunpack.c.h.b16 %v636
        %v815 = vunpack.c.l.b16 %v637
        %v816 = vunpack.c.h.b16 %v637
        %v817 = vunpack.c.l.b16 %v638
        %v818 = vunpack.c.h.b16 %v638
        %v819 = vunpack.c.l.b16 %v639
        %v820 = vunpack.c.h.b16 %v639
        %v821 = vunpack.c.l.b16 %v640
        %v822 = vunpack.c.h.b16 %v640
        %v823 = vunpack.c.l.b16 %v641
        %v824 = vunpack.c.h.b16 %v641
        %v825 = vunpack.c.l.b16 %v642
        %v826 = vunpack.c.h.b16 %v642
        %v827 = vunpack.c.l.b16 %v643
        %v828 = vunpack.c.h.b16 %v643
        %v829 = vunpack.c.l.b16 %v644
        %v830 = vunpack.c.h.b16 %v644
        %v831 = vunpack.c.l.b16 %v645
        %v832 = vunpack.c.h.b16 %v645
        %v833 = vunpack.c.l.b16 %v646
        %v834 = vunpack.c.h.b16 %v646
        %v835 = vunpack.c.l.b16 %v647
        %v836 = vunpack.c.h.b16 %v647
        %v837 = vunpack.c.l.b16 %v648
        %v838 = vunpack.c.h.b16 %v648
        %v839 = vunpack.c.l.b16 %v649
        %v840 = vunpack.c.h.b16 %v649
        %v841 = vunpack.c.l.b16 %v650
        %v842 = vunpack.c.h.b16 %v650
        %v843 = vunpack.c.l.b16 %v651
        %v844 = vunpack.c.h.b16 %v651
        %v845 = vunpack.c.l.b16 %v652
        %v846 = vunpack.c.h.b16 %v652
        %v847 = vunpack.c.l.b16 %v653
        %v848 = vunpack.c.h.b16 %v653
        %v849 = vunpack.c.l.b16 %v654
        %v850 = vunpack.c.h.b16 %v654
        %v851 = vunpack.c.l.b16 %v655
        %v852 = vunpack.c.h.b16 %v655
        %v853 = vunpack.c.l.b16 %v656
        %v854 = vunpack.c.h.b16 %v656
        %v855 = vunpack.c.l.b16 %v657
        %v856 = vunpack.c.h.b16 %v657
        %v857 = vunpack.c.l.b16 %v658
        %v858 = vunpack.c.h.b16 %v658
        %v859 = vunpack.c.l.b16 %v659
        %v860 = vunpack.c.h.b16 %v659
        %v861 = vunpack.c.l.b16 %v660
        %v862 = vunpack.c.h.b16 %v660
        %v863 = vunpack.c.l.b16 %v661
        %v864 = vunpack.c.h.b16 %v661
        %v865 = vunpack.c.l.b16 %v662
        %v866 = vunpack.c.h.b16 %v662
        %v867 = vunpack.c.l.b16 %v663
        %v868 = vunpack.c.h.b16 %v663
        %v869 = vunpack.c.l.b16 %v664
        %v870 = vunpack.c.h.b16 %v664
        %v871 = vunpack.c.l.b16 %v665
        %v872 = vunpack.c.h.b16 %v665
        %v873 = vunpack.c.l.b16 %v666
        %v874 = vunpack.c.h.b16 %v666
        %v875 = vunpack.c.l.b16 %v667
        %v876 = vunpack.c.h.b16 %v667
        %v877 = vunpack.c.l.b16 %v668
        %v878 = vunpack.c.h.b16 %v668
        %v879 = vunpack.c.l.b16 %v669
        %v880 = vunpack.c.h.b16 %v669
        %v881 = vunpack.c.l.b16 %v670
        %v882 = vunpack.c.h.b16 %v670
        %v883 = vunpack.c.l.b16 %v671
        %v884 = vunpack.c.h.b16 %v671
        %v885 = vunpack.c.l.b16 %v672
        %v886 = vunpack.c.h.b16 %v672
        %v887 = vunpack.c.l.b16 %v673
        %v888 = vunpack.c.h.b16 %v673
        %v889 = vunpack.c.l.b16 %v674
        %v890 = vunpack.c.h.b16 %v674
        %v891 = vunpack.c.l.b16 %v675
        %v892 = vunpack.c.h.b16 %v675
        %v893 = vunpack.c.l.b16 %v676
        %v894 = vunpack.c.h.b16 %v676
        %v895 = vunpack.c.l.b16 %v677
        %v896 = vunpack.c.h.b16 %v677
        %v897 = vunpack.c.l.b16 %v678
        %v898 = vunpack.c.h.b16 %v678
        %v899 = vunpack.c.l.b16 %v679
        %v900 = vunpack.c.h.b16 %v679
        %v901 = vpack.c.b16 %v777, %v773
        %v902 = vpack.c.b16 %v778, %v774
        %v903 = vpack.c.b16 %v779, %v775
        %v904 = vpack.c.b16 %v780, %v776
        %v905 = vpack.c.b16 %v785, %v781
        %v906 = vpack.c.b16 %v786, %v782
        %v907 = vpack.c.b16 %v787, %v783
        %v908 = vpack.c.b16 %v788, %v784
        %v909 = vpack.c.b16 %v793, %v789
        %v910 = vpack.c.b16 %v794, %v790
        %v911 = vpack.c.b16 %v795, %v791
        %v912 = vpack.c.b16 %v796, %v792
        %v913 = vpack.c.b16 %v801, %v797
        %v914 = vpack.c.b16 %v802, %v798
        %v915 = vpack.c.b16 %v803, %v799
        %v916 = vpack.c.b16 %v804, %v800
        %v917 = vpack.c.b16 %v809, %v805
        %v918 = vpack.c.b16 %v810, %v806
        %v919 = vpack.c.b16 %v811, %v807
        %v920 = vpack.c.b16 %v812, %v808
        %v921 = vpack.c.b16 %v817, %v813
        %v922 = vpack.c.b16 %v818, %v814
        %v923 = vpack.c.b16 %v819, %v815
        %v924 = vpack.c.b16 %v820, %v816
        %v925 = vpack.c.b16 %v825, %v821
        %v926 = vpack.c.b16 %v826, %v822
        %v927 = vpack.c.b16 %v827, %v823
        %v928 = vpack.c.b16 %v828, %v824
        %v929 = vpack.c.b16 %v833, %v829
        %v930 = vpack.c.b16 %v834, %v830
        %v931 = vpack.c.b16 %v835, %v831
        %v932 = vpack.c.b16 %v836, %v832
        %v933 = vpack.c.b16 %v841, %v837
        %v934 = vpack.c.b16 %v842, %v838
        %v935 = vpack.c.b16 %v843, %v839
        %v936 = vpack.c.b16 %v844, %v840
        %v937 = vpack.c.b16 %v849, %v845
        %v938 = vpack.c.b16 %v850, %v846
        %v939 = vpack.c.b16 %v851, %v847
        %v940 = vpack.c.b16 %v852, %v848
        %v941 = vpack.c.b16 %v857, %v853
        %v942 = vpack.c.b16 %v858, %v854
        %v943 = vpack.c.b16 %v859, %v855
        %v944 = vpack.c.b16 %v860, %v856
        %v945 = vpack.c.b16 %v865, %v861
        %v946 = vpack.c.b16 %v866, %v862
        %v947 = vpack.c.b16 %v867, %v863
        %v948 = vpack.c.b16 %v868, %v864
        %v949 = vpack.c.b16 %v873, %v869
        %v950 = vpack.c.b16 %v874, %v870
        %v951 = vpack.c.b16 %v875, %v871
        %v952 = vpack.c.b16 %v876, %v872
        %v953 = vpack.c.b16 %v881, %v877
        %v954 = vpack.c.b16 %v882, %v878
        %v955 = vpack.c.b16 %v883, %v879
        %v956 = vpack.c.b16 %v884, %v880
        %v957 = vpack.c.b16 %v889, %v885
        %v958 = vpack.c.b16 %v890, %v886
        %v959 = vpack.c.b16 %v891, %v887
        %v960 = vpack.c.b16 %v892, %v888
        %v961 = vpack.c.b16 %v897, %v893
        %v962 = vpack.c.b16 %v898, %v894
        %v963 = vpack.c.b16 %v899, %v895
        %v964 = vpack.c.b16 %v900, %v896
        %1029 = vmatprep.subr.bf16.mxu0 %v902
        %1030 = vmatpush1.bf16.msra.mxu0 %v901
        %1031 = vmatprep.subr.bf16.mxu0 %v906
        %1032 = vmatpush1.bf16.msra.mxu0 %v905
        %1033 = vmatprep.subr.bf16.mxu0 %v910
        %1034 = vmatpush1.bf16.msra.mxu0 %v909
        %1035 = vmatprep.subr.bf16.mxu0 %v914
        %1036 = vmatpush1.bf16.msra.mxu0 %v913
        %1037 = vmatprep.subr.bf16.mxu0 %v918
        %1038 = vmatpush1.bf16.msra.mxu0 %v917
        %1039 = vmatprep.subr.bf16.mxu0 %v922
        %1040 = vmatpush1.bf16.msra.mxu0 %v921
        %1041 = vmatprep.subr.bf16.mxu0 %v926
        %1042 = vmatpush1.bf16.msra.mxu0 %v925
        %1043 = vmatprep.subr.bf16.mxu0 %v930
        %1044 = vmatpush1.bf16.msra.mxu0 %v929
        %1045 = vmatprep.subr.bf16.mxu0 %v934
        %1046 = vmatpush1.bf16.msra.mxu0 %v933
        %1047 = vmatprep.subr.bf16.mxu0 %v938
        %1048 = vmatpush1.bf16.msra.mxu0 %v937
        %1049 = vmatprep.subr.bf16.mxu0 %v942
        %1050 = vmatpush1.bf16.msra.mxu0 %v941
        %1051 = vmatprep.subr.bf16.mxu0 %v946
        %1052 = vmatpush1.bf16.msra.mxu0 %v945
        %1053 = vmatprep.subr.bf16.mxu0 %v950
        %1054 = vmatpush1.bf16.msra.mxu0 %v949
        %1055 = vmatprep.subr.bf16.mxu0 %v954
        %1056 = vmatpush1.bf16.msra.mxu0 %v953
        %1057 = vmatprep.subr.bf16.mxu0 %v958
        %1058 = vmatpush1.bf16.msra.mxu0 %v957
        %1059 = vmatprep.subr.bf16.mxu0 %v962
        %1060 = vmatpush1.bf16.msra.mxu0 %v961
        %1061 = vmatprep.mubr.bf16.mxu0 %v706
        %1062 = vmatmul.mubr.bf16.gmra.mrb[0].mxu0 %v705
        %v1063 = vpop.f32.mrb[0].mxu0
        %v1064 = vadd.f32 %v685, %v1063
        %v1065 = vpop.f32.mrb[0].mxu0
        %v1066 = vadd.f32 %v689, %v1065
        %v1067 = vpop.f32.mrb[0].mxu0
        %v1068 = vpop.f32.mrb[0].mxu0
        %1069 = vdwg.mxu0
        %1070 = vmatprep.subr.bf16.mxu0 %v904
        %1071 = vmatpush1.bf16.msra.mxu0 %v903
        %1072 = vmatprep.subr.bf16.mxu0 %v908
        %1073 = vmatpush1.bf16.msra.mxu0 %v907
        %1074 = vmatprep.subr.bf16.mxu0 %v912
        %1075 = vmatpush1.bf16.msra.mxu0 %v911
        %1076 = vmatprep.subr.bf16.mxu0 %v916
        %1077 = vmatpush1.bf16.msra.mxu0 %v915
        %1078 = vmatprep.subr.bf16.mxu0 %v920
        %1079 = vmatpush1.bf16.msra.mxu0 %v919
        %1080 = vmatprep.subr.bf16.mxu0 %v924
        %1081 = vmatpush1.bf16.msra.mxu0 %v923
        %1082 = vmatprep.subr.bf16.mxu0 %v928
        %1083 = vmatpush1.bf16.msra.mxu0 %v927
        %1084 = vmatprep.subr.bf16.mxu0 %v932
        %1085 = vmatpush1.bf16.msra.mxu0 %v931
        %1086 = vmatprep.subr.bf16.mxu0 %v936
        %1087 = vmatpush1.bf16.msra.mxu0 %v935
        %1088 = vmatprep.subr.bf16.mxu0 %v940
        %1089 = vmatpush1.bf16.msra.mxu0 %v939
        %1090 = vmatprep.subr.bf16.mxu0 %v944
        %1091 = vmatpush1.bf16.msra.mxu0 %v943
        %1092 = vmatprep.subr.bf16.mxu0 %v948
        %1093 = vmatpush1.bf16.msra.mxu0 %v947
        %1094 = vmatprep.subr.bf16.mxu0 %v952
        %1095 = vmatpush1.bf16.msra.mxu0 %v951
        %1096 = vmatprep.subr.bf16.mxu0 %v956
        %1097 = vmatpush1.bf16.msra.mxu0 %v955
        %1098 = vmatprep.subr.bf16.mxu0 %v960
        %1099 = vmatpush1.bf16.msra.mxu0 %v959
        %1100 = vmatprep.subr.bf16.mxu0 %v964
        %1101 = vmatpush1.bf16.msra.mxu0 %v963
        %1102 = vmatprep.mubr.bf16.mxu0 %v706
        %1103 = vmatmul.mubr.bf16.gmra.mrb[0].mxu0 %v705
        %v1104 = vpop.f32.mrb[0].mxu0
        %v1105 = vadd.f32 %v693, %v1104
        %v1106 = vpop.f32.mrb[0].mxu0
        %v1107 = vadd.f32 %v697, %v1106
        %v1108 = vpop.f32.mrb[0].mxu0
        %v1109 = vpop.f32.mrb[0].mxu0
        %1110 = vdwg.mxu0
        %v1111 = vxor.u32 %v1064, 2147483648
        %v1112 = vmul.f32 %v1111, 1.442695
        %v1113 = vpow.pop %v1112
        %v1114 = vadd.f32 %v1113, 1.0
        %v1115 = vrcp.pop %v1114
        %v1116 = vmul.f32 1.0, %v1115
        %v1117 = vxor.u32 %v1066, 2147483648
        %v1118 = vmul.f32 %v1117, 1.442695
        %v1119 = vpow.pop %v1118
        %v1120 = vadd.f32 %v1119, 1.0
        %v1121 = vrcp.pop %v1120
        %v1122 = vmul.f32 1.0, %v1121
        %v1123 = vtanh.pop %v1105
        %v1124 = vxor.u32 %v1107, 2147483648
        %v1125 = vmul.f32 %v1124, 1.442695
        %v1126 = vpow.pop %v1125
        %v1127 = vadd.f32 %v1126, 1.0
        %v1128 = vrcp.pop %v1127
        %v1129 = vmul.f32 1.0, %v1128
        %v1130 = vmul.f32 %v1122, %v607
        %v1131 = vmul.f32 %v1116, %v1123
        %v1132 = vadd.f32 %v1130, %v1131
        %v1133 = vtanh.pop %v1132
        %v1134 = vmul.f32 %v1129, %v1133
        %v1135 = vsub.f32 %v1134, %v606
        %1137 = vset.pattern.permute.xlu0 0
        %1138 = vperm.xlu0 %1137, %v611
        %v1139 = vpop.permute.xlu0 %1138
        %v1141 = vmul.f32 %v1139, %v1135
        %v1142 = vadd.f32 %v606, %v1141
        %v1143 = vsub.f32 %v1132, %v607
        %v1144 = vmul.f32 %v1139, %v1143
        %v1145 = vadd.f32 %v607, %v1144
        %s1146 = scalar_lea.vmem %s566, 28
        %v1147 = vld [vmem:[%s1146] sm:$0xf]
        %s1148 = scalar_lea.vmem %s586, 56
        %v1149 = vld [vmem:[%s1148] sm:$0xff]
        %1150 = vst [vmem:[#allocation7] sm:$0xf] %v1147
        %v1151 = vpack.c.bf16 %v608, %v608
        %1152 = vst [vmem:[#allocation7 + $0x4] sm:$0xf] %v1151
        %v1153 = vld [vmem:[#allocation7] sm:$0xff]
        %v1154 = vld [vmem:[#allocation10] sm:$0xff]
        %v1155 = vld [vmem:[#allocation10 + $0x8] sm:$0xff]
        %v1156 = vld [vmem:[#allocation10 + $0x10] sm:$0xff]
        %v1157 = vld [vmem:[#allocation10 + $0x18] sm:$0xff]
        %v1158 = vld [vmem:[#allocation10 + $0x20] sm:$0xff]
        %v1159 = vld [vmem:[#allocation10 + $0x28] sm:$0xff]
        %v1160 = vld [vmem:[#allocation10 + $0x30] sm:$0xff]
        %v1161 = vld [vmem:[#allocation10 + $0x38] sm:$0xff]
        %v1162 = vld [vmem:[#allocation10 + $0x40] sm:$0xff]
        %v1163 = vld [vmem:[#allocation10 + $0x48] sm:$0xff]
        %v1164 = vld [vmem:[#allocation10 + $0x50] sm:$0xff]
        %v1165 = vld [vmem:[#allocation10 + $0x58] sm:$0xff]
        %v1166 = vld [vmem:[#allocation10 + $0x60] sm:$0xff]
        %v1167 = vld [vmem:[#allocation10 + $0x68] sm:$0xff]
        %v1168 = vld [vmem:[#allocation10 + $0x70] sm:$0xff]
        %v1169 = vld [vmem:[#allocation10 + $0x78] sm:$0xff]
        %v1170 = vld [vmem:[#allocation10 + $0x80] sm:$0xff]
        %v1171 = vld [vmem:[#allocation10 + $0x88] sm:$0xff]
        %v1172 = vld [vmem:[#allocation10 + $0x90] sm:$0xff]
        %v1173 = vld [vmem:[#allocation10 + $0x98] sm:$0xff]
        %v1174 = vld [vmem:[#allocation10 + $0xa0] sm:$0xff]
        %v1175 = vld [vmem:[#allocation10 + $0xa8] sm:$0xff]
        %v1176 = vld [vmem:[#allocation10 + $0xb0] sm:$0xff]
        %v1177 = vld [vmem:[#allocation10 + $0xb8] sm:$0xff]
        %v1178 = vld [vmem:[#allocation10 + $0xc0] sm:$0xff]
        %v1179 = vld [vmem:[#allocation10 + $0xc8] sm:$0xff]
        %v1180 = vld [vmem:[#allocation10 + $0xd0] sm:$0xff]
        %v1181 = vld [vmem:[#allocation10 + $0xd8] sm:$0xff]
        %v1182 = vld [vmem:[#allocation10 + $0xe0] sm:$0xff]
        %v1183 = vld [vmem:[#allocation10 + $0xe8] sm:$0xff]
        %v1184 = vld [vmem:[#allocation10 + $0xf0] sm:$0xff]
        %v1185 = vld [vmem:[#allocation10 + $0xf8] sm:$0xff]
        %v1186 = vld [vmem:[#allocation10 + $0x100] sm:$0xff]
        %v1187 = vld [vmem:[#allocation10 + $0x108] sm:$0xff]
        %v1188 = vld [vmem:[#allocation10 + $0x110] sm:$0xff]
        %v1189 = vld [vmem:[#allocation10 + $0x118] sm:$0xff]
        %v1190 = vld [vmem:[#allocation10 + $0x120] sm:$0xff]
        %v1191 = vld [vmem:[#allocation10 + $0x128] sm:$0xff]
        %v1192 = vld [vmem:[#allocation10 + $0x130] sm:$0xff]
        %v1193 = vld [vmem:[#allocation10 + $0x138] sm:$0xff]
        %v1194 = vld [vmem:[#allocation10 + $0x140] sm:$0xff]
        %v1195 = vld [vmem:[#allocation10 + $0x148] sm:$0xff]
        %v1196 = vld [vmem:[#allocation10 + $0x150] sm:$0xff]
        %v1197 = vld [vmem:[#allocation10 + $0x158] sm:$0xff]
        %v1198 = vld [vmem:[#allocation10 + $0x160] sm:$0xff]
        %v1199 = vld [vmem:[#allocation10 + $0x168] sm:$0xff]
        %v1200 = vld [vmem:[#allocation10 + $0x170] sm:$0xff]
        %v1201 = vld [vmem:[#allocation10 + $0x178] sm:$0xff]
        %v1202 = vld [vmem:[#allocation10 + $0x180] sm:$0xff]
        %v1203 = vld [vmem:[#allocation10 + $0x188] sm:$0xff]
        %v1204 = vld [vmem:[#allocation10 + $0x190] sm:$0xff]
        %v1205 = vld [vmem:[#allocation10 + $0x198] sm:$0xff]
        %v1206 = vld [vmem:[#allocation10 + $0x1a0] sm:$0xff]
        %v1207 = vld [vmem:[#allocation10 + $0x1a8] sm:$0xff]
        %v1208 = vld [vmem:[#allocation10 + $0x1b0] sm:$0xff]
        %v1209 = vld [vmem:[#allocation10 + $0x1b8] sm:$0xff]
        %v1210 = vld [vmem:[#allocation10 + $0x1c0] sm:$0xff]
        %v1211 = vld [vmem:[#allocation10 + $0x1c8] sm:$0xff]
        %v1212 = vld [vmem:[#allocation10 + $0x1d0] sm:$0xff]
        %v1213 = vld [vmem:[#allocation10 + $0x1d8] sm:$0xff]
        %v1214 = vld [vmem:[#allocation10 + $0x1e0] sm:$0xff]
        %v1215 = vld [vmem:[#allocation10 + $0x1e8] sm:$0xff]
        %v1216 = vld [vmem:[#allocation10 + $0x1f0] sm:$0xff]
        %v1217 = vld [vmem:[#allocation10 + $0x1f8] sm:$0xff]
        %v1218 = vld [vmem:[%s8] sm:$0xf]
        %v1220 = vlaneseq
        %v1221 = vshrl.u32 %v1220, 7
        %v1222 = vsub.s32 0, %v1221
        %v1223 = vrot.slane %v1218, %v1222
        %v1224 = vlaneseq
        %v1225 = vshrl.u32 %v1224, 7
        %v1226 = vsub.s32 1, %v1225
        %v1227 = vrot.slane %v1218, %v1226
        %v1228 = vlaneseq
        %v1229 = vshrl.u32 %v1228, 7
        %v1230 = vsub.s32 2, %v1229
        %v1231 = vrot.slane %v1218, %v1230
        %v1232 = vlaneseq
        %v1233 = vshrl.u32 %v1232, 7
        %v1234 = vsub.s32 3, %v1233
        %v1235 = vrot.slane %v1218, %v1234
        %v1241 = vunpack.c.l.b16 %v1153
        %v1242 = vunpack.c.h.b16 %v1153
        %v1243 = vpack.c.b16 %v1241, %v1241
        %v1244 = vpack.c.b16 %v1242, %v1242
        %v1311 = vunpack.c.l.b16 %v1154
        %v1312 = vunpack.c.h.b16 %v1154
        %v1313 = vunpack.c.l.b16 %v1155
        %v1314 = vunpack.c.h.b16 %v1155
        %v1315 = vunpack.c.l.b16 %v1156
        %v1316 = vunpack.c.h.b16 %v1156
        %v1317 = vunpack.c.l.b16 %v1157
        %v1318 = vunpack.c.h.b16 %v1157
        %v1319 = vunpack.c.l.b16 %v1158
        %v1320 = vunpack.c.h.b16 %v1158
        %v1321 = vunpack.c.l.b16 %v1159
        %v1322 = vunpack.c.h.b16 %v1159
        %v1323 = vunpack.c.l.b16 %v1160
        %v1324 = vunpack.c.h.b16 %v1160
        %v1325 = vunpack.c.l.b16 %v1161
        %v1326 = vunpack.c.h.b16 %v1161
        %v1327 = vunpack.c.l.b16 %v1162
        %v1328 = vunpack.c.h.b16 %v1162
        %v1329 = vunpack.c.l.b16 %v1163
        %v1330 = vunpack.c.h.b16 %v1163
        %v1331 = vunpack.c.l.b16 %v1164
        %v1332 = vunpack.c.h.b16 %v1164
        %v1333 = vunpack.c.l.b16 %v1165
        %v1334 = vunpack.c.h.b16 %v1165
        %v1335 = vunpack.c.l.b16 %v1166
        %v1336 = vunpack.c.h.b16 %v1166
        %v1337 = vunpack.c.l.b16 %v1167
        %v1338 = vunpack.c.h.b16 %v1167
        %v1339 = vunpack.c.l.b16 %v1168
        %v1340 = vunpack.c.h.b16 %v1168
        %v1341 = vunpack.c.l.b16 %v1169
        %v1342 = vunpack.c.h.b16 %v1169
        %v1343 = vunpack.c.l.b16 %v1170
        %v1344 = vunpack.c.h.b16 %v1170
        %v1345 = vunpack.c.l.b16 %v1171
        %v1346 = vunpack.c.h.b16 %v1171
        %v1347 = vunpack.c.l.b16 %v1172
        %v1348 = vunpack.c.h.b16 %v1172
        %v1349 = vunpack.c.l.b16 %v1173
        %v1350 = vunpack.c.h.b16 %v1173
        %v1351 = vunpack.c.l.b16 %v1174
        %v1352 = vunpack.c.h.b16 %v1174
        %v1353 = vunpack.c.l.b16 %v1175
        %v1354 = vunpack.c.h.b16 %v1175
        %v1355 = vunpack.c.l.b16 %v1176
        %v1356 = vunpack.c.h.b16 %v1176
        %v1357 = vunpack.c.l.b16 %v1177
        %v1358 = vunpack.c.h.b16 %v1177
        %v1359 = vunpack.c.l.b16 %v1178
        %v1360 = vunpack.c.h.b16 %v1178
        %v1361 = vunpack.c.l.b16 %v1179
        %v1362 = vunpack.c.h.b16 %v1179
        %v1363 = vunpack.c.l.b16 %v1180
        %v1364 = vunpack.c.h.b16 %v1180
        %v1365 = vunpack.c.l.b16 %v1181
        %v1366 = vunpack.c.h.b16 %v1181
        %v1367 = vunpack.c.l.b16 %v1182
        %v1368 = vunpack.c.h.b16 %v1182
        %v1369 = vunpack.c.l.b16 %v1183
        %v1370 = vunpack.c.h.b16 %v1183
        %v1371 = vunpack.c.l.b16 %v1184
        %v1372 = vunpack.c.h.b16 %v1184
        %v1373 = vunpack.c.l.b16 %v1185
        %v1374 = vunpack.c.h.b16 %v1185
        %v1375 = vunpack.c.l.b16 %v1186
        %v1376 = vunpack.c.h.b16 %v1186
        %v1377 = vunpack.c.l.b16 %v1187
        %v1378 = vunpack.c.h.b16 %v1187
        %v1379 = vunpack.c.l.b16 %v1188
        %v1380 = vunpack.c.h.b16 %v1188
        %v1381 = vunpack.c.l.b16 %v1189
        %v1382 = vunpack.c.h.b16 %v1189
        %v1383 = vunpack.c.l.b16 %v1190
        %v1384 = vunpack.c.h.b16 %v1190
        %v1385 = vunpack.c.l.b16 %v1191
        %v1386 = vunpack.c.h.b16 %v1191
        %v1387 = vunpack.c.l.b16 %v1192
        %v1388 = vunpack.c.h.b16 %v1192
        %v1389 = vunpack.c.l.b16 %v1193
        %v1390 = vunpack.c.h.b16 %v1193
        %v1391 = vunpack.c.l.b16 %v1194
        %v1392 = vunpack.c.h.b16 %v1194
        %v1393 = vunpack.c.l.b16 %v1195
        %v1394 = vunpack.c.h.b16 %v1195
        %v1395 = vunpack.c.l.b16 %v1196
        %v1396 = vunpack.c.h.b16 %v1196
        %v1397 = vunpack.c.l.b16 %v1197
        %v1398 = vunpack.c.h.b16 %v1197
        %v1399 = vunpack.c.l.b16 %v1198
        %v1400 = vunpack.c.h.b16 %v1198
        %v1401 = vunpack.c.l.b16 %v1199
        %v1402 = vunpack.c.h.b16 %v1199
        %v1403 = vunpack.c.l.b16 %v1200
        %v1404 = vunpack.c.h.b16 %v1200
        %v1405 = vunpack.c.l.b16 %v1201
        %v1406 = vunpack.c.h.b16 %v1201
        %v1407 = vunpack.c.l.b16 %v1202
        %v1408 = vunpack.c.h.b16 %v1202
        %v1409 = vunpack.c.l.b16 %v1203
        %v1410 = vunpack.c.h.b16 %v1203
        %v1411 = vunpack.c.l.b16 %v1204
        %v1412 = vunpack.c.h.b16 %v1204
        %v1413 = vunpack.c.l.b16 %v1205
        %v1414 = vunpack.c.h.b16 %v1205
        %v1415 = vunpack.c.l.b16 %v1206
        %v1416 = vunpack.c.h.b16 %v1206
        %v1417 = vunpack.c.l.b16 %v1207
        %v1418 = vunpack.c.h.b16 %v1207
        %v1419 = vunpack.c.l.b16 %v1208
        %v1420 = vunpack.c.h.b16 %v1208
        %v1421 = vunpack.c.l.b16 %v1209
        %v1422 = vunpack.c.h.b16 %v1209
        %v1423 = vunpack.c.l.b16 %v1210
        %v1424 = vunpack.c.h.b16 %v1210
        %v1425 = vunpack.c.l.b16 %v1211
        %v1426 = vunpack.c.h.b16 %v1211
        %v1427 = vunpack.c.l.b16 %v1212
        %v1428 = vunpack.c.h.b16 %v1212
        %v1429 = vunpack.c.l.b16 %v1213
        %v1430 = vunpack.c.h.b16 %v1213
        %v1431 = vunpack.c.l.b16 %v1214
        %v1432 = vunpack.c.h.b16 %v1214
        %v1433 = vunpack.c.l.b16 %v1215
        %v1434 = vunpack.c.h.b16 %v1215
        %v1435 = vunpack.c.l.b16 %v1216
        %v1436 = vunpack.c.h.b16 %v1216
        %v1437 = vunpack.c.l.b16 %v1217
        %v1438 = vunpack.c.h.b16 %v1217
        %v1439 = vpack.c.b16 %v1315, %v1311
        %v1440 = vpack.c.b16 %v1316, %v1312
        %v1441 = vpack.c.b16 %v1317, %v1313
        %v1442 = vpack.c.b16 %v1318, %v1314
        %v1443 = vpack.c.b16 %v1323, %v1319
        %v1444 = vpack.c.b16 %v1324, %v1320
        %v1445 = vpack.c.b16 %v1325, %v1321
        %v1446 = vpack.c.b16 %v1326, %v1322
        %v1447 = vpack.c.b16 %v1331, %v1327
        %v1448 = vpack.c.b16 %v1332, %v1328
        %v1449 = vpack.c.b16 %v1333, %v1329
        %v1450 = vpack.c.b16 %v1334, %v1330
        %v1451 = vpack.c.b16 %v1339, %v1335
        %v1452 = vpack.c.b16 %v1340, %v1336
        %v1453 = vpack.c.b16 %v1341, %v1337
        %v1454 = vpack.c.b16 %v1342, %v1338
        %v1455 = vpack.c.b16 %v1347, %v1343
        %v1456 = vpack.c.b16 %v1348, %v1344
        %v1457 = vpack.c.b16 %v1349, %v1345
        %v1458 = vpack.c.b16 %v1350, %v1346
        %v1459 = vpack.c.b16 %v1355, %v1351
        %v1460 = vpack.c.b16 %v1356, %v1352
        %v1461 = vpack.c.b16 %v1357, %v1353
        %v1462 = vpack.c.b16 %v1358, %v1354
        %v1463 = vpack.c.b16 %v1363, %v1359
        %v1464 = vpack.c.b16 %v1364, %v1360
        %v1465 = vpack.c.b16 %v1365, %v1361
        %v1466 = vpack.c.b16 %v1366, %v1362
        %v1467 = vpack.c.b16 %v1371, %v1367
        %v1468 = vpack.c.b16 %v1372, %v1368
        %v1469 = vpack.c.b16 %v1373, %v1369
        %v1470 = vpack.c.b16 %v1374, %v1370
        %v1471 = vpack.c.b16 %v1379, %v1375
        %v1472 = vpack.c.b16 %v1380, %v1376
        %v1473 = vpack.c.b16 %v1381, %v1377
        %v1474 = vpack.c.b16 %v1382, %v1378
        %v1475 = vpack.c.b16 %v1387, %v1383
        %v1476 = vpack.c.b16 %v1388, %v1384
        %v1477 = vpack.c.b16 %v1389, %v1385
        %v1478 = vpack.c.b16 %v1390, %v1386
        %v1479 = vpack.c.b16 %v1395, %v1391
        %v1480 = vpack.c.b16 %v1396, %v1392
        %v1481 = vpack.c.b16 %v1397, %v1393
        %v1482 = vpack.c.b16 %v1398, %v1394
        %v1483 = vpack.c.b16 %v1403, %v1399
        %v1484 = vpack.c.b16 %v1404, %v1400
        %v1485 = vpack.c.b16 %v1405, %v1401
        %v1486 = vpack.c.b16 %v1406, %v1402
        %v1487 = vpack.c.b16 %v1411, %v1407
        %v1488 = vpack.c.b16 %v1412, %v1408
        %v1489 = vpack.c.b16 %v1413, %v1409
        %v1490 = vpack.c.b16 %v1414, %v1410
        %v1491 = vpack.c.b16 %v1419, %v1415
        %v1492 = vpack.c.b16 %v1420, %v1416
        %v1493 = vpack.c.b16 %v1421, %v1417
        %v1494 = vpack.c.b16 %v1422, %v1418
        %v1495 = vpack.c.b16 %v1427, %v1423
        %v1496 = vpack.c.b16 %v1428, %v1424
        %v1497 = vpack.c.b16 %v1429, %v1425
        %v1498 = vpack.c.b16 %v1430, %v1426
        %v1499 = vpack.c.b16 %v1435, %v1431
        %v1500 = vpack.c.b16 %v1436, %v1432
        %v1501 = vpack.c.b16 %v1437, %v1433
        %v1502 = vpack.c.b16 %v1438, %v1434
        %1567 = vmatprep.subr.bf16.mxu0 %v1440
        %1568 = vmatpush1.bf16.msra.mxu0 %v1439
        %1569 = vmatprep.subr.bf16.mxu0 %v1444
        %1570 = vmatpush1.bf16.msra.mxu0 %v1443
        %1571 = vmatprep.subr.bf16.mxu0 %v1448
        %1572 = vmatpush1.bf16.msra.mxu0 %v1447
        %1573 = vmatprep.subr.bf16.mxu0 %v1452
        %1574 = vmatpush1.bf16.msra.mxu0 %v1451
        %1575 = vmatprep.subr.bf16.mxu0 %v1456
        %1576 = vmatpush1.bf16.msra.mxu0 %v1455
        %1577 = vmatprep.subr.bf16.mxu0 %v1460
        %1578 = vmatpush1.bf16.msra.mxu0 %v1459
        %1579 = vmatprep.subr.bf16.mxu0 %v1464
        %1580 = vmatpush1.bf16.msra.mxu0 %v1463
        %1581 = vmatprep.subr.bf16.mxu0 %v1468
        %1582 = vmatpush1.bf16.msra.mxu0 %v1467
        %1583 = vmatprep.subr.bf16.mxu0 %v1472
        %1584 = vmatpush1.bf16.msra.mxu0 %v1471
        %1585 = vmatprep.subr.bf16.mxu0 %v1476
        %1586 = vmatpush1.bf16.msra.mxu0 %v1475
        %1587 = vmatprep.subr.bf16.mxu0 %v1480
        %1588 = vmatpush1.bf16.msra.mxu0 %v1479
        %1589 = vmatprep.subr.bf16.mxu0 %v1484
        %1590 = vmatpush1.bf16.msra.mxu0 %v1483
        %1591 = vmatprep.subr.bf16.mxu0 %v1488
        %1592 = vmatpush1.bf16.msra.mxu0 %v1487
        %1593 = vmatprep.subr.bf16.mxu0 %v1492
        %1594 = vmatpush1.bf16.msra.mxu0 %v1491
        %1595 = vmatprep.subr.bf16.mxu0 %v1496
        %1596 = vmatpush1.bf16.msra.mxu0 %v1495
        %1597 = vmatprep.subr.bf16.mxu0 %v1500
        %1598 = vmatpush1.bf16.msra.mxu0 %v1499
        %1599 = vmatprep.mubr.bf16.mxu0 %v1244
        %1600 = vmatmul.mubr.bf16.gmra.mrb[0].mxu0 %v1243
        %v1601 = vpop.f32.mrb[0].mxu0
        %v1602 = vadd.f32 %v1223, %v1601
        %v1603 = vpop.f32.mrb[0].mxu0
        %v1604 = vadd.f32 %v1227, %v1603
        %v1605 = vpop.f32.mrb[0].mxu0
        %v1606 = vpop.f32.mrb[0].mxu0
        %1607 = vdwg.mxu0
        %1608 = vmatprep.subr.bf16.mxu0 %v1442
        %1609 = vmatpush1.bf16.msra.mxu0 %v1441
        %1610 = vmatprep.subr.bf16.mxu0 %v1446
        %1611 = vmatpush1.bf16.msra.mxu0 %v1445
        %1612 = vmatprep.subr.bf16.mxu0 %v1450
        %1613 = vmatpush1.bf16.msra.mxu0 %v1449
        %1614 = vmatprep.subr.bf16.mxu0 %v1454
        %1615 = vmatpush1.bf16.msra.mxu0 %v1453
        %1616 = vmatprep.subr.bf16.mxu0 %v1458
        %1617 = vmatpush1.bf16.msra.mxu0 %v1457
        %1618 = vmatprep.subr.bf16.mxu0 %v1462
        %1619 = vmatpush1.bf16.msra.mxu0 %v1461
        %1620 = vmatprep.subr.bf16.mxu0 %v1466
        %1621 = vmatpush1.bf16.msra.mxu0 %v1465
        %1622 = vmatprep.subr.bf16.mxu0 %v1470
        %1623 = vmatpush1.bf16.msra.mxu0 %v1469
        %1624 = vmatprep.subr.bf16.mxu0 %v1474
        %1625 = vmatpush1.bf16.msra.mxu0 %v1473
        %1626 = vmatprep.subr.bf16.mxu0 %v1478
        %1627 = vmatpush1.bf16.msra.mxu0 %v1477
        %1628 = vmatprep.subr.bf16.mxu0 %v1482
        %1629 = vmatpush1.bf16.msra.mxu0 %v1481
        %1630 = vmatprep.subr.bf16.mxu0 %v1486
        %1631 = vmatpush1.bf16.msra.mxu0 %v1485
        %1632 = vmatprep.subr.bf16.mxu0 %v1490
        %1633 = vmatpush1.bf16.msra.mxu0 %v1489
        %1634 = vmatprep.subr.bf16.mxu0 %v1494
        %1635 = vmatpush1.bf16.msra.mxu0 %v1493
        %1636 = vmatprep.subr.bf16.mxu0 %v1498
        %1637 = vmatpush1.bf16.msra.mxu0 %v1497
        %1638 = vmatprep.subr.bf16.mxu0 %v1502
        %1639 = vmatpush1.bf16.msra.mxu0 %v1501
        %1640 = vmatprep.mubr.bf16.mxu0 %v1244
        %1641 = vmatmul.mubr.bf16.gmra.mrb[0].mxu0 %v1243
        %v1642 = vpop.f32.mrb[0].mxu0
        %v1643 = vadd.f32 %v1231, %v1642
        %v1644 = vpop.f32.mrb[0].mxu0
        %v1645 = vadd.f32 %v1235, %v1644
        %v1646 = vpop.f32.mrb[0].mxu0
        %v1647 = vpop.f32.mrb[0].mxu0
        %1648 = vdwg.mxu0
        %v1649 = vxor.u32 %v1602, 2147483648
        %v1650 = vmul.f32 %v1649, 1.442695
        %v1651 = vpow.pop %v1650
        %v1652 = vadd.f32 %v1651, 1.0
        %v1653 = vrcp.pop %v1652
        %v1654 = vmul.f32 1.0, %v1653
        %v1655 = vxor.u32 %v1604, 2147483648
        %v1656 = vmul.f32 %v1655, 1.442695
        %v1657 = vpow.pop %v1656
        %v1658 = vadd.f32 %v1657, 1.0
        %v1659 = vrcp.pop %v1658
        %v1660 = vmul.f32 1.0, %v1659
        %v1661 = vtanh.pop %v1643
        %v1662 = vxor.u32 %v1645, 2147483648
        %v1663 = vmul.f32 %v1662, 1.442695
        %v1664 = vpow.pop %v1663
        %v1665 = vadd.f32 %v1664, 1.0
        %v1666 = vrcp.pop %v1665
        %v1667 = vmul.f32 1.0, %v1666
        %v1668 = vmul.f32 %v1660, %v609
        %v1669 = vmul.f32 %v1654, %v1661
        %v1670 = vadd.f32 %v1668, %v1669
        %v1671 = vtanh.pop %v1670
        %v1672 = vmul.f32 %v1667, %v1671
        %v1673 = vsub.f32 %v1672, %v608
        %1675 = vset.pattern.permute.xlu0 0
        %1676 = vperm.xlu0 %1675, %v1149
        %v1677 = vpop.permute.xlu0 %1676
        %v1679 = vmul.f32 %v1677, %v1673
        %v1680 = vadd.f32 %v608, %v1679
        %v1681 = vsub.f32 %v1670, %v609
        %v1682 = vmul.f32 %v1677, %v1681
        %v1683 = vadd.f32 %v609, %v1682
        %s1684 = scalar_lea.vmem %s556, 4
        %v1685 = vld [vmem:[%s1684] sm:$0xf]
        %s1686 = scalar_lea.vmem %s576, 8
        %v1687 = vld [vmem:[%s1686] sm:$0xff]
        %1688 = vst [vmem:[#allocation6] sm:$0xf] %v1685
        %v1689 = vpack.c.bf16 %v1142, %v1142
        %1690 = vst [vmem:[#allocation6 + $0x4] sm:$0xf] %v1689
        %v1691 = vld [vmem:[#allocation6] sm:$0xff]
        %v1692 = vld [vmem:[#allocation8] sm:$0xff]
        %v1693 = vld [vmem:[#allocation8 + $0x8] sm:$0xff]
        %v1694 = vld [vmem:[#allocation8 + $0x10] sm:$0xff]
        %v1695 = vld [vmem:[#allocation8 + $0x18] sm:$0xff]
        %v1696 = vld [vmem:[#allocation8 + $0x20] sm:$0xff]
        %v1697 = vld [vmem:[#allocation8 + $0x28] sm:$0xff]
        %v1698 = vld [vmem:[#allocation8 + $0x30] sm:$0xff]
        %v1699 = vld [vmem:[#allocation8 + $0x38] sm:$0xff]
        %v1700 = vld [vmem:[#allocation8 + $0x40] sm:$0xff]
        %v1701 = vld [vmem:[#allocation8 + $0x48] sm:$0xff]
        %v1702 = vld [vmem:[#allocation8 + $0x50] sm:$0xff]
        %v1703 = vld [vmem:[#allocation8 + $0x58] sm:$0xff]
        %v1704 = vld [vmem:[#allocation8 + $0x60] sm:$0xff]
        %v1705 = vld [vmem:[#allocation8 + $0x68] sm:$0xff]
        %v1706 = vld [vmem:[#allocation8 + $0x70] sm:$0xff]
        %v1707 = vld [vmem:[#allocation8 + $0x78] sm:$0xff]
        %v1708 = vld [vmem:[#allocation8 + $0x80] sm:$0xff]
        %v1709 = vld [vmem:[#allocation8 + $0x88] sm:$0xff]
        %v1710 = vld [vmem:[#allocation8 + $0x90] sm:$0xff]
        %v1711 = vld [vmem:[#allocation8 + $0x98] sm:$0xff]
        %v1712 = vld [vmem:[#allocation8 + $0xa0] sm:$0xff]
        %v1713 = vld [vmem:[#allocation8 + $0xa8] sm:$0xff]
        %v1714 = vld [vmem:[#allocation8 + $0xb0] sm:$0xff]
        %v1715 = vld [vmem:[#allocation8 + $0xb8] sm:$0xff]
        %v1716 = vld [vmem:[#allocation8 + $0xc0] sm:$0xff]
        %v1717 = vld [vmem:[#allocation8 + $0xc8] sm:$0xff]
        %v1718 = vld [vmem:[#allocation8 + $0xd0] sm:$0xff]
        %v1719 = vld [vmem:[#allocation8 + $0xd8] sm:$0xff]
        %v1720 = vld [vmem:[#allocation8 + $0xe0] sm:$0xff]
        %v1721 = vld [vmem:[#allocation8 + $0xe8] sm:$0xff]
        %v1722 = vld [vmem:[#allocation8 + $0xf0] sm:$0xff]
        %v1723 = vld [vmem:[#allocation8 + $0xf8] sm:$0xff]
        %v1724 = vld [vmem:[#allocation8 + $0x100] sm:$0xff]
        %v1725 = vld [vmem:[#allocation8 + $0x108] sm:$0xff]
        %v1726 = vld [vmem:[#allocation8 + $0x110] sm:$0xff]
        %v1727 = vld [vmem:[#allocation8 + $0x118] sm:$0xff]
        %v1728 = vld [vmem:[#allocation8 + $0x120] sm:$0xff]
        %v1729 = vld [vmem:[#allocation8 + $0x128] sm:$0xff]
        %v1730 = vld [vmem:[#allocation8 + $0x130] sm:$0xff]
        %v1731 = vld [vmem:[#allocation8 + $0x138] sm:$0xff]
        %v1732 = vld [vmem:[#allocation8 + $0x140] sm:$0xff]
        %v1733 = vld [vmem:[#allocation8 + $0x148] sm:$0xff]
        %v1734 = vld [vmem:[#allocation8 + $0x150] sm:$0xff]
        %v1735 = vld [vmem:[#allocation8 + $0x158] sm:$0xff]
        %v1736 = vld [vmem:[#allocation8 + $0x160] sm:$0xff]
        %v1737 = vld [vmem:[#allocation8 + $0x168] sm:$0xff]
        %v1738 = vld [vmem:[#allocation8 + $0x170] sm:$0xff]
        %v1739 = vld [vmem:[#allocation8 + $0x178] sm:$0xff]
        %v1740 = vld [vmem:[#allocation8 + $0x180] sm:$0xff]
        %v1741 = vld [vmem:[#allocation8 + $0x188] sm:$0xff]
        %v1742 = vld [vmem:[#allocation8 + $0x190] sm:$0xff]
        %v1743 = vld [vmem:[#allocation8 + $0x198] sm:$0xff]
        %v1744 = vld [vmem:[#allocation8 + $0x1a0] sm:$0xff]
        %v1745 = vld [vmem:[#allocation8 + $0x1a8] sm:$0xff]
        %v1746 = vld [vmem:[#allocation8 + $0x1b0] sm:$0xff]
        %v1747 = vld [vmem:[#allocation8 + $0x1b8] sm:$0xff]
        %v1748 = vld [vmem:[#allocation8 + $0x1c0] sm:$0xff]
        %v1749 = vld [vmem:[#allocation8 + $0x1c8] sm:$0xff]
        %v1750 = vld [vmem:[#allocation8 + $0x1d0] sm:$0xff]
        %v1751 = vld [vmem:[#allocation8 + $0x1d8] sm:$0xff]
        %v1752 = vld [vmem:[#allocation8 + $0x1e0] sm:$0xff]
        %v1753 = vld [vmem:[#allocation8 + $0x1e8] sm:$0xff]
        %v1754 = vld [vmem:[#allocation8 + $0x1f0] sm:$0xff]
        %v1755 = vld [vmem:[#allocation8 + $0x1f8] sm:$0xff]
        %v1756 = vld [vmem:[%s6] sm:$0xf]
        %v1758 = vlaneseq
        %v1759 = vshrl.u32 %v1758, 7
        %v1760 = vsub.s32 0, %v1759
        %v1761 = vrot.slane %v1756, %v1760
        %v1762 = vlaneseq
        %v1763 = vshrl.u32 %v1762, 7
        %v1764 = vsub.s32 1, %v1763
        %v1765 = vrot.slane %v1756, %v1764
        %v1766 = vlaneseq
        %v1767 = vshrl.u32 %v1766, 7
        %v1768 = vsub.s32 2, %v1767
        %v1769 = vrot.slane %v1756, %v1768
        %v1770 = vlaneseq
        %v1771 = vshrl.u32 %v1770, 7
        %v1772 = vsub.s32 3, %v1771
        %v1773 = vrot.slane %v1756, %v1772
        %v1779 = vunpack.c.l.b16 %v1691
        %v1780 = vunpack.c.h.b16 %v1691
        %v1781 = vpack.c.b16 %v1779, %v1779
        %v1782 = vpack.c.b16 %v1780, %v1780
        %v1849 = vunpack.c.l.b16 %v1692
        %v1850 = vunpack.c.h.b16 %v1692
        %v1851 = vunpack.c.l.b16 %v1693
        %v1852 = vunpack.c.h.b16 %v1693
        %v1853 = vunpack.c.l.b16 %v1694
        %v1854 = vunpack.c.h.b16 %v1694
        %v1855 = vunpack.c.l.b16 %v1695
        %v1856 = vunpack.c.h.b16 %v1695
        %v1857 = vunpack.c.l.b16 %v1696
        %v1858 = vunpack.c.h.b16 %v1696
        %v1859 = vunpack.c.l.b16 %v1697
        %v1860 = vunpack.c.h.b16 %v1697
        %v1861 = vunpack.c.l.b16 %v1698
        %v1862 = vunpack.c.h.b16 %v1698
        %v1863 = vunpack.c.l.b16 %v1699
        %v1864 = vunpack.c.h.b16 %v1699
        %v1865 = vunpack.c.l.b16 %v1700
        %v1866 = vunpack.c.h.b16 %v1700
        %v1867 = vunpack.c.l.b16 %v1701
        %v1868 = vunpack.c.h.b16 %v1701
        %v1869 = vunpack.c.l.b16 %v1702
        %v1870 = vunpack.c.h.b16 %v1702
        %v1871 = vunpack.c.l.b16 %v1703
        %v1872 = vunpack.c.h.b16 %v1703
        %v1873 = vunpack.c.l.b16 %v1704
        %v1874 = vunpack.c.h.b16 %v1704
        %v1875 = vunpack.c.l.b16 %v1705
        %v1876 = vunpack.c.h.b16 %v1705
        %v1877 = vunpack.c.l.b16 %v1706
        %v1878 = vunpack.c.h.b16 %v1706
        %v1879 = vunpack.c.l.b16 %v1707
        %v1880 = vunpack.c.h.b16 %v1707
        %v1881 = vunpack.c.l.b16 %v1708
        %v1882 = vunpack.c.h.b16 %v1708
        %v1883 = vunpack.c.l.b16 %v1709
        %v1884 = vunpack.c.h.b16 %v1709
        %v1885 = vunpack.c.l.b16 %v1710
        %v1886 = vunpack.c.h.b16 %v1710
        %v1887 = vunpack.c.l.b16 %v1711
        %v1888 = vunpack.c.h.b16 %v1711
        %v1889 = vunpack.c.l.b16 %v1712
        %v1890 = vunpack.c.h.b16 %v1712
        %v1891 = vunpack.c.l.b16 %v1713
        %v1892 = vunpack.c.h.b16 %v1713
        %v1893 = vunpack.c.l.b16 %v1714
        %v1894 = vunpack.c.h.b16 %v1714
        %v1895 = vunpack.c.l.b16 %v1715
        %v1896 = vunpack.c.h.b16 %v1715
        %v1897 = vunpack.c.l.b16 %v1716
        %v1898 = vunpack.c.h.b16 %v1716
        %v1899 = vunpack.c.l.b16 %v1717
        %v1900 = vunpack.c.h.b16 %v1717
        %v1901 = vunpack.c.l.b16 %v1718
        %v1902 = vunpack.c.h.b16 %v1718
        %v1903 = vunpack.c.l.b16 %v1719
        %v1904 = vunpack.c.h.b16 %v1719
        %v1905 = vunpack.c.l.b16 %v1720
        %v1906 = vunpack.c.h.b16 %v1720
        %v1907 = vunpack.c.l.b16 %v1721
        %v1908 = vunpack.c.h.b16 %v1721
        %v1909 = vunpack.c.l.b16 %v1722
        %v1910 = vunpack.c.h.b16 %v1722
        %v1911 = vunpack.c.l.b16 %v1723
        %v1912 = vunpack.c.h.b16 %v1723
        %v1913 = vunpack.c.l.b16 %v1724
        %v1914 = vunpack.c.h.b16 %v1724
        %v1915 = vunpack.c.l.b16 %v1725
        %v1916 = vunpack.c.h.b16 %v1725
        %v1917 = vunpack.c.l.b16 %v1726
        %v1918 = vunpack.c.h.b16 %v1726
        %v1919 = vunpack.c.l.b16 %v1727
        %v1920 = vunpack.c.h.b16 %v1727
        %v1921 = vunpack.c.l.b16 %v1728
        %v1922 = vunpack.c.h.b16 %v1728
        %v1923 = vunpack.c.l.b16 %v1729
        %v1924 = vunpack.c.h.b16 %v1729
        %v1925 = vunpack.c.l.b16 %v1730
        %v1926 = vunpack.c.h.b16 %v1730
        %v1927 = vunpack.c.l.b16 %v1731
        %v1928 = vunpack.c.h.b16 %v1731
        %v1929 = vunpack.c.l.b16 %v1732
        %v1930 = vunpack.c.h.b16 %v1732
        %v1931 = vunpack.c.l.b16 %v1733
        %v1932 = vunpack.c.h.b16 %v1733
        %v1933 = vunpack.c.l.b16 %v1734
        %v1934 = vunpack.c.h.b16 %v1734
        %v1935 = vunpack.c.l.b16 %v1735
        %v1936 = vunpack.c.h.b16 %v1735
        %v1937 = vunpack.c.l.b16 %v1736
        %v1938 = vunpack.c.h.b16 %v1736
        %v1939 = vunpack.c.l.b16 %v1737
        %v1940 = vunpack.c.h.b16 %v1737
        %v1941 = vunpack.c.l.b16 %v1738
        %v1942 = vunpack.c.h.b16 %v1738
        %v1943 = vunpack.c.l.b16 %v1739
        %v1944 = vunpack.c.h.b16 %v1739
        %v1945 = vunpack.c.l.b16 %v1740
        %v1946 = vunpack.c.h.b16 %v1740
        %v1947 = vunpack.c.l.b16 %v1741
        %v1948 = vunpack.c.h.b16 %v1741
        %v1949 = vunpack.c.l.b16 %v1742
        %v1950 = vunpack.c.h.b16 %v1742
        %v1951 = vunpack.c.l.b16 %v1743
        %v1952 = vunpack.c.h.b16 %v1743
        %v1953 = vunpack.c.l.b16 %v1744
        %v1954 = vunpack.c.h.b16 %v1744
        %v1955 = vunpack.c.l.b16 %v1745
        %v1956 = vunpack.c.h.b16 %v1745
        %v1957 = vunpack.c.l.b16 %v1746
        %v1958 = vunpack.c.h.b16 %v1746
        %v1959 = vunpack.c.l.b16 %v1747
        %v1960 = vunpack.c.h.b16 %v1747
        %v1961 = vunpack.c.l.b16 %v1748
        %v1962 = vunpack.c.h.b16 %v1748
        %v1963 = vunpack.c.l.b16 %v1749
        %v1964 = vunpack.c.h.b16 %v1749
        %v1965 = vunpack.c.l.b16 %v1750
        %v1966 = vunpack.c.h.b16 %v1750
        %v1967 = vunpack.c.l.b16 %v1751
        %v1968 = vunpack.c.h.b16 %v1751
        %v1969 = vunpack.c.l.b16 %v1752
        %v1970 = vunpack.c.h.b16 %v1752
        %v1971 = vunpack.c.l.b16 %v1753
        %v1972 = vunpack.c.h.b16 %v1753
        %v1973 = vunpack.c.l.b16 %v1754
        %v1974 = vunpack.c.h.b16 %v1754
        %v1975 = vunpack.c.l.b16 %v1755
        %v1976 = vunpack.c.h.b16 %v1755
        %v1977 = vpack.c.b16 %v1853, %v1849
        %v1978 = vpack.c.b16 %v1854, %v1850
        %v1979 = vpack.c.b16 %v1855, %v1851
        %v1980 = vpack.c.b16 %v1856, %v1852
        %v1981 = vpack.c.b16 %v1861, %v1857
        %v1982 = vpack.c.b16 %v1862, %v1858
        %v1983 = vpack.c.b16 %v1863, %v1859
        %v1984 = vpack.c.b16 %v1864, %v1860
        %v1985 = vpack.c.b16 %v1869, %v1865
        %v1986 = vpack.c.b16 %v1870, %v1866
        %v1987 = vpack.c.b16 %v1871, %v1867
        %v1988 = vpack.c.b16 %v1872, %v1868
        %v1989 = vpack.c.b16 %v1877, %v1873
        %v1990 = vpack.c.b16 %v1878, %v1874
        %v1991 = vpack.c.b16 %v1879, %v1875
        %v1992 = vpack.c.b16 %v1880, %v1876
        %v1993 = vpack.c.b16 %v1885, %v1881
        %v1994 = vpack.c.b16 %v1886, %v1882
        %v1995 = vpack.c.b16 %v1887, %v1883
        %v1996 = vpack.c.b16 %v1888, %v1884
        %v1997 = vpack.c.b16 %v1893, %v1889
        %v1998 = vpack.c.b16 %v1894, %v1890
        %v1999 = vpack.c.b16 %v1895, %v1891
        %v2000 = vpack.c.b16 %v1896, %v1892
        %v2001 = vpack.c.b16 %v1901, %v1897
        %v2002 = vpack.c.b16 %v1902, %v1898
        %v2003 = vpack.c.b16 %v1903, %v1899
        %v2004 = vpack.c.b16 %v1904, %v1900
        %v2005 = vpack.c.b16 %v1909, %v1905
        %v2006 = vpack.c.b16 %v1910, %v1906
        %v2007 = vpack.c.b16 %v1911, %v1907
        %v2008 = vpack.c.b16 %v1912, %v1908
        %v2009 = vpack.c.b16 %v1917, %v1913
        %v2010 = vpack.c.b16 %v1918, %v1914
        %v2011 = vpack.c.b16 %v1919, %v1915
        %v2012 = vpack.c.b16 %v1920, %v1916
        %v2013 = vpack.c.b16 %v1925, %v1921
        %v2014 = vpack.c.b16 %v1926, %v1922
        %v2015 = vpack.c.b16 %v1927, %v1923
        %v2016 = vpack.c.b16 %v1928, %v1924
        %v2017 = vpack.c.b16 %v1933, %v1929
        %v2018 = vpack.c.b16 %v1934, %v1930
        %v2019 = vpack.c.b16 %v1935, %v1931
        %v2020 = vpack.c.b16 %v1936, %v1932
        %v2021 = vpack.c.b16 %v1941, %v1937
        %v2022 = vpack.c.b16 %v1942, %v1938
        %v2023 = vpack.c.b16 %v1943, %v1939
        %v2024 = vpack.c.b16 %v1944, %v1940
        %v2025 = vpack.c.b16 %v1949, %v1945
        %v2026 = vpack.c.b16 %v1950, %v1946
        %v2027 = vpack.c.b16 %v1951, %v1947
        %v2028 = vpack.c.b16 %v1952, %v1948
        %v2029 = vpack.c.b16 %v1957, %v1953
        %v2030 = vpack.c.b16 %v1958, %v1954
        %v2031 = vpack.c.b16 %v1959, %v1955
        %v2032 = vpack.c.b16 %v1960, %v1956
        %v2033 = vpack.c.b16 %v1965, %v1961
        %v2034 = vpack.c.b16 %v1966, %v1962
        %v2035 = vpack.c.b16 %v1967, %v1963
        %v2036 = vpack.c.b16 %v1968, %v1964
        %v2037 = vpack.c.b16 %v1973, %v1969
        %v2038 = vpack.c.b16 %v1974, %v1970
        %v2039 = vpack.c.b16 %v1975, %v1971
        %v2040 = vpack.c.b16 %v1976, %v1972
        %2105 = vmatprep.subr.bf16.mxu0 %v1978
        %2106 = vmatpush1.bf16.msra.mxu0 %v1977
        %2107 = vmatprep.subr.bf16.mxu0 %v1982
        %2108 = vmatpush1.bf16.msra.mxu0 %v1981
        %2109 = vmatprep.subr.bf16.mxu0 %v1986
        %2110 = vmatpush1.bf16.msra.mxu0 %v1985
        %2111 = vmatprep.subr.bf16.mxu0 %v1990
        %2112 = vmatpush1.bf16.msra.mxu0 %v1989
        %2113 = vmatprep.subr.bf16.mxu0 %v1994
        %2114 = vmatpush1.bf16.msra.mxu0 %v1993
        %2115 = vmatprep.subr.bf16.mxu0 %v1998
        %2116 = vmatpush1.bf16.msra.mxu0 %v1997
        %2117 = vmatprep.subr.bf16.mxu0 %v2002
        %2118 = vmatpush1.bf16.msra.mxu0 %v2001
        %2119 = vmatprep.subr.bf16.mxu0 %v2006
        %2120 = vmatpush1.bf16.msra.mxu0 %v2005
        %2121 = vmatprep.subr.bf16.mxu0 %v2010
        %2122 = vmatpush1.bf16.msra.mxu0 %v2009
        %2123 = vmatprep.subr.bf16.mxu0 %v2014
        %2124 = vmatpush1.bf16.msra.mxu0 %v2013
        %2125 = vmatprep.subr.bf16.mxu0 %v2018
        %2126 = vmatpush1.bf16.msra.mxu0 %v2017
        %2127 = vmatprep.subr.bf16.mxu0 %v2022
        %2128 = vmatpush1.bf16.msra.mxu0 %v2021
        %2129 = vmatprep.subr.bf16.mxu0 %v2026
        %2130 = vmatpush1.bf16.msra.mxu0 %v2025
        %2131 = vmatprep.subr.bf16.mxu0 %v2030
        %2132 = vmatpush1.bf16.msra.mxu0 %v2029
        %2133 = vmatprep.subr.bf16.mxu0 %v2034
        %2134 = vmatpush1.bf16.msra.mxu0 %v2033
        %2135 = vmatprep.subr.bf16.mxu0 %v2038
        %2136 = vmatpush1.bf16.msra.mxu0 %v2037
        %2137 = vmatprep.mubr.bf16.mxu0 %v1782
        %2138 = vmatmul.mubr.bf16.gmra.mrb[0].mxu0 %v1781
        %v2139 = vpop.f32.mrb[0].mxu0
        %v2140 = vadd.f32 %v1761, %v2139
        %v2141 = vpop.f32.mrb[0].mxu0
        %v2142 = vadd.f32 %v1765, %v2141
        %v2143 = vpop.f32.mrb[0].mxu0
        %v2144 = vpop.f32.mrb[0].mxu0
        %2145 = vdwg.mxu0
        %2146 = vmatprep.subr.bf16.mxu0 %v1980
        %2147 = vmatpush1.bf16.msra.mxu0 %v1979
        %2148 = vmatprep.subr.bf16.mxu0 %v1984
        %2149 = vmatpush1.bf16.msra.mxu0 %v1983
        %2150 = vmatprep.subr.bf16.mxu0 %v1988
        %2151 = vmatpush1.bf16.msra.mxu0 %v1987
        %2152 = vmatprep.subr.bf16.mxu0 %v1992
        %2153 = vmatpush1.bf16.msra.mxu0 %v1991
        %2154 = vmatprep.subr.bf16.mxu0 %v1996
        %2155 = vmatpush1.bf16.msra.mxu0 %v1995
        %2156 = vmatprep.subr.bf16.mxu0 %v2000
        %2157 = vmatpush1.bf16.msra.mxu0 %v1999
        %2158 = vmatprep.subr.bf16.mxu0 %v2004
        %2159 = vmatpush1.bf16.msra.mxu0 %v2003
        %2160 = vmatprep.subr.bf16.mxu0 %v2008
        %2161 = vmatpush1.bf16.msra.mxu0 %v2007
        %2162 = vmatprep.subr.bf16.mxu0 %v2012
        %2163 = vmatpush1.bf16.msra.mxu0 %v2011
        %2164 = vmatprep.subr.bf16.mxu0 %v2016
        %2165 = vmatpush1.bf16.msra.mxu0 %v2015
        %2166 = vmatprep.subr.bf16.mxu0 %v2020
        %2167 = vmatpush1.bf16.msra.mxu0 %v2019
        %2168 = vmatprep.subr.bf16.mxu0 %v2024
        %2169 = vmatpush1.bf16.msra.mxu0 %v2023
        %2170 = vmatprep.subr.bf16.mxu0 %v2028
        %2171 = vmatpush1.bf16.msra.mxu0 %v2027
        %2172 = vmatprep.subr.bf16.mxu0 %v2032
        %2173 = vmatpush1.bf16.msra.mxu0 %v2031
        %2174 = vmatprep.subr.bf16.mxu0 %v2036
        %2175 = vmatpush1.bf16.msra.mxu0 %v2035
        %2176 = vmatprep.subr.bf16.mxu0 %v2040
        %2177 = vmatpush1.bf16.msra.mxu0 %v2039
        %2178 = vmatprep.mubr.bf16.mxu0 %v1782
        %2179 = vmatmul.mubr.bf16.gmra.mrb[0].mxu0 %v1781
        %v2180 = vpop.f32.mrb[0].mxu0
        %v2181 = vadd.f32 %v1769, %v2180
        %v2182 = vpop.f32.mrb[0].mxu0
        %v2183 = vadd.f32 %v1773, %v2182
        %v2184 = vpop.f32.mrb[0].mxu0
        %v2185 = vpop.f32.mrb[0].mxu0
        %2186 = vdwg.mxu0
        %v2187 = vxor.u32 %v2140, 2147483648
        %v2188 = vmul.f32 %v2187, 1.442695
        %v2189 = vpow.pop %v2188
        %v2190 = vadd.f32 %v2189, 1.0
        %v2191 = vrcp.pop %v2190
        %v2192 = vmul.f32 1.0, %v2191
        %v2193 = vxor.u32 %v2142, 2147483648
        %v2194 = vmul.f32 %v2193, 1.442695
        %v2195 = vpow.pop %v2194
        %v2196 = vadd.f32 %v2195, 1.0
        %v2197 = vrcp.pop %v2196
        %v2198 = vmul.f32 1.0, %v2197
        %v2199 = vtanh.pop %v2181
        %v2200 = vxor.u32 %v2183, 2147483648
        %v2201 = vmul.f32 %v2200, 1.442695
        %v2202 = vpow.pop %v2201
        %v2203 = vadd.f32 %v2202, 1.0
        %v2204 = vrcp.pop %v2203
        %v2205 = vmul.f32 1.0, %v2204
        %v2206 = vmul.f32 %v2198, %v1145
        %v2207 = vmul.f32 %v2192, %v2199
        %v2208 = vadd.f32 %v2206, %v2207
        %v2209 = vtanh.pop %v2208
        %v2210 = vmul.f32 %v2205, %v2209
        %v2211 = vsub.f32 %v2210, %v1142
        %2213 = vset.pattern.permute.xlu0 0
        %2214 = vperm.xlu0 %2213, %v1687
        %v2215 = vpop.permute.xlu0 %2214
        %v2217 = vmul.f32 %v2215, %v2211
        %v2218 = vadd.f32 %v1142, %v2217
        %v2219 = vsub.f32 %v2208, %v1145
        %v2220 = vmul.f32 %v2215, %v2219
        %v2221 = vadd.f32 %v1145, %v2220
        %s2222 = scalar_lea.vmem %s566, 24
        %v2223 = vld [vmem:[%s2222] sm:$0xf]
        %s2224 = scalar_lea.vmem %s586, 48
        %v2225 = vld [vmem:[%s2224] sm:$0xff]
        %2226 = vst [vmem:[#allocation7] sm:$0xf] %v2223
        %v2227 = vpack.c.bf16 %v1680, %v1680
        %2228 = vst [vmem:[#allocation7 + $0x4] sm:$0xf] %v2227
        %v2229 = vld [vmem:[#allocation7] sm:$0xff]
        %v2230 = vld [vmem:[#allocation10] sm:$0xff]
        %v2231 = vld [vmem:[#allocation10 + $0x8] sm:$0xff]
        %v2232 = vld [vmem:[#allocation10 + $0x10] sm:$0xff]
        %v2233 = vld [vmem:[#allocation10 + $0x18] sm:$0xff]
        %v2234 = vld [vmem:[#allocation10 + $0x20] sm:$0xff]
        %v2235 = vld [vmem:[#allocation10 + $0x28] sm:$0xff]
        %v2236 = vld [vmem:[#allocation10 + $0x30] sm:$0xff]
        %v2237 = vld [vmem:[#allocation10 + $0x38] sm:$0xff]
        %v2238 = vld [vmem:[#allocation10 + $0x40] sm:$0xff]
        %v2239 = vld [vmem:[#allocation10 + $0x48] sm:$0xff]
        %v2240 = vld [vmem:[#allocation10 + $0x50] sm:$0xff]
        %v2241 = vld [vmem:[#allocation10 + $0x58] sm:$0xff]
        %v2242 = vld [vmem:[#allocation10 + $0x60] sm:$0xff]
        %v2243 = vld [vmem:[#allocation10 + $0x68] sm:$0xff]
        %v2244 = vld [vmem:[#allocation10 + $0x70] sm:$0xff]
        %v2245 = vld [vmem:[#allocation10 + $0x78] sm:$0xff]
        %v2246 = vld [vmem:[#allocation10 + $0x80] sm:$0xff]
        %v2247 = vld [vmem:[#allocation10 + $0x88] sm:$0xff]
        %v2248 = vld [vmem:[#allocation10 + $0x90] sm:$0xff]
        %v2249 = vld [vmem:[#allocation10 + $0x98] sm:$0xff]
        %v2250 = vld [vmem:[#allocation10 + $0xa0] sm:$0xff]
        %v2251 = vld [vmem:[#allocation10 + $0xa8] sm:$0xff]
        %v2252 = vld [vmem:[#allocation10 + $0xb0] sm:$0xff]
        %v2253 = vld [vmem:[#allocation10 + $0xb8] sm:$0xff]
        %v2254 = vld [vmem:[#allocation10 + $0xc0] sm:$0xff]
        %v2255 = vld [vmem:[#allocation10 + $0xc8] sm:$0xff]
        %v2256 = vld [vmem:[#allocation10 + $0xd0] sm:$0xff]
        %v2257 = vld [vmem:[#allocation10 + $0xd8] sm:$0xff]
        %v2258 = vld [vmem:[#allocation10 + $0xe0] sm:$0xff]
        %v2259 = vld [vmem:[#allocation10 + $0xe8] sm:$0xff]
        %v2260 = vld [vmem:[#allocation10 + $0xf0] sm:$0xff]
        %v2261 = vld [vmem:[#allocation10 + $0xf8] sm:$0xff]
        %v2262 = vld [vmem:[#allocation10 + $0x100] sm:$0xff]
        %v2263 = vld [vmem:[#allocation10 + $0x108] sm:$0xff]
        %v2264 = vld [vmem:[#allocation10 + $0x110] sm:$0xff]
        %v2265 = vld [vmem:[#allocation10 + $0x118] sm:$0xff]
        %v2266 = vld [vmem:[#allocation10 + $0x120] sm:$0xff]
        %v2267 = vld [vmem:[#allocation10 + $0x128] sm:$0xff]
        %v2268 = vld [vmem:[#allocation10 + $0x130] sm:$0xff]
        %v2269 = vld [vmem:[#allocation10 + $0x138] sm:$0xff]
        %v2270 = vld [vmem:[#allocation10 + $0x140] sm:$0xff]
        %v2271 = vld [vmem:[#allocation10 + $0x148] sm:$0xff]
        %v2272 = vld [vmem:[#allocation10 + $0x150] sm:$0xff]
        %v2273 = vld [vmem:[#allocation10 + $0x158] sm:$0xff]
        %v2274 = vld [vmem:[#allocation10 + $0x160] sm:$0xff]
        %v2275 = vld [vmem:[#allocation10 + $0x168] sm:$0xff]
        %v2276 = vld [vmem:[#allocation10 + $0x170] sm:$0xff]
        %v2277 = vld [vmem:[#allocation10 + $0x178] sm:$0xff]
        %v2278 = vld [vmem:[#allocation10 + $0x180] sm:$0xff]
        %v2279 = vld [vmem:[#allocation10 + $0x188] sm:$0xff]
        %v2280 = vld [vmem:[#allocation10 + $0x190] sm:$0xff]
        %v2281 = vld [vmem:[#allocation10 + $0x198] sm:$0xff]
        %v2282 = vld [vmem:[#allocation10 + $0x1a0] sm:$0xff]
        %v2283 = vld [vmem:[#allocation10 + $0x1a8] sm:$0xff]
        %v2284 = vld [vmem:[#allocation10 + $0x1b0] sm:$0xff]
        %v2285 = vld [vmem:[#allocation10 + $0x1b8] sm:$0xff]
        %v2286 = vld [vmem:[#allocation10 + $0x1c0] sm:$0xff]
        %v2287 = vld [vmem:[#allocation10 + $0x1c8] sm:$0xff]
        %v2288 = vld [vmem:[#allocation10 + $0x1d0] sm:$0xff]
        %v2289 = vld [vmem:[#allocation10 + $0x1d8] sm:$0xff]
        %v2290 = vld [vmem:[#allocation10 + $0x1e0] sm:$0xff]
        %v2291 = vld [vmem:[#allocation10 + $0x1e8] sm:$0xff]
        %v2292 = vld [vmem:[#allocation10 + $0x1f0] sm:$0xff]
        %v2293 = vld [vmem:[#allocation10 + $0x1f8] sm:$0xff]
        %v2294 = vld [vmem:[%s8] sm:$0xf]
        %v2296 = vlaneseq
        %v2297 = vshrl.u32 %v2296, 7
        %v2298 = vsub.s32 0, %v2297
        %v2299 = vrot.slane %v2294, %v2298
        %v2300 = vlaneseq
        %v2301 = vshrl.u32 %v2300, 7
        %v2302 = vsub.s32 1, %v2301
        %v2303 = vrot.slane %v2294, %v2302
        %v2304 = vlaneseq
        %v2305 = vshrl.u32 %v2304, 7
        %v2306 = vsub.s32 2, %v2305
        %v2307 = vrot.slane %v2294, %v2306
        %v2308 = vlaneseq
        %v2309 = vshrl.u32 %v2308, 7
        %v2310 = vsub.s32 3, %v2309
        %v2311 = vrot.slane %v2294, %v2310
        %v2317 = vunpack.c.l.b16 %v2229
        %v2318 = vunpack.c.h.b16 %v2229
        %v2319 = vpack.c.b16 %v2317, %v2317
        %v2320 = vpack.c.b16 %v2318, %v2318
        %v2387 = vunpack.c.l.b16 %v2230
        %v2388 = vunpack.c.h.b16 %v2230
        %v2389 = vunpack.c.l.b16 %v2231
        %v2390 = vunpack.c.h.b16 %v2231
        %v2391 = vunpack.c.l.b16 %v2232
        %v2392 = vunpack.c.h.b16 %v2232
        %v2393 = vunpack.c.l.b16 %v2233
        %v2394 = vunpack.c.h.b16 %v2233
        %v2395 = vunpack.c.l.b16 %v2234
        %v2396 = vunpack.c.h.b16 %v2234
        %v2397 = vunpack.c.l.b16 %v2235
        %v2398 = vunpack.c.h.b16 %v2235
        %v2399 = vunpack.c.l.b16 %v2236
        %v2400 = vunpack.c.h.b16 %v2236
        %v2401 = vunpack.c.l.b16 %v2237
        %v2402 = vunpack.c.h.b16 %v2237
        %v2403 = vunpack.c.l.b16 %v2238
        %v2404 = vunpack.c.h.b16 %v2238
        %v2405 = vunpack.c.l.b16 %v2239
        %v2406 = vunpack.c.h.b16 %v2239
        %v2407 = vunpack.c.l.b16 %v2240
        %v2408 = vunpack.c.h.b16 %v2240
        %v2409 = vunpack.c.l.b16 %v2241
        %v2410 = vunpack.c.h.b16 %v2241
        %v2411 = vunpack.c.l.b16 %v2242
        %v2412 = vunpack.c.h.b16 %v2242
        %v2413 = vunpack.c.l.b16 %v2243
        %v2414 = vunpack.c.h.b16 %v2243
        %v2415 = vunpack.c.l.b16 %v2244
        %v2416 = vunpack.c.h.b16 %v2244
        %v2417 = vunpack.c.l.b16 %v2245
        %v2418 = vunpack.c.h.b16 %v2245
        %v2419 = vunpack.c.l.b16 %v2246
        %v2420 = vunpack.c.h.b16 %v2246
        %v2421 = vunpack.c.l.b16 %v2247
        %v2422 = vunpack.c.h.b16 %v2247
        %v2423 = vunpack.c.l.b16 %v2248
        %v2424 = vunpack.c.h.b16 %v2248
        %v2425 = vunpack.c.l.b16 %v2249
        %v2426 = vunpack.c.h.b16 %v2249
        %v2427 = vunpack.c.l.b16 %v2250
        %v2428 = vunpack.c.h.b16 %v2250
        %v2429 = vunpack.c.l.b16 %v2251
        %v2430 = vunpack.c.h.b16 %v2251
        %v2431 = vunpack.c.l.b16 %v2252
        %v2432 = vunpack.c.h.b16 %v2252
        %v2433 = vunpack.c.l.b16 %v2253
        %v2434 = vunpack.c.h.b16 %v2253
        %v2435 = vunpack.c.l.b16 %v2254
        %v2436 = vunpack.c.h.b16 %v2254
        %v2437 = vunpack.c.l.b16 %v2255
        %v2438 = vunpack.c.h.b16 %v2255
        %v2439 = vunpack.c.l.b16 %v2256
        %v2440 = vunpack.c.h.b16 %v2256
        %v2441 = vunpack.c.l.b16 %v2257
        %v2442 = vunpack.c.h.b16 %v2257
        %v2443 = vunpack.c.l.b16 %v2258
        %v2444 = vunpack.c.h.b16 %v2258
        %v2445 = vunpack.c.l.b16 %v2259
        %v2446 = vunpack.c.h.b16 %v2259
        %v2447 = vunpack.c.l.b16 %v2260
        %v2448 = vunpack.c.h.b16 %v2260
        %v2449 = vunpack.c.l.b16 %v2261
        %v2450 = vunpack.c.h.b16 %v2261
        %v2451 = vunpack.c.l.b16 %v2262
        %v2452 = vunpack.c.h.b16 %v2262
        %v2453 = vunpack.c.l.b16 %v2263
        %v2454 = vunpack.c.h.b16 %v2263
        %v2455 = vunpack.c.l.b16 %v2264
        %v2456 = vunpack.c.h.b16 %v2264
        %v2457 = vunpack.c.l.b16 %v2265
        %v2458 = vunpack.c.h.b16 %v2265
        %v2459 = vunpack.c.l.b16 %v2266
        %v2460 = vunpack.c.h.b16 %v2266
        %v2461 = vunpack.c.l.b16 %v2267
        %v2462 = vunpack.c.h.b16 %v2267
        %v2463 = vunpack.c.l.b16 %v2268
        %v2464 = vunpack.c.h.b16 %v2268
        %v2465 = vunpack.c.l.b16 %v2269
        %v2466 = vunpack.c.h.b16 %v2269
        %v2467 = vunpack.c.l.b16 %v2270
        %v2468 = vunpack.c.h.b16 %v2270
        %v2469 = vunpack.c.l.b16 %v2271
        %v2470 = vunpack.c.h.b16 %v2271
        %v2471 = vunpack.c.l.b16 %v2272
        %v2472 = vunpack.c.h.b16 %v2272
        %v2473 = vunpack.c.l.b16 %v2273
        %v2474 = vunpack.c.h.b16 %v2273
        %v2475 = vunpack.c.l.b16 %v2274
        %v2476 = vunpack.c.h.b16 %v2274
        %v2477 = vunpack.c.l.b16 %v2275
        %v2478 = vunpack.c.h.b16 %v2275
        %v2479 = vunpack.c.l.b16 %v2276
        %v2480 = vunpack.c.h.b16 %v2276
        %v2481 = vunpack.c.l.b16 %v2277
        %v2482 = vunpack.c.h.b16 %v2277
        %v2483 = vunpack.c.l.b16 %v2278
        %v2484 = vunpack.c.h.b16 %v2278
        %v2485 = vunpack.c.l.b16 %v2279
        %v2486 = vunpack.c.h.b16 %v2279
        %v2487 = vunpack.c.l.b16 %v2280
        %v2488 = vunpack.c.h.b16 %v2280
        %v2489 = vunpack.c.l.b16 %v2281
        %v2490 = vunpack.c.h.b16 %v2281
        %v2491 = vunpack.c.l.b16 %v2282
        %v2492 = vunpack.c.h.b16 %v2282
        %v2493 = vunpack.c.l.b16 %v2283
        %v2494 = vunpack.c.h.b16 %v2283
        %v2495 = vunpack.c.l.b16 %v2284
        %v2496 = vunpack.c.h.b16 %v2284
        %v2497 = vunpack.c.l.b16 %v2285
        %v2498 = vunpack.c.h.b16 %v2285
        %v2499 = vunpack.c.l.b16 %v2286
        %v2500 = vunpack.c.h.b16 %v2286
        %v2501 = vunpack.c.l.b16 %v2287
        %v2502 = vunpack.c.h.b16 %v2287
        %v2503 = vunpack.c.l.b16 %v2288
        %v2504 = vunpack.c.h.b16 %v2288
        %v2505 = vunpack.c.l.b16 %v2289
        %v2506 = vunpack.c.h.b16 %v2289
        %v2507 = vunpack.c.l.b16 %v2290
        %v2508 = vunpack.c.h.b16 %v2290
        %v2509 = vunpack.c.l.b16 %v2291
        %v2510 = vunpack.c.h.b16 %v2291
        %v2511 = vunpack.c.l.b16 %v2292
        %v2512 = vunpack.c.h.b16 %v2292
        %v2513 = vunpack.c.l.b16 %v2293
        %v2514 = vunpack.c.h.b16 %v2293
        %v2515 = vpack.c.b16 %v2391, %v2387
        %v2516 = vpack.c.b16 %v2392, %v2388
        %v2517 = vpack.c.b16 %v2393, %v2389
        %v2518 = vpack.c.b16 %v2394, %v2390
        %v2519 = vpack.c.b16 %v2399, %v2395
        %v2520 = vpack.c.b16 %v2400, %v2396
        %v2521 = vpack.c.b16 %v2401, %v2397
        %v2522 = vpack.c.b16 %v2402, %v2398
        %v2523 = vpack.c.b16 %v2407, %v2403
        %v2524 = vpack.c.b16 %v2408, %v2404
        %v2525 = vpack.c.b16 %v2409, %v2405
        %v2526 = vpack.c.b16 %v2410, %v2406
        %v2527 = vpack.c.b16 %v2415, %v2411
        %v2528 = vpack.c.b16 %v2416, %v2412
        %v2529 = vpack.c.b16 %v2417, %v2413
        %v2530 = vpack.c.b16 %v2418, %v2414
        %v2531 = vpack.c.b16 %v2423, %v2419
        %v2532 = vpack.c.b16 %v2424, %v2420
        %v2533 = vpack.c.b16 %v2425, %v2421
        %v2534 = vpack.c.b16 %v2426, %v2422
        %v2535 = vpack.c.b16 %v2431, %v2427
        %v2536 = vpack.c.b16 %v2432, %v2428
        %v2537 = vpack.c.b16 %v2433, %v2429
        %v2538 = vpack.c.b16 %v2434, %v2430
        %v2539 = vpack.c.b16 %v2439, %v2435
        %v2540 = vpack.c.b16 %v2440, %v2436
        %v2541 = vpack.c.b16 %v2441, %v2437
        %v2542 = vpack.c.b16 %v2442, %v2438
        %v2543 = vpack.c.b16 %v2447, %v2443
        %v2544 = vpack.c.b16 %v2448, %v2444
        %v2545 = vpack.c.b16 %v2449, %v2445
        %v2546 = vpack.c.b16 %v2450, %v2446
        %v2547 = vpack.c.b16 %v2455, %v2451
        %v2548 = vpack.c.b16 %v2456, %v2452
        %v2549 = vpack.c.b16 %v2457, %v2453
        %v2550 = vpack.c.b16 %v2458, %v2454
        %v2551 = vpack.c.b16 %v2463, %v2459
        %v2552 = vpack.c.b16 %v2464, %v2460
        %v2553 = vpack.c.b16 %v2465, %v2461
        %v2554 = vpack.c.b16 %v2466, %v2462
        %v2555 = vpack.c.b16 %v2471, %v2467
        %v2556 = vpack.c.b16 %v2472, %v2468
        %v2557 = vpack.c.b16 %v2473, %v2469
        %v2558 = vpack.c.b16 %v2474, %v2470
        %v2559 = vpack.c.b16 %v2479, %v2475
        %v2560 = vpack.c.b16 %v2480, %v2476
        %v2561 = vpack.c.b16 %v2481, %v2477
        %v2562 = vpack.c.b16 %v2482, %v2478
        %v2563 = vpack.c.b16 %v2487, %v2483
        %v2564 = vpack.c.b16 %v2488, %v2484
        %v2565 = vpack.c.b16 %v2489, %v2485
        %v2566 = vpack.c.b16 %v2490, %v2486
        %v2567 = vpack.c.b16 %v2495, %v2491
        %v2568 = vpack.c.b16 %v2496, %v2492
        %v2569 = vpack.c.b16 %v2497, %v2493
        %v2570 = vpack.c.b16 %v2498, %v2494
        %v2571 = vpack.c.b16 %v2503, %v2499
        %v2572 = vpack.c.b16 %v2504, %v2500
        %v2573 = vpack.c.b16 %v2505, %v2501
        %v2574 = vpack.c.b16 %v2506, %v2502
        %v2575 = vpack.c.b16 %v2511, %v2507
        %v2576 = vpack.c.b16 %v2512, %v2508
        %v2577 = vpack.c.b16 %v2513, %v2509
        %v2578 = vpack.c.b16 %v2514, %v2510
        %2643 = vmatprep.subr.bf16.mxu0 %v2516
        %2644 = vmatpush1.bf16.msra.mxu0 %v2515
        %2645 = vmatprep.subr.bf16.mxu0 %v2520
        %2646 = vmatpush1.bf16.msra.mxu0 %v2519
        %2647 = vmatprep.subr.bf16.mxu0 %v2524
        %2648 = vmatpush1.bf16.msra.mxu0 %v2523
        %2649 = vmatprep.subr.bf16.mxu0 %v2528
        %2650 = vmatpush1.bf16.msra.mxu0 %v2527
        %2651 = vmatprep.subr.bf16.mxu0 %v2532
        %2652 = vmatpush1.bf16.msra.mxu0 %v2531
        %2653 = vmatprep.subr.bf16.mxu0 %v2536
        %2654 = vmatpush1.bf16.msra.mxu0 %v2535
        %2655 = vmatprep.subr.bf16.mxu0 %v2540
        %2656 = vmatpush1.bf16.msra.mxu0 %v2539
        %2657 = vmatprep.subr.bf16.mxu0 %v2544
        %2658 = vmatpush1.bf16.msra.mxu0 %v2543
        %2659 = vmatprep.subr.bf16.mxu0 %v2548
        %2660 = vmatpush1.bf16.msra.mxu0 %v2547
        %2661 = vmatprep.subr.bf16.mxu0 %v2552
        %2662 = vmatpush1.bf16.msra.mxu0 %v2551
        %2663 = vmatprep.subr.bf16.mxu0 %v2556
        %2664 = vmatpush1.bf16.msra.mxu0 %v2555
        %2665 = vmatprep.subr.bf16.mxu0 %v2560
        %2666 = vmatpush1.bf16.msra.mxu0 %v2559
        %2667 = vmatprep.subr.bf16.mxu0 %v2564
        %2668 = vmatpush1.bf16.msra.mxu0 %v2563
        %2669 = vmatprep.subr.bf16.mxu0 %v2568
        %2670 = vmatpush1.bf16.msra.mxu0 %v2567
        %2671 = vmatprep.subr.bf16.mxu0 %v2572
        %2672 = vmatpush1.bf16.msra.mxu0 %v2571
        %2673 = vmatprep.subr.bf16.mxu0 %v2576
        %2674 = vmatpush1.bf16.msra.mxu0 %v2575
        %2675 = vmatprep.mubr.bf16.mxu0 %v2320
        %2676 = vmatmul.mubr.bf16.gmra.mrb[0].mxu0 %v2319
        %v2677 = vpop.f32.mrb[0].mxu0
        %v2678 = vadd.f32 %v2299, %v2677
        %v2679 = vpop.f32.mrb[0].mxu0
        %v2680 = vadd.f32 %v2303, %v2679
        %v2681 = vpop.f32.mrb[0].mxu0
        %v2682 = vpop.f32.mrb[0].mxu0
        %2683 = vdwg.mxu0
        %2684 = vmatprep.subr.bf16.mxu0 %v2518
        %2685 = vmatpush1.bf16.msra.mxu0 %v2517
        %2686 = vmatprep.subr.bf16.mxu0 %v2522
        %2687 = vmatpush1.bf16.msra.mxu0 %v2521
        %2688 = vmatprep.subr.bf16.mxu0 %v2526
        %2689 = vmatpush1.bf16.msra.mxu0 %v2525
        %2690 = vmatprep.subr.bf16.mxu0 %v2530
        %2691 = vmatpush1.bf16.msra.mxu0 %v2529
        %2692 = vmatprep.subr.bf16.mxu0 %v2534
        %2693 = vmatpush1.bf16.msra.mxu0 %v2533
        %2694 = vmatprep.subr.bf16.mxu0 %v2538
        %2695 = vmatpush1.bf16.msra.mxu0 %v2537
        %2696 = vmatprep.subr.bf16.mxu0 %v2542
        %2697 = vmatpush1.bf16.msra.mxu0 %v2541
        %2698 = vmatprep.subr.bf16.mxu0 %v2546
        %2699 = vmatpush1.bf16.msra.mxu0 %v2545
        %2700 = vmatprep.subr.bf16.mxu0 %v2550
        %2701 = vmatpush1.bf16.msra.mxu0 %v2549
        %2702 = vmatprep.subr.bf16.mxu0 %v2554
        %2703 = vmatpush1.bf16.msra.mxu0 %v2553
        %2704 = vmatprep.subr.bf16.mxu0 %v2558
        %2705 = vmatpush1.bf16.msra.mxu0 %v2557
        %2706 = vmatprep.subr.bf16.mxu0 %v2562
        %2707 = vmatpush1.bf16.msra.mxu0 %v2561
        %2708 = vmatprep.subr.bf16.mxu0 %v2566
        %2709 = vmatpush1.bf16.msra.mxu0 %v2565
        %2710 = vmatprep.subr.bf16.mxu0 %v2570
        %2711 = vmatpush1.bf16.msra.mxu0 %v2569
        %2712 = vmatprep.subr.bf16.mxu0 %v2574
        %2713 = vmatpush1.bf16.msra.mxu0 %v2573
        %2714 = vmatprep.subr.bf16.mxu0 %v2578
        %2715 = vmatpush1.bf16.msra.mxu0 %v2577
        %2716 = vmatprep.mubr.bf16.mxu0 %v2320
        %2717 = vmatmul.mubr.bf16.gmra.mrb[0].mxu0 %v2319
        %v2718 = vpop.f32.mrb[0].mxu0
        %v2719 = vadd.f32 %v2307, %v2718
        %v2720 = vpop.f32.mrb[0].mxu0
        %v2721 = vadd.f32 %v2311, %v2720
        %v2722 = vpop.f32.mrb[0].mxu0
        %v2723 = vpop.f32.mrb[0].mxu0
        %2724 = vdwg.mxu0
        %v2725 = vxor.u32 %v2678, 2147483648
        %v2726 = vmul.f32 %v2725, 1.442695
        %v2727 = vpow.pop %v2726
        %v2728 = vadd.f32 %v2727, 1.0
        %v2729 = vrcp.pop %v2728
        %v2730 = vmul.f32 1.0, %v2729
        %v2731 = vxor.u32 %v2680, 2147483648
        %v2732 = vmul.f32 %v2731, 1.442695
        %v2733 = vpow.pop %v2732
        %v2734 = vadd.f32 %v2733, 1.0
        %v2735 = vrcp.pop %v2734
        %v2736 = vmul.f32 1.0, %v2735
        %v2737 = vtanh.pop %v2719
        %v2738 = vxor.u32 %v2721, 2147483648
        %v2739 = vmul.f32 %v2738, 1.442695
        %v2740 = vpow.pop %v2739
        %v2741 = vadd.f32 %v2740, 1.0
        %v2742 = vrcp.pop %v2741
        %v2743 = vmul.f32 1.0, %v2742
        %v2744 = vmul.f32 %v2736, %v1683
        %v2745 = vmul.f32 %v2730, %v2737
        %v2746 = vadd.f32 %v2744, %v2745
        %v2747 = vtanh.pop %v2746
        %v2748 = vmul.f32 %v2743, %v2747
        %v2749 = vsub.f32 %v2748, %v1680
        %2751 = vset.pattern.permute.xlu0 0
        %2752 = vperm.xlu0 %2751, %v2225
        %v2753 = vpop.permute.xlu0 %2752
        %v2755 = vmul.f32 %v2753, %v2749
        %v2756 = vadd.f32 %v1680, %v2755
        %v2757 = vsub.f32 %v2746, %v1683
        %v2758 = vmul.f32 %v2753, %v2757
        %v2759 = vadd.f32 %v1683, %v2758
        %s2760 = scalar_lea.vmem %s556, 8
        %v2761 = vld [vmem:[%s2760] sm:$0xf]
        %s2762 = scalar_lea.vmem %s576, 16
        %v2763 = vld [vmem:[%s2762] sm:$0xff]
        %2764 = vst [vmem:[#allocation6] sm:$0xf] %v2761
        %v2765 = vpack.c.bf16 %v2218, %v2218
        %2766 = vst [vmem:[#allocation6 + $0x4] sm:$0xf] %v2765
        %v2767 = vld [vmem:[#allocation6] sm:$0xff]
        %v2768 = vld [vmem:[#allocation8] sm:$0xff]
        %v2769 = vld [vmem:[#allocation8 + $0x8] sm:$0xff]
        %v2770 = vld [vmem:[#allocation8 + $0x10] sm:$0xff]
        %v2771 = vld [vmem:[#allocation8 + $0x18] sm:$0xff]
        %v2772 = vld [vmem:[#allocation8 + $0x20] sm:$0xff]
        %v2773 = vld [vmem:[#allocation8 + $0x28] sm:$0xff]
        %v2774 = vld [vmem:[#allocation8 + $0x30] sm:$0xff]
        %v2775 = vld [vmem:[#allocation8 + $0x38] sm:$0xff]
        %v2776 = vld [vmem:[#allocation8 + $0x40] sm:$0xff]
        %v2777 = vld [vmem:[#allocation8 + $0x48] sm:$0xff]
        %v2778 = vld [vmem:[#allocation8 + $0x50] sm:$0xff]
        %v2779 = vld [vmem:[#allocation8 + $0x58] sm:$0xff]
        %v2780 = vld [vmem:[#allocation8 + $0x60] sm:$0xff]
        %v2781 = vld [vmem:[#allocation8 + $0x68] sm:$0xff]
        %v2782 = vld [vmem:[#allocation8 + $0x70] sm:$0xff]
        %v2783 = vld [vmem:[#allocation8 + $0x78] sm:$0xff]
        %v2784 = vld [vmem:[#allocation8 + $0x80] sm:$0xff]
        %v2785 = vld [vmem:[#allocation8 + $0x88] sm:$0xff]
        %v2786 = vld [vmem:[#allocation8 + $0x90] sm:$0xff]
        %v2787 = vld [vmem:[#allocation8 + $0x98] sm:$0xff]
        %v2788 = vld [vmem:[#allocation8 + $0xa0] sm:$0xff]
        %v2789 = vld [vmem:[#allocation8 + $0xa8] sm:$0xff]
        %v2790 = vld [vmem:[#allocation8 + $0xb0] sm:$0xff]
        %v2791 = vld [vmem:[#allocation8 + $0xb8] sm:$0xff]
        %v2792 = vld [vmem:[#allocation8 + $0xc0] sm:$0xff]
        %v2793 = vld [vmem:[#allocation8 + $0xc8] sm:$0xff]
        %v2794 = vld [vmem:[#allocation8 + $0xd0] sm:$0xff]
        %v2795 = vld [vmem:[#allocation8 + $0xd8] sm:$0xff]
        %v2796 = vld [vmem:[#allocation8 + $0xe0] sm:$0xff]
        %v2797 = vld [vmem:[#allocation8 + $0xe8] sm:$0xff]
        %v2798 = vld [vmem:[#allocation8 + $0xf0] sm:$0xff]
        %v2799 = vld [vmem:[#allocation8 + $0xf8] sm:$0xff]
        %v2800 = vld [vmem:[#allocation8 + $0x100] sm:$0xff]
        %v2801 = vld [vmem:[#allocation8 + $0x108] sm:$0xff]
        %v2802 = vld [vmem:[#allocation8 + $0x110] sm:$0xff]
        %v2803 = vld [vmem:[#allocation8 + $0x118] sm:$0xff]
        %v2804 = vld [vmem:[#allocation8 + $0x120] sm:$0xff]
        %v2805 = vld [vmem:[#allocation8 + $0x128] sm:$0xff]
        %v2806 = vld [vmem:[#allocation8 + $0x130] sm:$0xff]
        %v2807 = vld [vmem:[#allocation8 + $0x138] sm:$0xff]
        %v2808 = vld [vmem:[#allocation8 + $0x140] sm:$0xff]
        %v2809 = vld [vmem:[#allocation8 + $0x148] sm:$0xff]
        %v2810 = vld [vmem:[#allocation8 + $0x150] sm:$0xff]
        %v2811 = vld [vmem:[#allocation8 + $0x158] sm:$0xff]
        %v2812 = vld [vmem:[#allocation8 + $0x160] sm:$0xff]
        %v2813 = vld [vmem:[#allocation8 + $0x168] sm:$0xff]
        %v2814 = vld [vmem:[#allocation8 + $0x170] sm:$0xff]
        %v2815 = vld [vmem:[#allocation8 + $0x178] sm:$0xff]
        %v2816 = vld [vmem:[#allocation8 + $0x180] sm:$0xff]
        %v2817 = vld [vmem:[#allocation8 + $0x188] sm:$0xff]
        %v2818 = vld [vmem:[#allocation8 + $0x190] sm:$0xff]
        %v2819 = vld [vmem:[#allocation8 + $0x198] sm:$0xff]
        %v2820 = vld [vmem:[#allocation8 + $0x1a0] sm:$0xff]
        %v2821 = vld [vmem:[#allocation8 + $0x1a8] sm:$0xff]
        %v2822 = vld [vmem:[#allocation8 + $0x1b0] sm:$0xff]
        %v2823 = vld [vmem:[#allocation8 + $0x1b8] sm:$0xff]
        %v2824 = vld [vmem:[#allocation8 + $0x1c0] sm:$0xff]
        %v2825 = vld [vmem:[#allocation8 + $0x1c8] sm:$0xff]
        %v2826 = vld [vmem:[#allocation8 + $0x1d0] sm:$0xff]
        %v2827 = vld [vmem:[#allocation8 + $0x1d8] sm:$0xff]
        %v2828 = vld [vmem:[#allocation8 + $0x1e0] sm:$0xff]
        %v2829 = vld [vmem:[#allocation8 + $0x1e8] sm:$0xff]
        %v2830 = vld [vmem:[#allocation8 + $0x1f0] sm:$0xff]
        %v2831 = vld [vmem:[#allocation8 + $0x1f8] sm:$0xff]
        %v2832 = vld [vmem:[%s6] sm:$0xf]
        %v2834 = vlaneseq
        %v2835 = vshrl.u32 %v2834, 7
        %v2836 = vsub.s32 0, %v2835
        %v2837 = vrot.slane %v2832, %v2836
        %v2838 = vlaneseq
        %v2839 = vshrl.u32 %v2838, 7
        %v2840 = vsub.s32 1, %v2839
        %v2841 = vrot.slane %v2832, %v2840
        %v2842 = vlaneseq
        %v2843 = vshrl.u32 %v2842, 7
        %v2844 = vsub.s32 2, %v2843
        %v2845 = vrot.slane %v2832, %v2844
        %v2846 = vlaneseq
        %v2847 = vshrl.u32 %v2846, 7
        %v2848 = vsub.s32 3, %v2847
        %v2849 = vrot.slane %v2832, %v2848
        %v2855 = vunpack.c.l.b16 %v2767
        %v2856 = vunpack.c.h.b16 %v2767
        %v2857 = vpack.c.b16 %v2855, %v2855
        %v2858 = vpack.c.b16 %v2856, %v2856
        %v2925 = vunpack.c.l.b16 %v2768
        %v2926 = vunpack.c.h.b16 %v2768
        %v2927 = vunpack.c.l.b16 %v2769
        %v2928 = vunpack.c.h.b16 %v2769
        %v2929 = vunpack.c.l.b16 %v2770
        %v2930 = vunpack.c.h.b16 %v2770
        %v2931 = vunpack.c.l.b16 %v2771
        %v2932 = vunpack.c.h.b16 %v2771
        %v2933 = vunpack.c.l.b16 %v2772
        %v2934 = vunpack.c.h.b16 %v2772
        %v2935 = vunpack.c.l.b16 %v2773
        %v2936 = vunpack.c.h.b16 %v2773
        %v2937 = vunpack.c.l.b16 %v2774
        %v2938 = vunpack.c.h.b16 %v2774
        %v2939 = vunpack.c.l.b16 %v2775
        %v2940 = vunpack.c.h.b16 %v2775
        %v2941 = vunpack.c.l.b16 %v2776
        %v2942 = vunpack.c.h.b16 %v2776
        %v2943 = vunpack.c.l.b16 %v2777
        %v2944 = vunpack.c.h.b16 %v2777
        %v2945 = vunpack.c.l.b16 %v2778
        %v2946 = vunpack.c.h.b16 %v2778
        %v2947 = vunpack.c.l.b16 %v2779
        %v2948 = vunpack.c.h.b16 %v2779
        %v2949 = vunpack.c.l.b16 %v2780
        %v2950 = vunpack.c.h.b16 %v2780
        %v2951 = vunpack.c.l.b16 %v2781
        %v2952 = vunpack.c.h.b16 %v2781
        %v2953 = vunpack.c.l.b16 %v2782
        %v2954 = vunpack.c.h.b16 %v2782
        %v2955 = vunpack.c.l.b16 %v2783
        %v2956 = vunpack.c.h.b16 %v2783
        %v2957 = vunpack.c.l.b16 %v2784
        %v2958 = vunpack.c.h.b16 %v2784
        %v2959 = vunpack.c.l.b16 %v2785
        %v2960 = vunpack.c.h.b16 %v2785
        %v2961 = vunpack.c.l.b16 %v2786
        %v2962 = vunpack.c.h.b16 %v2786
        %v2963 = vunpack.c.l.b16 %v2787
        %v2964 = vunpack.c.h.b16 %v2787
        %v2965 = vunpack.c.l.b16 %v2788
        %v2966 = vunpack.c.h.b16 %v2788
        %v2967 = vunpack.c.l.b16 %v2789
        %v2968 = vunpack.c.h.b16 %v2789
        %v2969 = vunpack.c.l.b16 %v2790
        %v2970 = vunpack.c.h.b16 %v2790
        %v2971 = vunpack.c.l.b16 %v2791
        %v2972 = vunpack.c.h.b16 %v2791
        %v2973 = vunpack.c.l.b16 %v2792
        %v2974 = vunpack.c.h.b16 %v2792
        %v2975 = vunpack.c.l.b16 %v2793
        %v2976 = vunpack.c.h.b16 %v2793
        %v2977 = vunpack.c.l.b16 %v2794
        %v2978 = vunpack.c.h.b16 %v2794
        %v2979 = vunpack.c.l.b16 %v2795
        %v2980 = vunpack.c.h.b16 %v2795
        %v2981 = vunpack.c.l.b16 %v2796
        %v2982 = vunpack.c.h.b16 %v2796
        %v2983 = vunpack.c.l.b16 %v2797
        %v2984 = vunpack.c.h.b16 %v2797
        %v2985 = vunpack.c.l.b16 %v2798
        %v2986 = vunpack.c.h.b16 %v2798
        %v2987 = vunpack.c.l.b16 %v2799
        %v2988 = vunpack.c.h.b16 %v2799
        %v2989 = vunpack.c.l.b16 %v2800
        %v2990 = vunpack.c.h.b16 %v2800
        %v2991 = vunpack.c.l.b16 %v2801
        %v2992 = vunpack.c.h.b16 %v2801
        %v2993 = vunpack.c.l.b16 %v2802
        %v2994 = vunpack.c.h.b16 %v2802
        %v2995 = vunpack.c.l.b16 %v2803
        %v2996 = vunpack.c.h.b16 %v2803
        %v2997 = vunpack.c.l.b16 %v2804
        %v2998 = vunpack.c.h.b16 %v2804
        %v2999 = vunpack.c.l.b16 %v2805
        %v3000 = vunpack.c.h.b16 %v2805
        %v3001 = vunpack.c.l.b16 %v2806
        %v3002 = vunpack.c.h.b16 %v2806
        %v3003 = vunpack.c.l.b16 %v2807
        %v3004 = vunpack.c.h.b16 %v2807
        %v3005 = vunpack.c.l.b16 %v2808
        %v3006 = vunpack.c.h.b16 %v2808
        %v3007 = vunpack.c.l.b16 %v2809
        %v3008 = vunpack.c.h.b16 %v2809
        %v3009 = vunpack.c.l.b16 %v2810
        %v3010 = vunpack.c.h.b16 %v2810
        %v3011 = vunpack.c.l.b16 %v2811
        %v3012 = vunpack.c.h.b16 %v2811
        %v3013 = vunpack.c.l.b16 %v2812
        %v3014 = vunpack.c.h.b16 %v2812
        %v3015 = vunpack.c.l.b16 %v2813
        %v3016 = vunpack.c.h.b16 %v2813
        %v3017 = vunpack.c.l.b16 %v2814
        %v3018 = vunpack.c.h.b16 %v2814
        %v3019 = vunpack.c.l.b16 %v2815
        %v3020 = vunpack.c.h.b16 %v2815
        %v3021 = vunpack.c.l.b16 %v2816
        %v3022 = vunpack.c.h.b16 %v2816
        %v3023 = vunpack.c.l.b16 %v2817
        %v3024 = vunpack.c.h.b16 %v2817
        %v3025 = vunpack.c.l.b16 %v2818
        %v3026 = vunpack.c.h.b16 %v2818
        %v3027 = vunpack.c.l.b16 %v2819
        %v3028 = vunpack.c.h.b16 %v2819
        %v3029 = vunpack.c.l.b16 %v2820
        %v3030 = vunpack.c.h.b16 %v2820
        %v3031 = vunpack.c.l.b16 %v2821
        %v3032 = vunpack.c.h.b16 %v2821
        %v3033 = vunpack.c.l.b16 %v2822
        %v3034 = vunpack.c.h.b16 %v2822
        %v3035 = vunpack.c.l.b16 %v2823
        %v3036 = vunpack.c.h.b16 %v2823
        %v3037 = vunpack.c.l.b16 %v2824
        %v3038 = vunpack.c.h.b16 %v2824
        %v3039 = vunpack.c.l.b16 %v2825
        %v3040 = vunpack.c.h.b16 %v2825
        %v3041 = vunpack.c.l.b16 %v2826
        %v3042 = vunpack.c.h.b16 %v2826
        %v3043 = vunpack.c.l.b16 %v2827
        %v3044 = vunpack.c.h.b16 %v2827
        %v3045 = vunpack.c.l.b16 %v2828
        %v3046 = vunpack.c.h.b16 %v2828
        %v3047 = vunpack.c.l.b16 %v2829
        %v3048 = vunpack.c.h.b16 %v2829
        %v3049 = vunpack.c.l.b16 %v2830
        %v3050 = vunpack.c.h.b16 %v2830
        %v3051 = vunpack.c.l.b16 %v2831
        %v3052 = vunpack.c.h.b16 %v2831
        %v3053 = vpack.c.b16 %v2929, %v2925
        %v3054 = vpack.c.b16 %v2930, %v2926
        %v3055 = vpack.c.b16 %v2931, %v2927
        %v3056 = vpack.c.b16 %v2932, %v2928
        %v3057 = vpack.c.b16 %v2937, %v2933
        %v3058 = vpack.c.b16 %v2938, %v2934
        %v3059 = vpack.c.b16 %v2939, %v2935
        %v3060 = vpack.c.b16 %v2940, %v2936
        %v3061 = vpack.c.b16 %v2945, %v2941
        %v3062 = vpack.c.b16 %v2946, %v2942
        %v3063 = vpack.c.b16 %v2947, %v2943
        %v3064 = vpack.c.b16 %v2948, %v2944
        %v3065 = vpack.c.b16 %v2953, %v2949
        %v3066 = vpack.c.b16 %v2954, %v2950
        %v3067 = vpack.c.b16 %v2955, %v2951
        %v3068 = vpack.c.b16 %v2956, %v2952
        %v3069 = vpack.c.b16 %v2961, %v2957
        %v3070 = vpack.c.b16 %v2962, %v2958
        %v3071 = vpack.c.b16 %v2963, %v2959
        %v3072 = vpack.c.b16 %v2964, %v2960
        %v3073 = vpack.c.b16 %v2969, %v2965
        %v3074 = vpack.c.b16 %v2970, %v2966
        %v3075 = vpack.c.b16 %v2971, %v2967
        %v3076 = vpack.c.b16 %v2972, %v2968
        %v3077 = vpack.c.b16 %v2977, %v2973
        %v3078 = vpack.c.b16 %v2978, %v2974
        %v3079 = vpack.c.b16 %v2979, %v2975
        %v3080 = vpack.c.b16 %v2980, %v2976
        %v3081 = vpack.c.b16 %v2985, %v2981
        %v3082 = vpack.c.b16 %v2986, %v2982
        %v3083 = vpack.c.b16 %v2987, %v2983
        %v3084 = vpack.c.b16 %v2988, %v2984
        %v3085 = vpack.c.b16 %v2993, %v2989
        %v3086 = vpack.c.b16 %v2994, %v2990
        %v3087 = vpack.c.b16 %v2995, %v2991
        %v3088 = vpack.c.b16 %v2996, %v2992
        %v3089 = vpack.c.b16 %v3001, %v2997
        %v3090 = vpack.c.b16 %v3002, %v2998
        %v3091 = vpack.c.b16 %v3003, %v2999
        %v3092 = vpack.c.b16 %v3004, %v3000
        %v3093 = vpack.c.b16 %v3009, %v3005
        %v3094 = vpack.c.b16 %v3010, %v3006
        %v3095 = vpack.c.b16 %v3011, %v3007
        %v3096 = vpack.c.b16 %v3012, %v3008
        %v3097 = vpack.c.b16 %v3017, %v3013
        %v3098 = vpack.c.b16 %v3018, %v3014
        %v3099 = vpack.c.b16 %v3019, %v3015
        %v3100 = vpack.c.b16 %v3020, %v3016
        %v3101 = vpack.c.b16 %v3025, %v3021
        %v3102 = vpack.c.b16 %v3026, %v3022
        %v3103 = vpack.c.b16 %v3027, %v3023
        %v3104 = vpack.c.b16 %v3028, %v3024
        %v3105 = vpack.c.b16 %v3033, %v3029
        %v3106 = vpack.c.b16 %v3034, %v3030
        %v3107 = vpack.c.b16 %v3035, %v3031
        %v3108 = vpack.c.b16 %v3036, %v3032
        %v3109 = vpack.c.b16 %v3041, %v3037
        %v3110 = vpack.c.b16 %v3042, %v3038
        %v3111 = vpack.c.b16 %v3043, %v3039
        %v3112 = vpack.c.b16 %v3044, %v3040
        %v3113 = vpack.c.b16 %v3049, %v3045
        %v3114 = vpack.c.b16 %v3050, %v3046
        %v3115 = vpack.c.b16 %v3051, %v3047
        %v3116 = vpack.c.b16 %v3052, %v3048
        %3181 = vmatprep.subr.bf16.mxu0 %v3054
        %3182 = vmatpush1.bf16.msra.mxu0 %v3053
        %3183 = vmatprep.subr.bf16.mxu0 %v3058
        %3184 = vmatpush1.bf16.msra.mxu0 %v3057
        %3185 = vmatprep.subr.bf16.mxu0 %v3062
        %3186 = vmatpush1.bf16.msra.mxu0 %v3061
        %3187 = vmatprep.subr.bf16.mxu0 %v3066
        %3188 = vmatpush1.bf16.msra.mxu0 %v3065
        %3189 = vmatprep.subr.bf16.mxu0 %v3070
        %3190 = vmatpush1.bf16.msra.mxu0 %v3069
        %3191 = vmatprep.subr.bf16.mxu0 %v3074
        %3192 = vmatpush1.bf16.msra.mxu0 %v3073
        %3193 = vmatprep.subr.bf16.mxu0 %v3078
        %3194 = vmatpush1.bf16.msra.mxu0 %v3077
        %3195 = vmatprep.subr.bf16.mxu0 %v3082
        %3196 = vmatpush1.bf16.msra.mxu0 %v3081
        %3197 = vmatprep.subr.bf16.mxu0 %v3086
        %3198 = vmatpush1.bf16.msra.mxu0 %v3085
        %3199 = vmatprep.subr.bf16.mxu0 %v3090
        %3200 = vmatpush1.bf16.msra.mxu0 %v3089
        %3201 = vmatprep.subr.bf16.mxu0 %v3094
        %3202 = vmatpush1.bf16.msra.mxu0 %v3093
        %3203 = vmatprep.subr.bf16.mxu0 %v3098
        %3204 = vmatpush1.bf16.msra.mxu0 %v3097
        %3205 = vmatprep.subr.bf16.mxu0 %v3102
        %3206 = vmatpush1.bf16.msra.mxu0 %v3101
        %3207 = vmatprep.subr.bf16.mxu0 %v3106
        %3208 = vmatpush1.bf16.msra.mxu0 %v3105
        %3209 = vmatprep.subr.bf16.mxu0 %v3110
        %3210 = vmatpush1.bf16.msra.mxu0 %v3109
        %3211 = vmatprep.subr.bf16.mxu0 %v3114
        %3212 = vmatpush1.bf16.msra.mxu0 %v3113
        %3213 = vmatprep.mubr.bf16.mxu0 %v2858
        %3214 = vmatmul.mubr.bf16.gmra.mrb[0].mxu0 %v2857
        %v3215 = vpop.f32.mrb[0].mxu0
        %v3216 = vadd.f32 %v2837, %v3215
        %v3217 = vpop.f32.mrb[0].mxu0
        %v3218 = vadd.f32 %v2841, %v3217
        %v3219 = vpop.f32.mrb[0].mxu0
        %v3220 = vpop.f32.mrb[0].mxu0
        %3221 = vdwg.mxu0
        %3222 = vmatprep.subr.bf16.mxu0 %v3056
        %3223 = vmatpush1.bf16.msra.mxu0 %v3055
        %3224 = vmatprep.subr.bf16.mxu0 %v3060
        %3225 = vmatpush1.bf16.msra.mxu0 %v3059
        %3226 = vmatprep.subr.bf16.mxu0 %v3064
        %3227 = vmatpush1.bf16.msra.mxu0 %v3063
        %3228 = vmatprep.subr.bf16.mxu0 %v3068
        %3229 = vmatpush1.bf16.msra.mxu0 %v3067
        %3230 = vmatprep.subr.bf16.mxu0 %v3072
        %3231 = vmatpush1.bf16.msra.mxu0 %v3071
        %3232 = vmatprep.subr.bf16.mxu0 %v3076
        %3233 = vmatpush1.bf16.msra.mxu0 %v3075
        %3234 = vmatprep.subr.bf16.mxu0 %v3080
        %3235 = vmatpush1.bf16.msra.mxu0 %v3079
        %3236 = vmatprep.subr.bf16.mxu0 %v3084
        %3237 = vmatpush1.bf16.msra.mxu0 %v3083
        %3238 = vmatprep.subr.bf16.mxu0 %v3088
        %3239 = vmatpush1.bf16.msra.mxu0 %v3087
        %3240 = vmatprep.subr.bf16.mxu0 %v3092
        %3241 = vmatpush1.bf16.msra.mxu0 %v3091
        %3242 = vmatprep.subr.bf16.mxu0 %v3096
        %3243 = vmatpush1.bf16.msra.mxu0 %v3095
        %3244 = vmatprep.subr.bf16.mxu0 %v3100
        %3245 = vmatpush1.bf16.msra.mxu0 %v3099
        %3246 = vmatprep.subr.bf16.mxu0 %v3104
        %3247 = vmatpush1.bf16.msra.mxu0 %v3103
        %3248 = vmatprep.subr.bf16.mxu0 %v3108
        %3249 = vmatpush1.bf16.msra.mxu0 %v3107
        %3250 = vmatprep.subr.bf16.mxu0 %v3112
        %3251 = vmatpush1.bf16.msra.mxu0 %v3111
        %3252 = vmatprep.subr.bf16.mxu0 %v3116
        %3253 = vmatpush1.bf16.msra.mxu0 %v3115
        %3254 = vmatprep.mubr.bf16.mxu0 %v2858
        %3255 = vmatmul.mubr.bf16.gmra.mrb[0].mxu0 %v2857
        %v3256 = vpop.f32.mrb[0].mxu0
        %v3257 = vadd.f32 %v2845, %v3256
        %v3258 = vpop.f32.mrb[0].mxu0
        %v3259 = vadd.f32 %v2849, %v3258
        %v3260 = vpop.f32.mrb[0].mxu0
        %v3261 = vpop.f32.mrb[0].mxu0
        %3262 = vdwg.mxu0
        %v3263 = vxor.u32 %v3216, 2147483648
        %v3264 = vmul.f32 %v3263, 1.442695
        %v3265 = vpow.pop %v3264
        %v3266 = vadd.f32 %v3265, 1.0
        %v3267 = vrcp.pop %v3266
        %v3268 = vmul.f32 1.0, %v3267
        %v3269 = vxor.u32 %v3218, 2147483648
        %v3270 = vmul.f32 %v3269, 1.442695
        %v3271 = vpow.pop %v3270
        %v3272 = vadd.f32 %v3271, 1.0
        %v3273 = vrcp.pop %v3272
        %v3274 = vmul.f32 1.0, %v3273
        %v3275 = vtanh.pop %v3257
        %v3276 = vxor.u32 %v3259, 2147483648
        %v3277 = vmul.f32 %v3276, 1.442695
        %v3278 = vpow.pop %v3277
        %v3279 = vadd.f32 %v3278, 1.0
        %v3280 = vrcp.pop %v3279
        %v3281 = vmul.f32 1.0, %v3280
        %v3282 = vmul.f32 %v3274, %v2221
        %v3283 = vmul.f32 %v3268, %v3275
        %v3284 = vadd.f32 %v3282, %v3283
        %v3285 = vtanh.pop %v3284
        %v3286 = vmul.f32 %v3281, %v3285
        %v3287 = vsub.f32 %v3286, %v2218
        %3289 = vset.pattern.permute.xlu0 0
        %3290 = vperm.xlu0 %3289, %v2763
        %v3291 = vpop.permute.xlu0 %3290
        %v3293 = vmul.f32 %v3291, %v3287
        %v3294 = vadd.f32 %v2218, %v3293
        %v3295 = vsub.f32 %v3284, %v2221
        %v3296 = vmul.f32 %v3291, %v3295
        %v3297 = vadd.f32 %v2221, %v3296
        %s3298 = scalar_lea.vmem %s566, 20
        %v3299 = vld [vmem:[%s3298] sm:$0xf]
        %s3300 = scalar_lea.vmem %s586, 40
        %v3301 = vld [vmem:[%s3300] sm:$0xff]
        %3302 = vst [vmem:[#allocation7] sm:$0xf] %v3299
        %v3303 = vpack.c.bf16 %v2756, %v2756
        %3304 = vst [vmem:[#allocation7 + $0x4] sm:$0xf] %v3303
        %v3305 = vld [vmem:[#allocation7] sm:$0xff]
        %v3306 = vld [vmem:[#allocation10] sm:$0xff]
        %v3307 = vld [vmem:[#allocation10 + $0x8] sm:$0xff]
        %v3308 = vld [vmem:[#allocation10 + $0x10] sm:$0xff]
        %v3309 = vld [vmem:[#allocation10 + $0x18] sm:$0xff]
        %v3310 = vld [vmem:[#allocation10 + $0x20] sm:$0xff]
        %v3311 = vld [vmem:[#allocation10 + $0x28] sm:$0xff]
        %v3312 = vld [vmem:[#allocation10 + $0x30] sm:$0xff]
        %v3313 = vld [vmem:[#allocation10 + $0x38] sm:$0xff]
        %v3314 = vld [vmem:[#allocation10 + $0x40] sm:$0xff]
        %v3315 = vld [vmem:[#allocation10 + $0x48] sm:$0xff]
        %v3316 = vld [vmem:[#allocation10 + $0x50] sm:$0xff]
        %v3317 = vld [vmem:[#allocation10 + $0x58] sm:$0xff]
        %v3318 = vld [vmem:[#allocation10 + $0x60] sm:$0xff]
        %v3319 = vld [vmem:[#allocation10 + $0x68] sm:$0xff]
        %v3320 = vld [vmem:[#allocation10 + $0x70] sm:$0xff]
        %v3321 = vld [vmem:[#allocation10 + $0x78] sm:$0xff]
        %v3322 = vld [vmem:[#allocation10 + $0x80] sm:$0xff]
        %v3323 = vld [vmem:[#allocation10 + $0x88] sm:$0xff]
        %v3324 = vld [vmem:[#allocation10 + $0x90] sm:$0xff]
        %v3325 = vld [vmem:[#allocation10 + $0x98] sm:$0xff]
        %v3326 = vld [vmem:[#allocation10 + $0xa0] sm:$0xff]
        %v3327 = vld [vmem:[#allocation10 + $0xa8] sm:$0xff]
        %v3328 = vld [vmem:[#allocation10 + $0xb0] sm:$0xff]
        %v3329 = vld [vmem:[#allocation10 + $0xb8] sm:$0xff]
        %v3330 = vld [vmem:[#allocation10 + $0xc0] sm:$0xff]
        %v3331 = vld [vmem:[#allocation10 + $0xc8] sm:$0xff]
        %v3332 = vld [vmem:[#allocation10 + $0xd0] sm:$0xff]
        %v3333 = vld [vmem:[#allocation10 + $0xd8] sm:$0xff]
        %v3334 = vld [vmem:[#allocation10 + $0xe0] sm:$0xff]
        %v3335 = vld [vmem:[#allocation10 + $0xe8] sm:$0xff]
        %v3336 = vld [vmem:[#allocation10 + $0xf0] sm:$0xff]
        %v3337 = vld [vmem:[#allocation10 + $0xf8] sm:$0xff]
        %v3338 = vld [vmem:[#allocation10 + $0x100] sm:$0xff]
        %v3339 = vld [vmem:[#allocation10 + $0x108] sm:$0xff]
        %v3340 = vld [vmem:[#allocation10 + $0x110] sm:$0xff]
        %v3341 = vld [vmem:[#allocation10 + $0x118] sm:$0xff]
        %v3342 = vld [vmem:[#allocation10 + $0x120] sm:$0xff]
        %v3343 = vld [vmem:[#allocation10 + $0x128] sm:$0xff]
        %v3344 = vld [vmem:[#allocation10 + $0x130] sm:$0xff]
        %v3345 = vld [vmem:[#allocation10 + $0x138] sm:$0xff]
        %v3346 = vld [vmem:[#allocation10 + $0x140] sm:$0xff]
        %v3347 = vld [vmem:[#allocation10 + $0x148] sm:$0xff]
        %v3348 = vld [vmem:[#allocation10 + $0x150] sm:$0xff]
        %v3349 = vld [vmem:[#allocation10 + $0x158] sm:$0xff]
        %v3350 = vld [vmem:[#allocation10 + $0x160] sm:$0xff]
        %v3351 = vld [vmem:[#allocation10 + $0x168] sm:$0xff]
        %v3352 = vld [vmem:[#allocation10 + $0x170] sm:$0xff]
        %v3353 = vld [vmem:[#allocation10 + $0x178] sm:$0xff]
        %v3354 = vld [vmem:[#allocation10 + $0x180] sm:$0xff]
        %v3355 = vld [vmem:[#allocation10 + $0x188] sm:$0xff]
        %v3356 = vld [vmem:[#allocation10 + $0x190] sm:$0xff]
        %v3357 = vld [vmem:[#allocation10 + $0x198] sm:$0xff]
        %v3358 = vld [vmem:[#allocation10 + $0x1a0] sm:$0xff]
        %v3359 = vld [vmem:[#allocation10 + $0x1a8] sm:$0xff]
        %v3360 = vld [vmem:[#allocation10 + $0x1b0] sm:$0xff]
        %v3361 = vld [vmem:[#allocation10 + $0x1b8] sm:$0xff]
        %v3362 = vld [vmem:[#allocation10 + $0x1c0] sm:$0xff]
        %v3363 = vld [vmem:[#allocation10 + $0x1c8] sm:$0xff]
        %v3364 = vld [vmem:[#allocation10 + $0x1d0] sm:$0xff]
        %v3365 = vld [vmem:[#allocation10 + $0x1d8] sm:$0xff]
        %v3366 = vld [vmem:[#allocation10 + $0x1e0] sm:$0xff]
        %v3367 = vld [vmem:[#allocation10 + $0x1e8] sm:$0xff]
        %v3368 = vld [vmem:[#allocation10 + $0x1f0] sm:$0xff]
        %v3369 = vld [vmem:[#allocation10 + $0x1f8] sm:$0xff]
        %v3370 = vld [vmem:[%s8] sm:$0xf]
        %v3372 = vlaneseq
        %v3373 = vshrl.u32 %v3372, 7
        %v3374 = vsub.s32 0, %v3373
        %v3375 = vrot.slane %v3370, %v3374
        %v3376 = vlaneseq
        %v3377 = vshrl.u32 %v3376, 7
        %v3378 = vsub.s32 1, %v3377
        %v3379 = vrot.slane %v3370, %v3378
        %v3380 = vlaneseq
        %v3381 = vshrl.u32 %v3380, 7
        %v3382 = vsub.s32 2, %v3381
        %v3383 = vrot.slane %v3370, %v3382
        %v3384 = vlaneseq
        %v3385 = vshrl.u32 %v3384, 7
        %v3386 = vsub.s32 3, %v3385
        %v3387 = vrot.slane %v3370, %v3386
        %v3393 = vunpack.c.l.b16 %v3305
        %v3394 = vunpack.c.h.b16 %v3305
        %v3395 = vpack.c.b16 %v3393, %v3393
        %v3396 = vpack.c.b16 %v3394, %v3394
        %v3463 = vunpack.c.l.b16 %v3306
        %v3464 = vunpack.c.h.b16 %v3306
        %v3465 = vunpack.c.l.b16 %v3307
        %v3466 = vunpack.c.h.b16 %v3307
        %v3467 = vunpack.c.l.b16 %v3308
        %v3468 = vunpack.c.h.b16 %v3308
        %v3469 = vunpack.c.l.b16 %v3309
        %v3470 = vunpack.c.h.b16 %v3309
        %v3471 = vunpack.c.l.b16 %v3310
        %v3472 = vunpack.c.h.b16 %v3310
        %v3473 = vunpack.c.l.b16 %v3311
        %v3474 = vunpack.c.h.b16 %v3311
        %v3475 = vunpack.c.l.b16 %v3312
        %v3476 = vunpack.c.h.b16 %v3312
        %v3477 = vunpack.c.l.b16 %v3313
        %v3478 = vunpack.c.h.b16 %v3313
        %v3479 = vunpack.c.l.b16 %v3314
        %v3480 = vunpack.c.h.b16 %v3314
        %v3481 = vunpack.c.l.b16 %v3315
        %v3482 = vunpack.c.h.b16 %v3315
        %v3483 = vunpack.c.l.b16 %v3316
        %v3484 = vunpack.c.h.b16 %v3316
        %v3485 = vunpack.c.l.b16 %v3317
        %v3486 = vunpack.c.h.b16 %v3317
        %v3487 = vunpack.c.l.b16 %v3318
        %v3488 = vunpack.c.h.b16 %v3318
        %v3489 = vunpack.c.l.b16 %v3319
        %v3490 = vunpack.c.h.b16 %v3319
        %v3491 = vunpack.c.l.b16 %v3320
        %v3492 = vunpack.c.h.b16 %v3320
        %v3493 = vunpack.c.l.b16 %v3321
        %v3494 = vunpack.c.h.b16 %v3321
        %v3495 = vunpack.c.l.b16 %v3322
        %v3496 = vunpack.c.h.b16 %v3322
        %v3497 = vunpack.c.l.b16 %v3323
        %v3498 = vunpack.c.h.b16 %v3323
        %v3499 = vunpack.c.l.b16 %v3324
        %v3500 = vunpack.c.h.b16 %v3324
        %v3501 = vunpack.c.l.b16 %v3325
        %v3502 = vunpack.c.h.b16 %v3325
        %v3503 = vunpack.c.l.b16 %v3326
        %v3504 = vunpack.c.h.b16 %v3326
        %v3505 = vunpack.c.l.b16 %v3327
        %v3506 = vunpack.c.h.b16 %v3327
        %v3507 = vunpack.c.l.b16 %v3328
        %v3508 = vunpack.c.h.b16 %v3328
        %v3509 = vunpack.c.l.b16 %v3329
        %v3510 = vunpack.c.h.b16 %v3329
        %v3511 = vunpack.c.l.b16 %v3330
        %v3512 = vunpack.c.h.b16 %v3330
        %v3513 = vunpack.c.l.b16 %v3331
        %v3514 = vunpack.c.h.b16 %v3331
        %v3515 = vunpack.c.l.b16 %v3332
        %v3516 = vunpack.c.h.b16 %v3332
        %v3517 = vunpack.c.l.b16 %v3333
        %v3518 = vunpack.c.h.b16 %v3333
        %v3519 = vunpack.c.l.b16 %v3334
        %v3520 = vunpack.c.h.b16 %v3334
        %v3521 = vunpack.c.l.b16 %v3335
        %v3522 = vunpack.c.h.b16 %v3335
        %v3523 = vunpack.c.l.b16 %v3336
        %v3524 = vunpack.c.h.b16 %v3336
        %v3525 = vunpack.c.l.b16 %v3337
        %v3526 = vunpack.c.h.b16 %v3337
        %v3527 = vunpack.c.l.b16 %v3338
        %v3528 = vunpack.c.h.b16 %v3338
        %v3529 = vunpack.c.l.b16 %v3339
        %v3530 = vunpack.c.h.b16 %v3339
        %v3531 = vunpack.c.l.b16 %v3340
        %v3532 = vunpack.c.h.b16 %v3340
        %v3533 = vunpack.c.l.b16 %v3341
        %v3534 = vunpack.c.h.b16 %v3341
        %v3535 = vunpack.c.l.b16 %v3342
        %v3536 = vunpack.c.h.b16 %v3342
        %v3537 = vunpack.c.l.b16 %v3343
        %v3538 = vunpack.c.h.b16 %v3343
        %v3539 = vunpack.c.l.b16 %v3344
        %v3540 = vunpack.c.h.b16 %v3344
        %v3541 = vunpack.c.l.b16 %v3345
        %v3542 = vunpack.c.h.b16 %v3345
        %v3543 = vunpack.c.l.b16 %v3346
        %v3544 = vunpack.c.h.b16 %v3346
        %v3545 = vunpack.c.l.b16 %v3347
        %v3546 = vunpack.c.h.b16 %v3347
        %v3547 = vunpack.c.l.b16 %v3348
        %v3548 = vunpack.c.h.b16 %v3348
        %v3549 = vunpack.c.l.b16 %v3349
        %v3550 = vunpack.c.h.b16 %v3349
        %v3551 = vunpack.c.l.b16 %v3350
        %v3552 = vunpack.c.h.b16 %v3350
        %v3553 = vunpack.c.l.b16 %v3351
        %v3554 = vunpack.c.h.b16 %v3351
        %v3555 = vunpack.c.l.b16 %v3352
        %v3556 = vunpack.c.h.b16 %v3352
        %v3557 = vunpack.c.l.b16 %v3353
        %v3558 = vunpack.c.h.b16 %v3353
        %v3559 = vunpack.c.l.b16 %v3354
        %v3560 = vunpack.c.h.b16 %v3354
        %v3561 = vunpack.c.l.b16 %v3355
        %v3562 = vunpack.c.h.b16 %v3355
        %v3563 = vunpack.c.l.b16 %v3356
        %v3564 = vunpack.c.h.b16 %v3356
        %v3565 = vunpack.c.l.b16 %v3357
        %v3566 = vunpack.c.h.b16 %v3357
        %v3567 = vunpack.c.l.b16 %v3358
        %v3568 = vunpack.c.h.b16 %v3358
        %v3569 = vunpack.c.l.b16 %v3359
        %v3570 = vunpack.c.h.b16 %v3359
        %v3571 = vunpack.c.l.b16 %v3360
        %v3572 = vunpack.c.h.b16 %v3360
        %v3573 = vunpack.c.l.b16 %v3361
        %v3574 = vunpack.c.h.b16 %v3361
        %v3575 = vunpack.c.l.b16 %v3362
        %v3576 = vunpack.c.h.b16 %v3362
        %v3577 = vunpack.c.l.b16 %v3363
        %v3578 = vunpack.c.h.b16 %v3363
        %v3579 = vunpack.c.l.b16 %v3364
        %v3580 = vunpack.c.h.b16 %v3364
        %v3581 = vunpack.c.l.b16 %v3365
        %v3582 = vunpack.c.h.b16 %v3365
        %v3583 = vunpack.c.l.b16 %v3366
        %v3584 = vunpack.c.h.b16 %v3366
        %v3585 = vunpack.c.l.b16 %v3367
        %v3586 = vunpack.c.h.b16 %v3367
        %v3587 = vunpack.c.l.b16 %v3368
        %v3588 = vunpack.c.h.b16 %v3368
        %v3589 = vunpack.c.l.b16 %v3369
        %v3590 = vunpack.c.h.b16 %v3369
        %v3591 = vpack.c.b16 %v3467, %v3463
        %v3592 = vpack.c.b16 %v3468, %v3464
        %v3593 = vpack.c.b16 %v3469, %v3465
        %v3594 = vpack.c.b16 %v3470, %v3466
        %v3595 = vpack.c.b16 %v3475, %v3471
        %v3596 = vpack.c.b16 %v3476, %v3472
        %v3597 = vpack.c.b16 %v3477, %v3473
        %v3598 = vpack.c.b16 %v3478, %v3474
        %v3599 = vpack.c.b16 %v3483, %v3479
        %v3600 = vpack.c.b16 %v3484, %v3480
        %v3601 = vpack.c.b16 %v3485, %v3481
        %v3602 = vpack.c.b16 %v3486, %v3482
        %v3603 = vpack.c.b16 %v3491, %v3487
        %v3604 = vpack.c.b16 %v3492, %v3488
        %v3605 = vpack.c.b16 %v3493, %v3489
        %v3606 = vpack.c.b16 %v3494, %v3490
        %v3607 = vpack.c.b16 %v3499, %v3495
        %v3608 = vpack.c.b16 %v3500, %v3496
        %v3609 = vpack.c.b16 %v3501, %v3497
        %v3610 = vpack.c.b16 %v3502, %v3498
        %v3611 = vpack.c.b16 %v3507, %v3503
        %v3612 = vpack.c.b16 %v3508, %v3504
        %v3613 = vpack.c.b16 %v3509, %v3505
        %v3614 = vpack.c.b16 %v3510, %v3506
        %v3615 = vpack.c.b16 %v3515, %v3511
        %v3616 = vpack.c.b16 %v3516, %v3512
        %v3617 = vpack.c.b16 %v3517, %v3513
        %v3618 = vpack.c.b16 %v3518, %v3514
        %v3619 = vpack.c.b16 %v3523, %v3519
        %v3620 = vpack.c.b16 %v3524, %v3520
        %v3621 = vpack.c.b16 %v3525, %v3521
        %v3622 = vpack.c.b16 %v3526, %v3522
        %v3623 = vpack.c.b16 %v3531, %v3527
        %v3624 = vpack.c.b16 %v3532, %v3528
        %v3625 = vpack.c.b16 %v3533, %v3529
        %v3626 = vpack.c.b16 %v3534, %v3530
        %v3627 = vpack.c.b16 %v3539, %v3535
        %v3628 = vpack.c.b16 %v3540, %v3536
        %v3629 = vpack.c.b16 %v3541, %v3537
        %v3630 = vpack.c.b16 %v3542, %v3538
        %v3631 = vpack.c.b16 %v3547, %v3543
        %v3632 = vpack.c.b16 %v3548, %v3544
        %v3633 = vpack.c.b16 %v3549, %v3545
        %v3634 = vpack.c.b16 %v3550, %v3546
        %v3635 = vpack.c.b16 %v3555, %v3551
        %v3636 = vpack.c.b16 %v3556, %v3552
        %v3637 = vpack.c.b16 %v3557, %v3553
        %v3638 = vpack.c.b16 %v3558, %v3554
        %v3639 = vpack.c.b16 %v3563, %v3559
        %v3640 = vpack.c.b16 %v3564, %v3560
        %v3641 = vpack.c.b16 %v3565, %v3561
        %v3642 = vpack.c.b16 %v3566, %v3562
        %v3643 = vpack.c.b16 %v3571, %v3567
        %v3644 = vpack.c.b16 %v3572, %v3568
        %v3645 = vpack.c.b16 %v3573, %v3569
        %v3646 = vpack.c.b16 %v3574, %v3570
        %v3647 = vpack.c.b16 %v3579, %v3575
        %v3648 = vpack.c.b16 %v3580, %v3576
        %v3649 = vpack.c.b16 %v3581, %v3577
        %v3650 = vpack.c.b16 %v3582, %v3578
        %v3651 = vpack.c.b16 %v3587, %v3583
        %v3652 = vpack.c.b16 %v3588, %v3584
        %v3653 = vpack.c.b16 %v3589, %v3585
        %v3654 = vpack.c.b16 %v3590, %v3586
        %3719 = vmatprep.subr.bf16.mxu0 %v3592
        %3720 = vmatpush1.bf16.msra.mxu0 %v3591
        %3721 = vmatprep.subr.bf16.mxu0 %v3596
        %3722 = vmatpush1.bf16.msra.mxu0 %v3595
        %3723 = vmatprep.subr.bf16.mxu0 %v3600
        %3724 = vmatpush1.bf16.msra.mxu0 %v3599
        %3725 = vmatprep.subr.bf16.mxu0 %v3604
        %3726 = vmatpush1.bf16.msra.mxu0 %v3603
        %3727 = vmatprep.subr.bf16.mxu0 %v3608
        %3728 = vmatpush1.bf16.msra.mxu0 %v3607
        %3729 = vmatprep.subr.bf16.mxu0 %v3612
        %3730 = vmatpush1.bf16.msra.mxu0 %v3611
        %3731 = vmatprep.subr.bf16.mxu0 %v3616
        %3732 = vmatpush1.bf16.msra.mxu0 %v3615
        %3733 = vmatprep.subr.bf16.mxu0 %v3620
        %3734 = vmatpush1.bf16.msra.mxu0 %v3619
        %3735 = vmatprep.subr.bf16.mxu0 %v3624
        %3736 = vmatpush1.bf16.msra.mxu0 %v3623
        %3737 = vmatprep.subr.bf16.mxu0 %v3628
        %3738 = vmatpush1.bf16.msra.mxu0 %v3627
        %3739 = vmatprep.subr.bf16.mxu0 %v3632
        %3740 = vmatpush1.bf16.msra.mxu0 %v3631
        %3741 = vmatprep.subr.bf16.mxu0 %v3636
        %3742 = vmatpush1.bf16.msra.mxu0 %v3635
        %3743 = vmatprep.subr.bf16.mxu0 %v3640
        %3744 = vmatpush1.bf16.msra.mxu0 %v3639
        %3745 = vmatprep.subr.bf16.mxu0 %v3644
        %3746 = vmatpush1.bf16.msra.mxu0 %v3643
        %3747 = vmatprep.subr.bf16.mxu0 %v3648
        %3748 = vmatpush1.bf16.msra.mxu0 %v3647
        %3749 = vmatprep.subr.bf16.mxu0 %v3652
        %3750 = vmatpush1.bf16.msra.mxu0 %v3651
        %3751 = vmatprep.mubr.bf16.mxu0 %v3396
        %3752 = vmatmul.mubr.bf16.gmra.mrb[0].mxu0 %v3395
        %v3753 = vpop.f32.mrb[0].mxu0
        %v3754 = vadd.f32 %v3375, %v3753
        %v3755 = vpop.f32.mrb[0].mxu0
        %v3756 = vadd.f32 %v3379, %v3755
        %v3757 = vpop.f32.mrb[0].mxu0
        %v3758 = vpop.f32.mrb[0].mxu0
        %3759 = vdwg.mxu0
        %3760 = vmatprep.subr.bf16.mxu0 %v3594
        %3761 = vmatpush1.bf16.msra.mxu0 %v3593
        %3762 = vmatprep.subr.bf16.mxu0 %v3598
        %3763 = vmatpush1.bf16.msra.mxu0 %v3597
        %3764 = vmatprep.subr.bf16.mxu0 %v3602
        %3765 = vmatpush1.bf16.msra.mxu0 %v3601
        %3766 = vmatprep.subr.bf16.mxu0 %v3606
        %3767 = vmatpush1.bf16.msra.mxu0 %v3605
        %3768 = vmatprep.subr.bf16.mxu0 %v3610
        %3769 = vmatpush1.bf16.msra.mxu0 %v3609
        %3770 = vmatprep.subr.bf16.mxu0 %v3614
        %3771 = vmatpush1.bf16.msra.mxu0 %v3613
        %3772 = vmatprep.subr.bf16.mxu0 %v3618
        %3773 = vmatpush1.bf16.msra.mxu0 %v3617
        %3774 = vmatprep.subr.bf16.mxu0 %v3622
        %3775 = vmatpush1.bf16.msra.mxu0 %v3621
        %3776 = vmatprep.subr.bf16.mxu0 %v3626
        %3777 = vmatpush1.bf16.msra.mxu0 %v3625
        %3778 = vmatprep.subr.bf16.mxu0 %v3630
        %3779 = vmatpush1.bf16.msra.mxu0 %v3629
        %3780 = vmatprep.subr.bf16.mxu0 %v3634
        %3781 = vmatpush1.bf16.msra.mxu0 %v3633
        %3782 = vmatprep.subr.bf16.mxu0 %v3638
        %3783 = vmatpush1.bf16.msra.mxu0 %v3637
        %3784 = vmatprep.subr.bf16.mxu0 %v3642
        %3785 = vmatpush1.bf16.msra.mxu0 %v3641
        %3786 = vmatprep.subr.bf16.mxu0 %v3646
        %3787 = vmatpush1.bf16.msra.mxu0 %v3645
        %3788 = vmatprep.subr.bf16.mxu0 %v3650
        %3789 = vmatpush1.bf16.msra.mxu0 %v3649
        %3790 = vmatprep.subr.bf16.mxu0 %v3654
        %3791 = vmatpush1.bf16.msra.mxu0 %v3653
        %3792 = vmatprep.mubr.bf16.mxu0 %v3396
        %3793 = vmatmul.mubr.bf16.gmra.mrb[0].mxu0 %v3395
        %v3794 = vpop.f32.mrb[0].mxu0
        %v3795 = vadd.f32 %v3383, %v3794
        %v3796 = vpop.f32.mrb[0].mxu0
        %v3797 = vadd.f32 %v3387, %v3796
        %v3798 = vpop.f32.mrb[0].mxu0
        %v3799 = vpop.f32.mrb[0].mxu0
        %3800 = vdwg.mxu0
        %v3801 = vxor.u32 %v3754, 2147483648
        %v3802 = vmul.f32 %v3801, 1.442695
        %v3803 = vpow.pop %v3802
        %v3804 = vadd.f32 %v3803, 1.0
        %v3805 = vrcp.pop %v3804
        %v3806 = vmul.f32 1.0, %v3805
        %v3807 = vxor.u32 %v3756, 2147483648
        %v3808 = vmul.f32 %v3807, 1.442695
        %v3809 = vpow.pop %v3808
        %v3810 = vadd.f32 %v3809, 1.0
        %v3811 = vrcp.pop %v3810
        %v3812 = vmul.f32 1.0, %v3811
        %v3813 = vtanh.pop %v3795
        %v3814 = vxor.u32 %v3797, 2147483648
        %v3815 = vmul.f32 %v3814, 1.442695
        %v3816 = vpow.pop %v3815
        %v3817 = vadd.f32 %v3816, 1.0
        %v3818 = vrcp.pop %v3817
        %v3819 = vmul.f32 1.0, %v3818
        %v3820 = vmul.f32 %v3812, %v2759
        %v3821 = vmul.f32 %v3806, %v3813
        %v3822 = vadd.f32 %v3820, %v3821
        %v3823 = vtanh.pop %v3822
        %v3824 = vmul.f32 %v3819, %v3823
        %v3825 = vsub.f32 %v3824, %v2756
        %3827 = vset.pattern.permute.xlu0 0
        %3828 = vperm.xlu0 %3827, %v3301
        %v3829 = vpop.permute.xlu0 %3828
        %v3831 = vmul.f32 %v3829, %v3825
        %v3832 = vadd.f32 %v2756, %v3831
        %v3833 = vsub.f32 %v3822, %v2759
        %v3834 = vmul.f32 %v3829, %v3833
        %v3835 = vadd.f32 %v2759, %v3834
        %s3836 = scalar_lea.vmem %s556, 12
        %v3837 = vld [vmem:[%s3836] sm:$0xf]
        %s3838 = scalar_lea.vmem %s576, 24
        %v3839 = vld [vmem:[%s3838] sm:$0xff]
        %3840 = vst [vmem:[#allocation6] sm:$0xf] %v3837
        %v3841 = vpack.c.bf16 %v3294, %v3294
        %3842 = vst [vmem:[#allocation6 + $0x4] sm:$0xf] %v3841
        %v3843 = vld [vmem:[#allocation6] sm:$0xff]
        %v3844 = vld [vmem:[#allocation8] sm:$0xff]
        %v3845 = vld [vmem:[#allocation8 + $0x8] sm:$0xff]
        %v3846 = vld [vmem:[#allocation8 + $0x10] sm:$0xff]
        %v3847 = vld [vmem:[#allocation8 + $0x18] sm:$0xff]
        %v3848 = vld [vmem:[#allocation8 + $0x20] sm:$0xff]
        %v3849 = vld [vmem:[#allocation8 + $0x28] sm:$0xff]
        %v3850 = vld [vmem:[#allocation8 + $0x30] sm:$0xff]
        %v3851 = vld [vmem:[#allocation8 + $0x38] sm:$0xff]
        %v3852 = vld [vmem:[#allocation8 + $0x40] sm:$0xff]
        %v3853 = vld [vmem:[#allocation8 + $0x48] sm:$0xff]
        %v3854 = vld [vmem:[#allocation8 + $0x50] sm:$0xff]
        %v3855 = vld [vmem:[#allocation8 + $0x58] sm:$0xff]
        %v3856 = vld [vmem:[#allocation8 + $0x60] sm:$0xff]
        %v3857 = vld [vmem:[#allocation8 + $0x68] sm:$0xff]
        %v3858 = vld [vmem:[#allocation8 + $0x70] sm:$0xff]
        %v3859 = vld [vmem:[#allocation8 + $0x78] sm:$0xff]
        %v3860 = vld [vmem:[#allocation8 + $0x80] sm:$0xff]
        %v3861 = vld [vmem:[#allocation8 + $0x88] sm:$0xff]
        %v3862 = vld [vmem:[#allocation8 + $0x90] sm:$0xff]
        %v3863 = vld [vmem:[#allocation8 + $0x98] sm:$0xff]
        %v3864 = vld [vmem:[#allocation8 + $0xa0] sm:$0xff]
        %v3865 = vld [vmem:[#allocation8 + $0xa8] sm:$0xff]
        %v3866 = vld [vmem:[#allocation8 + $0xb0] sm:$0xff]
        %v3867 = vld [vmem:[#allocation8 + $0xb8] sm:$0xff]
        %v3868 = vld [vmem:[#allocation8 + $0xc0] sm:$0xff]
        %v3869 = vld [vmem:[#allocation8 + $0xc8] sm:$0xff]
        %v3870 = vld [vmem:[#allocation8 + $0xd0] sm:$0xff]
        %v3871 = vld [vmem:[#allocation8 + $0xd8] sm:$0xff]
        %v3872 = vld [vmem:[#allocation8 + $0xe0] sm:$0xff]
        %v3873 = vld [vmem:[#allocation8 + $0xe8] sm:$0xff]
        %v3874 = vld [vmem:[#allocation8 + $0xf0] sm:$0xff]
        %v3875 = vld [vmem:[#allocation8 + $0xf8] sm:$0xff]
        %v3876 = vld [vmem:[#allocation8 + $0x100] sm:$0xff]
        %v3877 = vld [vmem:[#allocation8 + $0x108] sm:$0xff]
        %v3878 = vld [vmem:[#allocation8 + $0x110] sm:$0xff]
        %v3879 = vld [vmem:[#allocation8 + $0x118] sm:$0xff]
        %v3880 = vld [vmem:[#allocation8 + $0x120] sm:$0xff]
        %v3881 = vld [vmem:[#allocation8 + $0x128] sm:$0xff]
        %v3882 = vld [vmem:[#allocation8 + $0x130] sm:$0xff]
        %v3883 = vld [vmem:[#allocation8 + $0x138] sm:$0xff]
        %v3884 = vld [vmem:[#allocation8 + $0x140] sm:$0xff]
        %v3885 = vld [vmem:[#allocation8 + $0x148] sm:$0xff]
        %v3886 = vld [vmem:[#allocation8 + $0x150] sm:$0xff]
        %v3887 = vld [vmem:[#allocation8 + $0x158] sm:$0xff]
        %v3888 = vld [vmem:[#allocation8 + $0x160] sm:$0xff]
        %v3889 = vld [vmem:[#allocation8 + $0x168] sm:$0xff]
        %v3890 = vld [vmem:[#allocation8 + $0x170] sm:$0xff]
        %v3891 = vld [vmem:[#allocation8 + $0x178] sm:$0xff]
        %v3892 = vld [vmem:[#allocation8 + $0x180] sm:$0xff]
        %v3893 = vld [vmem:[#allocation8 + $0x188] sm:$0xff]
        %v3894 = vld [vmem:[#allocation8 + $0x190] sm:$0xff]
        %v3895 = vld [vmem:[#allocation8 + $0x198] sm:$0xff]
        %v3896 = vld [vmem:[#allocation8 + $0x1a0] sm:$0xff]
        %v3897 = vld [vmem:[#allocation8 + $0x1a8] sm:$0xff]
        %v3898 = vld [vmem:[#allocation8 + $0x1b0] sm:$0xff]
        %v3899 = vld [vmem:[#allocation8 + $0x1b8] sm:$0xff]
        %v3900 = vld [vmem:[#allocation8 + $0x1c0] sm:$0xff]
        %v3901 = vld [vmem:[#allocation8 + $0x1c8] sm:$0xff]
        %v3902 = vld [vmem:[#allocation8 + $0x1d0] sm:$0xff]
        %v3903 = vld [vmem:[#allocation8 + $0x1d8] sm:$0xff]
        %v3904 = vld [vmem:[#allocation8 + $0x1e0] sm:$0xff]
        %v3905 = vld [vmem:[#allocation8 + $0x1e8] sm:$0xff]
        %v3906 = vld [vmem:[#allocation8 + $0x1f0] sm:$0xff]
        %v3907 = vld [vmem:[#allocation8 + $0x1f8] sm:$0xff]
        %v3908 = vld [vmem:[%s6] sm:$0xf]
        %v3910 = vlaneseq
        %v3911 = vshrl.u32 %v3910, 7
        %v3912 = vsub.s32 0, %v3911
        %v3913 = vrot.slane %v3908, %v3912
        %v3914 = vlaneseq
        %v3915 = vshrl.u32 %v3914, 7
        %v3916 = vsub.s32 1, %v3915
        %v3917 = vrot.slane %v3908, %v3916
        %v3918 = vlaneseq
        %v3919 = vshrl.u32 %v3918, 7
        %v3920 = vsub.s32 2, %v3919
        %v3921 = vrot.slane %v3908, %v3920
        %v3922 = vlaneseq
        %v3923 = vshrl.u32 %v3922, 7
        %v3924 = vsub.s32 3, %v3923
        %v3925 = vrot.slane %v3908, %v3924
        %v3931 = vunpack.c.l.b16 %v3843
        %v3932 = vunpack.c.h.b16 %v3843
        %v3933 = vpack.c.b16 %v3931, %v3931
        %v3934 = vpack.c.b16 %v3932, %v3932
        %v4001 = vunpack.c.l.b16 %v3844
        %v4002 = vunpack.c.h.b16 %v3844
        %v4003 = vunpack.c.l.b16 %v3845
        %v4004 = vunpack.c.h.b16 %v3845
        %v4005 = vunpack.c.l.b16 %v3846
        %v4006 = vunpack.c.h.b16 %v3846
        %v4007 = vunpack.c.l.b16 %v3847
        %v4008 = vunpack.c.h.b16 %v3847
        %v4009 = vunpack.c.l.b16 %v3848
        %v4010 = vunpack.c.h.b16 %v3848
        %v4011 = vunpack.c.l.b16 %v3849
        %v4012 = vunpack.c.h.b16 %v3849
        %v4013 = vunpack.c.l.b16 %v3850
        %v4014 = vunpack.c.h.b16 %v3850
        %v4015 = vunpack.c.l.b16 %v3851
        %v4016 = vunpack.c.h.b16 %v3851
        %v4017 = vunpack.c.l.b16 %v3852
        %v4018 = vunpack.c.h.b16 %v3852
        %v4019 = vunpack.c.l.b16 %v3853
        %v4020 = vunpack.c.h.b16 %v3853
        %v4021 = vunpack.c.l.b16 %v3854
        %v4022 = vunpack.c.h.b16 %v3854
        %v4023 = vunpack.c.l.b16 %v3855
        %v4024 = vunpack.c.h.b16 %v3855
        %v4025 = vunpack.c.l.b16 %v3856
        %v4026 = vunpack.c.h.b16 %v3856
        %v4027 = vunpack.c.l.b16 %v3857
        %v4028 = vunpack.c.h.b16 %v3857
        %v4029 = vunpack.c.l.b16 %v3858
        %v4030 = vunpack.c.h.b16 %v3858
        %v4031 = vunpack.c.l.b16 %v3859
        %v4032 = vunpack.c.h.b16 %v3859
        %v4033 = vunpack.c.l.b16 %v3860
        %v4034 = vunpack.c.h.b16 %v3860
        %v4035 = vunpack.c.l.b16 %v3861
        %v4036 = vunpack.c.h.b16 %v3861
        %v4037 = vunpack.c.l.b16 %v3862
        %v4038 = vunpack.c.h.b16 %v3862
        %v4039 = vunpack.c.l.b16 %v3863
        %v4040 = vunpack.c.h.b16 %v3863
        %v4041 = vunpack.c.l.b16 %v3864
        %v4042 = vunpack.c.h.b16 %v3864
        %v4043 = vunpack.c.l.b16 %v3865
        %v4044 = vunpack.c.h.b16 %v3865
        %v4045 = vunpack.c.l.b16 %v3866
        %v4046 = vunpack.c.h.b16 %v3866
        %v4047 = vunpack.c.l.b16 %v3867
        %v4048 = vunpack.c.h.b16 %v3867
        %v4049 = vunpack.c.l.b16 %v3868
        %v4050 = vunpack.c.h.b16 %v3868
        %v4051 = vunpack.c.l.b16 %v3869
        %v4052 = vunpack.c.h.b16 %v3869
        %v4053 = vunpack.c.l.b16 %v3870
        %v4054 = vunpack.c.h.b16 %v3870
        %v4055 = vunpack.c.l.b16 %v3871
        %v4056 = vunpack.c.h.b16 %v3871
        %v4057 = vunpack.c.l.b16 %v3872
        %v4058 = vunpack.c.h.b16 %v3872
        %v4059 = vunpack.c.l.b16 %v3873
        %v4060 = vunpack.c.h.b16 %v3873
        %v4061 = vunpack.c.l.b16 %v3874
        %v4062 = vunpack.c.h.b16 %v3874
        %v4063 = vunpack.c.l.b16 %v3875
        %v4064 = vunpack.c.h.b16 %v3875
        %v4065 = vunpack.c.l.b16 %v3876
        %v4066 = vunpack.c.h.b16 %v3876
        %v4067 = vunpack.c.l.b16 %v3877
        %v4068 = vunpack.c.h.b16 %v3877
        %v4069 = vunpack.c.l.b16 %v3878
        %v4070 = vunpack.c.h.b16 %v3878
        %v4071 = vunpack.c.l.b16 %v3879
        %v4072 = vunpack.c.h.b16 %v3879
        %v4073 = vunpack.c.l.b16 %v3880
        %v4074 = vunpack.c.h.b16 %v3880
        %v4075 = vunpack.c.l.b16 %v3881
        %v4076 = vunpack.c.h.b16 %v3881
        %v4077 = vunpack.c.l.b16 %v3882
        %v4078 = vunpack.c.h.b16 %v3882
        %v4079 = vunpack.c.l.b16 %v3883
        %v4080 = vunpack.c.h.b16 %v3883
        %v4081 = vunpack.c.l.b16 %v3884
        %v4082 = vunpack.c.h.b16 %v3884
        %v4083 = vunpack.c.l.b16 %v3885
        %v4084 = vunpack.c.h.b16 %v3885
        %v4085 = vunpack.c.l.b16 %v3886
        %v4086 = vunpack.c.h.b16 %v3886
        %v4087 = vunpack.c.l.b16 %v3887
        %v4088 = vunpack.c.h.b16 %v3887
        %v4089 = vunpack.c.l.b16 %v3888
        %v4090 = vunpack.c.h.b16 %v3888
        %v4091 = vunpack.c.l.b16 %v3889
        %v4092 = vunpack.c.h.b16 %v3889
        %v4093 = vunpack.c.l.b16 %v3890
        %v4094 = vunpack.c.h.b16 %v3890
        %v4095 = vunpack.c.l.b16 %v3891
        %v4096 = vunpack.c.h.b16 %v3891
        %v4097 = vunpack.c.l.b16 %v3892
        %v4098 = vunpack.c.h.b16 %v3892
        %v4099 = vunpack.c.l.b16 %v3893
        %v4100 = vunpack.c.h.b16 %v3893
        %v4101 = vunpack.c.l.b16 %v3894
        %v4102 = vunpack.c.h.b16 %v3894
        %v4103 = vunpack.c.l.b16 %v3895
        %v4104 = vunpack.c.h.b16 %v3895
        %v4105 = vunpack.c.l.b16 %v3896
        %v4106 = vunpack.c.h.b16 %v3896
        %v4107 = vunpack.c.l.b16 %v3897
        %v4108 = vunpack.c.h.b16 %v3897
        %v4109 = vunpack.c.l.b16 %v3898
        %v4110 = vunpack.c.h.b16 %v3898
        %v4111 = vunpack.c.l.b16 %v3899
        %v4112 = vunpack.c.h.b16 %v3899
        %v4113 = vunpack.c.l.b16 %v3900
        %v4114 = vunpack.c.h.b16 %v3900
        %v4115 = vunpack.c.l.b16 %v3901
        %v4116 = vunpack.c.h.b16 %v3901
        %v4117 = vunpack.c.l.b16 %v3902
        %v4118 = vunpack.c.h.b16 %v3902
        %v4119 = vunpack.c.l.b16 %v3903
        %v4120 = vunpack.c.h.b16 %v3903
        %v4121 = vunpack.c.l.b16 %v3904
        %v4122 = vunpack.c.h.b16 %v3904
        %v4123 = vunpack.c.l.b16 %v3905
        %v4124 = vunpack.c.h.b16 %v3905
        %v4125 = vunpack.c.l.b16 %v3906
        %v4126 = vunpack.c.h.b16 %v3906
        %v4127 = vunpack.c.l.b16 %v3907
        %v4128 = vunpack.c.h.b16 %v3907
        %v4129 = vpack.c.b16 %v4005, %v4001
        %v4130 = vpack.c.b16 %v4006, %v4002
        %v4131 = vpack.c.b16 %v4007, %v4003
        %v4132 = vpack.c.b16 %v4008, %v4004
        %v4133 = vpack.c.b16 %v4013, %v4009
        %v4134 = vpack.c.b16 %v4014, %v4010
        %v4135 = vpack.c.b16 %v4015, %v4011
        %v4136 = vpack.c.b16 %v4016, %v4012
        %v4137 = vpack.c.b16 %v4021, %v4017
        %v4138 = vpack.c.b16 %v4022, %v4018
        %v4139 = vpack.c.b16 %v4023, %v4019
        %v4140 = vpack.c.b16 %v4024, %v4020
        %v4141 = vpack.c.b16 %v4029, %v4025
        %v4142 = vpack.c.b16 %v4030, %v4026
        %v4143 = vpack.c.b16 %v4031, %v4027
        %v4144 = vpack.c.b16 %v4032, %v4028
        %v4145 = vpack.c.b16 %v4037, %v4033
        %v4146 = vpack.c.b16 %v4038, %v4034
        %v4147 = vpack.c.b16 %v4039, %v4035
        %v4148 = vpack.c.b16 %v4040, %v4036
        %v4149 = vpack.c.b16 %v4045, %v4041
        %v4150 = vpack.c.b16 %v4046, %v4042
        %v4151 = vpack.c.b16 %v4047, %v4043
        %v4152 = vpack.c.b16 %v4048, %v4044
        %v4153 = vpack.c.b16 %v4053, %v4049
        %v4154 = vpack.c.b16 %v4054, %v4050
        %v4155 = vpack.c.b16 %v4055, %v4051
        %v4156 = vpack.c.b16 %v4056, %v4052
        %v4157 = vpack.c.b16 %v4061, %v4057
        %v4158 = vpack.c.b16 %v4062, %v4058
        %v4159 = vpack.c.b16 %v4063, %v4059
        %v4160 = vpack.c.b16 %v4064, %v4060
        %v4161 = vpack.c.b16 %v4069, %v4065
        %v4162 = vpack.c.b16 %v4070, %v4066
        %v4163 = vpack.c.b16 %v4071, %v4067
        %v4164 = vpack.c.b16 %v4072, %v4068
        %v4165 = vpack.c.b16 %v4077, %v4073
        %v4166 = vpack.c.b16 %v4078, %v4074
        %v4167 = vpack.c.b16 %v4079, %v4075
        %v4168 = vpack.c.b16 %v4080, %v4076
        %v4169 = vpack.c.b16 %v4085, %v4081
        %v4170 = vpack.c.b16 %v4086, %v4082
        %v4171 = vpack.c.b16 %v4087, %v4083
        %v4172 = vpack.c.b16 %v4088, %v4084
        %v4173 = vpack.c.b16 %v4093, %v4089
        %v4174 = vpack.c.b16 %v4094, %v4090
        %v4175 = vpack.c.b16 %v4095, %v4091
        %v4176 = vpack.c.b16 %v4096, %v4092
        %v4177 = vpack.c.b16 %v4101, %v4097
        %v4178 = vpack.c.b16 %v4102, %v4098
        %v4179 = vpack.c.b16 %v4103, %v4099
        %v4180 = vpack.c.b16 %v4104, %v4100
        %v4181 = vpack.c.b16 %v4109, %v4105
        %v4182 = vpack.c.b16 %v4110, %v4106
        %v4183 = vpack.c.b16 %v4111, %v4107
        %v4184 = vpack.c.b16 %v4112, %v4108
        %v4185 = vpack.c.b16 %v4117, %v4113
        %v4186 = vpack.c.b16 %v4118, %v4114
        %v4187 = vpack.c.b16 %v4119, %v4115
        %v4188 = vpack.c.b16 %v4120, %v4116
        %v4189 = vpack.c.b16 %v4125, %v4121
        %v4190 = vpack.c.b16 %v4126, %v4122
        %v4191 = vpack.c.b16 %v4127, %v4123
        %v4192 = vpack.c.b16 %v4128, %v4124
        %4257 = vmatprep.subr.bf16.mxu0 %v4130
        %4258 = vmatpush1.bf16.msra.mxu0 %v4129
        %4259 = vmatprep.subr.bf16.mxu0 %v4134
        %4260 = vmatpush1.bf16.msra.mxu0 %v4133
        %4261 = vmatprep.subr.bf16.mxu0 %v4138
        %4262 = vmatpush1.bf16.msra.mxu0 %v4137
        %4263 = vmatprep.subr.bf16.mxu0 %v4142
        %4264 = vmatpush1.bf16.msra.mxu0 %v4141
        %4265 = vmatprep.subr.bf16.mxu0 %v4146
        %4266 = vmatpush1.bf16.msra.mxu0 %v4145
        %4267 = vmatprep.subr.bf16.mxu0 %v4150
        %4268 = vmatpush1.bf16.msra.mxu0 %v4149
        %4269 = vmatprep.subr.bf16.mxu0 %v4154
        %4270 = vmatpush1.bf16.msra.mxu0 %v4153
        %4271 = vmatprep.subr.bf16.mxu0 %v4158
        %4272 = vmatpush1.bf16.msra.mxu0 %v4157
        %4273 = vmatprep.subr.bf16.mxu0 %v4162
        %4274 = vmatpush1.bf16.msra.mxu0 %v4161
        %4275 = vmatprep.subr.bf16.mxu0 %v4166
        %4276 = vmatpush1.bf16.msra.mxu0 %v4165
        %4277 = vmatprep.subr.bf16.mxu0 %v4170
        %4278 = vmatpush1.bf16.msra.mxu0 %v4169
        %4279 = vmatprep.subr.bf16.mxu0 %v4174
        %4280 = vmatpush1.bf16.msra.mxu0 %v4173
        %4281 = vmatprep.subr.bf16.mxu0 %v4178
        %4282 = vmatpush1.bf16.msra.mxu0 %v4177
        %4283 = vmatprep.subr.bf16.mxu0 %v4182
        %4284 = vmatpush1.bf16.msra.mxu0 %v4181
        %4285 = vmatprep.subr.bf16.mxu0 %v4186
        %4286 = vmatpush1.bf16.msra.mxu0 %v4185
        %4287 = vmatprep.subr.bf16.mxu0 %v4190
        %4288 = vmatpush1.bf16.msra.mxu0 %v4189
        %4289 = vmatprep.mubr.bf16.mxu0 %v3934
        %4290 = vmatmul.mubr.bf16.gmra.mrb[0].mxu0 %v3933
        %v4291 = vpop.f32.mrb[0].mxu0
        %v4292 = vadd.f32 %v3913, %v4291
        %v4293 = vpop.f32.mrb[0].mxu0
        %v4294 = vadd.f32 %v3917, %v4293
        %v4295 = vpop.f32.mrb[0].mxu0
        %v4296 = vpop.f32.mrb[0].mxu0
        %4297 = vdwg.mxu0
        %4298 = vmatprep.subr.bf16.mxu0 %v4132
        %4299 = vmatpush1.bf16.msra.mxu0 %v4131
        %4300 = vmatprep.subr.bf16.mxu0 %v4136
        %4301 = vmatpush1.bf16.msra.mxu0 %v4135
        %4302 = vmatprep.subr.bf16.mxu0 %v4140
        %4303 = vmatpush1.bf16.msra.mxu0 %v4139
        %4304 = vmatprep.subr.bf16.mxu0 %v4144
        %4305 = vmatpush1.bf16.msra.mxu0 %v4143
        %4306 = vmatprep.subr.bf16.mxu0 %v4148
        %4307 = vmatpush1.bf16.msra.mxu0 %v4147
        %4308 = vmatprep.subr.bf16.mxu0 %v4152
        %4309 = vmatpush1.bf16.msra.mxu0 %v4151
        %4310 = vmatprep.subr.bf16.mxu0 %v4156
        %4311 = vmatpush1.bf16.msra.mxu0 %v4155
        %4312 = vmatprep.subr.bf16.mxu0 %v4160
        %4313 = vmatpush1.bf16.msra.mxu0 %v4159
        %4314 = vmatprep.subr.bf16.mxu0 %v4164
        %4315 = vmatpush1.bf16.msra.mxu0 %v4163
        %4316 = vmatprep.subr.bf16.mxu0 %v4168
        %4317 = vmatpush1.bf16.msra.mxu0 %v4167
        %4318 = vmatprep.subr.bf16.mxu0 %v4172
        %4319 = vmatpush1.bf16.msra.mxu0 %v4171
        %4320 = vmatprep.subr.bf16.mxu0 %v4176
        %4321 = vmatpush1.bf16.msra.mxu0 %v4175
        %4322 = vmatprep.subr.bf16.mxu0 %v4180
        %4323 = vmatpush1.bf16.msra.mxu0 %v4179
        %4324 = vmatprep.subr.bf16.mxu0 %v4184
        %4325 = vmatpush1.bf16.msra.mxu0 %v4183
        %4326 = vmatprep.subr.bf16.mxu0 %v4188
        %4327 = vmatpush1.bf16.msra.mxu0 %v4187
        %4328 = vmatprep.subr.bf16.mxu0 %v4192
        %4329 = vmatpush1.bf16.msra.mxu0 %v4191
        %4330 = vmatprep.mubr.bf16.mxu0 %v3934
        %4331 = vmatmul.mubr.bf16.gmra.mrb[0].mxu0 %v3933
        %v4332 = vpop.f32.mrb[0].mxu0
        %v4333 = vadd.f32 %v3921, %v4332
        %v4334 = vpop.f32.mrb[0].mxu0
        %v4335 = vadd.f32 %v3925, %v4334
        %v4336 = vpop.f32.mrb[0].mxu0
        %v4337 = vpop.f32.mrb[0].mxu0
        %4338 = vdwg.mxu0
        %v4339 = vxor.u32 %v4292, 2147483648
        %v4340 = vmul.f32 %v4339, 1.442695
        %v4341 = vpow.pop %v4340
        %v4342 = vadd.f32 %v4341, 1.0
        %v4343 = vrcp.pop %v4342
        %v4344 = vmul.f32 1.0, %v4343
        %v4345 = vxor.u32 %v4294, 2147483648
        %v4346 = vmul.f32 %v4345, 1.442695
        %v4347 = vpow.pop %v4346
        %v4348 = vadd.f32 %v4347, 1.0
        %v4349 = vrcp.pop %v4348
        %v4350 = vmul.f32 1.0, %v4349
        %v4351 = vtanh.pop %v4333
        %v4352 = vxor.u32 %v4335, 2147483648
        %v4353 = vmul.f32 %v4352, 1.442695
        %v4354 = vpow.pop %v4353
        %v4355 = vadd.f32 %v4354, 1.0
        %v4356 = vrcp.pop %v4355
        %v4357 = vmul.f32 1.0, %v4356
        %v4358 = vmul.f32 %v4350, %v3297
        %v4359 = vmul.f32 %v4344, %v4351
        %v4360 = vadd.f32 %v4358, %v4359
        %v4361 = vtanh.pop %v4360
        %v4362 = vmul.f32 %v4357, %v4361
        %v4363 = vsub.f32 %v4362, %v3294
        %4365 = vset.pattern.permute.xlu0 0
        %4366 = vperm.xlu0 %4365, %v3839
        %v4367 = vpop.permute.xlu0 %4366
        %v4369 = vmul.f32 %v4367, %v4363
        %v4370 = vadd.f32 %v3294, %v4369
        %v4371 = vsub.f32 %v4360, %v3297
        %v4372 = vmul.f32 %v4367, %v4371
        %v4373 = vadd.f32 %v3297, %v4372
        %s4374 = scalar_lea.vmem %s566, 16
        %v4375 = vld [vmem:[%s4374] sm:$0xf]
        %s4376 = scalar_lea.vmem %s586, 32
        %v4377 = vld [vmem:[%s4376] sm:$0xff]
        %4378 = vst [vmem:[#allocation7] sm:$0xf] %v4375
        %v4379 = vpack.c.bf16 %v3832, %v3832
        %4380 = vst [vmem:[#allocation7 + $0x4] sm:$0xf] %v4379
        %v4381 = vld [vmem:[#allocation7] sm:$0xff]
        %v4382 = vld [vmem:[#allocation10] sm:$0xff]
        %v4383 = vld [vmem:[#allocation10 + $0x8] sm:$0xff]
        %v4384 = vld [vmem:[#allocation10 + $0x10] sm:$0xff]
        %v4385 = vld [vmem:[#allocation10 + $0x18] sm:$0xff]
        %v4386 = vld [vmem:[#allocation10 + $0x20] sm:$0xff]
        %v4387 = vld [vmem:[#allocation10 + $0x28] sm:$0xff]
        %v4388 = vld [vmem:[#allocation10 + $0x30] sm:$0xff]
        %v4389 = vld [vmem:[#allocation10 + $0x38] sm:$0xff]
        %v4390 = vld [vmem:[#allocation10 + $0x40] sm:$0xff]
        %v4391 = vld [vmem:[#allocation10 + $0x48] sm:$0xff]
        %v4392 = vld [vmem:[#allocation10 + $0x50] sm:$0xff]
        %v4393 = vld [vmem:[#allocation10 + $0x58] sm:$0xff]
        %v4394 = vld [vmem:[#allocation10 + $0x60] sm:$0xff]
        %v4395 = vld [vmem:[#allocation10 + $0x68] sm:$0xff]
        %v4396 = vld [vmem:[#allocation10 + $0x70] sm:$0xff]
        %v4397 = vld [vmem:[#allocation10 + $0x78] sm:$0xff]
        %v4398 = vld [vmem:[#allocation10 + $0x80] sm:$0xff]
        %v4399 = vld [vmem:[#allocation10 + $0x88] sm:$0xff]
        %v4400 = vld [vmem:[#allocation10 + $0x90] sm:$0xff]
        %v4401 = vld [vmem:[#allocation10 + $0x98] sm:$0xff]
        %v4402 = vld [vmem:[#allocation10 + $0xa0] sm:$0xff]
        %v4403 = vld [vmem:[#allocation10 + $0xa8] sm:$0xff]
        %v4404 = vld [vmem:[#allocation10 + $0xb0] sm:$0xff]
        %v4405 = vld [vmem:[#allocation10 + $0xb8] sm:$0xff]
        %v4406 = vld [vmem:[#allocation10 + $0xc0] sm:$0xff]
        %v4407 = vld [vmem:[#allocation10 + $0xc8] sm:$0xff]
        %v4408 = vld [vmem:[#allocation10 + $0xd0] sm:$0xff]
        %v4409 = vld [vmem:[#allocation10 + $0xd8] sm:$0xff]
        %v4410 = vld [vmem:[#allocation10 + $0xe0] sm:$0xff]
        %v4411 = vld [vmem:[#allocation10 + $0xe8] sm:$0xff]
        %v4412 = vld [vmem:[#allocation10 + $0xf0] sm:$0xff]
        %v4413 = vld [vmem:[#allocation10 + $0xf8] sm:$0xff]
        %v4414 = vld [vmem:[#allocation10 + $0x100] sm:$0xff]
        %v4415 = vld [vmem:[#allocation10 + $0x108] sm:$0xff]
        %v4416 = vld [vmem:[#allocation10 + $0x110] sm:$0xff]
        %v4417 = vld [vmem:[#allocation10 + $0x118] sm:$0xff]
        %v4418 = vld [vmem:[#allocation10 + $0x120] sm:$0xff]
        %v4419 = vld [vmem:[#allocation10 + $0x128] sm:$0xff]
        %v4420 = vld [vmem:[#allocation10 + $0x130] sm:$0xff]
        %v4421 = vld [vmem:[#allocation10 + $0x138] sm:$0xff]
        %v4422 = vld [vmem:[#allocation10 + $0x140] sm:$0xff]
        %v4423 = vld [vmem:[#allocation10 + $0x148] sm:$0xff]
        %v4424 = vld [vmem:[#allocation10 + $0x150] sm:$0xff]
        %v4425 = vld [vmem:[#allocation10 + $0x158] sm:$0xff]
        %v4426 = vld [vmem:[#allocation10 + $0x160] sm:$0xff]
        %v4427 = vld [vmem:[#allocation10 + $0x168] sm:$0xff]
        %v4428 = vld [vmem:[#allocation10 + $0x170] sm:$0xff]
        %v4429 = vld [vmem:[#allocation10 + $0x178] sm:$0xff]
        %v4430 = vld [vmem:[#allocation10 + $0x180] sm:$0xff]
        %v4431 = vld [vmem:[#allocation10 + $0x188] sm:$0xff]
        %v4432 = vld [vmem:[#allocation10 + $0x190] sm:$0xff]
        %v4433 = vld [vmem:[#allocation10 + $0x198] sm:$0xff]
        %v4434 = vld [vmem:[#allocation10 + $0x1a0] sm:$0xff]
        %v4435 = vld [vmem:[#allocation10 + $0x1a8] sm:$0xff]
        %v4436 = vld [vmem:[#allocation10 + $0x1b0] sm:$0xff]
        %v4437 = vld [vmem:[#allocation10 + $0x1b8] sm:$0xff]
        %v4438 = vld [vmem:[#allocation10 + $0x1c0] sm:$0xff]
        %v4439 = vld [vmem:[#allocation10 + $0x1c8] sm:$0xff]
        %v4440 = vld [vmem:[#allocation10 + $0x1d0] sm:$0xff]
        %v4441 = vld [vmem:[#allocation10 + $0x1d8] sm:$0xff]
        %v4442 = vld [vmem:[#allocation10 + $0x1e0] sm:$0xff]
        %v4443 = vld [vmem:[#allocation10 + $0x1e8] sm:$0xff]
        %v4444 = vld [vmem:[#allocation10 + $0x1f0] sm:$0xff]
        %v4445 = vld [vmem:[#allocation10 + $0x1f8] sm:$0xff]
        %v4446 = vld [vmem:[%s8] sm:$0xf]
        %v4448 = vlaneseq
        %v4449 = vshrl.u32 %v4448, 7
        %v4450 = vsub.s32 0, %v4449
        %v4451 = vrot.slane %v4446, %v4450
        %v4452 = vlaneseq
        %v4453 = vshrl.u32 %v4452, 7
        %v4454 = vsub.s32 1, %v4453
        %v4455 = vrot.slane %v4446, %v4454
        %v4456 = vlaneseq
        %v4457 = vshrl.u32 %v4456, 7
        %v4458 = vsub.s32 2, %v4457
        %v4459 = vrot.slane %v4446, %v4458
        %v4460 = vlaneseq
        %v4461 = vshrl.u32 %v4460, 7
        %v4462 = vsub.s32 3, %v4461
        %v4463 = vrot.slane %v4446, %v4462
        %v4469 = vunpack.c.l.b16 %v4381
        %v4470 = vunpack.c.h.b16 %v4381
        %v4471 = vpack.c.b16 %v4469, %v4469
        %v4472 = vpack.c.b16 %v4470, %v4470
        %v4539 = vunpack.c.l.b16 %v4382
        %v4540 = vunpack.c.h.b16 %v4382
        %v4541 = vunpack.c.l.b16 %v4383
        %v4542 = vunpack.c.h.b16 %v4383
        %v4543 = vunpack.c.l.b16 %v4384
        %v4544 = vunpack.c.h.b16 %v4384
        %v4545 = vunpack.c.l.b16 %v4385
        %v4546 = vunpack.c.h.b16 %v4385
        %v4547 = vunpack.c.l.b16 %v4386
        %v4548 = vunpack.c.h.b16 %v4386
        %v4549 = vunpack.c.l.b16 %v4387
        %v4550 = vunpack.c.h.b16 %v4387
        %v4551 = vunpack.c.l.b16 %v4388
        %v4552 = vunpack.c.h.b16 %v4388
        %v4553 = vunpack.c.l.b16 %v4389
        %v4554 = vunpack.c.h.b16 %v4389
        %v4555 = vunpack.c.l.b16 %v4390
        %v4556 = vunpack.c.h.b16 %v4390
        %v4557 = vunpack.c.l.b16 %v4391
        %v4558 = vunpack.c.h.b16 %v4391
        %v4559 = vunpack.c.l.b16 %v4392
        %v4560 = vunpack.c.h.b16 %v4392
        %v4561 = vunpack.c.l.b16 %v4393
        %v4562 = vunpack.c.h.b16 %v4393
        %v4563 = vunpack.c.l.b16 %v4394
        %v4564 = vunpack.c.h.b16 %v4394
        %v4565 = vunpack.c.l.b16 %v4395
        %v4566 = vunpack.c.h.b16 %v4395
        %v4567 = vunpack.c.l.b16 %v4396
        %v4568 = vunpack.c.h.b16 %v4396
        %v4569 = vunpack.c.l.b16 %v4397
        %v4570 = vunpack.c.h.b16 %v4397
        %v4571 = vunpack.c.l.b16 %v4398
        %v4572 = vunpack.c.h.b16 %v4398
        %v4573 = vunpack.c.l.b16 %v4399
        %v4574 = vunpack.c.h.b16 %v4399
        %v4575 = vunpack.c.l.b16 %v4400
        %v4576 = vunpack.c.h.b16 %v4400
        %v4577 = vunpack.c.l.b16 %v4401
        %v4578 = vunpack.c.h.b16 %v4401
        %v4579 = vunpack.c.l.b16 %v4402
        %v4580 = vunpack.c.h.b16 %v4402
        %v4581 = vunpack.c.l.b16 %v4403
        %v4582 = vunpack.c.h.b16 %v4403
        %v4583 = vunpack.c.l.b16 %v4404
        %v4584 = vunpack.c.h.b16 %v4404
        %v4585 = vunpack.c.l.b16 %v4405
        %v4586 = vunpack.c.h.b16 %v4405
        %v4587 = vunpack.c.l.b16 %v4406
        %v4588 = vunpack.c.h.b16 %v4406
        %v4589 = vunpack.c.l.b16 %v4407
        %v4590 = vunpack.c.h.b16 %v4407
        %v4591 = vunpack.c.l.b16 %v4408
        %v4592 = vunpack.c.h.b16 %v4408
        %v4593 = vunpack.c.l.b16 %v4409
        %v4594 = vunpack.c.h.b16 %v4409
        %v4595 = vunpack.c.l.b16 %v4410
        %v4596 = vunpack.c.h.b16 %v4410
        %v4597 = vunpack.c.l.b16 %v4411
        %v4598 = vunpack.c.h.b16 %v4411
        %v4599 = vunpack.c.l.b16 %v4412
        %v4600 = vunpack.c.h.b16 %v4412
        %v4601 = vunpack.c.l.b16 %v4413
        %v4602 = vunpack.c.h.b16 %v4413
        %v4603 = vunpack.c.l.b16 %v4414
        %v4604 = vunpack.c.h.b16 %v4414
        %v4605 = vunpack.c.l.b16 %v4415
        %v4606 = vunpack.c.h.b16 %v4415
        %v4607 = vunpack.c.l.b16 %v4416
        %v4608 = vunpack.c.h.b16 %v4416
        %v4609 = vunpack.c.l.b16 %v4417
        %v4610 = vunpack.c.h.b16 %v4417
        %v4611 = vunpack.c.l.b16 %v4418
        %v4612 = vunpack.c.h.b16 %v4418
        %v4613 = vunpack.c.l.b16 %v4419
        %v4614 = vunpack.c.h.b16 %v4419
        %v4615 = vunpack.c.l.b16 %v4420
        %v4616 = vunpack.c.h.b16 %v4420
        %v4617 = vunpack.c.l.b16 %v4421
        %v4618 = vunpack.c.h.b16 %v4421
        %v4619 = vunpack.c.l.b16 %v4422
        %v4620 = vunpack.c.h.b16 %v4422
        %v4621 = vunpack.c.l.b16 %v4423
        %v4622 = vunpack.c.h.b16 %v4423
        %v4623 = vunpack.c.l.b16 %v4424
        %v4624 = vunpack.c.h.b16 %v4424
        %v4625 = vunpack.c.l.b16 %v4425
        %v4626 = vunpack.c.h.b16 %v4425
        %v4627 = vunpack.c.l.b16 %v4426
        %v4628 = vunpack.c.h.b16 %v4426
        %v4629 = vunpack.c.l.b16 %v4427
        %v4630 = vunpack.c.h.b16 %v4427
        %v4631 = vunpack.c.l.b16 %v4428
        %v4632 = vunpack.c.h.b16 %v4428
        %v4633 = vunpack.c.l.b16 %v4429
        %v4634 = vunpack.c.h.b16 %v4429
        %v4635 = vunpack.c.l.b16 %v4430
        %v4636 = vunpack.c.h.b16 %v4430
        %v4637 = vunpack.c.l.b16 %v4431
        %v4638 = vunpack.c.h.b16 %v4431
        %v4639 = vunpack.c.l.b16 %v4432
        %v4640 = vunpack.c.h.b16 %v4432
        %v4641 = vunpack.c.l.b16 %v4433
        %v4642 = vunpack.c.h.b16 %v4433
        %v4643 = vunpack.c.l.b16 %v4434
        %v4644 = vunpack.c.h.b16 %v4434
        %v4645 = vunpack.c.l.b16 %v4435
        %v4646 = vunpack.c.h.b16 %v4435
        %v4647 = vunpack.c.l.b16 %v4436
        %v4648 = vunpack.c.h.b16 %v4436
        %v4649 = vunpack.c.l.b16 %v4437
        %v4650 = vunpack.c.h.b16 %v4437
        %v4651 = vunpack.c.l.b16 %v4438
        %v4652 = vunpack.c.h.b16 %v4438
        %v4653 = vunpack.c.l.b16 %v4439
        %v4654 = vunpack.c.h.b16 %v4439
        %v4655 = vunpack.c.l.b16 %v4440
        %v4656 = vunpack.c.h.b16 %v4440
        %v4657 = vunpack.c.l.b16 %v4441
        %v4658 = vunpack.c.h.b16 %v4441
        %v4659 = vunpack.c.l.b16 %v4442
        %v4660 = vunpack.c.h.b16 %v4442
        %v4661 = vunpack.c.l.b16 %v4443
        %v4662 = vunpack.c.h.b16 %v4443
        %v4663 = vunpack.c.l.b16 %v4444
        %v4664 = vunpack.c.h.b16 %v4444
        %v4665 = vunpack.c.l.b16 %v4445
        %v4666 = vunpack.c.h.b16 %v4445
        %v4667 = vpack.c.b16 %v4543, %v4539
        %v4668 = vpack.c.b16 %v4544, %v4540
        %v4669 = vpack.c.b16 %v4545, %v4541
        %v4670 = vpack.c.b16 %v4546, %v4542
        %v4671 = vpack.c.b16 %v4551, %v4547
        %v4672 = vpack.c.b16 %v4552, %v4548
        %v4673 = vpack.c.b16 %v4553, %v4549
        %v4674 = vpack.c.b16 %v4554, %v4550
        %v4675 = vpack.c.b16 %v4559, %v4555
        %v4676 = vpack.c.b16 %v4560, %v4556
        %v4677 = vpack.c.b16 %v4561, %v4557
        %v4678 = vpack.c.b16 %v4562, %v4558
        %v4679 = vpack.c.b16 %v4567, %v4563
        %v4680 = vpack.c.b16 %v4568, %v4564
        %v4681 = vpack.c.b16 %v4569, %v4565
        %v4682 = vpack.c.b16 %v4570, %v4566
        %v4683 = vpack.c.b16 %v4575, %v4571
        %v4684 = vpack.c.b16 %v4576, %v4572
        %v4685 = vpack.c.b16 %v4577, %v4573
        %v4686 = vpack.c.b16 %v4578, %v4574
        %v4687 = vpack.c.b16 %v4583, %v4579
        %v4688 = vpack.c.b16 %v4584, %v4580
        %v4689 = vpack.c.b16 %v4585, %v4581
        %v4690 = vpack.c.b16 %v4586, %v4582
        %v4691 = vpack.c.b16 %v4591, %v4587
        %v4692 = vpack.c.b16 %v4592, %v4588
        %v4693 = vpack.c.b16 %v4593, %v4589
        %v4694 = vpack.c.b16 %v4594, %v4590
        %v4695 = vpack.c.b16 %v4599, %v4595
        %v4696 = vpack.c.b16 %v4600, %v4596
        %v4697 = vpack.c.b16 %v4601, %v4597
        %v4698 = vpack.c.b16 %v4602, %v4598
        %v4699 = vpack.c.b16 %v4607, %v4603
        %v4700 = vpack.c.b16 %v4608, %v4604
        %v4701 = vpack.c.b16 %v4609, %v4605
        %v4702 = vpack.c.b16 %v4610, %v4606
        %v4703 = vpack.c.b16 %v4615, %v4611
        %v4704 = vpack.c.b16 %v4616, %v4612
        %v4705 = vpack.c.b16 %v4617, %v4613
        %v4706 = vpack.c.b16 %v4618, %v4614
        %v4707 = vpack.c.b16 %v4623, %v4619
        %v4708 = vpack.c.b16 %v4624, %v4620
        %v4709 = vpack.c.b16 %v4625, %v4621
        %v4710 = vpack.c.b16 %v4626, %v4622
        %v4711 = vpack.c.b16 %v4631, %v4627
        %v4712 = vpack.c.b16 %v4632, %v4628
        %v4713 = vpack.c.b16 %v4633, %v4629
        %v4714 = vpack.c.b16 %v4634, %v4630
        %v4715 = vpack.c.b16 %v4639, %v4635
        %v4716 = vpack.c.b16 %v4640, %v4636
        %v4717 = vpack.c.b16 %v4641, %v4637
        %v4718 = vpack.c.b16 %v4642, %v4638
        %v4719 = vpack.c.b16 %v4647, %v4643
        %v4720 = vpack.c.b16 %v4648, %v4644
        %v4721 = vpack.c.b16 %v4649, %v4645
        %v4722 = vpack.c.b16 %v4650, %v4646
        %v4723 = vpack.c.b16 %v4655, %v4651
        %v4724 = vpack.c.b16 %v4656, %v4652
        %v4725 = vpack.c.b16 %v4657, %v4653
        %v4726 = vpack.c.b16 %v4658, %v4654
        %v4727 = vpack.c.b16 %v4663, %v4659
        %v4728 = vpack.c.b16 %v4664, %v4660
        %v4729 = vpack.c.b16 %v4665, %v4661
        %v4730 = vpack.c.b16 %v4666, %v4662
        %4795 = vmatprep.subr.bf16.mxu0 %v4668
        %4796 = vmatpush1.bf16.msra.mxu0 %v4667
        %4797 = vmatprep.subr.bf16.mxu0 %v4672
        %4798 = vmatpush1.bf16.msra.mxu0 %v4671
        %4799 = vmatprep.subr.bf16.mxu0 %v4676
        %4800 = vmatpush1.bf16.msra.mxu0 %v4675
        %4801 = vmatprep.subr.bf16.mxu0 %v4680
        %4802 = vmatpush1.bf16.msra.mxu0 %v4679
        %4803 = vmatprep.subr.bf16.mxu0 %v4684
        %4804 = vmatpush1.bf16.msra.mxu0 %v4683
        %4805 = vmatprep.subr.bf16.mxu0 %v4688
        %4806 = vmatpush1.bf16.msra.mxu0 %v4687
        %4807 = vmatprep.subr.bf16.mxu0 %v4692
        %4808 = vmatpush1.bf16.msra.mxu0 %v4691
        %4809 = vmatprep.subr.bf16.mxu0 %v4696
        %4810 = vmatpush1.bf16.msra.mxu0 %v4695
        %4811 = vmatprep.subr.bf16.mxu0 %v4700
        %4812 = vmatpush1.bf16.msra.mxu0 %v4699
        %4813 = vmatprep.subr.bf16.mxu0 %v4704
        %4814 = vmatpush1.bf16.msra.mxu0 %v4703
        %4815 = vmatprep.subr.bf16.mxu0 %v4708
        %4816 = vmatpush1.bf16.msra.mxu0 %v4707
        %4817 = vmatprep.subr.bf16.mxu0 %v4712
        %4818 = vmatpush1.bf16.msra.mxu0 %v4711
        %4819 = vmatprep.subr.bf16.mxu0 %v4716
        %4820 = vmatpush1.bf16.msra.mxu0 %v4715
        %4821 = vmatprep.subr.bf16.mxu0 %v4720
        %4822 = vmatpush1.bf16.msra.mxu0 %v4719
        %4823 = vmatprep.subr.bf16.mxu0 %v4724
        %4824 = vmatpush1.bf16.msra.mxu0 %v4723
        %4825 = vmatprep.subr.bf16.mxu0 %v4728
        %4826 = vmatpush1.bf16.msra.mxu0 %v4727
        %4827 = vmatprep.mubr.bf16.mxu0 %v4472
        %4828 = vmatmul.mubr.bf16.gmra.mrb[0].mxu0 %v4471
        %v4829 = vpop.f32.mrb[0].mxu0
        %v4830 = vadd.f32 %v4451, %v4829
        %v4831 = vpop.f32.mrb[0].mxu0
        %v4832 = vadd.f32 %v4455, %v4831
        %v4833 = vpop.f32.mrb[0].mxu0
        %v4834 = vpop.f32.mrb[0].mxu0
        %4835 = vdwg.mxu0
        %4836 = vmatprep.subr.bf16.mxu0 %v4670
        %4837 = vmatpush1.bf16.msra.mxu0 %v4669
        %4838 = vmatprep.subr.bf16.mxu0 %v4674
        %4839 = vmatpush1.bf16.msra.mxu0 %v4673
        %4840 = vmatprep.subr.bf16.mxu0 %v4678
        %4841 = vmatpush1.bf16.msra.mxu0 %v4677
        %4842 = vmatprep.subr.bf16.mxu0 %v4682
        %4843 = vmatpush1.bf16.msra.mxu0 %v4681
        %4844 = vmatprep.subr.bf16.mxu0 %v4686
        %4845 = vmatpush1.bf16.msra.mxu0 %v4685
        %4846 = vmatprep.subr.bf16.mxu0 %v4690
        %4847 = vmatpush1.bf16.msra.mxu0 %v4689
        %4848 = vmatprep.subr.bf16.mxu0 %v4694
        %4849 = vmatpush1.bf16.msra.mxu0 %v4693
        %4850 = vmatprep.subr.bf16.mxu0 %v4698
        %4851 = vmatpush1.bf16.msra.mxu0 %v4697
        %4852 = vmatprep.subr.bf16.mxu0 %v4702
        %4853 = vmatpush1.bf16.msra.mxu0 %v4701
        %4854 = vmatprep.subr.bf16.mxu0 %v4706
        %4855 = vmatpush1.bf16.msra.mxu0 %v4705
        %4856 = vmatprep.subr.bf16.mxu0 %v4710
        %4857 = vmatpush1.bf16.msra.mxu0 %v4709
        %4858 = vmatprep.subr.bf16.mxu0 %v4714
        %4859 = vmatpush1.bf16.msra.mxu0 %v4713
        %4860 = vmatprep.subr.bf16.mxu0 %v4718
        %4861 = vmatpush1.bf16.msra.mxu0 %v4717
        %4862 = vmatprep.subr.bf16.mxu0 %v4722
        %4863 = vmatpush1.bf16.msra.mxu0 %v4721
        %4864 = vmatprep.subr.bf16.mxu0 %v4726
        %4865 = vmatpush1.bf16.msra.mxu0 %v4725
        %4866 = vmatprep.subr.bf16.mxu0 %v4730
        %4867 = vmatpush1.bf16.msra.mxu0 %v4729
        %4868 = vmatprep.mubr.bf16.mxu0 %v4472
        %4869 = vmatmul.mubr.bf16.gmra.mrb[0].mxu0 %v4471
        %v4870 = vpop.f32.mrb[0].mxu0
        %v4871 = vadd.f32 %v4459, %v4870
        %v4872 = vpop.f32.mrb[0].mxu0
        %v4873 = vadd.f32 %v4463, %v4872
        %v4874 = vpop.f32.mrb[0].mxu0
        %v4875 = vpop.f32.mrb[0].mxu0
        %4876 = vdwg.mxu0
        %v4877 = vxor.u32 %v4830, 2147483648
        %v4878 = vmul.f32 %v4877, 1.442695
        %v4879 = vpow.pop %v4878
        %v4880 = vadd.f32 %v4879, 1.0
        %v4881 = vrcp.pop %v4880
        %v4882 = vmul.f32 1.0, %v4881
        %v4883 = vxor.u32 %v4832, 2147483648
        %v4884 = vmul.f32 %v4883, 1.442695
        %v4885 = vpow.pop %v4884
        %v4886 = vadd.f32 %v4885, 1.0
        %v4887 = vrcp.pop %v4886
        %v4888 = vmul.f32 1.0, %v4887
        %v4889 = vtanh.pop %v4871
        %v4890 = vxor.u32 %v4873, 2147483648
        %v4891 = vmul.f32 %v4890, 1.442695
        %v4892 = vpow.pop %v4891
        %v4893 = vadd.f32 %v4892, 1.0
        %v4894 = vrcp.pop %v4893
        %v4895 = vmul.f32 1.0, %v4894
        %v4896 = vmul.f32 %v4888, %v3835
        %v4897 = vmul.f32 %v4882, %v4889
        %v4898 = vadd.f32 %v4896, %v4897
        %v4899 = vtanh.pop %v4898
        %v4900 = vmul.f32 %v4895, %v4899
        %v4901 = vsub.f32 %v4900, %v3832
        %4903 = vset.pattern.permute.xlu0 0
        %4904 = vperm.xlu0 %4903, %v4377
        %v4905 = vpop.permute.xlu0 %4904
        %v4907 = vmul.f32 %v4905, %v4901
        %v4908 = vadd.f32 %v3832, %v4907
        %v4909 = vsub.f32 %v4898, %v3835
        %v4910 = vmul.f32 %v4905, %v4909
        %v4911 = vadd.f32 %v3835, %v4910
        %s4912 = scalar_lea.vmem %s556, 16
        %v4913 = vld [vmem:[%s4912] sm:$0xf]
        %s4914 = scalar_lea.vmem %s576, 32
        %v4915 = vld [vmem:[%s4914] sm:$0xff]
        %4916 = vst [vmem:[#allocation6] sm:$0xf] %v4913
        %v4917 = vpack.c.bf16 %v4370, %v4370
        %4918 = vst [vmem:[#allocation6 + $0x4] sm:$0xf] %v4917
        %v4919 = vld [vmem:[#allocation6] sm:$0xff]
        %v4920 = vld [vmem:[#allocation8] sm:$0xff]
        %v4921 = vld [vmem:[#allocation8 + $0x8] sm:$0xff]
        %v4922 = vld [vmem:[#allocation8 + $0x10] sm:$0xff]
        %v4923 = vld [vmem:[#allocation8 + $0x18] sm:$0xff]
        %v4924 = vld [vmem:[#allocation8 + $0x20] sm:$0xff]
        %v4925 = vld [vmem:[#allocation8 + $0x28] sm:$0xff]
        %v4926 = vld [vmem:[#allocation8 + $0x30] sm:$0xff]
        %v4927 = vld [vmem:[#allocation8 + $0x38] sm:$0xff]
        %v4928 = vld [vmem:[#allocation8 + $0x40] sm:$0xff]
        %v4929 = vld [vmem:[#allocation8 + $0x48] sm:$0xff]
        %v4930 = vld [vmem:[#allocation8 + $0x50] sm:$0xff]
        %v4931 = vld [vmem:[#allocation8 + $0x58] sm:$0xff]
        %v4932 = vld [vmem:[#allocation8 + $0x60] sm:$0xff]
        %v4933 = vld [vmem:[#allocation8 + $0x68] sm:$0xff]
        %v4934 = vld [vmem:[#allocation8 + $0x70] sm:$0xff]
        %v4935 = vld [vmem:[#allocation8 + $0x78] sm:$0xff]
        %v4936 = vld [vmem:[#allocation8 + $0x80] sm:$0xff]
        %v4937 = vld [vmem:[#allocation8 + $0x88] sm:$0xff]
        %v4938 = vld [vmem:[#allocation8 + $0x90] sm:$0xff]
        %v4939 = vld [vmem:[#allocation8 + $0x98] sm:$0xff]
        %v4940 = vld [vmem:[#allocation8 + $0xa0] sm:$0xff]
        %v4941 = vld [vmem:[#allocation8 + $0xa8] sm:$0xff]
        %v4942 = vld [vmem:[#allocation8 + $0xb0] sm:$0xff]
        %v4943 = vld [vmem:[#allocation8 + $0xb8] sm:$0xff]
        %v4944 = vld [vmem:[#allocation8 + $0xc0] sm:$0xff]
        %v4945 = vld [vmem:[#allocation8 + $0xc8] sm:$0xff]
        %v4946 = vld [vmem:[#allocation8 + $0xd0] sm:$0xff]
        %v4947 = vld [vmem:[#allocation8 + $0xd8] sm:$0xff]
        %v4948 = vld [vmem:[#allocation8 + $0xe0] sm:$0xff]
        %v4949 = vld [vmem:[#allocation8 + $0xe8] sm:$0xff]
        %v4950 = vld [vmem:[#allocation8 + $0xf0] sm:$0xff]
        %v4951 = vld [vmem:[#allocation8 + $0xf8] sm:$0xff]
        %v4952 = vld [vmem:[#allocation8 + $0x100] sm:$0xff]
        %v4953 = vld [vmem:[#allocation8 + $0x108] sm:$0xff]
        %v4954 = vld [vmem:[#allocation8 + $0x110] sm:$0xff]
        %v4955 = vld [vmem:[#allocation8 + $0x118] sm:$0xff]
        %v4956 = vld [vmem:[#allocation8 + $0x120] sm:$0xff]
        %v4957 = vld [vmem:[#allocation8 + $0x128] sm:$0xff]
        %v4958 = vld [vmem:[#allocation8 + $0x130] sm:$0xff]
        %v4959 = vld [vmem:[#allocation8 + $0x138] sm:$0xff]
        %v4960 = vld [vmem:[#allocation8 + $0x140] sm:$0xff]
        %v4961 = vld [vmem:[#allocation8 + $0x148] sm:$0xff]
        %v4962 = vld [vmem:[#allocation8 + $0x150] sm:$0xff]
        %v4963 = vld [vmem:[#allocation8 + $0x158] sm:$0xff]
        %v4964 = vld [vmem:[#allocation8 + $0x160] sm:$0xff]
        %v4965 = vld [vmem:[#allocation8 + $0x168] sm:$0xff]
        %v4966 = vld [vmem:[#allocation8 + $0x170] sm:$0xff]
        %v4967 = vld [vmem:[#allocation8 + $0x178] sm:$0xff]
        %v4968 = vld [vmem:[#allocation8 + $0x180] sm:$0xff]
        %v4969 = vld [vmem:[#allocation8 + $0x188] sm:$0xff]
        %v4970 = vld [vmem:[#allocation8 + $0x190] sm:$0xff]
        %v4971 = vld [vmem:[#allocation8 + $0x198] sm:$0xff]
        %v4972 = vld [vmem:[#allocation8 + $0x1a0] sm:$0xff]
        %v4973 = vld [vmem:[#allocation8 + $0x1a8] sm:$0xff]
        %v4974 = vld [vmem:[#allocation8 + $0x1b0] sm:$0xff]
        %v4975 = vld [vmem:[#allocation8 + $0x1b8] sm:$0xff]
        %v4976 = vld [vmem:[#allocation8 + $0x1c0] sm:$0xff]
        %v4977 = vld [vmem:[#allocation8 + $0x1c8] sm:$0xff]
        %v4978 = vld [vmem:[#allocation8 + $0x1d0] sm:$0xff]
        %v4979 = vld [vmem:[#allocation8 + $0x1d8] sm:$0xff]
        %v4980 = vld [vmem:[#allocation8 + $0x1e0] sm:$0xff]
        %v4981 = vld [vmem:[#allocation8 + $0x1e8] sm:$0xff]
        %v4982 = vld [vmem:[#allocation8 + $0x1f0] sm:$0xff]
        %v4983 = vld [vmem:[#allocation8 + $0x1f8] sm:$0xff]
        %v4984 = vld [vmem:[%s6] sm:$0xf]
        %v4986 = vlaneseq
        %v4987 = vshrl.u32 %v4986, 7
        %v4988 = vsub.s32 0, %v4987
        %v4989 = vrot.slane %v4984, %v4988
        %v4990 = vlaneseq
        %v4991 = vshrl.u32 %v4990, 7
        %v4992 = vsub.s32 1, %v4991
        %v4993 = vrot.slane %v4984, %v4992
        %v4994 = vlaneseq
        %v4995 = vshrl.u32 %v4994, 7
        %v4996 = vsub.s32 2, %v4995
        %v4997 = vrot.slane %v4984, %v4996
        %v4998 = vlaneseq
        %v4999 = vshrl.u32 %v4998, 7
        %v5000 = vsub.s32 3, %v4999
        %v5001 = vrot.slane %v4984, %v5000
        %v5007 = vunpack.c.l.b16 %v4919
        %v5008 = vunpack.c.h.b16 %v4919
        %v5009 = vpack.c.b16 %v5007, %v5007
        %v5010 = vpack.c.b16 %v5008, %v5008
        %v5077 = vunpack.c.l.b16 %v4920
        %v5078 = vunpack.c.h.b16 %v4920
        %v5079 = vunpack.c.l.b16 %v4921
        %v5080 = vunpack.c.h.b16 %v4921
        %v5081 = vunpack.c.l.b16 %v4922
        %v5082 = vunpack.c.h.b16 %v4922
        %v5083 = vunpack.c.l.b16 %v4923
        %v5084 = vunpack.c.h.b16 %v4923
        %v5085 = vunpack.c.l.b16 %v4924
        %v5086 = vunpack.c.h.b16 %v4924
        %v5087 = vunpack.c.l.b16 %v4925
        %v5088 = vunpack.c.h.b16 %v4925
        %v5089 = vunpack.c.l.b16 %v4926
        %v5090 = vunpack.c.h.b16 %v4926
        %v5091 = vunpack.c.l.b16 %v4927
        %v5092 = vunpack.c.h.b16 %v4927
        %v5093 = vunpack.c.l.b16 %v4928
        %v5094 = vunpack.c.h.b16 %v4928
        %v5095 = vunpack.c.l.b16 %v4929
        %v5096 = vunpack.c.h.b16 %v4929
        %v5097 = vunpack.c.l.b16 %v4930
        %v5098 = vunpack.c.h.b16 %v4930
        %v5099 = vunpack.c.l.b16 %v4931
        %v5100 = vunpack.c.h.b16 %v4931
        %v5101 = vunpack.c.l.b16 %v4932
        %v5102 = vunpack.c.h.b16 %v4932
        %v5103 = vunpack.c.l.b16 %v4933
        %v5104 = vunpack.c.h.b16 %v4933
        %v5105 = vunpack.c.l.b16 %v4934
        %v5106 = vunpack.c.h.b16 %v4934
        %v5107 = vunpack.c.l.b16 %v4935
        %v5108 = vunpack.c.h.b16 %v4935
        %v5109 = vunpack.c.l.b16 %v4936
        %v5110 = vunpack.c.h.b16 %v4936
        %v5111 = vunpack.c.l.b16 %v4937
        %v5112 = vunpack.c.h.b16 %v4937
        %v5113 = vunpack.c.l.b16 %v4938
        %v5114 = vunpack.c.h.b16 %v4938
        %v5115 = vunpack.c.l.b16 %v4939
        %v5116 = vunpack.c.h.b16 %v4939
        %v5117 = vunpack.c.l.b16 %v4940
        %v5118 = vunpack.c.h.b16 %v4940
        %v5119 = vunpack.c.l.b16 %v4941
        %v5120 = vunpack.c.h.b16 %v4941
        %v5121 = vunpack.c.l.b16 %v4942
        %v5122 = vunpack.c.h.b16 %v4942
        %v5123 = vunpack.c.l.b16 %v4943
        %v5124 = vunpack.c.h.b16 %v4943
        %v5125 = vunpack.c.l.b16 %v4944
        %v5126 = vunpack.c.h.b16 %v4944
        %v5127 = vunpack.c.l.b16 %v4945
        %v5128 = vunpack.c.h.b16 %v4945
        %v5129 = vunpack.c.l.b16 %v4946
        %v5130 = vunpack.c.h.b16 %v4946
        %v5131 = vunpack.c.l.b16 %v4947
        %v5132 = vunpack.c.h.b16 %v4947
        %v5133 = vunpack.c.l.b16 %v4948
        %v5134 = vunpack.c.h.b16 %v4948
        %v5135 = vunpack.c.l.b16 %v4949
        %v5136 = vunpack.c.h.b16 %v4949
        %v5137 = vunpack.c.l.b16 %v4950
        %v5138 = vunpack.c.h.b16 %v4950
        %v5139 = vunpack.c.l.b16 %v4951
        %v5140 = vunpack.c.h.b16 %v4951
        %v5141 = vunpack.c.l.b16 %v4952
        %v5142 = vunpack.c.h.b16 %v4952
        %v5143 = vunpack.c.l.b16 %v4953
        %v5144 = vunpack.c.h.b16 %v4953
        %v5145 = vunpack.c.l.b16 %v4954
        %v5146 = vunpack.c.h.b16 %v4954
        %v5147 = vunpack.c.l.b16 %v4955
        %v5148 = vunpack.c.h.b16 %v4955
        %v5149 = vunpack.c.l.b16 %v4956
        %v5150 = vunpack.c.h.b16 %v4956
        %v5151 = vunpack.c.l.b16 %v4957
        %v5152 = vunpack.c.h.b16 %v4957
        %v5153 = vunpack.c.l.b16 %v4958
        %v5154 = vunpack.c.h.b16 %v4958
        %v5155 = vunpack.c.l.b16 %v4959
        %v5156 = vunpack.c.h.b16 %v4959
        %v5157 = vunpack.c.l.b16 %v4960
        %v5158 = vunpack.c.h.b16 %v4960
        %v5159 = vunpack.c.l.b16 %v4961
        %v5160 = vunpack.c.h.b16 %v4961
        %v5161 = vunpack.c.l.b16 %v4962
        %v5162 = vunpack.c.h.b16 %v4962
        %v5163 = vunpack.c.l.b16 %v4963
        %v5164 = vunpack.c.h.b16 %v4963
        %v5165 = vunpack.c.l.b16 %v4964
        %v5166 = vunpack.c.h.b16 %v4964
        %v5167 = vunpack.c.l.b16 %v4965
        %v5168 = vunpack.c.h.b16 %v4965
        %v5169 = vunpack.c.l.b16 %v4966
        %v5170 = vunpack.c.h.b16 %v4966
        %v5171 = vunpack.c.l.b16 %v4967
        %v5172 = vunpack.c.h.b16 %v4967
        %v5173 = vunpack.c.l.b16 %v4968
        %v5174 = vunpack.c.h.b16 %v4968
        %v5175 = vunpack.c.l.b16 %v4969
        %v5176 = vunpack.c.h.b16 %v4969
        %v5177 = vunpack.c.l.b16 %v4970
        %v5178 = vunpack.c.h.b16 %v4970
        %v5179 = vunpack.c.l.b16 %v4971
        %v5180 = vunpack.c.h.b16 %v4971
        %v5181 = vunpack.c.l.b16 %v4972
        %v5182 = vunpack.c.h.b16 %v4972
        %v5183 = vunpack.c.l.b16 %v4973
        %v5184 = vunpack.c.h.b16 %v4973
        %v5185 = vunpack.c.l.b16 %v4974
        %v5186 = vunpack.c.h.b16 %v4974
        %v5187 = vunpack.c.l.b16 %v4975
        %v5188 = vunpack.c.h.b16 %v4975
        %v5189 = vunpack.c.l.b16 %v4976
        %v5190 = vunpack.c.h.b16 %v4976
        %v5191 = vunpack.c.l.b16 %v4977
        %v5192 = vunpack.c.h.b16 %v4977
        %v5193 = vunpack.c.l.b16 %v4978
        %v5194 = vunpack.c.h.b16 %v4978
        %v5195 = vunpack.c.l.b16 %v4979
        %v5196 = vunpack.c.h.b16 %v4979
        %v5197 = vunpack.c.l.b16 %v4980
        %v5198 = vunpack.c.h.b16 %v4980
        %v5199 = vunpack.c.l.b16 %v4981
        %v5200 = vunpack.c.h.b16 %v4981
        %v5201 = vunpack.c.l.b16 %v4982
        %v5202 = vunpack.c.h.b16 %v4982
        %v5203 = vunpack.c.l.b16 %v4983
        %v5204 = vunpack.c.h.b16 %v4983
        %v5205 = vpack.c.b16 %v5081, %v5077
        %v5206 = vpack.c.b16 %v5082, %v5078
        %v5207 = vpack.c.b16 %v5083, %v5079
        %v5208 = vpack.c.b16 %v5084, %v5080
        %v5209 = vpack.c.b16 %v5089, %v5085
        %v5210 = vpack.c.b16 %v5090, %v5086
        %v5211 = vpack.c.b16 %v5091, %v5087
        %v5212 = vpack.c.b16 %v5092, %v5088
        %v5213 = vpack.c.b16 %v5097, %v5093
        %v5214 = vpack.c.b16 %v5098, %v5094
        %v5215 = vpack.c.b16 %v5099, %v5095
        %v5216 = vpack.c.b16 %v5100, %v5096
        %v5217 = vpack.c.b16 %v5105, %v5101
        %v5218 = vpack.c.b16 %v5106, %v5102
        %v5219 = vpack.c.b16 %v5107, %v5103
        %v5220 = vpack.c.b16 %v5108, %v5104
        %v5221 = vpack.c.b16 %v5113, %v5109
        %v5222 = vpack.c.b16 %v5114, %v5110
        %v5223 = vpack.c.b16 %v5115, %v5111
        %v5224 = vpack.c.b16 %v5116, %v5112
        %v5225 = vpack.c.b16 %v5121, %v5117
        %v5226 = vpack.c.b16 %v5122, %v5118
        %v5227 = vpack.c.b16 %v5123, %v5119
        %v5228 = vpack.c.b16 %v5124, %v5120
        %v5229 = vpack.c.b16 %v5129, %v5125
        %v5230 = vpack.c.b16 %v5130, %v5126
        %v5231 = vpack.c.b16 %v5131, %v5127
        %v5232 = vpack.c.b16 %v5132, %v5128
        %v5233 = vpack.c.b16 %v5137, %v5133
        %v5234 = vpack.c.b16 %v5138, %v5134
        %v5235 = vpack.c.b16 %v5139, %v5135
        %v5236 = vpack.c.b16 %v5140, %v5136
        %v5237 = vpack.c.b16 %v5145, %v5141
        %v5238 = vpack.c.b16 %v5146, %v5142
        %v5239 = vpack.c.b16 %v5147, %v5143
        %v5240 = vpack.c.b16 %v5148, %v5144
        %v5241 = vpack.c.b16 %v5153, %v5149
        %v5242 = vpack.c.b16 %v5154, %v5150
        %v5243 = vpack.c.b16 %v5155, %v5151
        %v5244 = vpack.c.b16 %v5156, %v5152
        %v5245 = vpack.c.b16 %v5161, %v5157
        %v5246 = vpack.c.b16 %v5162, %v5158
        %v5247 = vpack.c.b16 %v5163, %v5159
        %v5248 = vpack.c.b16 %v5164, %v5160
        %v5249 = vpack.c.b16 %v5169, %v5165
        %v5250 = vpack.c.b16 %v5170, %v5166
        %v5251 = vpack.c.b16 %v5171, %v5167
        %v5252 = vpack.c.b16 %v5172, %v5168
        %v5253 = vpack.c.b16 %v5177, %v5173
        %v5254 = vpack.c.b16 %v5178, %v5174
        %v5255 = vpack.c.b16 %v5179, %v5175
        %v5256 = vpack.c.b16 %v5180, %v5176
        %v5257 = vpack.c.b16 %v5185, %v5181
        %v5258 = vpack.c.b16 %v5186, %v5182
        %v5259 = vpack.c.b16 %v5187, %v5183
        %v5260 = vpack.c.b16 %v5188, %v5184
        %v5261 = vpack.c.b16 %v5193, %v5189
        %v5262 = vpack.c.b16 %v5194, %v5190
        %v5263 = vpack.c.b16 %v5195, %v5191
        %v5264 = vpack.c.b16 %v5196, %v5192
        %v5265 = vpack.c.b16 %v5201, %v5197
        %v5266 = vpack.c.b16 %v5202, %v5198
        %v5267 = vpack.c.b16 %v5203, %v5199
        %v5268 = vpack.c.b16 %v5204, %v5200
        %5333 = vmatprep.subr.bf16.mxu0 %v5206
        %5334 = vmatpush1.bf16.msra.mxu0 %v5205
        %5335 = vmatprep.subr.bf16.mxu0 %v5210
        %5336 = vmatpush1.bf16.msra.mxu0 %v5209
        %5337 = vmatprep.subr.bf16.mxu0 %v5214
        %5338 = vmatpush1.bf16.msra.mxu0 %v5213
        %5339 = vmatprep.subr.bf16.mxu0 %v5218
        %5340 = vmatpush1.bf16.msra.mxu0 %v5217
        %5341 = vmatprep.subr.bf16.mxu0 %v5222
        %5342 = vmatpush1.bf16.msra.mxu0 %v5221
        %5343 = vmatprep.subr.bf16.mxu0 %v5226
        %5344 = vmatpush1.bf16.msra.mxu0 %v5225
        %5345 = vmatprep.subr.bf16.mxu0 %v5230
        %5346 = vmatpush1.bf16.msra.mxu0 %v5229
        %5347 = vmatprep.subr.bf16.mxu0 %v5234
        %5348 = vmatpush1.bf16.msra.mxu0 %v5233
        %5349 = vmatprep.subr.bf16.mxu0 %v5238
        %5350 = vmatpush1.bf16.msra.mxu0 %v5237
        %5351 = vmatprep.subr.bf16.mxu0 %v5242
        %5352 = vmatpush1.bf16.msra.mxu0 %v5241
        %5353 = vmatprep.subr.bf16.mxu0 %v5246
        %5354 = vmatpush1.bf16.msra.mxu0 %v5245
        %5355 = vmatprep.subr.bf16.mxu0 %v5250
        %5356 = vmatpush1.bf16.msra.mxu0 %v5249
        %5357 = vmatprep.subr.bf16.mxu0 %v5254
        %5358 = vmatpush1.bf16.msra.mxu0 %v5253
        %5359 = vmatprep.subr.bf16.mxu0 %v5258
        %5360 = vmatpush1.bf16.msra.mxu0 %v5257
        %5361 = vmatprep.subr.bf16.mxu0 %v5262
        %5362 = vmatpush1.bf16.msra.mxu0 %v5261
        %5363 = vmatprep.subr.bf16.mxu0 %v5266
        %5364 = vmatpush1.bf16.msra.mxu0 %v5265
        %5365 = vmatprep.mubr.bf16.mxu0 %v5010
        %5366 = vmatmul.mubr.bf16.gmra.mrb[0].mxu0 %v5009
        %v5367 = vpop.f32.mrb[0].mxu0
        %v5368 = vadd.f32 %v4989, %v5367
        %v5369 = vpop.f32.mrb[0].mxu0
        %v5370 = vadd.f32 %v4993, %v5369
        %v5371 = vpop.f32.mrb[0].mxu0
        %v5372 = vpop.f32.mrb[0].mxu0
        %5373 = vdwg.mxu0
        %5374 = vmatprep.subr.bf16.mxu0 %v5208
        %5375 = vmatpush1.bf16.msra.mxu0 %v5207
        %5376 = vmatprep.subr.bf16.mxu0 %v5212
        %5377 = vmatpush1.bf16.msra.mxu0 %v5211
        %5378 = vmatprep.subr.bf16.mxu0 %v5216
        %5379 = vmatpush1.bf16.msra.mxu0 %v5215
        %5380 = vmatprep.subr.bf16.mxu0 %v5220
        %5381 = vmatpush1.bf16.msra.mxu0 %v5219
        %5382 = vmatprep.subr.bf16.mxu0 %v5224
        %5383 = vmatpush1.bf16.msra.mxu0 %v5223
        %5384 = vmatprep.subr.bf16.mxu0 %v5228
        %5385 = vmatpush1.bf16.msra.mxu0 %v5227
        %5386 = vmatprep.subr.bf16.mxu0 %v5232
        %5387 = vmatpush1.bf16.msra.mxu0 %v5231
        %5388 = vmatprep.subr.bf16.mxu0 %v5236
        %5389 = vmatpush1.bf16.msra.mxu0 %v5235
        %5390 = vmatprep.subr.bf16.mxu0 %v5240
        %5391 = vmatpush1.bf16.msra.mxu0 %v5239
        %5392 = vmatprep.subr.bf16.mxu0 %v5244
        %5393 = vmatpush1.bf16.msra.mxu0 %v5243
        %5394 = vmatprep.subr.bf16.mxu0 %v5248
        %5395 = vmatpush1.bf16.msra.mxu0 %v5247
        %5396 = vmatprep.subr.bf16.mxu0 %v5252
        %5397 = vmatpush1.bf16.msra.mxu0 %v5251
        %5398 = vmatprep.subr.bf16.mxu0 %v5256
        %5399 = vmatpush1.bf16.msra.mxu0 %v5255
        %5400 = vmatprep.subr.bf16.mxu0 %v5260
        %5401 = vmatpush1.bf16.msra.mxu0 %v5259
        %5402 = vmatprep.subr.bf16.mxu0 %v5264
        %5403 = vmatpush1.bf16.msra.mxu0 %v5263
        %5404 = vmatprep.subr.bf16.mxu0 %v5268
        %5405 = vmatpush1.bf16.msra.mxu0 %v5267
        %5406 = vmatprep.mubr.bf16.mxu0 %v5010
        %5407 = vmatmul.mubr.bf16.gmra.mrb[0].mxu0 %v5009
        %v5408 = vpop.f32.mrb[0].mxu0
        %v5409 = vadd.f32 %v4997, %v5408
        %v5410 = vpop.f32.mrb[0].mxu0
        %v5411 = vadd.f32 %v5001, %v5410
        %v5412 = vpop.f32.mrb[0].mxu0
        %v5413 = vpop.f32.mrb[0].mxu0
        %5414 = vdwg.mxu0
        %v5415 = vxor.u32 %v5368, 2147483648
        %v5416 = vmul.f32 %v5415, 1.442695
        %v5417 = vpow.pop %v5416
        %v5418 = vadd.f32 %v5417, 1.0
        %v5419 = vrcp.pop %v5418
        %v5420 = vmul.f32 1.0, %v5419
        %v5421 = vxor.u32 %v5370, 2147483648
        %v5422 = vmul.f32 %v5421, 1.442695
        %v5423 = vpow.pop %v5422
        %v5424 = vadd.f32 %v5423, 1.0
        %v5425 = vrcp.pop %v5424
        %v5426 = vmul.f32 1.0, %v5425
        %v5427 = vtanh.pop %v5409
        %v5428 = vxor.u32 %v5411, 2147483648
        %v5429 = vmul.f32 %v5428, 1.442695
        %v5430 = vpow.pop %v5429
        %v5431 = vadd.f32 %v5430, 1.0
        %v5432 = vrcp.pop %v5431
        %v5433 = vmul.f32 1.0, %v5432
        %v5434 = vmul.f32 %v5426, %v4373
        %v5435 = vmul.f32 %v5420, %v5427
        %v5436 = vadd.f32 %v5434, %v5435
        %v5437 = vtanh.pop %v5436
        %v5438 = vmul.f32 %v5433, %v5437
        %v5439 = vsub.f32 %v5438, %v4370
        %5441 = vset.pattern.permute.xlu0 0
        %5442 = vperm.xlu0 %5441, %v4915
        %v5443 = vpop.permute.xlu0 %5442
        %v5445 = vmul.f32 %v5443, %v5439
        %v5446 = vadd.f32 %v4370, %v5445
        %v5447 = vsub.f32 %v5436, %v4373
        %v5448 = vmul.f32 %v5443, %v5447
        %v5449 = vadd.f32 %v4373, %v5448
        %s5450 = scalar_lea.vmem %s566, 12
        %v5451 = vld [vmem:[%s5450] sm:$0xf]
        %s5452 = scalar_lea.vmem %s586, 24
        %v5453 = vld [vmem:[%s5452] sm:$0xff]
        %5454 = vst [vmem:[#allocation7] sm:$0xf] %v5451
        %v5455 = vpack.c.bf16 %v4908, %v4908
        %5456 = vst [vmem:[#allocation7 + $0x4] sm:$0xf] %v5455
        %v5457 = vld [vmem:[#allocation7] sm:$0xff]
        %v5458 = vld [vmem:[#allocation10] sm:$0xff]
        %v5459 = vld [vmem:[#allocation10 + $0x8] sm:$0xff]
        %v5460 = vld [vmem:[#allocation10 + $0x10] sm:$0xff]
        %v5461 = vld [vmem:[#allocation10 + $0x18] sm:$0xff]
        %v5462 = vld [vmem:[#allocation10 + $0x20] sm:$0xff]
        %v5463 = vld [vmem:[#allocation10 + $0x28] sm:$0xff]
        %v5464 = vld [vmem:[#allocation10 + $0x30] sm:$0xff]
        %v5465 = vld [vmem:[#allocation10 + $0x38] sm:$0xff]
        %v5466 = vld [vmem:[#allocation10 + $0x40] sm:$0xff]
        %v5467 = vld [vmem:[#allocation10 + $0x48] sm:$0xff]
        %v5468 = vld [vmem:[#allocation10 + $0x50] sm:$0xff]
        %v5469 = vld [vmem:[#allocation10 + $0x58] sm:$0xff]
        %v5470 = vld [vmem:[#allocation10 + $0x60] sm:$0xff]
        %v5471 = vld [vmem:[#allocation10 + $0x68] sm:$0xff]
        %v5472 = vld [vmem:[#allocation10 + $0x70] sm:$0xff]
        %v5473 = vld [vmem:[#allocation10 + $0x78] sm:$0xff]
        %v5474 = vld [vmem:[#allocation10 + $0x80] sm:$0xff]
        %v5475 = vld [vmem:[#allocation10 + $0x88] sm:$0xff]
        %v5476 = vld [vmem:[#allocation10 + $0x90] sm:$0xff]
        %v5477 = vld [vmem:[#allocation10 + $0x98] sm:$0xff]
        %v5478 = vld [vmem:[#allocation10 + $0xa0] sm:$0xff]
        %v5479 = vld [vmem:[#allocation10 + $0xa8] sm:$0xff]
        %v5480 = vld [vmem:[#allocation10 + $0xb0] sm:$0xff]
        %v5481 = vld [vmem:[#allocation10 + $0xb8] sm:$0xff]
        %v5482 = vld [vmem:[#allocation10 + $0xc0] sm:$0xff]
        %v5483 = vld [vmem:[#allocation10 + $0xc8] sm:$0xff]
        %v5484 = vld [vmem:[#allocation10 + $0xd0] sm:$0xff]
        %v5485 = vld [vmem:[#allocation10 + $0xd8] sm:$0xff]
        %v5486 = vld [vmem:[#allocation10 + $0xe0] sm:$0xff]
        %v5487 = vld [vmem:[#allocation10 + $0xe8] sm:$0xff]
        %v5488 = vld [vmem:[#allocation10 + $0xf0] sm:$0xff]
        %v5489 = vld [vmem:[#allocation10 + $0xf8] sm:$0xff]
        %v5490 = vld [vmem:[#allocation10 + $0x100] sm:$0xff]
        %v5491 = vld [vmem:[#allocation10 + $0x108] sm:$0xff]
        %v5492 = vld [vmem:[#allocation10 + $0x110] sm:$0xff]
        %v5493 = vld [vmem:[#allocation10 + $0x118] sm:$0xff]
        %v5494 = vld [vmem:[#allocation10 + $0x120] sm:$0xff]
        %v5495 = vld [vmem:[#allocation10 + $0x128] sm:$0xff]
        %v5496 = vld [vmem:[#allocation10 + $0x130] sm:$0xff]
        %v5497 = vld [vmem:[#allocation10 + $0x138] sm:$0xff]
        %v5498 = vld [vmem:[#allocation10 + $0x140] sm:$0xff]
        %v5499 = vld [vmem:[#allocation10 + $0x148] sm:$0xff]
        %v5500 = vld [vmem:[#allocation10 + $0x150] sm:$0xff]
        %v5501 = vld [vmem:[#allocation10 + $0x158] sm:$0xff]
        %v5502 = vld [vmem:[#allocation10 + $0x160] sm:$0xff]
        %v5503 = vld [vmem:[#allocation10 + $0x168] sm:$0xff]
        %v5504 = vld [vmem:[#allocation10 + $0x170] sm:$0xff]
        %v5505 = vld [vmem:[#allocation10 + $0x178] sm:$0xff]
        %v5506 = vld [vmem:[#allocation10 + $0x180] sm:$0xff]
        %v5507 = vld [vmem:[#allocation10 + $0x188] sm:$0xff]
        %v5508 = vld [vmem:[#allocation10 + $0x190] sm:$0xff]
        %v5509 = vld [vmem:[#allocation10 + $0x198] sm:$0xff]
        %v5510 = vld [vmem:[#allocation10 + $0x1a0] sm:$0xff]
        %v5511 = vld [vmem:[#allocation10 + $0x1a8] sm:$0xff]
        %v5512 = vld [vmem:[#allocation10 + $0x1b0] sm:$0xff]
        %v5513 = vld [vmem:[#allocation10 + $0x1b8] sm:$0xff]
        %v5514 = vld [vmem:[#allocation10 + $0x1c0] sm:$0xff]
        %v5515 = vld [vmem:[#allocation10 + $0x1c8] sm:$0xff]
        %v5516 = vld [vmem:[#allocation10 + $0x1d0] sm:$0xff]
        %v5517 = vld [vmem:[#allocation10 + $0x1d8] sm:$0xff]
        %v5518 = vld [vmem:[#allocation10 + $0x1e0] sm:$0xff]
        %v5519 = vld [vmem:[#allocation10 + $0x1e8] sm:$0xff]
        %v5520 = vld [vmem:[#allocation10 + $0x1f0] sm:$0xff]
        %v5521 = vld [vmem:[#allocation10 + $0x1f8] sm:$0xff]
        %v5522 = vld [vmem:[%s8] sm:$0xf]
        %v5524 = vlaneseq
        %v5525 = vshrl.u32 %v5524, 7
        %v5526 = vsub.s32 0, %v5525
        %v5527 = vrot.slane %v5522, %v5526
        %v5528 = vlaneseq
        %v5529 = vshrl.u32 %v5528, 7
        %v5530 = vsub.s32 1, %v5529
        %v5531 = vrot.slane %v5522, %v5530
        %v5532 = vlaneseq
        %v5533 = vshrl.u32 %v5532, 7
        %v5534 = vsub.s32 2, %v5533
        %v5535 = vrot.slane %v5522, %v5534
        %v5536 = vlaneseq
        %v5537 = vshrl.u32 %v5536, 7
        %v5538 = vsub.s32 3, %v5537
        %v5539 = vrot.slane %v5522, %v5538
        %v5545 = vunpack.c.l.b16 %v5457
        %v5546 = vunpack.c.h.b16 %v5457
        %v5547 = vpack.c.b16 %v5545, %v5545
        %v5548 = vpack.c.b16 %v5546, %v5546
        %v5615 = vunpack.c.l.b16 %v5458
        %v5616 = vunpack.c.h.b16 %v5458
        %v5617 = vunpack.c.l.b16 %v5459
        %v5618 = vunpack.c.h.b16 %v5459
        %v5619 = vunpack.c.l.b16 %v5460
        %v5620 = vunpack.c.h.b16 %v5460
        %v5621 = vunpack.c.l.b16 %v5461
        %v5622 = vunpack.c.h.b16 %v5461
        %v5623 = vunpack.c.l.b16 %v5462
        %v5624 = vunpack.c.h.b16 %v5462
        %v5625 = vunpack.c.l.b16 %v5463
        %v5626 = vunpack.c.h.b16 %v5463
        %v5627 = vunpack.c.l.b16 %v5464
        %v5628 = vunpack.c.h.b16 %v5464
        %v5629 = vunpack.c.l.b16 %v5465
        %v5630 = vunpack.c.h.b16 %v5465
        %v5631 = vunpack.c.l.b16 %v5466
        %v5632 = vunpack.c.h.b16 %v5466
        %v5633 = vunpack.c.l.b16 %v5467
        %v5634 = vunpack.c.h.b16 %v5467
        %v5635 = vunpack.c.l.b16 %v5468
        %v5636 = vunpack.c.h.b16 %v5468
        %v5637 = vunpack.c.l.b16 %v5469
        %v5638 = vunpack.c.h.b16 %v5469
        %v5639 = vunpack.c.l.b16 %v5470
        %v5640 = vunpack.c.h.b16 %v5470
        %v5641 = vunpack.c.l.b16 %v5471
        %v5642 = vunpack.c.h.b16 %v5471
        %v5643 = vunpack.c.l.b16 %v5472
        %v5644 = vunpack.c.h.b16 %v5472
        %v5645 = vunpack.c.l.b16 %v5473
        %v5646 = vunpack.c.h.b16 %v5473
        %v5647 = vunpack.c.l.b16 %v5474
        %v5648 = vunpack.c.h.b16 %v5474
        %v5649 = vunpack.c.l.b16 %v5475
        %v5650 = vunpack.c.h.b16 %v5475
        %v5651 = vunpack.c.l.b16 %v5476
        %v5652 = vunpack.c.h.b16 %v5476
        %v5653 = vunpack.c.l.b16 %v5477
        %v5654 = vunpack.c.h.b16 %v5477
        %v5655 = vunpack.c.l.b16 %v5478
        %v5656 = vunpack.c.h.b16 %v5478
        %v5657 = vunpack.c.l.b16 %v5479
        %v5658 = vunpack.c.h.b16 %v5479
        %v5659 = vunpack.c.l.b16 %v5480
        %v5660 = vunpack.c.h.b16 %v5480
        %v5661 = vunpack.c.l.b16 %v5481
        %v5662 = vunpack.c.h.b16 %v5481
        %v5663 = vunpack.c.l.b16 %v5482
        %v5664 = vunpack.c.h.b16 %v5482
        %v5665 = vunpack.c.l.b16 %v5483
        %v5666 = vunpack.c.h.b16 %v5483
        %v5667 = vunpack.c.l.b16 %v5484
        %v5668 = vunpack.c.h.b16 %v5484
        %v5669 = vunpack.c.l.b16 %v5485
        %v5670 = vunpack.c.h.b16 %v5485
        %v5671 = vunpack.c.l.b16 %v5486
        %v5672 = vunpack.c.h.b16 %v5486
        %v5673 = vunpack.c.l.b16 %v5487
        %v5674 = vunpack.c.h.b16 %v5487
        %v5675 = vunpack.c.l.b16 %v5488
        %v5676 = vunpack.c.h.b16 %v5488
        %v5677 = vunpack.c.l.b16 %v5489
        %v5678 = vunpack.c.h.b16 %v5489
        %v5679 = vunpack.c.l.b16 %v5490
        %v5680 = vunpack.c.h.b16 %v5490
        %v5681 = vunpack.c.l.b16 %v5491
        %v5682 = vunpack.c.h.b16 %v5491
        %v5683 = vunpack.c.l.b16 %v5492
        %v5684 = vunpack.c.h.b16 %v5492
        %v5685 = vunpack.c.l.b16 %v5493
        %v5686 = vunpack.c.h.b16 %v5493
        %v5687 = vunpack.c.l.b16 %v5494
        %v5688 = vunpack.c.h.b16 %v5494
        %v5689 = vunpack.c.l.b16 %v5495
        %v5690 = vunpack.c.h.b16 %v5495
        %v5691 = vunpack.c.l.b16 %v5496
        %v5692 = vunpack.c.h.b16 %v5496
        %v5693 = vunpack.c.l.b16 %v5497
        %v5694 = vunpack.c.h.b16 %v5497
        %v5695 = vunpack.c.l.b16 %v5498
        %v5696 = vunpack.c.h.b16 %v5498
        %v5697 = vunpack.c.l.b16 %v5499
        %v5698 = vunpack.c.h.b16 %v5499
        %v5699 = vunpack.c.l.b16 %v5500
        %v5700 = vunpack.c.h.b16 %v5500
        %v5701 = vunpack.c.l.b16 %v5501
        %v5702 = vunpack.c.h.b16 %v5501
        %v5703 = vunpack.c.l.b16 %v5502
        %v5704 = vunpack.c.h.b16 %v5502
        %v5705 = vunpack.c.l.b16 %v5503
        %v5706 = vunpack.c.h.b16 %v5503
        %v5707 = vunpack.c.l.b16 %v5504
        %v5708 = vunpack.c.h.b16 %v5504
        %v5709 = vunpack.c.l.b16 %v5505
        %v5710 = vunpack.c.h.b16 %v5505
        %v5711 = vunpack.c.l.b16 %v5506
        %v5712 = vunpack.c.h.b16 %v5506
        %v5713 = vunpack.c.l.b16 %v5507
        %v5714 = vunpack.c.h.b16 %v5507
        %v5715 = vunpack.c.l.b16 %v5508
        %v5716 = vunpack.c.h.b16 %v5508
        %v5717 = vunpack.c.l.b16 %v5509
        %v5718 = vunpack.c.h.b16 %v5509
        %v5719 = vunpack.c.l.b16 %v5510
        %v5720 = vunpack.c.h.b16 %v5510
        %v5721 = vunpack.c.l.b16 %v5511
        %v5722 = vunpack.c.h.b16 %v5511
        %v5723 = vunpack.c.l.b16 %v5512
        %v5724 = vunpack.c.h.b16 %v5512
        %v5725 = vunpack.c.l.b16 %v5513
        %v5726 = vunpack.c.h.b16 %v5513
        %v5727 = vunpack.c.l.b16 %v5514
        %v5728 = vunpack.c.h.b16 %v5514
        %v5729 = vunpack.c.l.b16 %v5515
        %v5730 = vunpack.c.h.b16 %v5515
        %v5731 = vunpack.c.l.b16 %v5516
        %v5732 = vunpack.c.h.b16 %v5516
        %v5733 = vunpack.c.l.b16 %v5517
        %v5734 = vunpack.c.h.b16 %v5517
        %v5735 = vunpack.c.l.b16 %v5518
        %v5736 = vunpack.c.h.b16 %v5518
        %v5737 = vunpack.c.l.b16 %v5519
        %v5738 = vunpack.c.h.b16 %v5519
        %v5739 = vunpack.c.l.b16 %v5520
        %v5740 = vunpack.c.h.b16 %v5520
        %v5741 = vunpack.c.l.b16 %v5521
        %v5742 = vunpack.c.h.b16 %v5521
        %v5743 = vpack.c.b16 %v5619, %v5615
        %v5744 = vpack.c.b16 %v5620, %v5616
        %v5745 = vpack.c.b16 %v5621, %v5617
        %v5746 = vpack.c.b16 %v5622, %v5618
        %v5747 = vpack.c.b16 %v5627, %v5623
        %v5748 = vpack.c.b16 %v5628, %v5624
        %v5749 = vpack.c.b16 %v5629, %v5625
        %v5750 = vpack.c.b16 %v5630, %v5626
        %v5751 = vpack.c.b16 %v5635, %v5631
        %v5752 = vpack.c.b16 %v5636, %v5632
        %v5753 = vpack.c.b16 %v5637, %v5633
        %v5754 = vpack.c.b16 %v5638, %v5634
        %v5755 = vpack.c.b16 %v5643, %v5639
        %v5756 = vpack.c.b16 %v5644, %v5640
        %v5757 = vpack.c.b16 %v5645, %v5641
        %v5758 = vpack.c.b16 %v5646, %v5642
        %v5759 = vpack.c.b16 %v5651, %v5647
        %v5760 = vpack.c.b16 %v5652, %v5648
        %v5761 = vpack.c.b16 %v5653, %v5649
        %v5762 = vpack.c.b16 %v5654, %v5650
        %v5763 = vpack.c.b16 %v5659, %v5655
        %v5764 = vpack.c.b16 %v5660, %v5656
        %v5765 = vpack.c.b16 %v5661, %v5657
        %v5766 = vpack.c.b16 %v5662, %v5658
        %v5767 = vpack.c.b16 %v5667, %v5663
        %v5768 = vpack.c.b16 %v5668, %v5664
        %v5769 = vpack.c.b16 %v5669, %v5665
        %v5770 = vpack.c.b16 %v5670, %v5666
        %v5771 = vpack.c.b16 %v5675, %v5671
        %v5772 = vpack.c.b16 %v5676, %v5672
        %v5773 = vpack.c.b16 %v5677, %v5673
        %v5774 = vpack.c.b16 %v5678, %v5674
        %v5775 = vpack.c.b16 %v5683, %v5679
        %v5776 = vpack.c.b16 %v5684, %v5680
        %v5777 = vpack.c.b16 %v5685, %v5681
        %v5778 = vpack.c.b16 %v5686, %v5682
        %v5779 = vpack.c.b16 %v5691, %v5687
        %v5780 = vpack.c.b16 %v5692, %v5688
        %v5781 = vpack.c.b16 %v5693, %v5689
        %v5782 = vpack.c.b16 %v5694, %v5690
        %v5783 = vpack.c.b16 %v5699, %v5695
        %v5784 = vpack.c.b16 %v5700, %v5696
        %v5785 = vpack.c.b16 %v5701, %v5697
        %v5786 = vpack.c.b16 %v5702, %v5698
        %v5787 = vpack.c.b16 %v5707, %v5703
        %v5788 = vpack.c.b16 %v5708, %v5704
        %v5789 = vpack.c.b16 %v5709, %v5705
        %v5790 = vpack.c.b16 %v5710, %v5706
        %v5791 = vpack.c.b16 %v5715, %v5711
        %v5792 = vpack.c.b16 %v5716, %v5712
        %v5793 = vpack.c.b16 %v5717, %v5713
        %v5794 = vpack.c.b16 %v5718, %v5714
        %v5795 = vpack.c.b16 %v5723, %v5719
        %v5796 = vpack.c.b16 %v5724, %v5720
        %v5797 = vpack.c.b16 %v5725, %v5721
        %v5798 = vpack.c.b16 %v5726, %v5722
        %v5799 = vpack.c.b16 %v5731, %v5727
        %v5800 = vpack.c.b16 %v5732, %v5728
        %v5801 = vpack.c.b16 %v5733, %v5729
        %v5802 = vpack.c.b16 %v5734, %v5730
        %v5803 = vpack.c.b16 %v5739, %v5735
        %v5804 = vpack.c.b16 %v5740, %v5736
        %v5805 = vpack.c.b16 %v5741, %v5737
        %v5806 = vpack.c.b16 %v5742, %v5738
        %5871 = vmatprep.subr.bf16.mxu0 %v5744
        %5872 = vmatpush1.bf16.msra.mxu0 %v5743
        %5873 = vmatprep.subr.bf16.mxu0 %v5748
        %5874 = vmatpush1.bf16.msra.mxu0 %v5747
        %5875 = vmatprep.subr.bf16.mxu0 %v5752
        %5876 = vmatpush1.bf16.msra.mxu0 %v5751
        %5877 = vmatprep.subr.bf16.mxu0 %v5756
        %5878 = vmatpush1.bf16.msra.mxu0 %v5755
        %5879 = vmatprep.subr.bf16.mxu0 %v5760
        %5880 = vmatpush1.bf16.msra.mxu0 %v5759
        %5881 = vmatprep.subr.bf16.mxu0 %v5764
        %5882 = vmatpush1.bf16.msra.mxu0 %v5763
        %5883 = vmatprep.subr.bf16.mxu0 %v5768
        %5884 = vmatpush1.bf16.msra.mxu0 %v5767
        %5885 = vmatprep.subr.bf16.mxu0 %v5772
        %5886 = vmatpush1.bf16.msra.mxu0 %v5771
        %5887 = vmatprep.subr.bf16.mxu0 %v5776
        %5888 = vmatpush1.bf16.msra.mxu0 %v5775
        %5889 = vmatprep.subr.bf16.mxu0 %v5780
        %5890 = vmatpush1.bf16.msra.mxu0 %v5779
        %5891 = vmatprep.subr.bf16.mxu0 %v5784
        %5892 = vmatpush1.bf16.msra.mxu0 %v5783
        %5893 = vmatprep.subr.bf16.mxu0 %v5788
        %5894 = vmatpush1.bf16.msra.mxu0 %v5787
        %5895 = vmatprep.subr.bf16.mxu0 %v5792
        %5896 = vmatpush1.bf16.msra.mxu0 %v5791
        %5897 = vmatprep.subr.bf16.mxu0 %v5796
        %5898 = vmatpush1.bf16.msra.mxu0 %v5795
        %5899 = vmatprep.subr.bf16.mxu0 %v5800
        %5900 = vmatpush1.bf16.msra.mxu0 %v5799
        %5901 = vmatprep.subr.bf16.mxu0 %v5804
        %5902 = vmatpush1.bf16.msra.mxu0 %v5803
        %5903 = vmatprep.mubr.bf16.mxu0 %v5548
        %5904 = vmatmul.mubr.bf16.gmra.mrb[0].mxu0 %v5547
        %v5905 = vpop.f32.mrb[0].mxu0
        %v5906 = vadd.f32 %v5527, %v5905
        %v5907 = vpop.f32.mrb[0].mxu0
        %v5908 = vadd.f32 %v5531, %v5907
        %v5909 = vpop.f32.mrb[0].mxu0
        %v5910 = vpop.f32.mrb[0].mxu0
        %5911 = vdwg.mxu0
        %5912 = vmatprep.subr.bf16.mxu0 %v5746
        %5913 = vmatpush1.bf16.msra.mxu0 %v5745
        %5914 = vmatprep.subr.bf16.mxu0 %v5750
        %5915 = vmatpush1.bf16.msra.mxu0 %v5749
        %5916 = vmatprep.subr.bf16.mxu0 %v5754
        %5917 = vmatpush1.bf16.msra.mxu0 %v5753
        %5918 = vmatprep.subr.bf16.mxu0 %v5758
        %5919 = vmatpush1.bf16.msra.mxu0 %v5757
        %5920 = vmatprep.subr.bf16.mxu0 %v5762
        %5921 = vmatpush1.bf16.msra.mxu0 %v5761
        %5922 = vmatprep.subr.bf16.mxu0 %v5766
        %5923 = vmatpush1.bf16.msra.mxu0 %v5765
        %5924 = vmatprep.subr.bf16.mxu0 %v5770
        %5925 = vmatpush1.bf16.msra.mxu0 %v5769
        %5926 = vmatprep.subr.bf16.mxu0 %v5774
        %5927 = vmatpush1.bf16.msra.mxu0 %v5773
        %5928 = vmatprep.subr.bf16.mxu0 %v5778
        %5929 = vmatpush1.bf16.msra.mxu0 %v5777
        %5930 = vmatprep.subr.bf16.mxu0 %v5782
        %5931 = vmatpush1.bf16.msra.mxu0 %v5781
        %5932 = vmatprep.subr.bf16.mxu0 %v5786
        %5933 = vmatpush1.bf16.msra.mxu0 %v5785
        %5934 = vmatprep.subr.bf16.mxu0 %v5790
        %5935 = vmatpush1.bf16.msra.mxu0 %v5789
        %5936 = vmatprep.subr.bf16.mxu0 %v5794
        %5937 = vmatpush1.bf16.msra.mxu0 %v5793
        %5938 = vmatprep.subr.bf16.mxu0 %v5798
        %5939 = vmatpush1.bf16.msra.mxu0 %v5797
        %5940 = vmatprep.subr.bf16.mxu0 %v5802
        %5941 = vmatpush1.bf16.msra.mxu0 %v5801
        %5942 = vmatprep.subr.bf16.mxu0 %v5806
        %5943 = vmatpush1.bf16.msra.mxu0 %v5805
        %5944 = vmatprep.mubr.bf16.mxu0 %v5548
        %5945 = vmatmul.mubr.bf16.gmra.mrb[0].mxu0 %v5547
        %v5946 = vpop.f32.mrb[0].mxu0
        %v5947 = vadd.f32 %v5535, %v5946
        %v5948 = vpop.f32.mrb[0].mxu0
        %v5949 = vadd.f32 %v5539, %v5948
        %v5950 = vpop.f32.mrb[0].mxu0
        %v5951 = vpop.f32.mrb[0].mxu0
        %5952 = vdwg.mxu0
        %v5953 = vxor.u32 %v5906, 2147483648
        %v5954 = vmul.f32 %v5953, 1.442695
        %v5955 = vpow.pop %v5954
        %v5956 = vadd.f32 %v5955, 1.0
        %v5957 = vrcp.pop %v5956
        %v5958 = vmul.f32 1.0, %v5957
        %v5959 = vxor.u32 %v5908, 2147483648
        %v5960 = vmul.f32 %v5959, 1.442695
        %v5961 = vpow.pop %v5960
        %v5962 = vadd.f32 %v5961, 1.0
        %v5963 = vrcp.pop %v5962
        %v5964 = vmul.f32 1.0, %v5963
        %v5965 = vtanh.pop %v5947
        %v5966 = vxor.u32 %v5949, 2147483648
        %v5967 = vmul.f32 %v5966, 1.442695
        %v5968 = vpow.pop %v5967
        %v5969 = vadd.f32 %v5968, 1.0
        %v5970 = vrcp.pop %v5969
        %v5971 = vmul.f32 1.0, %v5970
        %v5972 = vmul.f32 %v5964, %v4911
        %v5973 = vmul.f32 %v5958, %v5965
        %v5974 = vadd.f32 %v5972, %v5973
        %v5975 = vtanh.pop %v5974
        %v5976 = vmul.f32 %v5971, %v5975
        %v5977 = vsub.f32 %v5976, %v4908
        %5979 = vset.pattern.permute.xlu0 0
        %5980 = vperm.xlu0 %5979, %v5453
        %v5981 = vpop.permute.xlu0 %5980
        %v5983 = vmul.f32 %v5981, %v5977
        %v5984 = vadd.f32 %v4908, %v5983
        %v5985 = vsub.f32 %v5974, %v4911
        %v5986 = vmul.f32 %v5981, %v5985
        %v5987 = vadd.f32 %v4911, %v5986
        %s5988 = scalar_lea.vmem %s556, 20
        %v5989 = vld [vmem:[%s5988] sm:$0xf]
        %s5990 = scalar_lea.vmem %s576, 40
        %v5991 = vld [vmem:[%s5990] sm:$0xff]
        %5992 = vst [vmem:[#allocation6] sm:$0xf] %v5989
        %v5993 = vpack.c.bf16 %v5446, %v5446
        %5994 = vst [vmem:[#allocation6 + $0x4] sm:$0xf] %v5993
        %v5995 = vld [vmem:[#allocation6] sm:$0xff]
        %v5996 = vld [vmem:[#allocation8] sm:$0xff]
        %v5997 = vld [vmem:[#allocation8 + $0x8] sm:$0xff]
        %v5998 = vld [vmem:[#allocation8 + $0x10] sm:$0xff]
        %v5999 = vld [vmem:[#allocation8 + $0x18] sm:$0xff]
        %v6000 = vld [vmem:[#allocation8 + $0x20] sm:$0xff]
        %v6001 = vld [vmem:[#allocation8 + $0x28] sm:$0xff]
        %v6002 = vld [vmem:[#allocation8 + $0x30] sm:$0xff]
        %v6003 = vld [vmem:[#allocation8 + $0x38] sm:$0xff]
        %v6004 = vld [vmem:[#allocation8 + $0x40] sm:$0xff]
        %v6005 = vld [vmem:[#allocation8 + $0x48] sm:$0xff]
        %v6006 = vld [vmem:[#allocation8 + $0x50] sm:$0xff]
        %v6007 = vld [vmem:[#allocation8 + $0x58] sm:$0xff]
        %v6008 = vld [vmem:[#allocation8 + $0x60] sm:$0xff]
        %v6009 = vld [vmem:[#allocation8 + $0x68] sm:$0xff]
        %v6010 = vld [vmem:[#allocation8 + $0x70] sm:$0xff]
        %v6011 = vld [vmem:[#allocation8 + $0x78] sm:$0xff]
        %v6012 = vld [vmem:[#allocation8 + $0x80] sm:$0xff]
        %v6013 = vld [vmem:[#allocation8 + $0x88] sm:$0xff]
        %v6014 = vld [vmem:[#allocation8 + $0x90] sm:$0xff]
        %v6015 = vld [vmem:[#allocation8 + $0x98] sm:$0xff]
        %v6016 = vld [vmem:[#allocation8 + $0xa0] sm:$0xff]
        %v6017 = vld [vmem:[#allocation8 + $0xa8] sm:$0xff]
        %v6018 = vld [vmem:[#allocation8 + $0xb0] sm:$0xff]
        %v6019 = vld [vmem:[#allocation8 + $0xb8] sm:$0xff]
        %v6020 = vld [vmem:[#allocation8 + $0xc0] sm:$0xff]
        %v6021 = vld [vmem:[#allocation8 + $0xc8] sm:$0xff]
        %v6022 = vld [vmem:[#allocation8 + $0xd0] sm:$0xff]
        %v6023 = vld [vmem:[#allocation8 + $0xd8] sm:$0xff]
        %v6024 = vld [vmem:[#allocation8 + $0xe0] sm:$0xff]
        %v6025 = vld [vmem:[#allocation8 + $0xe8] sm:$0xff]
        %v6026 = vld [vmem:[#allocation8 + $0xf0] sm:$0xff]
        %v6027 = vld [vmem:[#allocation8 + $0xf8] sm:$0xff]
        %v6028 = vld [vmem:[#allocation8 + $0x100] sm:$0xff]
        %v6029 = vld [vmem:[#allocation8 + $0x108] sm:$0xff]
        %v6030 = vld [vmem:[#allocation8 + $0x110] sm:$0xff]
        %v6031 = vld [vmem:[#allocation8 + $0x118] sm:$0xff]
        %v6032 = vld [vmem:[#allocation8 + $0x120] sm:$0xff]
        %v6033 = vld [vmem:[#allocation8 + $0x128] sm:$0xff]
        %v6034 = vld [vmem:[#allocation8 + $0x130] sm:$0xff]
        %v6035 = vld [vmem:[#allocation8 + $0x138] sm:$0xff]
        %v6036 = vld [vmem:[#allocation8 + $0x140] sm:$0xff]
        %v6037 = vld [vmem:[#allocation8 + $0x148] sm:$0xff]
        %v6038 = vld [vmem:[#allocation8 + $0x150] sm:$0xff]
        %v6039 = vld [vmem:[#allocation8 + $0x158] sm:$0xff]
        %v6040 = vld [vmem:[#allocation8 + $0x160] sm:$0xff]
        %v6041 = vld [vmem:[#allocation8 + $0x168] sm:$0xff]
        %v6042 = vld [vmem:[#allocation8 + $0x170] sm:$0xff]
        %v6043 = vld [vmem:[#allocation8 + $0x178] sm:$0xff]
        %v6044 = vld [vmem:[#allocation8 + $0x180] sm:$0xff]
        %v6045 = vld [vmem:[#allocation8 + $0x188] sm:$0xff]
        %v6046 = vld [vmem:[#allocation8 + $0x190] sm:$0xff]
        %v6047 = vld [vmem:[#allocation8 + $0x198] sm:$0xff]
        %v6048 = vld [vmem:[#allocation8 + $0x1a0] sm:$0xff]
        %v6049 = vld [vmem:[#allocation8 + $0x1a8] sm:$0xff]
        %v6050 = vld [vmem:[#allocation8 + $0x1b0] sm:$0xff]
        %v6051 = vld [vmem:[#allocation8 + $0x1b8] sm:$0xff]
        %v6052 = vld [vmem:[#allocation8 + $0x1c0] sm:$0xff]
        %v6053 = vld [vmem:[#allocation8 + $0x1c8] sm:$0xff]
        %v6054 = vld [vmem:[#allocation8 + $0x1d0] sm:$0xff]
        %v6055 = vld [vmem:[#allocation8 + $0x1d8] sm:$0xff]
        %v6056 = vld [vmem:[#allocation8 + $0x1e0] sm:$0xff]
        %v6057 = vld [vmem:[#allocation8 + $0x1e8] sm:$0xff]
        %v6058 = vld [vmem:[#allocation8 + $0x1f0] sm:$0xff]
        %v6059 = vld [vmem:[#allocation8 + $0x1f8] sm:$0xff]
        %v6060 = vld [vmem:[%s6] sm:$0xf]
        %v6062 = vlaneseq
        %v6063 = vshrl.u32 %v6062, 7
        %v6064 = vsub.s32 0, %v6063
        %v6065 = vrot.slane %v6060, %v6064
        %v6066 = vlaneseq
        %v6067 = vshrl.u32 %v6066, 7
        %v6068 = vsub.s32 1, %v6067
        %v6069 = vrot.slane %v6060, %v6068
        %v6070 = vlaneseq
        %v6071 = vshrl.u32 %v6070, 7
        %v6072 = vsub.s32 2, %v6071
        %v6073 = vrot.slane %v6060, %v6072
        %v6074 = vlaneseq
        %v6075 = vshrl.u32 %v6074, 7
        %v6076 = vsub.s32 3, %v6075
        %v6077 = vrot.slane %v6060, %v6076
        %v6083 = vunpack.c.l.b16 %v5995
        %v6084 = vunpack.c.h.b16 %v5995
        %v6085 = vpack.c.b16 %v6083, %v6083
        %v6086 = vpack.c.b16 %v6084, %v6084
        %v6153 = vunpack.c.l.b16 %v5996
        %v6154 = vunpack.c.h.b16 %v5996
        %v6155 = vunpack.c.l.b16 %v5997
        %v6156 = vunpack.c.h.b16 %v5997
        %v6157 = vunpack.c.l.b16 %v5998
        %v6158 = vunpack.c.h.b16 %v5998
        %v6159 = vunpack.c.l.b16 %v5999
        %v6160 = vunpack.c.h.b16 %v5999
        %v6161 = vunpack.c.l.b16 %v6000
        %v6162 = vunpack.c.h.b16 %v6000
        %v6163 = vunpack.c.l.b16 %v6001
        %v6164 = vunpack.c.h.b16 %v6001
        %v6165 = vunpack.c.l.b16 %v6002
        %v6166 = vunpack.c.h.b16 %v6002
        %v6167 = vunpack.c.l.b16 %v6003
        %v6168 = vunpack.c.h.b16 %v6003
        %v6169 = vunpack.c.l.b16 %v6004
        %v6170 = vunpack.c.h.b16 %v6004
        %v6171 = vunpack.c.l.b16 %v6005
        %v6172 = vunpack.c.h.b16 %v6005
        %v6173 = vunpack.c.l.b16 %v6006
        %v6174 = vunpack.c.h.b16 %v6006
        %v6175 = vunpack.c.l.b16 %v6007
        %v6176 = vunpack.c.h.b16 %v6007
        %v6177 = vunpack.c.l.b16 %v6008
        %v6178 = vunpack.c.h.b16 %v6008
        %v6179 = vunpack.c.l.b16 %v6009
        %v6180 = vunpack.c.h.b16 %v6009
        %v6181 = vunpack.c.l.b16 %v6010
        %v6182 = vunpack.c.h.b16 %v6010
        %v6183 = vunpack.c.l.b16 %v6011
        %v6184 = vunpack.c.h.b16 %v6011
        %v6185 = vunpack.c.l.b16 %v6012
        %v6186 = vunpack.c.h.b16 %v6012
        %v6187 = vunpack.c.l.b16 %v6013
        %v6188 = vunpack.c.h.b16 %v6013
        %v6189 = vunpack.c.l.b16 %v6014
        %v6190 = vunpack.c.h.b16 %v6014
        %v6191 = vunpack.c.l.b16 %v6015
        %v6192 = vunpack.c.h.b16 %v6015
        %v6193 = vunpack.c.l.b16 %v6016
        %v6194 = vunpack.c.h.b16 %v6016
        %v6195 = vunpack.c.l.b16 %v6017
        %v6196 = vunpack.c.h.b16 %v6017
        %v6197 = vunpack.c.l.b16 %v6018
        %v6198 = vunpack.c.h.b16 %v6018
        %v6199 = vunpack.c.l.b16 %v6019
        %v6200 = vunpack.c.h.b16 %v6019
        %v6201 = vunpack.c.l.b16 %v6020
        %v6202 = vunpack.c.h.b16 %v6020
        %v6203 = vunpack.c.l.b16 %v6021
        %v6204 = vunpack.c.h.b16 %v6021
        %v6205 = vunpack.c.l.b16 %v6022
        %v6206 = vunpack.c.h.b16 %v6022
        %v6207 = vunpack.c.l.b16 %v6023
        %v6208 = vunpack.c.h.b16 %v6023
        %v6209 = vunpack.c.l.b16 %v6024
        %v6210 = vunpack.c.h.b16 %v6024
        %v6211 = vunpack.c.l.b16 %v6025
        %v6212 = vunpack.c.h.b16 %v6025
        %v6213 = vunpack.c.l.b16 %v6026
        %v6214 = vunpack.c.h.b16 %v6026
        %v6215 = vunpack.c.l.b16 %v6027
        %v6216 = vunpack.c.h.b16 %v6027
        %v6217 = vunpack.c.l.b16 %v6028
        %v6218 = vunpack.c.h.b16 %v6028
        %v6219 = vunpack.c.l.b16 %v6029
        %v6220 = vunpack.c.h.b16 %v6029
        %v6221 = vunpack.c.l.b16 %v6030
        %v6222 = vunpack.c.h.b16 %v6030
        %v6223 = vunpack.c.l.b16 %v6031
        %v6224 = vunpack.c.h.b16 %v6031
        %v6225 = vunpack.c.l.b16 %v6032
        %v6226 = vunpack.c.h.b16 %v6032
        %v6227 = vunpack.c.l.b16 %v6033
        %v6228 = vunpack.c.h.b16 %v6033
        %v6229 = vunpack.c.l.b16 %v6034
        %v6230 = vunpack.c.h.b16 %v6034
        %v6231 = vunpack.c.l.b16 %v6035
        %v6232 = vunpack.c.h.b16 %v6035
        %v6233 = vunpack.c.l.b16 %v6036
        %v6234 = vunpack.c.h.b16 %v6036
        %v6235 = vunpack.c.l.b16 %v6037
        %v6236 = vunpack.c.h.b16 %v6037
        %v6237 = vunpack.c.l.b16 %v6038
        %v6238 = vunpack.c.h.b16 %v6038
        %v6239 = vunpack.c.l.b16 %v6039
        %v6240 = vunpack.c.h.b16 %v6039
        %v6241 = vunpack.c.l.b16 %v6040
        %v6242 = vunpack.c.h.b16 %v6040
        %v6243 = vunpack.c.l.b16 %v6041
        %v6244 = vunpack.c.h.b16 %v6041
        %v6245 = vunpack.c.l.b16 %v6042
        %v6246 = vunpack.c.h.b16 %v6042
        %v6247 = vunpack.c.l.b16 %v6043
        %v6248 = vunpack.c.h.b16 %v6043
        %v6249 = vunpack.c.l.b16 %v6044
        %v6250 = vunpack.c.h.b16 %v6044
        %v6251 = vunpack.c.l.b16 %v6045
        %v6252 = vunpack.c.h.b16 %v6045
        %v6253 = vunpack.c.l.b16 %v6046
        %v6254 = vunpack.c.h.b16 %v6046
        %v6255 = vunpack.c.l.b16 %v6047
        %v6256 = vunpack.c.h.b16 %v6047
        %v6257 = vunpack.c.l.b16 %v6048
        %v6258 = vunpack.c.h.b16 %v6048
        %v6259 = vunpack.c.l.b16 %v6049
        %v6260 = vunpack.c.h.b16 %v6049
        %v6261 = vunpack.c.l.b16 %v6050
        %v6262 = vunpack.c.h.b16 %v6050
        %v6263 = vunpack.c.l.b16 %v6051
        %v6264 = vunpack.c.h.b16 %v6051
        %v6265 = vunpack.c.l.b16 %v6052
        %v6266 = vunpack.c.h.b16 %v6052
        %v6267 = vunpack.c.l.b16 %v6053
        %v6268 = vunpack.c.h.b16 %v6053
        %v6269 = vunpack.c.l.b16 %v6054
        %v6270 = vunpack.c.h.b16 %v6054
        %v6271 = vunpack.c.l.b16 %v6055
        %v6272 = vunpack.c.h.b16 %v6055
        %v6273 = vunpack.c.l.b16 %v6056
        %v6274 = vunpack.c.h.b16 %v6056
        %v6275 = vunpack.c.l.b16 %v6057
        %v6276 = vunpack.c.h.b16 %v6057
        %v6277 = vunpack.c.l.b16 %v6058
        %v6278 = vunpack.c.h.b16 %v6058
        %v6279 = vunpack.c.l.b16 %v6059
        %v6280 = vunpack.c.h.b16 %v6059
        %v6281 = vpack.c.b16 %v6157, %v6153
        %v6282 = vpack.c.b16 %v6158, %v6154
        %v6283 = vpack.c.b16 %v6159, %v6155
        %v6284 = vpack.c.b16 %v6160, %v6156
        %v6285 = vpack.c.b16 %v6165, %v6161
        %v6286 = vpack.c.b16 %v6166, %v6162
        %v6287 = vpack.c.b16 %v6167, %v6163
        %v6288 = vpack.c.b16 %v6168, %v6164
        %v6289 = vpack.c.b16 %v6173, %v6169
        %v6290 = vpack.c.b16 %v6174, %v6170
        %v6291 = vpack.c.b16 %v6175, %v6171
        %v6292 = vpack.c.b16 %v6176, %v6172
        %v6293 = vpack.c.b16 %v6181, %v6177
        %v6294 = vpack.c.b16 %v6182, %v6178
        %v6295 = vpack.c.b16 %v6183, %v6179
        %v6296 = vpack.c.b16 %v6184, %v6180
        %v6297 = vpack.c.b16 %v6189, %v6185
        %v6298 = vpack.c.b16 %v6190, %v6186
        %v6299 = vpack.c.b16 %v6191, %v6187
        %v6300 = vpack.c.b16 %v6192, %v6188
        %v6301 = vpack.c.b16 %v6197, %v6193
        %v6302 = vpack.c.b16 %v6198, %v6194
        %v6303 = vpack.c.b16 %v6199, %v6195
        %v6304 = vpack.c.b16 %v6200, %v6196
        %v6305 = vpack.c.b16 %v6205, %v6201
        %v6306 = vpack.c.b16 %v6206, %v6202
        %v6307 = vpack.c.b16 %v6207, %v6203
        %v6308 = vpack.c.b16 %v6208, %v6204
        %v6309 = vpack.c.b16 %v6213, %v6209
        %v6310 = vpack.c.b16 %v6214, %v6210
        %v6311 = vpack.c.b16 %v6215, %v6211
        %v6312 = vpack.c.b16 %v6216, %v6212
        %v6313 = vpack.c.b16 %v6221, %v6217
        %v6314 = vpack.c.b16 %v6222, %v6218
        %v6315 = vpack.c.b16 %v6223, %v6219
        %v6316 = vpack.c.b16 %v6224, %v6220
        %v6317 = vpack.c.b16 %v6229, %v6225
        %v6318 = vpack.c.b16 %v6230, %v6226
        %v6319 = vpack.c.b16 %v6231, %v6227
        %v6320 = vpack.c.b16 %v6232, %v6228
        %v6321 = vpack.c.b16 %v6237, %v6233
        %v6322 = vpack.c.b16 %v6238, %v6234
        %v6323 = vpack.c.b16 %v6239, %v6235
        %v6324 = vpack.c.b16 %v6240, %v6236
        %v6325 = vpack.c.b16 %v6245, %v6241
        %v6326 = vpack.c.b16 %v6246, %v6242
        %v6327 = vpack.c.b16 %v6247, %v6243
        %v6328 = vpack.c.b16 %v6248, %v6244
        %v6329 = vpack.c.b16 %v6253, %v6249
        %v6330 = vpack.c.b16 %v6254, %v6250
        %v6331 = vpack.c.b16 %v6255, %v6251
        %v6332 = vpack.c.b16 %v6256, %v6252
        %v6333 = vpack.c.b16 %v6261, %v6257
        %v6334 = vpack.c.b16 %v6262, %v6258
        %v6335 = vpack.c.b16 %v6263, %v6259
        %v6336 = vpack.c.b16 %v6264, %v6260
        %v6337 = vpack.c.b16 %v6269, %v6265
        %v6338 = vpack.c.b16 %v6270, %v6266
        %v6339 = vpack.c.b16 %v6271, %v6267
        %v6340 = vpack.c.b16 %v6272, %v6268
        %v6341 = vpack.c.b16 %v6277, %v6273
        %v6342 = vpack.c.b16 %v6278, %v6274
        %v6343 = vpack.c.b16 %v6279, %v6275
        %v6344 = vpack.c.b16 %v6280, %v6276
        %6409 = vmatprep.subr.bf16.mxu0 %v6282
        %6410 = vmatpush1.bf16.msra.mxu0 %v6281
        %6411 = vmatprep.subr.bf16.mxu0 %v6286
        %6412 = vmatpush1.bf16.msra.mxu0 %v6285
        %6413 = vmatprep.subr.bf16.mxu0 %v6290
        %6414 = vmatpush1.bf16.msra.mxu0 %v6289
        %6415 = vmatprep.subr.bf16.mxu0 %v6294
        %6416 = vmatpush1.bf16.msra.mxu0 %v6293
        %6417 = vmatprep.subr.bf16.mxu0 %v6298
        %6418 = vmatpush1.bf16.msra.mxu0 %v6297
        %6419 = vmatprep.subr.bf16.mxu0 %v6302
        %6420 = vmatpush1.bf16.msra.mxu0 %v6301
        %6421 = vmatprep.subr.bf16.mxu0 %v6306
        %6422 = vmatpush1.bf16.msra.mxu0 %v6305
        %6423 = vmatprep.subr.bf16.mxu0 %v6310
        %6424 = vmatpush1.bf16.msra.mxu0 %v6309
        %6425 = vmatprep.subr.bf16.mxu0 %v6314
        %6426 = vmatpush1.bf16.msra.mxu0 %v6313
        %6427 = vmatprep.subr.bf16.mxu0 %v6318
        %6428 = vmatpush1.bf16.msra.mxu0 %v6317
        %6429 = vmatprep.subr.bf16.mxu0 %v6322
        %6430 = vmatpush1.bf16.msra.mxu0 %v6321
        %6431 = vmatprep.subr.bf16.mxu0 %v6326
        %6432 = vmatpush1.bf16.msra.mxu0 %v6325
        %6433 = vmatprep.subr.bf16.mxu0 %v6330
        %6434 = vmatpush1.bf16.msra.mxu0 %v6329
        %6435 = vmatprep.subr.bf16.mxu0 %v6334
        %6436 = vmatpush1.bf16.msra.mxu0 %v6333
        %6437 = vmatprep.subr.bf16.mxu0 %v6338
        %6438 = vmatpush1.bf16.msra.mxu0 %v6337
        %6439 = vmatprep.subr.bf16.mxu0 %v6342
        %6440 = vmatpush1.bf16.msra.mxu0 %v6341
        %6441 = vmatprep.mubr.bf16.mxu0 %v6086
        %6442 = vmatmul.mubr.bf16.gmra.mrb[0].mxu0 %v6085
        %v6443 = vpop.f32.mrb[0].mxu0
        %v6444 = vadd.f32 %v6065, %v6443
        %v6445 = vpop.f32.mrb[0].mxu0
        %v6446 = vadd.f32 %v6069, %v6445
        %v6447 = vpop.f32.mrb[0].mxu0
        %v6448 = vpop.f32.mrb[0].mxu0
        %6449 = vdwg.mxu0
        %6450 = vmatprep.subr.bf16.mxu0 %v6284
        %6451 = vmatpush1.bf16.msra.mxu0 %v6283
        %6452 = vmatprep.subr.bf16.mxu0 %v6288
        %6453 = vmatpush1.bf16.msra.mxu0 %v6287
        %6454 = vmatprep.subr.bf16.mxu0 %v6292
        %6455 = vmatpush1.bf16.msra.mxu0 %v6291
        %6456 = vmatprep.subr.bf16.mxu0 %v6296
        %6457 = vmatpush1.bf16.msra.mxu0 %v6295
        %6458 = vmatprep.subr.bf16.mxu0 %v6300
        %6459 = vmatpush1.bf16.msra.mxu0 %v6299
        %6460 = vmatprep.subr.bf16.mxu0 %v6304
        %6461 = vmatpush1.bf16.msra.mxu0 %v6303
        %6462 = vmatprep.subr.bf16.mxu0 %v6308
        %6463 = vmatpush1.bf16.msra.mxu0 %v6307
        %6464 = vmatprep.subr.bf16.mxu0 %v6312
        %6465 = vmatpush1.bf16.msra.mxu0 %v6311
        %6466 = vmatprep.subr.bf16.mxu0 %v6316
        %6467 = vmatpush1.bf16.msra.mxu0 %v6315
        %6468 = vmatprep.subr.bf16.mxu0 %v6320
        %6469 = vmatpush1.bf16.msra.mxu0 %v6319
        %6470 = vmatprep.subr.bf16.mxu0 %v6324
        %6471 = vmatpush1.bf16.msra.mxu0 %v6323
        %6472 = vmatprep.subr.bf16.mxu0 %v6328
        %6473 = vmatpush1.bf16.msra.mxu0 %v6327
        %6474 = vmatprep.subr.bf16.mxu0 %v6332
        %6475 = vmatpush1.bf16.msra.mxu0 %v6331
        %6476 = vmatprep.subr.bf16.mxu0 %v6336
        %6477 = vmatpush1.bf16.msra.mxu0 %v6335
        %6478 = vmatprep.subr.bf16.mxu0 %v6340
        %6479 = vmatpush1.bf16.msra.mxu0 %v6339
        %6480 = vmatprep.subr.bf16.mxu0 %v6344
        %6481 = vmatpush1.bf16.msra.mxu0 %v6343
        %6482 = vmatprep.mubr.bf16.mxu0 %v6086
        %6483 = vmatmul.mubr.bf16.gmra.mrb[0].mxu0 %v6085
        %v6484 = vpop.f32.mrb[0].mxu0
        %v6485 = vadd.f32 %v6073, %v6484
        %v6486 = vpop.f32.mrb[0].mxu0
        %v6487 = vadd.f32 %v6077, %v6486
        %v6488 = vpop.f32.mrb[0].mxu0
        %v6489 = vpop.f32.mrb[0].mxu0
        %6490 = vdwg.mxu0
        %v6491 = vxor.u32 %v6444, 2147483648
        %v6492 = vmul.f32 %v6491, 1.442695
        %v6493 = vpow.pop %v6492
        %v6494 = vadd.f32 %v6493, 1.0
        %v6495 = vrcp.pop %v6494
        %v6496 = vmul.f32 1.0, %v6495
        %v6497 = vxor.u32 %v6446, 2147483648
        %v6498 = vmul.f32 %v6497, 1.442695
        %v6499 = vpow.pop %v6498
        %v6500 = vadd.f32 %v6499, 1.0
        %v6501 = vrcp.pop %v6500
        %v6502 = vmul.f32 1.0, %v6501
        %v6503 = vtanh.pop %v6485
        %v6504 = vxor.u32 %v6487, 2147483648
        %v6505 = vmul.f32 %v6504, 1.442695
        %v6506 = vpow.pop %v6505
        %v6507 = vadd.f32 %v6506, 1.0
        %v6508 = vrcp.pop %v6507
        %v6509 = vmul.f32 1.0, %v6508
        %v6510 = vmul.f32 %v6502, %v5449
        %v6511 = vmul.f32 %v6496, %v6503
        %v6512 = vadd.f32 %v6510, %v6511
        %v6513 = vtanh.pop %v6512
        %v6514 = vmul.f32 %v6509, %v6513
        %v6515 = vsub.f32 %v6514, %v5446
        %6517 = vset.pattern.permute.xlu0 0
        %6518 = vperm.xlu0 %6517, %v5991
        %v6519 = vpop.permute.xlu0 %6518
        %v6521 = vmul.f32 %v6519, %v6515
        %v6522 = vadd.f32 %v5446, %v6521
        %v6523 = vsub.f32 %v6512, %v5449
        %v6524 = vmul.f32 %v6519, %v6523
        %v6525 = vadd.f32 %v5449, %v6524
        %s6526 = scalar_lea.vmem %s566, 8
        %v6527 = vld [vmem:[%s6526] sm:$0xf]
        %s6528 = scalar_lea.vmem %s586, 16
        %v6529 = vld [vmem:[%s6528] sm:$0xff]
        %6530 = vst [vmem:[#allocation7] sm:$0xf] %v6527
        %v6531 = vpack.c.bf16 %v5984, %v5984
        %6532 = vst [vmem:[#allocation7 + $0x4] sm:$0xf] %v6531
        %v6533 = vld [vmem:[#allocation7] sm:$0xff]
        %v6534 = vld [vmem:[#allocation10] sm:$0xff]
        %v6535 = vld [vmem:[#allocation10 + $0x8] sm:$0xff]
        %v6536 = vld [vmem:[#allocation10 + $0x10] sm:$0xff]
        %v6537 = vld [vmem:[#allocation10 + $0x18] sm:$0xff]
        %v6538 = vld [vmem:[#allocation10 + $0x20] sm:$0xff]
        %v6539 = vld [vmem:[#allocation10 + $0x28] sm:$0xff]
        %v6540 = vld [vmem:[#allocation10 + $0x30] sm:$0xff]
        %v6541 = vld [vmem:[#allocation10 + $0x38] sm:$0xff]
        %v6542 = vld [vmem:[#allocation10 + $0x40] sm:$0xff]
        %v6543 = vld [vmem:[#allocation10 + $0x48] sm:$0xff]
        %v6544 = vld [vmem:[#allocation10 + $0x50] sm:$0xff]
        %v6545 = vld [vmem:[#allocation10 + $0x58] sm:$0xff]
        %v6546 = vld [vmem:[#allocation10 + $0x60] sm:$0xff]
        %v6547 = vld [vmem:[#allocation10 + $0x68] sm:$0xff]
        %v6548 = vld [vmem:[#allocation10 + $0x70] sm:$0xff]
        %v6549 = vld [vmem:[#allocation10 + $0x78] sm:$0xff]
        %v6550 = vld [vmem:[#allocation10 + $0x80] sm:$0xff]
        %v6551 = vld [vmem:[#allocation10 + $0x88] sm:$0xff]
        %v6552 = vld [vmem:[#allocation10 + $0x90] sm:$0xff]
        %v6553 = vld [vmem:[#allocation10 + $0x98] sm:$0xff]
        %v6554 = vld [vmem:[#allocation10 + $0xa0] sm:$0xff]
        %v6555 = vld [vmem:[#allocation10 + $0xa8] sm:$0xff]
        %v6556 = vld [vmem:[#allocation10 + $0xb0] sm:$0xff]
        %v6557 = vld [vmem:[#allocation10 + $0xb8] sm:$0xff]
        %v6558 = vld [vmem:[#allocation10 + $0xc0] sm:$0xff]
        %v6559 = vld [vmem:[#allocation10 + $0xc8] sm:$0xff]
        %v6560 = vld [vmem:[#allocation10 + $0xd0] sm:$0xff]
        %v6561 = vld [vmem:[#allocation10 + $0xd8] sm:$0xff]
        %v6562 = vld [vmem:[#allocation10 + $0xe0] sm:$0xff]
        %v6563 = vld [vmem:[#allocation10 + $0xe8] sm:$0xff]
        %v6564 = vld [vmem:[#allocation10 + $0xf0] sm:$0xff]
        %v6565 = vld [vmem:[#allocation10 + $0xf8] sm:$0xff]
        %v6566 = vld [vmem:[#allocation10 + $0x100] sm:$0xff]
        %v6567 = vld [vmem:[#allocation10 + $0x108] sm:$0xff]
        %v6568 = vld [vmem:[#allocation10 + $0x110] sm:$0xff]
        %v6569 = vld [vmem:[#allocation10 + $0x118] sm:$0xff]
        %v6570 = vld [vmem:[#allocation10 + $0x120] sm:$0xff]
        %v6571 = vld [vmem:[#allocation10 + $0x128] sm:$0xff]
        %v6572 = vld [vmem:[#allocation10 + $0x130] sm:$0xff]
        %v6573 = vld [vmem:[#allocation10 + $0x138] sm:$0xff]
        %v6574 = vld [vmem:[#allocation10 + $0x140] sm:$0xff]
        %v6575 = vld [vmem:[#allocation10 + $0x148] sm:$0xff]
        %v6576 = vld [vmem:[#allocation10 + $0x150] sm:$0xff]
        %v6577 = vld [vmem:[#allocation10 + $0x158] sm:$0xff]
        %v6578 = vld [vmem:[#allocation10 + $0x160] sm:$0xff]
        %v6579 = vld [vmem:[#allocation10 + $0x168] sm:$0xff]
        %v6580 = vld [vmem:[#allocation10 + $0x170] sm:$0xff]
        %v6581 = vld [vmem:[#allocation10 + $0x178] sm:$0xff]
        %v6582 = vld [vmem:[#allocation10 + $0x180] sm:$0xff]
        %v6583 = vld [vmem:[#allocation10 + $0x188] sm:$0xff]
        %v6584 = vld [vmem:[#allocation10 + $0x190] sm:$0xff]
        %v6585 = vld [vmem:[#allocation10 + $0x198] sm:$0xff]
        %v6586 = vld [vmem:[#allocation10 + $0x1a0] sm:$0xff]
        %v6587 = vld [vmem:[#allocation10 + $0x1a8] sm:$0xff]
        %v6588 = vld [vmem:[#allocation10 + $0x1b0] sm:$0xff]
        %v6589 = vld [vmem:[#allocation10 + $0x1b8] sm:$0xff]
        %v6590 = vld [vmem:[#allocation10 + $0x1c0] sm:$0xff]
        %v6591 = vld [vmem:[#allocation10 + $0x1c8] sm:$0xff]
        %v6592 = vld [vmem:[#allocation10 + $0x1d0] sm:$0xff]
        %v6593 = vld [vmem:[#allocation10 + $0x1d8] sm:$0xff]
        %v6594 = vld [vmem:[#allocation10 + $0x1e0] sm:$0xff]
        %v6595 = vld [vmem:[#allocation10 + $0x1e8] sm:$0xff]
        %v6596 = vld [vmem:[#allocation10 + $0x1f0] sm:$0xff]
        %v6597 = vld [vmem:[#allocation10 + $0x1f8] sm:$0xff]
        %v6598 = vld [vmem:[%s8] sm:$0xf]
        %v6600 = vlaneseq
        %v6601 = vshrl.u32 %v6600, 7
        %v6602 = vsub.s32 0, %v6601
        %v6603 = vrot.slane %v6598, %v6602
        %v6604 = vlaneseq
        %v6605 = vshrl.u32 %v6604, 7
        %v6606 = vsub.s32 1, %v6605
        %v6607 = vrot.slane %v6598, %v6606
        %v6608 = vlaneseq
        %v6609 = vshrl.u32 %v6608, 7
        %v6610 = vsub.s32 2, %v6609
        %v6611 = vrot.slane %v6598, %v6610
        %v6612 = vlaneseq
        %v6613 = vshrl.u32 %v6612, 7
        %v6614 = vsub.s32 3, %v6613
        %v6615 = vrot.slane %v6598, %v6614
        %v6621 = vunpack.c.l.b16 %v6533
        %v6622 = vunpack.c.h.b16 %v6533
        %v6623 = vpack.c.b16 %v6621, %v6621
        %v6624 = vpack.c.b16 %v6622, %v6622
        %v6691 = vunpack.c.l.b16 %v6534
        %v6692 = vunpack.c.h.b16 %v6534
        %v6693 = vunpack.c.l.b16 %v6535
        %v6694 = vunpack.c.h.b16 %v6535
        %v6695 = vunpack.c.l.b16 %v6536
        %v6696 = vunpack.c.h.b16 %v6536
        %v6697 = vunpack.c.l.b16 %v6537
        %v6698 = vunpack.c.h.b16 %v6537
        %v6699 = vunpack.c.l.b16 %v6538
        %v6700 = vunpack.c.h.b16 %v6538
        %v6701 = vunpack.c.l.b16 %v6539
        %v6702 = vunpack.c.h.b16 %v6539
        %v6703 = vunpack.c.l.b16 %v6540
        %v6704 = vunpack.c.h.b16 %v6540
        %v6705 = vunpack.c.l.b16 %v6541
        %v6706 = vunpack.c.h.b16 %v6541
        %v6707 = vunpack.c.l.b16 %v6542
        %v6708 = vunpack.c.h.b16 %v6542
        %v6709 = vunpack.c.l.b16 %v6543
        %v6710 = vunpack.c.h.b16 %v6543
        %v6711 = vunpack.c.l.b16 %v6544
        %v6712 = vunpack.c.h.b16 %v6544
        %v6713 = vunpack.c.l.b16 %v6545
        %v6714 = vunpack.c.h.b16 %v6545
        %v6715 = vunpack.c.l.b16 %v6546
        %v6716 = vunpack.c.h.b16 %v6546
        %v6717 = vunpack.c.l.b16 %v6547
        %v6718 = vunpack.c.h.b16 %v6547
        %v6719 = vunpack.c.l.b16 %v6548
        %v6720 = vunpack.c.h.b16 %v6548
        %v6721 = vunpack.c.l.b16 %v6549
        %v6722 = vunpack.c.h.b16 %v6549
        %v6723 = vunpack.c.l.b16 %v6550
        %v6724 = vunpack.c.h.b16 %v6550
        %v6725 = vunpack.c.l.b16 %v6551
        %v6726 = vunpack.c.h.b16 %v6551
        %v6727 = vunpack.c.l.b16 %v6552
        %v6728 = vunpack.c.h.b16 %v6552
        %v6729 = vunpack.c.l.b16 %v6553
        %v6730 = vunpack.c.h.b16 %v6553
        %v6731 = vunpack.c.l.b16 %v6554
        %v6732 = vunpack.c.h.b16 %v6554
        %v6733 = vunpack.c.l.b16 %v6555
        %v6734 = vunpack.c.h.b16 %v6555
        %v6735 = vunpack.c.l.b16 %v6556
        %v6736 = vunpack.c.h.b16 %v6556
        %v6737 = vunpack.c.l.b16 %v6557
        %v6738 = vunpack.c.h.b16 %v6557
        %v6739 = vunpack.c.l.b16 %v6558
        %v6740 = vunpack.c.h.b16 %v6558
        %v6741 = vunpack.c.l.b16 %v6559
        %v6742 = vunpack.c.h.b16 %v6559
        %v6743 = vunpack.c.l.b16 %v6560
        %v6744 = vunpack.c.h.b16 %v6560
        %v6745 = vunpack.c.l.b16 %v6561
        %v6746 = vunpack.c.h.b16 %v6561
        %v6747 = vunpack.c.l.b16 %v6562
        %v6748 = vunpack.c.h.b16 %v6562
        %v6749 = vunpack.c.l.b16 %v6563
        %v6750 = vunpack.c.h.b16 %v6563
        %v6751 = vunpack.c.l.b16 %v6564
        %v6752 = vunpack.c.h.b16 %v6564
        %v6753 = vunpack.c.l.b16 %v6565
        %v6754 = vunpack.c.h.b16 %v6565
        %v6755 = vunpack.c.l.b16 %v6566
        %v6756 = vunpack.c.h.b16 %v6566
        %v6757 = vunpack.c.l.b16 %v6567
        %v6758 = vunpack.c.h.b16 %v6567
        %v6759 = vunpack.c.l.b16 %v6568
        %v6760 = vunpack.c.h.b16 %v6568
        %v6761 = vunpack.c.l.b16 %v6569
        %v6762 = vunpack.c.h.b16 %v6569
        %v6763 = vunpack.c.l.b16 %v6570
        %v6764 = vunpack.c.h.b16 %v6570
        %v6765 = vunpack.c.l.b16 %v6571
        %v6766 = vunpack.c.h.b16 %v6571
        %v6767 = vunpack.c.l.b16 %v6572
        %v6768 = vunpack.c.h.b16 %v6572
        %v6769 = vunpack.c.l.b16 %v6573
        %v6770 = vunpack.c.h.b16 %v6573
        %v6771 = vunpack.c.l.b16 %v6574
        %v6772 = vunpack.c.h.b16 %v6574
        %v6773 = vunpack.c.l.b16 %v6575
        %v6774 = vunpack.c.h.b16 %v6575
        %v6775 = vunpack.c.l.b16 %v6576
        %v6776 = vunpack.c.h.b16 %v6576
        %v6777 = vunpack.c.l.b16 %v6577
        %v6778 = vunpack.c.h.b16 %v6577
        %v6779 = vunpack.c.l.b16 %v6578
        %v6780 = vunpack.c.h.b16 %v6578
        %v6781 = vunpack.c.l.b16 %v6579
        %v6782 = vunpack.c.h.b16 %v6579
        %v6783 = vunpack.c.l.b16 %v6580
        %v6784 = vunpack.c.h.b16 %v6580
        %v6785 = vunpack.c.l.b16 %v6581
        %v6786 = vunpack.c.h.b16 %v6581
        %v6787 = vunpack.c.l.b16 %v6582
        %v6788 = vunpack.c.h.b16 %v6582
        %v6789 = vunpack.c.l.b16 %v6583
        %v6790 = vunpack.c.h.b16 %v6583
        %v6791 = vunpack.c.l.b16 %v6584
        %v6792 = vunpack.c.h.b16 %v6584
        %v6793 = vunpack.c.l.b16 %v6585
        %v6794 = vunpack.c.h.b16 %v6585
        %v6795 = vunpack.c.l.b16 %v6586
        %v6796 = vunpack.c.h.b16 %v6586
        %v6797 = vunpack.c.l.b16 %v6587
        %v6798 = vunpack.c.h.b16 %v6587
        %v6799 = vunpack.c.l.b16 %v6588
        %v6800 = vunpack.c.h.b16 %v6588
        %v6801 = vunpack.c.l.b16 %v6589
        %v6802 = vunpack.c.h.b16 %v6589
        %v6803 = vunpack.c.l.b16 %v6590
        %v6804 = vunpack.c.h.b16 %v6590
        %v6805 = vunpack.c.l.b16 %v6591
        %v6806 = vunpack.c.h.b16 %v6591
        %v6807 = vunpack.c.l.b16 %v6592
        %v6808 = vunpack.c.h.b16 %v6592
        %v6809 = vunpack.c.l.b16 %v6593
        %v6810 = vunpack.c.h.b16 %v6593
        %v6811 = vunpack.c.l.b16 %v6594
        %v6812 = vunpack.c.h.b16 %v6594
        %v6813 = vunpack.c.l.b16 %v6595
        %v6814 = vunpack.c.h.b16 %v6595
        %v6815 = vunpack.c.l.b16 %v6596
        %v6816 = vunpack.c.h.b16 %v6596
        %v6817 = vunpack.c.l.b16 %v6597
        %v6818 = vunpack.c.h.b16 %v6597
        %v6819 = vpack.c.b16 %v6695, %v6691
        %v6820 = vpack.c.b16 %v6696, %v6692
        %v6821 = vpack.c.b16 %v6697, %v6693
        %v6822 = vpack.c.b16 %v6698, %v6694
        %v6823 = vpack.c.b16 %v6703, %v6699
        %v6824 = vpack.c.b16 %v6704, %v6700
        %v6825 = vpack.c.b16 %v6705, %v6701
        %v6826 = vpack.c.b16 %v6706, %v6702
        %v6827 = vpack.c.b16 %v6711, %v6707
        %v6828 = vpack.c.b16 %v6712, %v6708
        %v6829 = vpack.c.b16 %v6713, %v6709
        %v6830 = vpack.c.b16 %v6714, %v6710
        %v6831 = vpack.c.b16 %v6719, %v6715
        %v6832 = vpack.c.b16 %v6720, %v6716
        %v6833 = vpack.c.b16 %v6721, %v6717
        %v6834 = vpack.c.b16 %v6722, %v6718
        %v6835 = vpack.c.b16 %v6727, %v6723
        %v6836 = vpack.c.b16 %v6728, %v6724
        %v6837 = vpack.c.b16 %v6729, %v6725
        %v6838 = vpack.c.b16 %v6730, %v6726
        %v6839 = vpack.c.b16 %v6735, %v6731
        %v6840 = vpack.c.b16 %v6736, %v6732
        %v6841 = vpack.c.b16 %v6737, %v6733
        %v6842 = vpack.c.b16 %v6738, %v6734
        %v6843 = vpack.c.b16 %v6743, %v6739
        %v6844 = vpack.c.b16 %v6744, %v6740
        %v6845 = vpack.c.b16 %v6745, %v6741
        %v6846 = vpack.c.b16 %v6746, %v6742
        %v6847 = vpack.c.b16 %v6751, %v6747
        %v6848 = vpack.c.b16 %v6752, %v6748
        %v6849 = vpack.c.b16 %v6753, %v6749
        %v6850 = vpack.c.b16 %v6754, %v6750
        %v6851 = vpack.c.b16 %v6759, %v6755
        %v6852 = vpack.c.b16 %v6760, %v6756
        %v6853 = vpack.c.b16 %v6761, %v6757
        %v6854 = vpack.c.b16 %v6762, %v6758
        %v6855 = vpack.c.b16 %v6767, %v6763
        %v6856 = vpack.c.b16 %v6768, %v6764
        %v6857 = vpack.c.b16 %v6769, %v6765
        %v6858 = vpack.c.b16 %v6770, %v6766
        %v6859 = vpack.c.b16 %v6775, %v6771
        %v6860 = vpack.c.b16 %v6776, %v6772
        %v6861 = vpack.c.b16 %v6777, %v6773
        %v6862 = vpack.c.b16 %v6778, %v6774
        %v6863 = vpack.c.b16 %v6783, %v6779
        %v6864 = vpack.c.b16 %v6784, %v6780
        %v6865 = vpack.c.b16 %v6785, %v6781
        %v6866 = vpack.c.b16 %v6786, %v6782
        %v6867 = vpack.c.b16 %v6791, %v6787
        %v6868 = vpack.c.b16 %v6792, %v6788
        %v6869 = vpack.c.b16 %v6793, %v6789
        %v6870 = vpack.c.b16 %v6794, %v6790
        %v6871 = vpack.c.b16 %v6799, %v6795
        %v6872 = vpack.c.b16 %v6800, %v6796
        %v6873 = vpack.c.b16 %v6801, %v6797
        %v6874 = vpack.c.b16 %v6802, %v6798
        %v6875 = vpack.c.b16 %v6807, %v6803
        %v6876 = vpack.c.b16 %v6808, %v6804
        %v6877 = vpack.c.b16 %v6809, %v6805
        %v6878 = vpack.c.b16 %v6810, %v6806
        %v6879 = vpack.c.b16 %v6815, %v6811
        %v6880 = vpack.c.b16 %v6816, %v6812
        %v6881 = vpack.c.b16 %v6817, %v6813
        %v6882 = vpack.c.b16 %v6818, %v6814
        %6947 = vmatprep.subr.bf16.mxu0 %v6820
        %6948 = vmatpush1.bf16.msra.mxu0 %v6819
        %6949 = vmatprep.subr.bf16.mxu0 %v6824
        %6950 = vmatpush1.bf16.msra.mxu0 %v6823
        %6951 = vmatprep.subr.bf16.mxu0 %v6828
        %6952 = vmatpush1.bf16.msra.mxu0 %v6827
        %6953 = vmatprep.subr.bf16.mxu0 %v6832
        %6954 = vmatpush1.bf16.msra.mxu0 %v6831
        %6955 = vmatprep.subr.bf16.mxu0 %v6836
        %6956 = vmatpush1.bf16.msra.mxu0 %v6835
        %6957 = vmatprep.subr.bf16.mxu0 %v6840
        %6958 = vmatpush1.bf16.msra.mxu0 %v6839
        %6959 = vmatprep.subr.bf16.mxu0 %v6844
        %6960 = vmatpush1.bf16.msra.mxu0 %v6843
        %6961 = vmatprep.subr.bf16.mxu0 %v6848
        %6962 = vmatpush1.bf16.msra.mxu0 %v6847
        %6963 = vmatprep.subr.bf16.mxu0 %v6852
        %6964 = vmatpush1.bf16.msra.mxu0 %v6851
        %6965 = vmatprep.subr.bf16.mxu0 %v6856
        %6966 = vmatpush1.bf16.msra.mxu0 %v6855
        %6967 = vmatprep.subr.bf16.mxu0 %v6860
        %6968 = vmatpush1.bf16.msra.mxu0 %v6859
        %6969 = vmatprep.subr.bf16.mxu0 %v6864
        %6970 = vmatpush1.bf16.msra.mxu0 %v6863
        %6971 = vmatprep.subr.bf16.mxu0 %v6868
        %6972 = vmatpush1.bf16.msra.mxu0 %v6867
        %6973 = vmatprep.subr.bf16.mxu0 %v6872
        %6974 = vmatpush1.bf16.msra.mxu0 %v6871
        %6975 = vmatprep.subr.bf16.mxu0 %v6876
        %6976 = vmatpush1.bf16.msra.mxu0 %v6875
        %6977 = vmatprep.subr.bf16.mxu0 %v6880
        %6978 = vmatpush1.bf16.msra.mxu0 %v6879
        %6979 = vmatprep.mubr.bf16.mxu0 %v6624
        %6980 = vmatmul.mubr.bf16.gmra.mrb[0].mxu0 %v6623
        %v6981 = vpop.f32.mrb[0].mxu0
        %v6982 = vadd.f32 %v6603, %v6981
        %v6983 = vpop.f32.mrb[0].mxu0
        %v6984 = vadd.f32 %v6607, %v6983
        %v6985 = vpop.f32.mrb[0].mxu0
        %v6986 = vpop.f32.mrb[0].mxu0
        %6987 = vdwg.mxu0
        %6988 = vmatprep.subr.bf16.mxu0 %v6822
        %6989 = vmatpush1.bf16.msra.mxu0 %v6821
        %6990 = vmatprep.subr.bf16.mxu0 %v6826
        %6991 = vmatpush1.bf16.msra.mxu0 %v6825
        %6992 = vmatprep.subr.bf16.mxu0 %v6830
        %6993 = vmatpush1.bf16.msra.mxu0 %v6829
        %6994 = vmatprep.subr.bf16.mxu0 %v6834
        %6995 = vmatpush1.bf16.msra.mxu0 %v6833
        %6996 = vmatprep.subr.bf16.mxu0 %v6838
        %6997 = vmatpush1.bf16.msra.mxu0 %v6837
        %6998 = vmatprep.subr.bf16.mxu0 %v6842
        %6999 = vmatpush1.bf16.msra.mxu0 %v6841
        %7000 = vmatprep.subr.bf16.mxu0 %v6846
        %7001 = vmatpush1.bf16.msra.mxu0 %v6845
        %7002 = vmatprep.subr.bf16.mxu0 %v6850
        %7003 = vmatpush1.bf16.msra.mxu0 %v6849
        %7004 = vmatprep.subr.bf16.mxu0 %v6854
        %7005 = vmatpush1.bf16.msra.mxu0 %v6853
        %7006 = vmatprep.subr.bf16.mxu0 %v6858
        %7007 = vmatpush1.bf16.msra.mxu0 %v6857
        %7008 = vmatprep.subr.bf16.mxu0 %v6862
        %7009 = vmatpush1.bf16.msra.mxu0 %v6861
        %7010 = vmatprep.subr.bf16.mxu0 %v6866
        %7011 = vmatpush1.bf16.msra.mxu0 %v6865
        %7012 = vmatprep.subr.bf16.mxu0 %v6870
        %7013 = vmatpush1.bf16.msra.mxu0 %v6869
        %7014 = vmatprep.subr.bf16.mxu0 %v6874
        %7015 = vmatpush1.bf16.msra.mxu0 %v6873
        %7016 = vmatprep.subr.bf16.mxu0 %v6878
        %7017 = vmatpush1.bf16.msra.mxu0 %v6877
        %7018 = vmatprep.subr.bf16.mxu0 %v6882
        %7019 = vmatpush1.bf16.msra.mxu0 %v6881
        %7020 = vmatprep.mubr.bf16.mxu0 %v6624
        %7021 = vmatmul.mubr.bf16.gmra.mrb[0].mxu0 %v6623
        %v7022 = vpop.f32.mrb[0].mxu0
        %v7023 = vadd.f32 %v6611, %v7022
        %v7024 = vpop.f32.mrb[0].mxu0
        %v7025 = vadd.f32 %v6615, %v7024
        %v7026 = vpop.f32.mrb[0].mxu0
        %v7027 = vpop.f32.mrb[0].mxu0
        %7028 = vdwg.mxu0
        %v7029 = vxor.u32 %v6982, 2147483648
        %v7030 = vmul.f32 %v7029, 1.442695
        %v7031 = vpow.pop %v7030
        %v7032 = vadd.f32 %v7031, 1.0
        %v7033 = vrcp.pop %v7032
        %v7034 = vmul.f32 1.0, %v7033
        %v7035 = vxor.u32 %v6984, 2147483648
        %v7036 = vmul.f32 %v7035, 1.442695
        %v7037 = vpow.pop %v7036
        %v7038 = vadd.f32 %v7037, 1.0
        %v7039 = vrcp.pop %v7038
        %v7040 = vmul.f32 1.0, %v7039
        %v7041 = vtanh.pop %v7023
        %v7042 = vxor.u32 %v7025, 2147483648
        %v7043 = vmul.f32 %v7042, 1.442695
        %v7044 = vpow.pop %v7043
        %v7045 = vadd.f32 %v7044, 1.0
        %v7046 = vrcp.pop %v7045
        %v7047 = vmul.f32 1.0, %v7046
        %v7048 = vmul.f32 %v7040, %v5987
        %v7049 = vmul.f32 %v7034, %v7041
        %v7050 = vadd.f32 %v7048, %v7049
        %v7051 = vtanh.pop %v7050
        %v7052 = vmul.f32 %v7047, %v7051
        %v7053 = vsub.f32 %v7052, %v5984
        %7055 = vset.pattern.permute.xlu0 0
        %7056 = vperm.xlu0 %7055, %v6529
        %v7057 = vpop.permute.xlu0 %7056
        %v7059 = vmul.f32 %v7057, %v7053
        %v7060 = vadd.f32 %v5984, %v7059
        %v7061 = vsub.f32 %v7050, %v5987
        %v7062 = vmul.f32 %v7057, %v7061
        %v7063 = vadd.f32 %v5987, %v7062
        %s7064 = scalar_lea.vmem %s556, 24
        %v7065 = vld [vmem:[%s7064] sm:$0xf]
        %s7066 = scalar_lea.vmem %s576, 48
        %v7067 = vld [vmem:[%s7066] sm:$0xff]
        %7068 = vst [vmem:[#allocation6] sm:$0xf] %v7065
        %v7069 = vpack.c.bf16 %v6522, %v6522
        %7070 = vst [vmem:[#allocation6 + $0x4] sm:$0xf] %v7069
        %v7071 = vld [vmem:[#allocation6] sm:$0xff]
        %v7072 = vld [vmem:[#allocation8] sm:$0xff]
        %v7073 = vld [vmem:[#allocation8 + $0x8] sm:$0xff]
        %v7074 = vld [vmem:[#allocation8 + $0x10] sm:$0xff]
        %v7075 = vld [vmem:[#allocation8 + $0x18] sm:$0xff]
        %v7076 = vld [vmem:[#allocation8 + $0x20] sm:$0xff]
        %v7077 = vld [vmem:[#allocation8 + $0x28] sm:$0xff]
        %v7078 = vld [vmem:[#allocation8 + $0x30] sm:$0xff]
        %v7079 = vld [vmem:[#allocation8 + $0x38] sm:$0xff]
        %v7080 = vld [vmem:[#allocation8 + $0x40] sm:$0xff]
        %v7081 = vld [vmem:[#allocation8 + $0x48] sm:$0xff]
        %v7082 = vld [vmem:[#allocation8 + $0x50] sm:$0xff]
        %v7083 = vld [vmem:[#allocation8 + $0x58] sm:$0xff]
        %v7084 = vld [vmem:[#allocation8 + $0x60] sm:$0xff]
        %v7085 = vld [vmem:[#allocation8 + $0x68] sm:$0xff]
        %v7086 = vld [vmem:[#allocation8 + $0x70] sm:$0xff]
        %v7087 = vld [vmem:[#allocation8 + $0x78] sm:$0xff]
        %v7088 = vld [vmem:[#allocation8 + $0x80] sm:$0xff]
        %v7089 = vld [vmem:[#allocation8 + $0x88] sm:$0xff]
        %v7090 = vld [vmem:[#allocation8 + $0x90] sm:$0xff]
        %v7091 = vld [vmem:[#allocation8 + $0x98] sm:$0xff]
        %v7092 = vld [vmem:[#allocation8 + $0xa0] sm:$0xff]
        %v7093 = vld [vmem:[#allocation8 + $0xa8] sm:$0xff]
        %v7094 = vld [vmem:[#allocation8 + $0xb0] sm:$0xff]
        %v7095 = vld [vmem:[#allocation8 + $0xb8] sm:$0xff]
        %v7096 = vld [vmem:[#allocation8 + $0xc0] sm:$0xff]
        %v7097 = vld [vmem:[#allocation8 + $0xc8] sm:$0xff]
        %v7098 = vld [vmem:[#allocation8 + $0xd0] sm:$0xff]
        %v7099 = vld [vmem:[#allocation8 + $0xd8] sm:$0xff]
        %v7100 = vld [vmem:[#allocation8 + $0xe0] sm:$0xff]
        %v7101 = vld [vmem:[#allocation8 + $0xe8] sm:$0xff]
        %v7102 = vld [vmem:[#allocation8 + $0xf0] sm:$0xff]
        %v7103 = vld [vmem:[#allocation8 + $0xf8] sm:$0xff]
        %v7104 = vld [vmem:[#allocation8 + $0x100] sm:$0xff]
        %v7105 = vld [vmem:[#allocation8 + $0x108] sm:$0xff]
        %v7106 = vld [vmem:[#allocation8 + $0x110] sm:$0xff]
        %v7107 = vld [vmem:[#allocation8 + $0x118] sm:$0xff]
        %v7108 = vld [vmem:[#allocation8 + $0x120] sm:$0xff]
        %v7109 = vld [vmem:[#allocation8 + $0x128] sm:$0xff]
        %v7110 = vld [vmem:[#allocation8 + $0x130] sm:$0xff]
        %v7111 = vld [vmem:[#allocation8 + $0x138] sm:$0xff]
        %v7112 = vld [vmem:[#allocation8 + $0x140] sm:$0xff]
        %v7113 = vld [vmem:[#allocation8 + $0x148] sm:$0xff]
        %v7114 = vld [vmem:[#allocation8 + $0x150] sm:$0xff]
        %v7115 = vld [vmem:[#allocation8 + $0x158] sm:$0xff]
        %v7116 = vld [vmem:[#allocation8 + $0x160] sm:$0xff]
        %v7117 = vld [vmem:[#allocation8 + $0x168] sm:$0xff]
        %v7118 = vld [vmem:[#allocation8 + $0x170] sm:$0xff]
        %v7119 = vld [vmem:[#allocation8 + $0x178] sm:$0xff]
        %v7120 = vld [vmem:[#allocation8 + $0x180] sm:$0xff]
        %v7121 = vld [vmem:[#allocation8 + $0x188] sm:$0xff]
        %v7122 = vld [vmem:[#allocation8 + $0x190] sm:$0xff]
        %v7123 = vld [vmem:[#allocation8 + $0x198] sm:$0xff]
        %v7124 = vld [vmem:[#allocation8 + $0x1a0] sm:$0xff]
        %v7125 = vld [vmem:[#allocation8 + $0x1a8] sm:$0xff]
        %v7126 = vld [vmem:[#allocation8 + $0x1b0] sm:$0xff]
        %v7127 = vld [vmem:[#allocation8 + $0x1b8] sm:$0xff]
        %v7128 = vld [vmem:[#allocation8 + $0x1c0] sm:$0xff]
        %v7129 = vld [vmem:[#allocation8 + $0x1c8] sm:$0xff]
        %v7130 = vld [vmem:[#allocation8 + $0x1d0] sm:$0xff]
        %v7131 = vld [vmem:[#allocation8 + $0x1d8] sm:$0xff]
        %v7132 = vld [vmem:[#allocation8 + $0x1e0] sm:$0xff]
        %v7133 = vld [vmem:[#allocation8 + $0x1e8] sm:$0xff]
        %v7134 = vld [vmem:[#allocation8 + $0x1f0] sm:$0xff]
        %v7135 = vld [vmem:[#allocation8 + $0x1f8] sm:$0xff]
        %v7136 = vld [vmem:[%s6] sm:$0xf]
        %v7138 = vlaneseq
        %v7139 = vshrl.u32 %v7138, 7
        %v7140 = vsub.s32 0, %v7139
        %v7141 = vrot.slane %v7136, %v7140
        %v7142 = vlaneseq
        %v7143 = vshrl.u32 %v7142, 7
        %v7144 = vsub.s32 1, %v7143
        %v7145 = vrot.slane %v7136, %v7144
        %v7146 = vlaneseq
        %v7147 = vshrl.u32 %v7146, 7
        %v7148 = vsub.s32 2, %v7147
        %v7149 = vrot.slane %v7136, %v7148
        %v7150 = vlaneseq
        %v7151 = vshrl.u32 %v7150, 7
        %v7152 = vsub.s32 3, %v7151
        %v7153 = vrot.slane %v7136, %v7152
        %v7159 = vunpack.c.l.b16 %v7071
        %v7160 = vunpack.c.h.b16 %v7071
        %v7161 = vpack.c.b16 %v7159, %v7159
        %v7162 = vpack.c.b16 %v7160, %v7160
        %v7229 = vunpack.c.l.b16 %v7072
        %v7230 = vunpack.c.h.b16 %v7072
        %v7231 = vunpack.c.l.b16 %v7073
        %v7232 = vunpack.c.h.b16 %v7073
        %v7233 = vunpack.c.l.b16 %v7074
        %v7234 = vunpack.c.h.b16 %v7074
        %v7235 = vunpack.c.l.b16 %v7075
        %v7236 = vunpack.c.h.b16 %v7075
        %v7237 = vunpack.c.l.b16 %v7076
        %v7238 = vunpack.c.h.b16 %v7076
        %v7239 = vunpack.c.l.b16 %v7077
        %v7240 = vunpack.c.h.b16 %v7077
        %v7241 = vunpack.c.l.b16 %v7078
        %v7242 = vunpack.c.h.b16 %v7078
        %v7243 = vunpack.c.l.b16 %v7079
        %v7244 = vunpack.c.h.b16 %v7079
        %v7245 = vunpack.c.l.b16 %v7080
        %v7246 = vunpack.c.h.b16 %v7080
        %v7247 = vunpack.c.l.b16 %v7081
        %v7248 = vunpack.c.h.b16 %v7081
        %v7249 = vunpack.c.l.b16 %v7082
        %v7250 = vunpack.c.h.b16 %v7082
        %v7251 = vunpack.c.l.b16 %v7083
        %v7252 = vunpack.c.h.b16 %v7083
        %v7253 = vunpack.c.l.b16 %v7084
        %v7254 = vunpack.c.h.b16 %v7084
        %v7255 = vunpack.c.l.b16 %v7085
        %v7256 = vunpack.c.h.b16 %v7085
        %v7257 = vunpack.c.l.b16 %v7086
        %v7258 = vunpack.c.h.b16 %v7086
        %v7259 = vunpack.c.l.b16 %v7087
        %v7260 = vunpack.c.h.b16 %v7087
        %v7261 = vunpack.c.l.b16 %v7088
        %v7262 = vunpack.c.h.b16 %v7088
        %v7263 = vunpack.c.l.b16 %v7089
        %v7264 = vunpack.c.h.b16 %v7089
        %v7265 = vunpack.c.l.b16 %v7090
        %v7266 = vunpack.c.h.b16 %v7090
        %v7267 = vunpack.c.l.b16 %v7091
        %v7268 = vunpack.c.h.b16 %v7091
        %v7269 = vunpack.c.l.b16 %v7092
        %v7270 = vunpack.c.h.b16 %v7092
        %v7271 = vunpack.c.l.b16 %v7093
        %v7272 = vunpack.c.h.b16 %v7093
        %v7273 = vunpack.c.l.b16 %v7094
        %v7274 = vunpack.c.h.b16 %v7094
        %v7275 = vunpack.c.l.b16 %v7095
        %v7276 = vunpack.c.h.b16 %v7095
        %v7277 = vunpack.c.l.b16 %v7096
        %v7278 = vunpack.c.h.b16 %v7096
        %v7279 = vunpack.c.l.b16 %v7097
        %v7280 = vunpack.c.h.b16 %v7097
        %v7281 = vunpack.c.l.b16 %v7098
        %v7282 = vunpack.c.h.b16 %v7098
        %v7283 = vunpack.c.l.b16 %v7099
        %v7284 = vunpack.c.h.b16 %v7099
        %v7285 = vunpack.c.l.b16 %v7100
        %v7286 = vunpack.c.h.b16 %v7100
        %v7287 = vunpack.c.l.b16 %v7101
        %v7288 = vunpack.c.h.b16 %v7101
        %v7289 = vunpack.c.l.b16 %v7102
        %v7290 = vunpack.c.h.b16 %v7102
        %v7291 = vunpack.c.l.b16 %v7103
        %v7292 = vunpack.c.h.b16 %v7103
        %v7293 = vunpack.c.l.b16 %v7104
        %v7294 = vunpack.c.h.b16 %v7104
        %v7295 = vunpack.c.l.b16 %v7105
        %v7296 = vunpack.c.h.b16 %v7105
        %v7297 = vunpack.c.l.b16 %v7106
        %v7298 = vunpack.c.h.b16 %v7106
        %v7299 = vunpack.c.l.b16 %v7107
        %v7300 = vunpack.c.h.b16 %v7107
        %v7301 = vunpack.c.l.b16 %v7108
        %v7302 = vunpack.c.h.b16 %v7108
        %v7303 = vunpack.c.l.b16 %v7109
        %v7304 = vunpack.c.h.b16 %v7109
        %v7305 = vunpack.c.l.b16 %v7110
        %v7306 = vunpack.c.h.b16 %v7110
        %v7307 = vunpack.c.l.b16 %v7111
        %v7308 = vunpack.c.h.b16 %v7111
        %v7309 = vunpack.c.l.b16 %v7112
        %v7310 = vunpack.c.h.b16 %v7112
        %v7311 = vunpack.c.l.b16 %v7113
        %v7312 = vunpack.c.h.b16 %v7113
        %v7313 = vunpack.c.l.b16 %v7114
        %v7314 = vunpack.c.h.b16 %v7114
        %v7315 = vunpack.c.l.b16 %v7115
        %v7316 = vunpack.c.h.b16 %v7115
        %v7317 = vunpack.c.l.b16 %v7116
        %v7318 = vunpack.c.h.b16 %v7116
        %v7319 = vunpack.c.l.b16 %v7117
        %v7320 = vunpack.c.h.b16 %v7117
        %v7321 = vunpack.c.l.b16 %v7118
        %v7322 = vunpack.c.h.b16 %v7118
        %v7323 = vunpack.c.l.b16 %v7119
        %v7324 = vunpack.c.h.b16 %v7119
        %v7325 = vunpack.c.l.b16 %v7120
        %v7326 = vunpack.c.h.b16 %v7120
        %v7327 = vunpack.c.l.b16 %v7121
        %v7328 = vunpack.c.h.b16 %v7121
        %v7329 = vunpack.c.l.b16 %v7122
        %v7330 = vunpack.c.h.b16 %v7122
        %v7331 = vunpack.c.l.b16 %v7123
        %v7332 = vunpack.c.h.b16 %v7123
        %v7333 = vunpack.c.l.b16 %v7124
        %v7334 = vunpack.c.h.b16 %v7124
        %v7335 = vunpack.c.l.b16 %v7125
        %v7336 = vunpack.c.h.b16 %v7125
        %v7337 = vunpack.c.l.b16 %v7126
        %v7338 = vunpack.c.h.b16 %v7126
        %v7339 = vunpack.c.l.b16 %v7127
        %v7340 = vunpack.c.h.b16 %v7127
        %v7341 = vunpack.c.l.b16 %v7128
        %v7342 = vunpack.c.h.b16 %v7128
        %v7343 = vunpack.c.l.b16 %v7129
        %v7344 = vunpack.c.h.b16 %v7129
        %v7345 = vunpack.c.l.b16 %v7130
        %v7346 = vunpack.c.h.b16 %v7130
        %v7347 = vunpack.c.l.b16 %v7131
        %v7348 = vunpack.c.h.b16 %v7131
        %v7349 = vunpack.c.l.b16 %v7132
        %v7350 = vunpack.c.h.b16 %v7132
        %v7351 = vunpack.c.l.b16 %v7133
        %v7352 = vunpack.c.h.b16 %v7133
        %v7353 = vunpack.c.l.b16 %v7134
        %v7354 = vunpack.c.h.b16 %v7134
        %v7355 = vunpack.c.l.b16 %v7135
        %v7356 = vunpack.c.h.b16 %v7135
        %v7357 = vpack.c.b16 %v7233, %v7229
        %v7358 = vpack.c.b16 %v7234, %v7230
        %v7359 = vpack.c.b16 %v7235, %v7231
        %v7360 = vpack.c.b16 %v7236, %v7232
        %v7361 = vpack.c.b16 %v7241, %v7237
        %v7362 = vpack.c.b16 %v7242, %v7238
        %v7363 = vpack.c.b16 %v7243, %v7239
        %v7364 = vpack.c.b16 %v7244, %v7240
        %v7365 = vpack.c.b16 %v7249, %v7245
        %v7366 = vpack.c.b16 %v7250, %v7246
        %v7367 = vpack.c.b16 %v7251, %v7247
        %v7368 = vpack.c.b16 %v7252, %v7248
        %v7369 = vpack.c.b16 %v7257, %v7253
        %v7370 = vpack.c.b16 %v7258, %v7254
        %v7371 = vpack.c.b16 %v7259, %v7255
        %v7372 = vpack.c.b16 %v7260, %v7256
        %v7373 = vpack.c.b16 %v7265, %v7261
        %v7374 = vpack.c.b16 %v7266, %v7262
        %v7375 = vpack.c.b16 %v7267, %v7263
        %v7376 = vpack.c.b16 %v7268, %v7264
        %v7377 = vpack.c.b16 %v7273, %v7269
        %v7378 = vpack.c.b16 %v7274, %v7270
        %v7379 = vpack.c.b16 %v7275, %v7271
        %v7380 = vpack.c.b16 %v7276, %v7272
        %v7381 = vpack.c.b16 %v7281, %v7277
        %v7382 = vpack.c.b16 %v7282, %v7278
        %v7383 = vpack.c.b16 %v7283, %v7279
        %v7384 = vpack.c.b16 %v7284, %v7280
        %v7385 = vpack.c.b16 %v7289, %v7285
        %v7386 = vpack.c.b16 %v7290, %v7286
        %v7387 = vpack.c.b16 %v7291, %v7287
        %v7388 = vpack.c.b16 %v7292, %v7288
        %v7389 = vpack.c.b16 %v7297, %v7293
        %v7390 = vpack.c.b16 %v7298, %v7294
        %v7391 = vpack.c.b16 %v7299, %v7295
        %v7392 = vpack.c.b16 %v7300, %v7296
        %v7393 = vpack.c.b16 %v7305, %v7301
        %v7394 = vpack.c.b16 %v7306, %v7302
        %v7395 = vpack.c.b16 %v7307, %v7303
        %v7396 = vpack.c.b16 %v7308, %v7304
        %v7397 = vpack.c.b16 %v7313, %v7309
        %v7398 = vpack.c.b16 %v7314, %v7310
        %v7399 = vpack.c.b16 %v7315, %v7311
        %v7400 = vpack.c.b16 %v7316, %v7312
        %v7401 = vpack.c.b16 %v7321, %v7317
        %v7402 = vpack.c.b16 %v7322, %v7318
        %v7403 = vpack.c.b16 %v7323, %v7319
        %v7404 = vpack.c.b16 %v7324, %v7320
        %v7405 = vpack.c.b16 %v7329, %v7325
        %v7406 = vpack.c.b16 %v7330, %v7326
        %v7407 = vpack.c.b16 %v7331, %v7327
        %v7408 = vpack.c.b16 %v7332, %v7328
        %v7409 = vpack.c.b16 %v7337, %v7333
        %v7410 = vpack.c.b16 %v7338, %v7334
        %v7411 = vpack.c.b16 %v7339, %v7335
        %v7412 = vpack.c.b16 %v7340, %v7336
        %v7413 = vpack.c.b16 %v7345, %v7341
        %v7414 = vpack.c.b16 %v7346, %v7342
        %v7415 = vpack.c.b16 %v7347, %v7343
        %v7416 = vpack.c.b16 %v7348, %v7344
        %v7417 = vpack.c.b16 %v7353, %v7349
        %v7418 = vpack.c.b16 %v7354, %v7350
        %v7419 = vpack.c.b16 %v7355, %v7351
        %v7420 = vpack.c.b16 %v7356, %v7352
        %7485 = vmatprep.subr.bf16.mxu0 %v7358
        %7486 = vmatpush1.bf16.msra.mxu0 %v7357
        %7487 = vmatprep.subr.bf16.mxu0 %v7362
        %7488 = vmatpush1.bf16.msra.mxu0 %v7361
        %7489 = vmatprep.subr.bf16.mxu0 %v7366
        %7490 = vmatpush1.bf16.msra.mxu0 %v7365
        %7491 = vmatprep.subr.bf16.mxu0 %v7370
        %7492 = vmatpush1.bf16.msra.mxu0 %v7369
        %7493 = vmatprep.subr.bf16.mxu0 %v7374
        %7494 = vmatpush1.bf16.msra.mxu0 %v7373
        %7495 = vmatprep.subr.bf16.mxu0 %v7378
        %7496 = vmatpush1.bf16.msra.mxu0 %v7377
        %7497 = vmatprep.subr.bf16.mxu0 %v7382
        %7498 = vmatpush1.bf16.msra.mxu0 %v7381
        %7499 = vmatprep.subr.bf16.mxu0 %v7386
        %7500 = vmatpush1.bf16.msra.mxu0 %v7385
        %7501 = vmatprep.subr.bf16.mxu0 %v7390
        %7502 = vmatpush1.bf16.msra.mxu0 %v7389
        %7503 = vmatprep.subr.bf16.mxu0 %v7394
        %7504 = vmatpush1.bf16.msra.mxu0 %v7393
        %7505 = vmatprep.subr.bf16.mxu0 %v7398
        %7506 = vmatpush1.bf16.msra.mxu0 %v7397
        %7507 = vmatprep.subr.bf16.mxu0 %v7402
        %7508 = vmatpush1.bf16.msra.mxu0 %v7401
        %7509 = vmatprep.subr.bf16.mxu0 %v7406
        %7510 = vmatpush1.bf16.msra.mxu0 %v7405
        %7511 = vmatprep.subr.bf16.mxu0 %v7410
        %7512 = vmatpush1.bf16.msra.mxu0 %v7409
        %7513 = vmatprep.subr.bf16.mxu0 %v7414
        %7514 = vmatpush1.bf16.msra.mxu0 %v7413
        %7515 = vmatprep.subr.bf16.mxu0 %v7418
        %7516 = vmatpush1.bf16.msra.mxu0 %v7417
        %7517 = vmatprep.mubr.bf16.mxu0 %v7162
        %7518 = vmatmul.mubr.bf16.gmra.mrb[0].mxu0 %v7161
        %v7519 = vpop.f32.mrb[0].mxu0
        %v7520 = vadd.f32 %v7141, %v7519
        %v7521 = vpop.f32.mrb[0].mxu0
        %v7522 = vadd.f32 %v7145, %v7521
        %v7523 = vpop.f32.mrb[0].mxu0
        %v7524 = vpop.f32.mrb[0].mxu0
        %7525 = vdwg.mxu0
        %7526 = vmatprep.subr.bf16.mxu0 %v7360
        %7527 = vmatpush1.bf16.msra.mxu0 %v7359
        %7528 = vmatprep.subr.bf16.mxu0 %v7364
        %7529 = vmatpush1.bf16.msra.mxu0 %v7363
        %7530 = vmatprep.subr.bf16.mxu0 %v7368
        %7531 = vmatpush1.bf16.msra.mxu0 %v7367
        %7532 = vmatprep.subr.bf16.mxu0 %v7372
        %7533 = vmatpush1.bf16.msra.mxu0 %v7371
        %7534 = vmatprep.subr.bf16.mxu0 %v7376
        %7535 = vmatpush1.bf16.msra.mxu0 %v7375
        %7536 = vmatprep.subr.bf16.mxu0 %v7380
        %7537 = vmatpush1.bf16.msra.mxu0 %v7379
        %7538 = vmatprep.subr.bf16.mxu0 %v7384
        %7539 = vmatpush1.bf16.msra.mxu0 %v7383
        %7540 = vmatprep.subr.bf16.mxu0 %v7388
        %7541 = vmatpush1.bf16.msra.mxu0 %v7387
        %7542 = vmatprep.subr.bf16.mxu0 %v7392
        %7543 = vmatpush1.bf16.msra.mxu0 %v7391
        %7544 = vmatprep.subr.bf16.mxu0 %v7396
        %7545 = vmatpush1.bf16.msra.mxu0 %v7395
        %7546 = vmatprep.subr.bf16.mxu0 %v7400
        %7547 = vmatpush1.bf16.msra.mxu0 %v7399
        %7548 = vmatprep.subr.bf16.mxu0 %v7404
        %7549 = vmatpush1.bf16.msra.mxu0 %v7403
        %7550 = vmatprep.subr.bf16.mxu0 %v7408
        %7551 = vmatpush1.bf16.msra.mxu0 %v7407
        %7552 = vmatprep.subr.bf16.mxu0 %v7412
        %7553 = vmatpush1.bf16.msra.mxu0 %v7411
        %7554 = vmatprep.subr.bf16.mxu0 %v7416
        %7555 = vmatpush1.bf16.msra.mxu0 %v7415
        %7556 = vmatprep.subr.bf16.mxu0 %v7420
        %7557 = vmatpush1.bf16.msra.mxu0 %v7419
        %7558 = vmatprep.mubr.bf16.mxu0 %v7162
        %7559 = vmatmul.mubr.bf16.gmra.mrb[0].mxu0 %v7161
        %v7560 = vpop.f32.mrb[0].mxu0
        %v7561 = vadd.f32 %v7149, %v7560
        %v7562 = vpop.f32.mrb[0].mxu0
        %v7563 = vadd.f32 %v7153, %v7562
        %v7564 = vpop.f32.mrb[0].mxu0
        %v7565 = vpop.f32.mrb[0].mxu0
        %7566 = vdwg.mxu0
        %v7567 = vxor.u32 %v7520, 2147483648
        %v7568 = vmul.f32 %v7567, 1.442695
        %v7569 = vpow.pop %v7568
        %v7570 = vadd.f32 %v7569, 1.0
        %v7571 = vrcp.pop %v7570
        %v7572 = vmul.f32 1.0, %v7571
        %v7573 = vxor.u32 %v7522, 2147483648
        %v7574 = vmul.f32 %v7573, 1.442695
        %v7575 = vpow.pop %v7574
        %v7576 = vadd.f32 %v7575, 1.0
        %v7577 = vrcp.pop %v7576
        %v7578 = vmul.f32 1.0, %v7577
        %v7579 = vtanh.pop %v7561
        %v7580 = vxor.u32 %v7563, 2147483648
        %v7581 = vmul.f32 %v7580, 1.442695
        %v7582 = vpow.pop %v7581
        %v7583 = vadd.f32 %v7582, 1.0
        %v7584 = vrcp.pop %v7583
        %v7585 = vmul.f32 1.0, %v7584
        %v7586 = vmul.f32 %v7578, %v6525
        %v7587 = vmul.f32 %v7572, %v7579
        %v7588 = vadd.f32 %v7586, %v7587
        %v7589 = vtanh.pop %v7588
        %v7590 = vmul.f32 %v7585, %v7589
        %v7591 = vsub.f32 %v7590, %v6522
        %7593 = vset.pattern.permute.xlu0 0
        %7594 = vperm.xlu0 %7593, %v7067
        %v7595 = vpop.permute.xlu0 %7594
        %v7597 = vmul.f32 %v7595, %v7591
        %v7598 = vadd.f32 %v6522, %v7597
        %v7599 = vsub.f32 %v7588, %v6525
        %v7600 = vmul.f32 %v7595, %v7599
        %v7601 = vadd.f32 %v6525, %v7600
        %s7602 = scalar_lea.vmem %s566, 4
        %v7603 = vld [vmem:[%s7602] sm:$0xf]
        %s7604 = scalar_lea.vmem %s586, 8
        %v7605 = vld [vmem:[%s7604] sm:$0xff]
        %7606 = vst [vmem:[#allocation7] sm:$0xf] %v7603
        %v7607 = vpack.c.bf16 %v7060, %v7060
        %7608 = vst [vmem:[#allocation7 + $0x4] sm:$0xf] %v7607
        %v7609 = vld [vmem:[#allocation7] sm:$0xff]
        %v7610 = vld [vmem:[#allocation10] sm:$0xff]
        %v7611 = vld [vmem:[#allocation10 + $0x8] sm:$0xff]
        %v7612 = vld [vmem:[#allocation10 + $0x10] sm:$0xff]
        %v7613 = vld [vmem:[#allocation10 + $0x18] sm:$0xff]
        %v7614 = vld [vmem:[#allocation10 + $0x20] sm:$0xff]
        %v7615 = vld [vmem:[#allocation10 + $0x28] sm:$0xff]
        %v7616 = vld [vmem:[#allocation10 + $0x30] sm:$0xff]
        %v7617 = vld [vmem:[#allocation10 + $0x38] sm:$0xff]
        %v7618 = vld [vmem:[#allocation10 + $0x40] sm:$0xff]
        %v7619 = vld [vmem:[#allocation10 + $0x48] sm:$0xff]
        %v7620 = vld [vmem:[#allocation10 + $0x50] sm:$0xff]
        %v7621 = vld [vmem:[#allocation10 + $0x58] sm:$0xff]
        %v7622 = vld [vmem:[#allocation10 + $0x60] sm:$0xff]
        %v7623 = vld [vmem:[#allocation10 + $0x68] sm:$0xff]
        %v7624 = vld [vmem:[#allocation10 + $0x70] sm:$0xff]
        %v7625 = vld [vmem:[#allocation10 + $0x78] sm:$0xff]
        %v7626 = vld [vmem:[#allocation10 + $0x80] sm:$0xff]
        %v7627 = vld [vmem:[#allocation10 + $0x88] sm:$0xff]
        %v7628 = vld [vmem:[#allocation10 + $0x90] sm:$0xff]
        %v7629 = vld [vmem:[#allocation10 + $0x98] sm:$0xff]
        %v7630 = vld [vmem:[#allocation10 + $0xa0] sm:$0xff]
        %v7631 = vld [vmem:[#allocation10 + $0xa8] sm:$0xff]
        %v7632 = vld [vmem:[#allocation10 + $0xb0] sm:$0xff]
        %v7633 = vld [vmem:[#allocation10 + $0xb8] sm:$0xff]
        %v7634 = vld [vmem:[#allocation10 + $0xc0] sm:$0xff]
        %v7635 = vld [vmem:[#allocation10 + $0xc8] sm:$0xff]
        %v7636 = vld [vmem:[#allocation10 + $0xd0] sm:$0xff]
        %v7637 = vld [vmem:[#allocation10 + $0xd8] sm:$0xff]
        %v7638 = vld [vmem:[#allocation10 + $0xe0] sm:$0xff]
        %v7639 = vld [vmem:[#allocation10 + $0xe8] sm:$0xff]
        %v7640 = vld [vmem:[#allocation10 + $0xf0] sm:$0xff]
        %v7641 = vld [vmem:[#allocation10 + $0xf8] sm:$0xff]
        %v7642 = vld [vmem:[#allocation10 + $0x100] sm:$0xff]
        %v7643 = vld [vmem:[#allocation10 + $0x108] sm:$0xff]
        %v7644 = vld [vmem:[#allocation10 + $0x110] sm:$0xff]
        %v7645 = vld [vmem:[#allocation10 + $0x118] sm:$0xff]
        %v7646 = vld [vmem:[#allocation10 + $0x120] sm:$0xff]
        %v7647 = vld [vmem:[#allocation10 + $0x128] sm:$0xff]
        %v7648 = vld [vmem:[#allocation10 + $0x130] sm:$0xff]
        %v7649 = vld [vmem:[#allocation10 + $0x138] sm:$0xff]
        %v7650 = vld [vmem:[#allocation10 + $0x140] sm:$0xff]
        %v7651 = vld [vmem:[#allocation10 + $0x148] sm:$0xff]
        %v7652 = vld [vmem:[#allocation10 + $0x150] sm:$0xff]
        %v7653 = vld [vmem:[#allocation10 + $0x158] sm:$0xff]
        %v7654 = vld [vmem:[#allocation10 + $0x160] sm:$0xff]
        %v7655 = vld [vmem:[#allocation10 + $0x168] sm:$0xff]
        %v7656 = vld [vmem:[#allocation10 + $0x170] sm:$0xff]
        %v7657 = vld [vmem:[#allocation10 + $0x178] sm:$0xff]
        %v7658 = vld [vmem:[#allocation10 + $0x180] sm:$0xff]
        %v7659 = vld [vmem:[#allocation10 + $0x188] sm:$0xff]
        %v7660 = vld [vmem:[#allocation10 + $0x190] sm:$0xff]
        %v7661 = vld [vmem:[#allocation10 + $0x198] sm:$0xff]
        %v7662 = vld [vmem:[#allocation10 + $0x1a0] sm:$0xff]
        %v7663 = vld [vmem:[#allocation10 + $0x1a8] sm:$0xff]
        %v7664 = vld [vmem:[#allocation10 + $0x1b0] sm:$0xff]
        %v7665 = vld [vmem:[#allocation10 + $0x1b8] sm:$0xff]
        %v7666 = vld [vmem:[#allocation10 + $0x1c0] sm:$0xff]
        %v7667 = vld [vmem:[#allocation10 + $0x1c8] sm:$0xff]
        %v7668 = vld [vmem:[#allocation10 + $0x1d0] sm:$0xff]
        %v7669 = vld [vmem:[#allocation10 + $0x1d8] sm:$0xff]
        %v7670 = vld [vmem:[#allocation10 + $0x1e0] sm:$0xff]
        %v7671 = vld [vmem:[#allocation10 + $0x1e8] sm:$0xff]
        %v7672 = vld [vmem:[#allocation10 + $0x1f0] sm:$0xff]
        %v7673 = vld [vmem:[#allocation10 + $0x1f8] sm:$0xff]
        %v7674 = vld [vmem:[%s8] sm:$0xf]
        %v7676 = vlaneseq
        %v7677 = vshrl.u32 %v7676, 7
        %v7678 = vsub.s32 0, %v7677
        %v7679 = vrot.slane %v7674, %v7678
        %v7680 = vlaneseq
        %v7681 = vshrl.u32 %v7680, 7
        %v7682 = vsub.s32 1, %v7681
        %v7683 = vrot.slane %v7674, %v7682
        %v7684 = vlaneseq
        %v7685 = vshrl.u32 %v7684, 7
        %v7686 = vsub.s32 2, %v7685
        %v7687 = vrot.slane %v7674, %v7686
        %v7688 = vlaneseq
        %v7689 = vshrl.u32 %v7688, 7
        %v7690 = vsub.s32 3, %v7689
        %v7691 = vrot.slane %v7674, %v7690
        %v7697 = vunpack.c.l.b16 %v7609
        %v7698 = vunpack.c.h.b16 %v7609
        %v7699 = vpack.c.b16 %v7697, %v7697
        %v7700 = vpack.c.b16 %v7698, %v7698
        %v7767 = vunpack.c.l.b16 %v7610
        %v7768 = vunpack.c.h.b16 %v7610
        %v7769 = vunpack.c.l.b16 %v7611
        %v7770 = vunpack.c.h.b16 %v7611
        %v7771 = vunpack.c.l.b16 %v7612
        %v7772 = vunpack.c.h.b16 %v7612
        %v7773 = vunpack.c.l.b16 %v7613
        %v7774 = vunpack.c.h.b16 %v7613
        %v7775 = vunpack.c.l.b16 %v7614
        %v7776 = vunpack.c.h.b16 %v7614
        %v7777 = vunpack.c.l.b16 %v7615
        %v7778 = vunpack.c.h.b16 %v7615
        %v7779 = vunpack.c.l.b16 %v7616
        %v7780 = vunpack.c.h.b16 %v7616
        %v7781 = vunpack.c.l.b16 %v7617
        %v7782 = vunpack.c.h.b16 %v7617
        %v7783 = vunpack.c.l.b16 %v7618
        %v7784 = vunpack.c.h.b16 %v7618
        %v7785 = vunpack.c.l.b16 %v7619
        %v7786 = vunpack.c.h.b16 %v7619
        %v7787 = vunpack.c.l.b16 %v7620
        %v7788 = vunpack.c.h.b16 %v7620
        %v7789 = vunpack.c.l.b16 %v7621
        %v7790 = vunpack.c.h.b16 %v7621
        %v7791 = vunpack.c.l.b16 %v7622
        %v7792 = vunpack.c.h.b16 %v7622
        %v7793 = vunpack.c.l.b16 %v7623
        %v7794 = vunpack.c.h.b16 %v7623
        %v7795 = vunpack.c.l.b16 %v7624
        %v7796 = vunpack.c.h.b16 %v7624
        %v7797 = vunpack.c.l.b16 %v7625
        %v7798 = vunpack.c.h.b16 %v7625
        %v7799 = vunpack.c.l.b16 %v7626
        %v7800 = vunpack.c.h.b16 %v7626
        %v7801 = vunpack.c.l.b16 %v7627
        %v7802 = vunpack.c.h.b16 %v7627
        %v7803 = vunpack.c.l.b16 %v7628
        %v7804 = vunpack.c.h.b16 %v7628
        %v7805 = vunpack.c.l.b16 %v7629
        %v7806 = vunpack.c.h.b16 %v7629
        %v7807 = vunpack.c.l.b16 %v7630
        %v7808 = vunpack.c.h.b16 %v7630
        %v7809 = vunpack.c.l.b16 %v7631
        %v7810 = vunpack.c.h.b16 %v7631
        %v7811 = vunpack.c.l.b16 %v7632
        %v7812 = vunpack.c.h.b16 %v7632
        %v7813 = vunpack.c.l.b16 %v7633
        %v7814 = vunpack.c.h.b16 %v7633
        %v7815 = vunpack.c.l.b16 %v7634
        %v7816 = vunpack.c.h.b16 %v7634
        %v7817 = vunpack.c.l.b16 %v7635
        %v7818 = vunpack.c.h.b16 %v7635
        %v7819 = vunpack.c.l.b16 %v7636
        %v7820 = vunpack.c.h.b16 %v7636
        %v7821 = vunpack.c.l.b16 %v7637
        %v7822 = vunpack.c.h.b16 %v7637
        %v7823 = vunpack.c.l.b16 %v7638
        %v7824 = vunpack.c.h.b16 %v7638
        %v7825 = vunpack.c.l.b16 %v7639
        %v7826 = vunpack.c.h.b16 %v7639
        %v7827 = vunpack.c.l.b16 %v7640
        %v7828 = vunpack.c.h.b16 %v7640
        %v7829 = vunpack.c.l.b16 %v7641
        %v7830 = vunpack.c.h.b16 %v7641
        %v7831 = vunpack.c.l.b16 %v7642
        %v7832 = vunpack.c.h.b16 %v7642
        %v7833 = vunpack.c.l.b16 %v7643
        %v7834 = vunpack.c.h.b16 %v7643
        %v7835 = vunpack.c.l.b16 %v7644
        %v7836 = vunpack.c.h.b16 %v7644
        %v7837 = vunpack.c.l.b16 %v7645
        %v7838 = vunpack.c.h.b16 %v7645
        %v7839 = vunpack.c.l.b16 %v7646
        %v7840 = vunpack.c.h.b16 %v7646
        %v7841 = vunpack.c.l.b16 %v7647
        %v7842 = vunpack.c.h.b16 %v7647
        %v7843 = vunpack.c.l.b16 %v7648
        %v7844 = vunpack.c.h.b16 %v7648
        %v7845 = vunpack.c.l.b16 %v7649
        %v7846 = vunpack.c.h.b16 %v7649
        %v7847 = vunpack.c.l.b16 %v7650
        %v7848 = vunpack.c.h.b16 %v7650
        %v7849 = vunpack.c.l.b16 %v7651
        %v7850 = vunpack.c.h.b16 %v7651
        %v7851 = vunpack.c.l.b16 %v7652
        %v7852 = vunpack.c.h.b16 %v7652
        %v7853 = vunpack.c.l.b16 %v7653
        %v7854 = vunpack.c.h.b16 %v7653
        %v7855 = vunpack.c.l.b16 %v7654
        %v7856 = vunpack.c.h.b16 %v7654
        %v7857 = vunpack.c.l.b16 %v7655
        %v7858 = vunpack.c.h.b16 %v7655
        %v7859 = vunpack.c.l.b16 %v7656
        %v7860 = vunpack.c.h.b16 %v7656
        %v7861 = vunpack.c.l.b16 %v7657
        %v7862 = vunpack.c.h.b16 %v7657
        %v7863 = vunpack.c.l.b16 %v7658
        %v7864 = vunpack.c.h.b16 %v7658
        %v7865 = vunpack.c.l.b16 %v7659
        %v7866 = vunpack.c.h.b16 %v7659
        %v7867 = vunpack.c.l.b16 %v7660
        %v7868 = vunpack.c.h.b16 %v7660
        %v7869 = vunpack.c.l.b16 %v7661
        %v7870 = vunpack.c.h.b16 %v7661
        %v7871 = vunpack.c.l.b16 %v7662
        %v7872 = vunpack.c.h.b16 %v7662
        %v7873 = vunpack.c.l.b16 %v7663
        %v7874 = vunpack.c.h.b16 %v7663
        %v7875 = vunpack.c.l.b16 %v7664
        %v7876 = vunpack.c.h.b16 %v7664
        %v7877 = vunpack.c.l.b16 %v7665
        %v7878 = vunpack.c.h.b16 %v7665
        %v7879 = vunpack.c.l.b16 %v7666
        %v7880 = vunpack.c.h.b16 %v7666
        %v7881 = vunpack.c.l.b16 %v7667
        %v7882 = vunpack.c.h.b16 %v7667
        %v7883 = vunpack.c.l.b16 %v7668
        %v7884 = vunpack.c.h.b16 %v7668
        %v7885 = vunpack.c.l.b16 %v7669
        %v7886 = vunpack.c.h.b16 %v7669
        %v7887 = vunpack.c.l.b16 %v7670
        %v7888 = vunpack.c.h.b16 %v7670
        %v7889 = vunpack.c.l.b16 %v7671
        %v7890 = vunpack.c.h.b16 %v7671
        %v7891 = vunpack.c.l.b16 %v7672
        %v7892 = vunpack.c.h.b16 %v7672
        %v7893 = vunpack.c.l.b16 %v7673
        %v7894 = vunpack.c.h.b16 %v7673
        %v7895 = vpack.c.b16 %v7771, %v7767
        %v7896 = vpack.c.b16 %v7772, %v7768
        %v7897 = vpack.c.b16 %v7773, %v7769
        %v7898 = vpack.c.b16 %v7774, %v7770
        %v7899 = vpack.c.b16 %v7779, %v7775
        %v7900 = vpack.c.b16 %v7780, %v7776
        %v7901 = vpack.c.b16 %v7781, %v7777
        %v7902 = vpack.c.b16 %v7782, %v7778
        %v7903 = vpack.c.b16 %v7787, %v7783
        %v7904 = vpack.c.b16 %v7788, %v7784
        %v7905 = vpack.c.b16 %v7789, %v7785
        %v7906 = vpack.c.b16 %v7790, %v7786
        %v7907 = vpack.c.b16 %v7795, %v7791
        %v7908 = vpack.c.b16 %v7796, %v7792
        %v7909 = vpack.c.b16 %v7797, %v7793
        %v7910 = vpack.c.b16 %v7798, %v7794
        %v7911 = vpack.c.b16 %v7803, %v7799
        %v7912 = vpack.c.b16 %v7804, %v7800
        %v7913 = vpack.c.b16 %v7805, %v7801
        %v7914 = vpack.c.b16 %v7806, %v7802
        %v7915 = vpack.c.b16 %v7811, %v7807
        %v7916 = vpack.c.b16 %v7812, %v7808
        %v7917 = vpack.c.b16 %v7813, %v7809
        %v7918 = vpack.c.b16 %v7814, %v7810
        %v7919 = vpack.c.b16 %v7819, %v7815
        %v7920 = vpack.c.b16 %v7820, %v7816
        %v7921 = vpack.c.b16 %v7821, %v7817
        %v7922 = vpack.c.b16 %v7822, %v7818
        %v7923 = vpack.c.b16 %v7827, %v7823
        %v7924 = vpack.c.b16 %v7828, %v7824
        %v7925 = vpack.c.b16 %v7829, %v7825
        %v7926 = vpack.c.b16 %v7830, %v7826
        %v7927 = vpack.c.b16 %v7835, %v7831
        %v7928 = vpack.c.b16 %v7836, %v7832
        %v7929 = vpack.c.b16 %v7837, %v7833
        %v7930 = vpack.c.b16 %v7838, %v7834
        %v7931 = vpack.c.b16 %v7843, %v7839
        %v7932 = vpack.c.b16 %v7844, %v7840
        %v7933 = vpack.c.b16 %v7845, %v7841
        %v7934 = vpack.c.b16 %v7846, %v7842
        %v7935 = vpack.c.b16 %v7851, %v7847
        %v7936 = vpack.c.b16 %v7852, %v7848
        %v7937 = vpack.c.b16 %v7853, %v7849
        %v7938 = vpack.c.b16 %v7854, %v7850
        %v7939 = vpack.c.b16 %v7859, %v7855
        %v7940 = vpack.c.b16 %v7860, %v7856
        %v7941 = vpack.c.b16 %v7861, %v7857
        %v7942 = vpack.c.b16 %v7862, %v7858
        %v7943 = vpack.c.b16 %v7867, %v7863
        %v7944 = vpack.c.b16 %v7868, %v7864
        %v7945 = vpack.c.b16 %v7869, %v7865
        %v7946 = vpack.c.b16 %v7870, %v7866
        %v7947 = vpack.c.b16 %v7875, %v7871
        %v7948 = vpack.c.b16 %v7876, %v7872
        %v7949 = vpack.c.b16 %v7877, %v7873
        %v7950 = vpack.c.b16 %v7878, %v7874
        %v7951 = vpack.c.b16 %v7883, %v7879
        %v7952 = vpack.c.b16 %v7884, %v7880
        %v7953 = vpack.c.b16 %v7885, %v7881
        %v7954 = vpack.c.b16 %v7886, %v7882
        %v7955 = vpack.c.b16 %v7891, %v7887
        %v7956 = vpack.c.b16 %v7892, %v7888
        %v7957 = vpack.c.b16 %v7893, %v7889
        %v7958 = vpack.c.b16 %v7894, %v7890
        %8023 = vmatprep.subr.bf16.mxu0 %v7896
        %8024 = vmatpush1.bf16.msra.mxu0 %v7895
        %8025 = vmatprep.subr.bf16.mxu0 %v7900
        %8026 = vmatpush1.bf16.msra.mxu0 %v7899
        %8027 = vmatprep.subr.bf16.mxu0 %v7904
        %8028 = vmatpush1.bf16.msra.mxu0 %v7903
        %8029 = vmatprep.subr.bf16.mxu0 %v7908
        %8030 = vmatpush1.bf16.msra.mxu0 %v7907
        %8031 = vmatprep.subr.bf16.mxu0 %v7912
        %8032 = vmatpush1.bf16.msra.mxu0 %v7911
        %8033 = vmatprep.subr.bf16.mxu0 %v7916
        %8034 = vmatpush1.bf16.msra.mxu0 %v7915
        %8035 = vmatprep.subr.bf16.mxu0 %v7920
        %8036 = vmatpush1.bf16.msra.mxu0 %v7919
        %8037 = vmatprep.subr.bf16.mxu0 %v7924
        %8038 = vmatpush1.bf16.msra.mxu0 %v7923
        %8039 = vmatprep.subr.bf16.mxu0 %v7928
        %8040 = vmatpush1.bf16.msra.mxu0 %v7927
        %8041 = vmatprep.subr.bf16.mxu0 %v7932
        %8042 = vmatpush1.bf16.msra.mxu0 %v7931
        %8043 = vmatprep.subr.bf16.mxu0 %v7936
        %8044 = vmatpush1.bf16.msra.mxu0 %v7935
        %8045 = vmatprep.subr.bf16.mxu0 %v7940
        %8046 = vmatpush1.bf16.msra.mxu0 %v7939
        %8047 = vmatprep.subr.bf16.mxu0 %v7944
        %8048 = vmatpush1.bf16.msra.mxu0 %v7943
        %8049 = vmatprep.subr.bf16.mxu0 %v7948
        %8050 = vmatpush1.bf16.msra.mxu0 %v7947
        %8051 = vmatprep.subr.bf16.mxu0 %v7952
        %8052 = vmatpush1.bf16.msra.mxu0 %v7951
        %8053 = vmatprep.subr.bf16.mxu0 %v7956
        %8054 = vmatpush1.bf16.msra.mxu0 %v7955
        %8055 = vmatprep.mubr.bf16.mxu0 %v7700
        %8056 = vmatmul.mubr.bf16.gmra.mrb[0].mxu0 %v7699
        %v8057 = vpop.f32.mrb[0].mxu0
        %v8058 = vadd.f32 %v7679, %v8057
        %v8059 = vpop.f32.mrb[0].mxu0
        %v8060 = vadd.f32 %v7683, %v8059
        %v8061 = vpop.f32.mrb[0].mxu0
        %v8062 = vpop.f32.mrb[0].mxu0
        %8063 = vdwg.mxu0
        %8064 = vmatprep.subr.bf16.mxu0 %v7898
        %8065 = vmatpush1.bf16.msra.mxu0 %v7897
        %8066 = vmatprep.subr.bf16.mxu0 %v7902
        %8067 = vmatpush1.bf16.msra.mxu0 %v7901
        %8068 = vmatprep.subr.bf16.mxu0 %v7906
        %8069 = vmatpush1.bf16.msra.mxu0 %v7905
        %8070 = vmatprep.subr.bf16.mxu0 %v7910
        %8071 = vmatpush1.bf16.msra.mxu0 %v7909
        %8072 = vmatprep.subr.bf16.mxu0 %v7914
        %8073 = vmatpush1.bf16.msra.mxu0 %v7913
        %8074 = vmatprep.subr.bf16.mxu0 %v7918
        %8075 = vmatpush1.bf16.msra.mxu0 %v7917
        %8076 = vmatprep.subr.bf16.mxu0 %v7922
        %8077 = vmatpush1.bf16.msra.mxu0 %v7921
        %8078 = vmatprep.subr.bf16.mxu0 %v7926
        %8079 = vmatpush1.bf16.msra.mxu0 %v7925
        %8080 = vmatprep.subr.bf16.mxu0 %v7930
        %8081 = vmatpush1.bf16.msra.mxu0 %v7929
        %8082 = vmatprep.subr.bf16.mxu0 %v7934
        %8083 = vmatpush1.bf16.msra.mxu0 %v7933
        %8084 = vmatprep.subr.bf16.mxu0 %v7938
        %8085 = vmatpush1.bf16.msra.mxu0 %v7937
        %8086 = vmatprep.subr.bf16.mxu0 %v7942
        %8087 = vmatpush1.bf16.msra.mxu0 %v7941
        %8088 = vmatprep.subr.bf16.mxu0 %v7946
        %8089 = vmatpush1.bf16.msra.mxu0 %v7945
        %8090 = vmatprep.subr.bf16.mxu0 %v7950
        %8091 = vmatpush1.bf16.msra.mxu0 %v7949
        %8092 = vmatprep.subr.bf16.mxu0 %v7954
        %8093 = vmatpush1.bf16.msra.mxu0 %v7953
        %8094 = vmatprep.subr.bf16.mxu0 %v7958
        %8095 = vmatpush1.bf16.msra.mxu0 %v7957
        %8096 = vmatprep.mubr.bf16.mxu0 %v7700
        %8097 = vmatmul.mubr.bf16.gmra.mrb[0].mxu0 %v7699
        %v8098 = vpop.f32.mrb[0].mxu0
        %v8099 = vadd.f32 %v7687, %v8098
        %v8100 = vpop.f32.mrb[0].mxu0
        %v8101 = vadd.f32 %v7691, %v8100
        %v8102 = vpop.f32.mrb[0].mxu0
        %v8103 = vpop.f32.mrb[0].mxu0
        %8104 = vdwg.mxu0
        %v8105 = vxor.u32 %v8058, 2147483648
        %v8106 = vmul.f32 %v8105, 1.442695
        %v8107 = vpow.pop %v8106
        %v8108 = vadd.f32 %v8107, 1.0
        %v8109 = vrcp.pop %v8108
        %v8110 = vmul.f32 1.0, %v8109
        %v8111 = vxor.u32 %v8060, 2147483648
        %v8112 = vmul.f32 %v8111, 1.442695
        %v8113 = vpow.pop %v8112
        %v8114 = vadd.f32 %v8113, 1.0
        %v8115 = vrcp.pop %v8114
        %v8116 = vmul.f32 1.0, %v8115
        %v8117 = vtanh.pop %v8099
        %v8118 = vxor.u32 %v8101, 2147483648
        %v8119 = vmul.f32 %v8118, 1.442695
        %v8120 = vpow.pop %v8119
        %v8121 = vadd.f32 %v8120, 1.0
        %v8122 = vrcp.pop %v8121
        %v8123 = vmul.f32 1.0, %v8122
        %v8124 = vmul.f32 %v8116, %v7063
        %v8125 = vmul.f32 %v8110, %v8117
        %v8126 = vadd.f32 %v8124, %v8125
        %v8127 = vtanh.pop %v8126
        %v8128 = vmul.f32 %v8123, %v8127
        %v8129 = vsub.f32 %v8128, %v7060
        %8131 = vset.pattern.permute.xlu0 0
        %8132 = vperm.xlu0 %8131, %v7605
        %v8133 = vpop.permute.xlu0 %8132
        %v8135 = vmul.f32 %v8133, %v8129
        %v8136 = vadd.f32 %v7060, %v8135
        %v8137 = vsub.f32 %v8126, %v7063
        %v8138 = vmul.f32 %v8133, %v8137
        %v8139 = vadd.f32 %v7063, %v8138
        %s8140 = scalar_lea.vmem %s556, 28
        %v8141 = vld [vmem:[%s8140] sm:$0xf]
        %s8142 = scalar_lea.vmem %s576, 56
        %v8143 = vld [vmem:[%s8142] sm:$0xff]
        %8144 = vst [vmem:[#allocation6] sm:$0xf] %v8141
        %v8145 = vpack.c.bf16 %v7598, %v7598
        %8146 = vst [vmem:[#allocation6 + $0x4] sm:$0xf] %v8145
        %v8147 = vld [vmem:[#allocation6] sm:$0xff]
        %v8148 = vld [vmem:[#allocation8] sm:$0xff]
        %v8149 = vld [vmem:[#allocation8 + $0x8] sm:$0xff]
        %v8150 = vld [vmem:[#allocation8 + $0x10] sm:$0xff]
        %v8151 = vld [vmem:[#allocation8 + $0x18] sm:$0xff]
        %v8152 = vld [vmem:[#allocation8 + $0x20] sm:$0xff]
        %v8153 = vld [vmem:[#allocation8 + $0x28] sm:$0xff]
        %v8154 = vld [vmem:[#allocation8 + $0x30] sm:$0xff]
        %v8155 = vld [vmem:[#allocation8 + $0x38] sm:$0xff]
        %v8156 = vld [vmem:[#allocation8 + $0x40] sm:$0xff]
        %v8157 = vld [vmem:[#allocation8 + $0x48] sm:$0xff]
        %v8158 = vld [vmem:[#allocation8 + $0x50] sm:$0xff]
        %v8159 = vld [vmem:[#allocation8 + $0x58] sm:$0xff]
        %v8160 = vld [vmem:[#allocation8 + $0x60] sm:$0xff]
        %v8161 = vld [vmem:[#allocation8 + $0x68] sm:$0xff]
        %v8162 = vld [vmem:[#allocation8 + $0x70] sm:$0xff]
        %v8163 = vld [vmem:[#allocation8 + $0x78] sm:$0xff]
        %v8164 = vld [vmem:[#allocation8 + $0x80] sm:$0xff]
        %v8165 = vld [vmem:[#allocation8 + $0x88] sm:$0xff]
        %v8166 = vld [vmem:[#allocation8 + $0x90] sm:$0xff]
        %v8167 = vld [vmem:[#allocation8 + $0x98] sm:$0xff]
        %v8168 = vld [vmem:[#allocation8 + $0xa0] sm:$0xff]
        %v8169 = vld [vmem:[#allocation8 + $0xa8] sm:$0xff]
        %v8170 = vld [vmem:[#allocation8 + $0xb0] sm:$0xff]
        %v8171 = vld [vmem:[#allocation8 + $0xb8] sm:$0xff]
        %v8172 = vld [vmem:[#allocation8 + $0xc0] sm:$0xff]
        %v8173 = vld [vmem:[#allocation8 + $0xc8] sm:$0xff]
        %v8174 = vld [vmem:[#allocation8 + $0xd0] sm:$0xff]
        %v8175 = vld [vmem:[#allocation8 + $0xd8] sm:$0xff]
        %v8176 = vld [vmem:[#allocation8 + $0xe0] sm:$0xff]
        %v8177 = vld [vmem:[#allocation8 + $0xe8] sm:$0xff]
        %v8178 = vld [vmem:[#allocation8 + $0xf0] sm:$0xff]
        %v8179 = vld [vmem:[#allocation8 + $0xf8] sm:$0xff]
        %v8180 = vld [vmem:[#allocation8 + $0x100] sm:$0xff]
        %v8181 = vld [vmem:[#allocation8 + $0x108] sm:$0xff]
        %v8182 = vld [vmem:[#allocation8 + $0x110] sm:$0xff]
        %v8183 = vld [vmem:[#allocation8 + $0x118] sm:$0xff]
        %v8184 = vld [vmem:[#allocation8 + $0x120] sm:$0xff]
        %v8185 = vld [vmem:[#allocation8 + $0x128] sm:$0xff]
        %v8186 = vld [vmem:[#allocation8 + $0x130] sm:$0xff]
        %v8187 = vld [vmem:[#allocation8 + $0x138] sm:$0xff]
        %v8188 = vld [vmem:[#allocation8 + $0x140] sm:$0xff]
        %v8189 = vld [vmem:[#allocation8 + $0x148] sm:$0xff]
        %v8190 = vld [vmem:[#allocation8 + $0x150] sm:$0xff]
        %v8191 = vld [vmem:[#allocation8 + $0x158] sm:$0xff]
        %v8192 = vld [vmem:[#allocation8 + $0x160] sm:$0xff]
        %v8193 = vld [vmem:[#allocation8 + $0x168] sm:$0xff]
        %v8194 = vld [vmem:[#allocation8 + $0x170] sm:$0xff]
        %v8195 = vld [vmem:[#allocation8 + $0x178] sm:$0xff]
        %v8196 = vld [vmem:[#allocation8 + $0x180] sm:$0xff]
        %v8197 = vld [vmem:[#allocation8 + $0x188] sm:$0xff]
        %v8198 = vld [vmem:[#allocation8 + $0x190] sm:$0xff]
        %v8199 = vld [vmem:[#allocation8 + $0x198] sm:$0xff]
        %v8200 = vld [vmem:[#allocation8 + $0x1a0] sm:$0xff]
        %v8201 = vld [vmem:[#allocation8 + $0x1a8] sm:$0xff]
        %v8202 = vld [vmem:[#allocation8 + $0x1b0] sm:$0xff]
        %v8203 = vld [vmem:[#allocation8 + $0x1b8] sm:$0xff]
        %v8204 = vld [vmem:[#allocation8 + $0x1c0] sm:$0xff]
        %v8205 = vld [vmem:[#allocation8 + $0x1c8] sm:$0xff]
        %v8206 = vld [vmem:[#allocation8 + $0x1d0] sm:$0xff]
        %v8207 = vld [vmem:[#allocation8 + $0x1d8] sm:$0xff]
        %v8208 = vld [vmem:[#allocation8 + $0x1e0] sm:$0xff]
        %v8209 = vld [vmem:[#allocation8 + $0x1e8] sm:$0xff]
        %v8210 = vld [vmem:[#allocation8 + $0x1f0] sm:$0xff]
        %v8211 = vld [vmem:[#allocation8 + $0x1f8] sm:$0xff]
        %v8212 = vld [vmem:[%s6] sm:$0xf]
        %v8214 = vlaneseq
        %v8215 = vshrl.u32 %v8214, 7
        %v8216 = vsub.s32 0, %v8215
        %v8217 = vrot.slane %v8212, %v8216
        %v8218 = vlaneseq
        %v8219 = vshrl.u32 %v8218, 7
        %v8220 = vsub.s32 1, %v8219
        %v8221 = vrot.slane %v8212, %v8220
        %v8222 = vlaneseq
        %v8223 = vshrl.u32 %v8222, 7
        %v8224 = vsub.s32 2, %v8223
        %v8225 = vrot.slane %v8212, %v8224
        %v8226 = vlaneseq
        %v8227 = vshrl.u32 %v8226, 7
        %v8228 = vsub.s32 3, %v8227
        %v8229 = vrot.slane %v8212, %v8228
        %v8235 = vunpack.c.l.b16 %v8147
        %v8236 = vunpack.c.h.b16 %v8147
        %v8237 = vpack.c.b16 %v8235, %v8235
        %v8238 = vpack.c.b16 %v8236, %v8236
        %v8305 = vunpack.c.l.b16 %v8148
        %v8306 = vunpack.c.h.b16 %v8148
        %v8307 = vunpack.c.l.b16 %v8149
        %v8308 = vunpack.c.h.b16 %v8149
        %v8309 = vunpack.c.l.b16 %v8150
        %v8310 = vunpack.c.h.b16 %v8150
        %v8311 = vunpack.c.l.b16 %v8151
        %v8312 = vunpack.c.h.b16 %v8151
        %v8313 = vunpack.c.l.b16 %v8152
        %v8314 = vunpack.c.h.b16 %v8152
        %v8315 = vunpack.c.l.b16 %v8153
        %v8316 = vunpack.c.h.b16 %v8153
        %v8317 = vunpack.c.l.b16 %v8154
        %v8318 = vunpack.c.h.b16 %v8154
        %v8319 = vunpack.c.l.b16 %v8155
        %v8320 = vunpack.c.h.b16 %v8155
        %v8321 = vunpack.c.l.b16 %v8156
        %v8322 = vunpack.c.h.b16 %v8156
        %v8323 = vunpack.c.l.b16 %v8157
        %v8324 = vunpack.c.h.b16 %v8157
        %v8325 = vunpack.c.l.b16 %v8158
        %v8326 = vunpack.c.h.b16 %v8158
        %v8327 = vunpack.c.l.b16 %v8159
        %v8328 = vunpack.c.h.b16 %v8159
        %v8329 = vunpack.c.l.b16 %v8160
        %v8330 = vunpack.c.h.b16 %v8160
        %v8331 = vunpack.c.l.b16 %v8161
        %v8332 = vunpack.c.h.b16 %v8161
        %v8333 = vunpack.c.l.b16 %v8162
        %v8334 = vunpack.c.h.b16 %v8162
        %v8335 = vunpack.c.l.b16 %v8163
        %v8336 = vunpack.c.h.b16 %v8163
        %v8337 = vunpack.c.l.b16 %v8164
        %v8338 = vunpack.c.h.b16 %v8164
        %v8339 = vunpack.c.l.b16 %v8165
        %v8340 = vunpack.c.h.b16 %v8165
        %v8341 = vunpack.c.l.b16 %v8166
        %v8342 = vunpack.c.h.b16 %v8166
        %v8343 = vunpack.c.l.b16 %v8167
        %v8344 = vunpack.c.h.b16 %v8167
        %v8345 = vunpack.c.l.b16 %v8168
        %v8346 = vunpack.c.h.b16 %v8168
        %v8347 = vunpack.c.l.b16 %v8169
        %v8348 = vunpack.c.h.b16 %v8169
        %v8349 = vunpack.c.l.b16 %v8170
        %v8350 = vunpack.c.h.b16 %v8170
        %v8351 = vunpack.c.l.b16 %v8171
        %v8352 = vunpack.c.h.b16 %v8171
        %v8353 = vunpack.c.l.b16 %v8172
        %v8354 = vunpack.c.h.b16 %v8172
        %v8355 = vunpack.c.l.b16 %v8173
        %v8356 = vunpack.c.h.b16 %v8173
        %v8357 = vunpack.c.l.b16 %v8174
        %v8358 = vunpack.c.h.b16 %v8174
        %v8359 = vunpack.c.l.b16 %v8175
        %v8360 = vunpack.c.h.b16 %v8175
        %v8361 = vunpack.c.l.b16 %v8176
        %v8362 = vunpack.c.h.b16 %v8176
        %v8363 = vunpack.c.l.b16 %v8177
        %v8364 = vunpack.c.h.b16 %v8177
        %v8365 = vunpack.c.l.b16 %v8178
        %v8366 = vunpack.c.h.b16 %v8178
        %v8367 = vunpack.c.l.b16 %v8179
        %v8368 = vunpack.c.h.b16 %v8179
        %v8369 = vunpack.c.l.b16 %v8180
        %v8370 = vunpack.c.h.b16 %v8180
        %v8371 = vunpack.c.l.b16 %v8181
        %v8372 = vunpack.c.h.b16 %v8181
        %v8373 = vunpack.c.l.b16 %v8182
        %v8374 = vunpack.c.h.b16 %v8182
        %v8375 = vunpack.c.l.b16 %v8183
        %v8376 = vunpack.c.h.b16 %v8183
        %v8377 = vunpack.c.l.b16 %v8184
        %v8378 = vunpack.c.h.b16 %v8184
        %v8379 = vunpack.c.l.b16 %v8185
        %v8380 = vunpack.c.h.b16 %v8185
        %v8381 = vunpack.c.l.b16 %v8186
        %v8382 = vunpack.c.h.b16 %v8186
        %v8383 = vunpack.c.l.b16 %v8187
        %v8384 = vunpack.c.h.b16 %v8187
        %v8385 = vunpack.c.l.b16 %v8188
        %v8386 = vunpack.c.h.b16 %v8188
        %v8387 = vunpack.c.l.b16 %v8189
        %v8388 = vunpack.c.h.b16 %v8189
        %v8389 = vunpack.c.l.b16 %v8190
        %v8390 = vunpack.c.h.b16 %v8190
        %v8391 = vunpack.c.l.b16 %v8191
        %v8392 = vunpack.c.h.b16 %v8191
        %v8393 = vunpack.c.l.b16 %v8192
        %v8394 = vunpack.c.h.b16 %v8192
        %v8395 = vunpack.c.l.b16 %v8193
        %v8396 = vunpack.c.h.b16 %v8193
        %v8397 = vunpack.c.l.b16 %v8194
        %v8398 = vunpack.c.h.b16 %v8194
        %v8399 = vunpack.c.l.b16 %v8195
        %v8400 = vunpack.c.h.b16 %v8195
        %v8401 = vunpack.c.l.b16 %v8196
        %v8402 = vunpack.c.h.b16 %v8196
        %v8403 = vunpack.c.l.b16 %v8197
        %v8404 = vunpack.c.h.b16 %v8197
        %v8405 = vunpack.c.l.b16 %v8198
        %v8406 = vunpack.c.h.b16 %v8198
        %v8407 = vunpack.c.l.b16 %v8199
        %v8408 = vunpack.c.h.b16 %v8199
        %v8409 = vunpack.c.l.b16 %v8200
        %v8410 = vunpack.c.h.b16 %v8200
        %v8411 = vunpack.c.l.b16 %v8201
        %v8412 = vunpack.c.h.b16 %v8201
        %v8413 = vunpack.c.l.b16 %v8202
        %v8414 = vunpack.c.h.b16 %v8202
        %v8415 = vunpack.c.l.b16 %v8203
        %v8416 = vunpack.c.h.b16 %v8203
        %v8417 = vunpack.c.l.b16 %v8204
        %v8418 = vunpack.c.h.b16 %v8204
        %v8419 = vunpack.c.l.b16 %v8205
        %v8420 = vunpack.c.h.b16 %v8205
        %v8421 = vunpack.c.l.b16 %v8206
        %v8422 = vunpack.c.h.b16 %v8206
        %v8423 = vunpack.c.l.b16 %v8207
        %v8424 = vunpack.c.h.b16 %v8207
        %v8425 = vunpack.c.l.b16 %v8208
        %v8426 = vunpack.c.h.b16 %v8208
        %v8427 = vunpack.c.l.b16 %v8209
        %v8428 = vunpack.c.h.b16 %v8209
        %v8429 = vunpack.c.l.b16 %v8210
        %v8430 = vunpack.c.h.b16 %v8210
        %v8431 = vunpack.c.l.b16 %v8211
        %v8432 = vunpack.c.h.b16 %v8211
        %v8433 = vpack.c.b16 %v8309, %v8305
        %v8434 = vpack.c.b16 %v8310, %v8306
        %v8435 = vpack.c.b16 %v8311, %v8307
        %v8436 = vpack.c.b16 %v8312, %v8308
        %v8437 = vpack.c.b16 %v8317, %v8313
        %v8438 = vpack.c.b16 %v8318, %v8314
        %v8439 = vpack.c.b16 %v8319, %v8315
        %v8440 = vpack.c.b16 %v8320, %v8316
        %v8441 = vpack.c.b16 %v8325, %v8321
        %v8442 = vpack.c.b16 %v8326, %v8322
        %v8443 = vpack.c.b16 %v8327, %v8323
        %v8444 = vpack.c.b16 %v8328, %v8324
        %v8445 = vpack.c.b16 %v8333, %v8329
        %v8446 = vpack.c.b16 %v8334, %v8330
        %v8447 = vpack.c.b16 %v8335, %v8331
        %v8448 = vpack.c.b16 %v8336, %v8332
        %v8449 = vpack.c.b16 %v8341, %v8337
        %v8450 = vpack.c.b16 %v8342, %v8338
        %v8451 = vpack.c.b16 %v8343, %v8339
        %v8452 = vpack.c.b16 %v8344, %v8340
        %v8453 = vpack.c.b16 %v8349, %v8345
        %v8454 = vpack.c.b16 %v8350, %v8346
        %v8455 = vpack.c.b16 %v8351, %v8347
        %v8456 = vpack.c.b16 %v8352, %v8348
        %v8457 = vpack.c.b16 %v8357, %v8353
        %v8458 = vpack.c.b16 %v8358, %v8354
        %v8459 = vpack.c.b16 %v8359, %v8355
        %v8460 = vpack.c.b16 %v8360, %v8356
        %v8461 = vpack.c.b16 %v8365, %v8361
        %v8462 = vpack.c.b16 %v8366, %v8362
        %v8463 = vpack.c.b16 %v8367, %v8363
        %v8464 = vpack.c.b16 %v8368, %v8364
        %v8465 = vpack.c.b16 %v8373, %v8369
        %v8466 = vpack.c.b16 %v8374, %v8370
        %v8467 = vpack.c.b16 %v8375, %v8371
        %v8468 = vpack.c.b16 %v8376, %v8372
        %v8469 = vpack.c.b16 %v8381, %v8377
        %v8470 = vpack.c.b16 %v8382, %v8378
        %v8471 = vpack.c.b16 %v8383, %v8379
        %v8472 = vpack.c.b16 %v8384, %v8380
        %v8473 = vpack.c.b16 %v8389, %v8385
        %v8474 = vpack.c.b16 %v8390, %v8386
        %v8475 = vpack.c.b16 %v8391, %v8387
        %v8476 = vpack.c.b16 %v8392, %v8388
        %v8477 = vpack.c.b16 %v8397, %v8393
        %v8478 = vpack.c.b16 %v8398, %v8394
        %v8479 = vpack.c.b16 %v8399, %v8395
        %v8480 = vpack.c.b16 %v8400, %v8396
        %v8481 = vpack.c.b16 %v8405, %v8401
        %v8482 = vpack.c.b16 %v8406, %v8402
        %v8483 = vpack.c.b16 %v8407, %v8403
        %v8484 = vpack.c.b16 %v8408, %v8404
        %v8485 = vpack.c.b16 %v8413, %v8409
        %v8486 = vpack.c.b16 %v8414, %v8410
        %v8487 = vpack.c.b16 %v8415, %v8411
        %v8488 = vpack.c.b16 %v8416, %v8412
        %v8489 = vpack.c.b16 %v8421, %v8417
        %v8490 = vpack.c.b16 %v8422, %v8418
        %v8491 = vpack.c.b16 %v8423, %v8419
        %v8492 = vpack.c.b16 %v8424, %v8420
        %v8493 = vpack.c.b16 %v8429, %v8425
        %v8494 = vpack.c.b16 %v8430, %v8426
        %v8495 = vpack.c.b16 %v8431, %v8427
        %v8496 = vpack.c.b16 %v8432, %v8428
        %8561 = vmatprep.subr.bf16.mxu0 %v8434
        %8562 = vmatpush1.bf16.msra.mxu0 %v8433
        %8563 = vmatprep.subr.bf16.mxu0 %v8438
        %8564 = vmatpush1.bf16.msra.mxu0 %v8437
        %8565 = vmatprep.subr.bf16.mxu0 %v8442
        %8566 = vmatpush1.bf16.msra.mxu0 %v8441
        %8567 = vmatprep.subr.bf16.mxu0 %v8446
        %8568 = vmatpush1.bf16.msra.mxu0 %v8445
        %8569 = vmatprep.subr.bf16.mxu0 %v8450
        %8570 = vmatpush1.bf16.msra.mxu0 %v8449
        %8571 = vmatprep.subr.bf16.mxu0 %v8454
        %8572 = vmatpush1.bf16.msra.mxu0 %v8453
        %8573 = vmatprep.subr.bf16.mxu0 %v8458
        %8574 = vmatpush1.bf16.msra.mxu0 %v8457
        %8575 = vmatprep.subr.bf16.mxu0 %v8462
        %8576 = vmatpush1.bf16.msra.mxu0 %v8461
        %8577 = vmatprep.subr.bf16.mxu0 %v8466
        %8578 = vmatpush1.bf16.msra.mxu0 %v8465
        %8579 = vmatprep.subr.bf16.mxu0 %v8470
        %8580 = vmatpush1.bf16.msra.mxu0 %v8469
        %8581 = vmatprep.subr.bf16.mxu0 %v8474
        %8582 = vmatpush1.bf16.msra.mxu0 %v8473
        %8583 = vmatprep.subr.bf16.mxu0 %v8478
        %8584 = vmatpush1.bf16.msra.mxu0 %v8477
        %8585 = vmatprep.subr.bf16.mxu0 %v8482
        %8586 = vmatpush1.bf16.msra.mxu0 %v8481
        %8587 = vmatprep.subr.bf16.mxu0 %v8486
        %8588 = vmatpush1.bf16.msra.mxu0 %v8485
        %8589 = vmatprep.subr.bf16.mxu0 %v8490
        %8590 = vmatpush1.bf16.msra.mxu0 %v8489
        %8591 = vmatprep.subr.bf16.mxu0 %v8494
        %8592 = vmatpush1.bf16.msra.mxu0 %v8493
        %8593 = vmatprep.mubr.bf16.mxu0 %v8238
        %8594 = vmatmul.mubr.bf16.gmra.mrb[0].mxu0 %v8237
        %v8595 = vpop.f32.mrb[0].mxu0
        %v8596 = vadd.f32 %v8217, %v8595
        %v8597 = vpop.f32.mrb[0].mxu0
        %v8598 = vadd.f32 %v8221, %v8597
        %v8599 = vpop.f32.mrb[0].mxu0
        %v8600 = vpop.f32.mrb[0].mxu0
        %8601 = vdwg.mxu0
        %8602 = vmatprep.subr.bf16.mxu0 %v8436
        %8603 = vmatpush1.bf16.msra.mxu0 %v8435
        %8604 = vmatprep.subr.bf16.mxu0 %v8440
        %8605 = vmatpush1.bf16.msra.mxu0 %v8439
        %8606 = vmatprep.subr.bf16.mxu0 %v8444
        %8607 = vmatpush1.bf16.msra.mxu0 %v8443
        %8608 = vmatprep.subr.bf16.mxu0 %v8448
        %8609 = vmatpush1.bf16.msra.mxu0 %v8447
        %8610 = vmatprep.subr.bf16.mxu0 %v8452
        %8611 = vmatpush1.bf16.msra.mxu0 %v8451
        %8612 = vmatprep.subr.bf16.mxu0 %v8456
        %8613 = vmatpush1.bf16.msra.mxu0 %v8455
        %8614 = vmatprep.subr.bf16.mxu0 %v8460
        %8615 = vmatpush1.bf16.msra.mxu0 %v8459
        %8616 = vmatprep.subr.bf16.mxu0 %v8464
        %8617 = vmatpush1.bf16.msra.mxu0 %v8463
        %8618 = vmatprep.subr.bf16.mxu0 %v8468
        %8619 = vmatpush1.bf16.msra.mxu0 %v8467
        %8620 = vmatprep.subr.bf16.mxu0 %v8472
        %8621 = vmatpush1.bf16.msra.mxu0 %v8471
        %8622 = vmatprep.subr.bf16.mxu0 %v8476
        %8623 = vmatpush1.bf16.msra.mxu0 %v8475
        %8624 = vmatprep.subr.bf16.mxu0 %v8480
        %8625 = vmatpush1.bf16.msra.mxu0 %v8479
        %8626 = vmatprep.subr.bf16.mxu0 %v8484
        %8627 = vmatpush1.bf16.msra.mxu0 %v8483
        %8628 = vmatprep.subr.bf16.mxu0 %v8488
        %8629 = vmatpush1.bf16.msra.mxu0 %v8487
        %8630 = vmatprep.subr.bf16.mxu0 %v8492
        %8631 = vmatpush1.bf16.msra.mxu0 %v8491
        %8632 = vmatprep.subr.bf16.mxu0 %v8496
        %8633 = vmatpush1.bf16.msra.mxu0 %v8495
        %8634 = vmatprep.mubr.bf16.mxu0 %v8238
        %8635 = vmatmul.mubr.bf16.gmra.mrb[0].mxu0 %v8237
        %v8636 = vpop.f32.mrb[0].mxu0
        %v8637 = vadd.f32 %v8225, %v8636
        %v8638 = vpop.f32.mrb[0].mxu0
        %v8639 = vadd.f32 %v8229, %v8638
        %v8640 = vpop.f32.mrb[0].mxu0
        %v8641 = vpop.f32.mrb[0].mxu0
        %8642 = vdwg.mxu0
        %v8643 = vxor.u32 %v8596, 2147483648
        %v8644 = vmul.f32 %v8643, 1.442695
        %v8645 = vpow.pop %v8644
        %v8646 = vadd.f32 %v8645, 1.0
        %v8647 = vrcp.pop %v8646
        %v8648 = vmul.f32 1.0, %v8647
        %v8649 = vxor.u32 %v8598, 2147483648
        %v8650 = vmul.f32 %v8649, 1.442695
        %v8651 = vpow.pop %v8650
        %v8652 = vadd.f32 %v8651, 1.0
        %v8653 = vrcp.pop %v8652
        %v8654 = vmul.f32 1.0, %v8653
        %v8655 = vtanh.pop %v8637
        %v8656 = vxor.u32 %v8639, 2147483648
        %v8657 = vmul.f32 %v8656, 1.442695
        %v8658 = vpow.pop %v8657
        %v8659 = vadd.f32 %v8658, 1.0
        %v8660 = vrcp.pop %v8659
        %v8661 = vmul.f32 1.0, %v8660
        %v8662 = vmul.f32 %v8654, %v7601
        %v8663 = vmul.f32 %v8648, %v8655
        %v8664 = vadd.f32 %v8662, %v8663
        %v8665 = vtanh.pop %v8664
        %v8666 = vmul.f32 %v8661, %v8665
        %v8667 = vsub.f32 %v8666, %v7598
        %8669 = vset.pattern.permute.xlu0 0
        %8670 = vperm.xlu0 %8669, %v8143
        %v8671 = vpop.permute.xlu0 %8670
        %v8673 = vmul.f32 %v8671, %v8667
        %v8674 = vadd.f32 %v7598, %v8673
        %v8675 = vsub.f32 %v8664, %v7601
        %v8676 = vmul.f32 %v8671, %v8675
        %v8677 = vadd.f32 %v7601, %v8676
        %v8678 = vld [vmem:[%s566] sm:$0xf]
        %v8679 = vld [vmem:[%s586] sm:$0xff]
        %8680 = vst [vmem:[#allocation7] sm:$0xf] %v8678
        %v8681 = vpack.c.bf16 %v8136, %v8136
        %8682 = vst [vmem:[#allocation7 + $0x4] sm:$0xf] %v8681
        %v8683 = vld [vmem:[#allocation7] sm:$0xff]
        %v8684 = vld [vmem:[#allocation10] sm:$0xff]
        %v8685 = vld [vmem:[#allocation10 + $0x8] sm:$0xff]
        %v8686 = vld [vmem:[#allocation10 + $0x10] sm:$0xff]
        %v8687 = vld [vmem:[#allocation10 + $0x18] sm:$0xff]
        %v8688 = vld [vmem:[#allocation10 + $0x20] sm:$0xff]
        %v8689 = vld [vmem:[#allocation10 + $0x28] sm:$0xff]
        %v8690 = vld [vmem:[#allocation10 + $0x30] sm:$0xff]
        %v8691 = vld [vmem:[#allocation10 + $0x38] sm:$0xff]
        %v8692 = vld [vmem:[#allocation10 + $0x40] sm:$0xff]
        %v8693 = vld [vmem:[#allocation10 + $0x48] sm:$0xff]
        %v8694 = vld [vmem:[#allocation10 + $0x50] sm:$0xff]
        %v8695 = vld [vmem:[#allocation10 + $0x58] sm:$0xff]
        %v8696 = vld [vmem:[#allocation10 + $0x60] sm:$0xff]
        %v8697 = vld [vmem:[#allocation10 + $0x68] sm:$0xff]
        %v8698 = vld [vmem:[#allocation10 + $0x70] sm:$0xff]
        %v8699 = vld [vmem:[#allocation10 + $0x78] sm:$0xff]
        %v8700 = vld [vmem:[#allocation10 + $0x80] sm:$0xff]
        %v8701 = vld [vmem:[#allocation10 + $0x88] sm:$0xff]
        %v8702 = vld [vmem:[#allocation10 + $0x90] sm:$0xff]
        %v8703 = vld [vmem:[#allocation10 + $0x98] sm:$0xff]
        %v8704 = vld [vmem:[#allocation10 + $0xa0] sm:$0xff]
        %v8705 = vld [vmem:[#allocation10 + $0xa8] sm:$0xff]
        %v8706 = vld [vmem:[#allocation10 + $0xb0] sm:$0xff]
        %v8707 = vld [vmem:[#allocation10 + $0xb8] sm:$0xff]
        %v8708 = vld [vmem:[#allocation10 + $0xc0] sm:$0xff]
        %v8709 = vld [vmem:[#allocation10 + $0xc8] sm:$0xff]
        %v8710 = vld [vmem:[#allocation10 + $0xd0] sm:$0xff]
        %v8711 = vld [vmem:[#allocation10 + $0xd8] sm:$0xff]
        %v8712 = vld [vmem:[#allocation10 + $0xe0] sm:$0xff]
        %v8713 = vld [vmem:[#allocation10 + $0xe8] sm:$0xff]
        %v8714 = vld [vmem:[#allocation10 + $0xf0] sm:$0xff]
        %v8715 = vld [vmem:[#allocation10 + $0xf8] sm:$0xff]
        %v8716 = vld [vmem:[#allocation10 + $0x100] sm:$0xff]
        %v8717 = vld [vmem:[#allocation10 + $0x108] sm:$0xff]
        %v8718 = vld [vmem:[#allocation10 + $0x110] sm:$0xff]
        %v8719 = vld [vmem:[#allocation10 + $0x118] sm:$0xff]
        %v8720 = vld [vmem:[#allocation10 + $0x120] sm:$0xff]
        %v8721 = vld [vmem:[#allocation10 + $0x128] sm:$0xff]
        %v8722 = vld [vmem:[#allocation10 + $0x130] sm:$0xff]
        %v8723 = vld [vmem:[#allocation10 + $0x138] sm:$0xff]
        %v8724 = vld [vmem:[#allocation10 + $0x140] sm:$0xff]
        %v8725 = vld [vmem:[#allocation10 + $0x148] sm:$0xff]
        %v8726 = vld [vmem:[#allocation10 + $0x150] sm:$0xff]
        %v8727 = vld [vmem:[#allocation10 + $0x158] sm:$0xff]
        %v8728 = vld [vmem:[#allocation10 + $0x160] sm:$0xff]
        %v8729 = vld [vmem:[#allocation10 + $0x168] sm:$0xff]
        %v8730 = vld [vmem:[#allocation10 + $0x170] sm:$0xff]
        %v8731 = vld [vmem:[#allocation10 + $0x178] sm:$0xff]
        %v8732 = vld [vmem:[#allocation10 + $0x180] sm:$0xff]
        %v8733 = vld [vmem:[#allocation10 + $0x188] sm:$0xff]
        %v8734 = vld [vmem:[#allocation10 + $0x190] sm:$0xff]
        %v8735 = vld [vmem:[#allocation10 + $0x198] sm:$0xff]
        %v8736 = vld [vmem:[#allocation10 + $0x1a0] sm:$0xff]
        %v8737 = vld [vmem:[#allocation10 + $0x1a8] sm:$0xff]
        %v8738 = vld [vmem:[#allocation10 + $0x1b0] sm:$0xff]
        %v8739 = vld [vmem:[#allocation10 + $0x1b8] sm:$0xff]
        %v8740 = vld [vmem:[#allocation10 + $0x1c0] sm:$0xff]
        %v8741 = vld [vmem:[#allocation10 + $0x1c8] sm:$0xff]
        %v8742 = vld [vmem:[#allocation10 + $0x1d0] sm:$0xff]
        %v8743 = vld [vmem:[#allocation10 + $0x1d8] sm:$0xff]
        %v8744 = vld [vmem:[#allocation10 + $0x1e0] sm:$0xff]
        %v8745 = vld [vmem:[#allocation10 + $0x1e8] sm:$0xff]
        %v8746 = vld [vmem:[#allocation10 + $0x1f0] sm:$0xff]
        %v8747 = vld [vmem:[#allocation10 + $0x1f8] sm:$0xff]
        %v8748 = vld [vmem:[%s8] sm:$0xf]
        %v8750 = vlaneseq
        %v8751 = vshrl.u32 %v8750, 7
        %v8752 = vsub.s32 0, %v8751
        %v8753 = vrot.slane %v8748, %v8752
        %v8754 = vlaneseq
        %v8755 = vshrl.u32 %v8754, 7
        %v8756 = vsub.s32 1, %v8755
        %v8757 = vrot.slane %v8748, %v8756
        %v8758 = vlaneseq
        %v8759 = vshrl.u32 %v8758, 7
        %v8760 = vsub.s32 2, %v8759
        %v8761 = vrot.slane %v8748, %v8760
        %v8762 = vlaneseq
        %v8763 = vshrl.u32 %v8762, 7
        %v8764 = vsub.s32 3, %v8763
        %v8765 = vrot.slane %v8748, %v8764
        %v8771 = vunpack.c.l.b16 %v8683
        %v8772 = vunpack.c.h.b16 %v8683
        %v8773 = vpack.c.b16 %v8771, %v8771
        %v8774 = vpack.c.b16 %v8772, %v8772
        %v8841 = vunpack.c.l.b16 %v8684
        %v8842 = vunpack.c.h.b16 %v8684
        %v8843 = vunpack.c.l.b16 %v8685
        %v8844 = vunpack.c.h.b16 %v8685
        %v8845 = vunpack.c.l.b16 %v8686
        %v8846 = vunpack.c.h.b16 %v8686
        %v8847 = vunpack.c.l.b16 %v8687
        %v8848 = vunpack.c.h.b16 %v8687
        %v8849 = vunpack.c.l.b16 %v8688
        %v8850 = vunpack.c.h.b16 %v8688
        %v8851 = vunpack.c.l.b16 %v8689
        %v8852 = vunpack.c.h.b16 %v8689
        %v8853 = vunpack.c.l.b16 %v8690
        %v8854 = vunpack.c.h.b16 %v8690
        %v8855 = vunpack.c.l.b16 %v8691
        %v8856 = vunpack.c.h.b16 %v8691
        %v8857 = vunpack.c.l.b16 %v8692
        %v8858 = vunpack.c.h.b16 %v8692
        %v8859 = vunpack.c.l.b16 %v8693
        %v8860 = vunpack.c.h.b16 %v8693
        %v8861 = vunpack.c.l.b16 %v8694
        %v8862 = vunpack.c.h.b16 %v8694
        %v8863 = vunpack.c.l.b16 %v8695
        %v8864 = vunpack.c.h.b16 %v8695
        %v8865 = vunpack.c.l.b16 %v8696
        %v8866 = vunpack.c.h.b16 %v8696
        %v8867 = vunpack.c.l.b16 %v8697
        %v8868 = vunpack.c.h.b16 %v8697
        %v8869 = vunpack.c.l.b16 %v8698
        %v8870 = vunpack.c.h.b16 %v8698
        %v8871 = vunpack.c.l.b16 %v8699
        %v8872 = vunpack.c.h.b16 %v8699
        %v8873 = vunpack.c.l.b16 %v8700
        %v8874 = vunpack.c.h.b16 %v8700
        %v8875 = vunpack.c.l.b16 %v8701
        %v8876 = vunpack.c.h.b16 %v8701
        %v8877 = vunpack.c.l.b16 %v8702
        %v8878 = vunpack.c.h.b16 %v8702
        %v8879 = vunpack.c.l.b16 %v8703
        %v8880 = vunpack.c.h.b16 %v8703
        %v8881 = vunpack.c.l.b16 %v8704
        %v8882 = vunpack.c.h.b16 %v8704
        %v8883 = vunpack.c.l.b16 %v8705
        %v8884 = vunpack.c.h.b16 %v8705
        %v8885 = vunpack.c.l.b16 %v8706
        %v8886 = vunpack.c.h.b16 %v8706
        %v8887 = vunpack.c.l.b16 %v8707
        %v8888 = vunpack.c.h.b16 %v8707
        %v8889 = vunpack.c.l.b16 %v8708
        %v8890 = vunpack.c.h.b16 %v8708
        %v8891 = vunpack.c.l.b16 %v8709
        %v8892 = vunpack.c.h.b16 %v8709
        %v8893 = vunpack.c.l.b16 %v8710
        %v8894 = vunpack.c.h.b16 %v8710
        %v8895 = vunpack.c.l.b16 %v8711
        %v8896 = vunpack.c.h.b16 %v8711
        %v8897 = vunpack.c.l.b16 %v8712
        %v8898 = vunpack.c.h.b16 %v8712
        %v8899 = vunpack.c.l.b16 %v8713
        %v8900 = vunpack.c.h.b16 %v8713
        %v8901 = vunpack.c.l.b16 %v8714
        %v8902 = vunpack.c.h.b16 %v8714
        %v8903 = vunpack.c.l.b16 %v8715
        %v8904 = vunpack.c.h.b16 %v8715
        %v8905 = vunpack.c.l.b16 %v8716
        %v8906 = vunpack.c.h.b16 %v8716
        %v8907 = vunpack.c.l.b16 %v8717
        %v8908 = vunpack.c.h.b16 %v8717
        %v8909 = vunpack.c.l.b16 %v8718
        %v8910 = vunpack.c.h.b16 %v8718
        %v8911 = vunpack.c.l.b16 %v8719
        %v8912 = vunpack.c.h.b16 %v8719
        %v8913 = vunpack.c.l.b16 %v8720
        %v8914 = vunpack.c.h.b16 %v8720
        %v8915 = vunpack.c.l.b16 %v8721
        %v8916 = vunpack.c.h.b16 %v8721
        %v8917 = vunpack.c.l.b16 %v8722
        %v8918 = vunpack.c.h.b16 %v8722
        %v8919 = vunpack.c.l.b16 %v8723
        %v8920 = vunpack.c.h.b16 %v8723
        %v8921 = vunpack.c.l.b16 %v8724
        %v8922 = vunpack.c.h.b16 %v8724
        %v8923 = vunpack.c.l.b16 %v8725
        %v8924 = vunpack.c.h.b16 %v8725
        %v8925 = vunpack.c.l.b16 %v8726
        %v8926 = vunpack.c.h.b16 %v8726
        %v8927 = vunpack.c.l.b16 %v8727
        %v8928 = vunpack.c.h.b16 %v8727
        %v8929 = vunpack.c.l.b16 %v8728
        %v8930 = vunpack.c.h.b16 %v8728
        %v8931 = vunpack.c.l.b16 %v8729
        %v8932 = vunpack.c.h.b16 %v8729
        %v8933 = vunpack.c.l.b16 %v8730
        %v8934 = vunpack.c.h.b16 %v8730
        %v8935 = vunpack.c.l.b16 %v8731
        %v8936 = vunpack.c.h.b16 %v8731
        %v8937 = vunpack.c.l.b16 %v8732
        %v8938 = vunpack.c.h.b16 %v8732
        %v8939 = vunpack.c.l.b16 %v8733
        %v8940 = vunpack.c.h.b16 %v8733
        %v8941 = vunpack.c.l.b16 %v8734
        %v8942 = vunpack.c.h.b16 %v8734
        %v8943 = vunpack.c.l.b16 %v8735
        %v8944 = vunpack.c.h.b16 %v8735
        %v8945 = vunpack.c.l.b16 %v8736
        %v8946 = vunpack.c.h.b16 %v8736
        %v8947 = vunpack.c.l.b16 %v8737
        %v8948 = vunpack.c.h.b16 %v8737
        %v8949 = vunpack.c.l.b16 %v8738
        %v8950 = vunpack.c.h.b16 %v8738
        %v8951 = vunpack.c.l.b16 %v8739
        %v8952 = vunpack.c.h.b16 %v8739
        %v8953 = vunpack.c.l.b16 %v8740
        %v8954 = vunpack.c.h.b16 %v8740
        %v8955 = vunpack.c.l.b16 %v8741
        %v8956 = vunpack.c.h.b16 %v8741
        %v8957 = vunpack.c.l.b16 %v8742
        %v8958 = vunpack.c.h.b16 %v8742
        %v8959 = vunpack.c.l.b16 %v8743
        %v8960 = vunpack.c.h.b16 %v8743
        %v8961 = vunpack.c.l.b16 %v8744
        %v8962 = vunpack.c.h.b16 %v8744
        %v8963 = vunpack.c.l.b16 %v8745
        %v8964 = vunpack.c.h.b16 %v8745
        %v8965 = vunpack.c.l.b16 %v8746
        %v8966 = vunpack.c.h.b16 %v8746
        %v8967 = vunpack.c.l.b16 %v8747
        %v8968 = vunpack.c.h.b16 %v8747
        %v8969 = vpack.c.b16 %v8845, %v8841
        %v8970 = vpack.c.b16 %v8846, %v8842
        %v8971 = vpack.c.b16 %v8847, %v8843
        %v8972 = vpack.c.b16 %v8848, %v8844
        %v8973 = vpack.c.b16 %v8853, %v8849
        %v8974 = vpack.c.b16 %v8854, %v8850
        %v8975 = vpack.c.b16 %v8855, %v8851
        %v8976 = vpack.c.b16 %v8856, %v8852
        %v8977 = vpack.c.b16 %v8861, %v8857
        %v8978 = vpack.c.b16 %v8862, %v8858
        %v8979 = vpack.c.b16 %v8863, %v8859
        %v8980 = vpack.c.b16 %v8864, %v8860
        %v8981 = vpack.c.b16 %v8869, %v8865
        %v8982 = vpack.c.b16 %v8870, %v8866
        %v8983 = vpack.c.b16 %v8871, %v8867
        %v8984 = vpack.c.b16 %v8872, %v8868
        %v8985 = vpack.c.b16 %v8877, %v8873
        %v8986 = vpack.c.b16 %v8878, %v8874
        %v8987 = vpack.c.b16 %v8879, %v8875
        %v8988 = vpack.c.b16 %v8880, %v8876
        %v8989 = vpack.c.b16 %v8885, %v8881
        %v8990 = vpack.c.b16 %v8886, %v8882
        %v8991 = vpack.c.b16 %v8887, %v8883
        %v8992 = vpack.c.b16 %v8888, %v8884
        %v8993 = vpack.c.b16 %v8893, %v8889
        %v8994 = vpack.c.b16 %v8894, %v8890
        %v8995 = vpack.c.b16 %v8895, %v8891
        %v8996 = vpack.c.b16 %v8896, %v8892
        %v8997 = vpack.c.b16 %v8901, %v8897
        %v8998 = vpack.c.b16 %v8902, %v8898
        %v8999 = vpack.c.b16 %v8903, %v8899
        %v9000 = vpack.c.b16 %v8904, %v8900
        %v9001 = vpack.c.b16 %v8909, %v8905
        %v9002 = vpack.c.b16 %v8910, %v8906
        %v9003 = vpack.c.b16 %v8911, %v8907
        %v9004 = vpack.c.b16 %v8912, %v8908
        %v9005 = vpack.c.b16 %v8917, %v8913
        %v9006 = vpack.c.b16 %v8918, %v8914
        %v9007 = vpack.c.b16 %v8919, %v8915
        %v9008 = vpack.c.b16 %v8920, %v8916
        %v9009 = vpack.c.b16 %v8925, %v8921
        %v9010 = vpack.c.b16 %v8926, %v8922
        %v9011 = vpack.c.b16 %v8927, %v8923
        %v9012 = vpack.c.b16 %v8928, %v8924
        %v9013 = vpack.c.b16 %v8933, %v8929
        %v9014 = vpack.c.b16 %v8934, %v8930
        %v9015 = vpack.c.b16 %v8935, %v8931
        %v9016 = vpack.c.b16 %v8936, %v8932
        %v9017 = vpack.c.b16 %v8941, %v8937
        %v9018 = vpack.c.b16 %v8942, %v8938
        %v9019 = vpack.c.b16 %v8943, %v8939
        %v9020 = vpack.c.b16 %v8944, %v8940
        %v9021 = vpack.c.b16 %v8949, %v8945
        %v9022 = vpack.c.b16 %v8950, %v8946
        %v9023 = vpack.c.b16 %v8951, %v8947
        %v9024 = vpack.c.b16 %v8952, %v8948
        %v9025 = vpack.c.b16 %v8957, %v8953
        %v9026 = vpack.c.b16 %v8958, %v8954
        %v9027 = vpack.c.b16 %v8959, %v8955
        %v9028 = vpack.c.b16 %v8960, %v8956
        %v9029 = vpack.c.b16 %v8965, %v8961
        %v9030 = vpack.c.b16 %v8966, %v8962
        %v9031 = vpack.c.b16 %v8967, %v8963
        %v9032 = vpack.c.b16 %v8968, %v8964
        %9097 = vmatprep.subr.bf16.mxu0 %v8970
        %9098 = vmatpush1.bf16.msra.mxu0 %v8969
        %9099 = vmatprep.subr.bf16.mxu0 %v8974
        %9100 = vmatpush1.bf16.msra.mxu0 %v8973
        %9101 = vmatprep.subr.bf16.mxu0 %v8978
        %9102 = vmatpush1.bf16.msra.mxu0 %v8977
        %9103 = vmatprep.subr.bf16.mxu0 %v8982
        %9104 = vmatpush1.bf16.msra.mxu0 %v8981
        %9105 = vmatprep.subr.bf16.mxu0 %v8986
        %9106 = vmatpush1.bf16.msra.mxu0 %v8985
        %9107 = vmatprep.subr.bf16.mxu0 %v8990
        %9108 = vmatpush1.bf16.msra.mxu0 %v8989
        %9109 = vmatprep.subr.bf16.mxu0 %v8994
        %9110 = vmatpush1.bf16.msra.mxu0 %v8993
        %9111 = vmatprep.subr.bf16.mxu0 %v8998
        %9112 = vmatpush1.bf16.msra.mxu0 %v8997
        %9113 = vmatprep.subr.bf16.mxu0 %v9002
        %9114 = vmatpush1.bf16.msra.mxu0 %v9001
        %9115 = vmatprep.subr.bf16.mxu0 %v9006
        %9116 = vmatpush1.bf16.msra.mxu0 %v9005
        %9117 = vmatprep.subr.bf16.mxu0 %v9010
        %9118 = vmatpush1.bf16.msra.mxu0 %v9009
        %9119 = vmatprep.subr.bf16.mxu0 %v9014
        %9120 = vmatpush1.bf16.msra.mxu0 %v9013
        %9121 = vmatprep.subr.bf16.mxu0 %v9018
        %9122 = vmatpush1.bf16.msra.mxu0 %v9017
        %9123 = vmatprep.subr.bf16.mxu0 %v9022
        %9124 = vmatpush1.bf16.msra.mxu0 %v9021
        %9125 = vmatprep.subr.bf16.mxu0 %v9026
        %9126 = vmatpush1.bf16.msra.mxu0 %v9025
        %9127 = vmatprep.subr.bf16.mxu0 %v9030
        %9128 = vmatpush1.bf16.msra.mxu0 %v9029
        %9129 = vmatprep.mubr.bf16.mxu0 %v8774
        %9130 = vmatmul.mubr.bf16.gmra.mrb[0].mxu0 %v8773
        %v9131 = vpop.f32.mrb[0].mxu0
        %v9132 = vadd.f32 %v8753, %v9131
        %v9133 = vpop.f32.mrb[0].mxu0
        %v9134 = vadd.f32 %v8757, %v9133
        %v9135 = vpop.f32.mrb[0].mxu0
        %v9136 = vpop.f32.mrb[0].mxu0
        %9137 = vdwg.mxu0
        %9138 = vmatprep.subr.bf16.mxu0 %v8972
        %9139 = vmatpush1.bf16.msra.mxu0 %v8971
        %9140 = vmatprep.subr.bf16.mxu0 %v8976
        %9141 = vmatpush1.bf16.msra.mxu0 %v8975
        %9142 = vmatprep.subr.bf16.mxu0 %v8980
        %9143 = vmatpush1.bf16.msra.mxu0 %v8979
        %9144 = vmatprep.subr.bf16.mxu0 %v8984
        %9145 = vmatpush1.bf16.msra.mxu0 %v8983
        %9146 = vmatprep.subr.bf16.mxu0 %v8988
        %9147 = vmatpush1.bf16.msra.mxu0 %v8987
        %9148 = vmatprep.subr.bf16.mxu0 %v8992
        %9149 = vmatpush1.bf16.msra.mxu0 %v8991
        %9150 = vmatprep.subr.bf16.mxu0 %v8996
        %9151 = vmatpush1.bf16.msra.mxu0 %v8995
        %9152 = vmatprep.subr.bf16.mxu0 %v9000
        %9153 = vmatpush1.bf16.msra.mxu0 %v8999
        %9154 = vmatprep.subr.bf16.mxu0 %v9004
        %9155 = vmatpush1.bf16.msra.mxu0 %v9003
        %9156 = vmatprep.subr.bf16.mxu0 %v9008
        %9157 = vmatpush1.bf16.msra.mxu0 %v9007
        %9158 = vmatprep.subr.bf16.mxu0 %v9012
        %9159 = vmatpush1.bf16.msra.mxu0 %v9011
        %9160 = vmatprep.subr.bf16.mxu0 %v9016
        %9161 = vmatpush1.bf16.msra.mxu0 %v9015
        %9162 = vmatprep.subr.bf16.mxu0 %v9020
        %9163 = vmatpush1.bf16.msra.mxu0 %v9019
        %9164 = vmatprep.subr.bf16.mxu0 %v9024
        %9165 = vmatpush1.bf16.msra.mxu0 %v9023
        %9166 = vmatprep.subr.bf16.mxu0 %v9028
        %9167 = vmatpush1.bf16.msra.mxu0 %v9027
        %9168 = vmatprep.subr.bf16.mxu0 %v9032
        %9169 = vmatpush1.bf16.msra.mxu0 %v9031
        %9170 = vmatprep.mubr.bf16.mxu0 %v8774
        %9171 = vmatmul.mubr.bf16.gmra.mrb[0].mxu0 %v8773
        %v9172 = vpop.f32.mrb[0].mxu0
        %v9173 = vadd.f32 %v8761, %v9172
        %v9174 = vpop.f32.mrb[0].mxu0
        %v9175 = vadd.f32 %v8765, %v9174
        %v9176 = vpop.f32.mrb[0].mxu0
        %v9177 = vpop.f32.mrb[0].mxu0
        %9178 = vdwg.mxu0
        %v9179 = vxor.u32 %v9132, 2147483648
        %v9180 = vmul.f32 %v9179, 1.442695
        %v9181 = vpow.pop %v9180
        %v9182 = vadd.f32 %v9181, 1.0
        %v9183 = vrcp.pop %v9182
        %v9184 = vmul.f32 1.0, %v9183
        %v9185 = vxor.u32 %v9134, 2147483648
        %v9186 = vmul.f32 %v9185, 1.442695
        %v9187 = vpow.pop %v9186
        %v9188 = vadd.f32 %v9187, 1.0
        %v9189 = vrcp.pop %v9188
        %v9190 = vmul.f32 1.0, %v9189
        %v9191 = vtanh.pop %v9173
        %v9192 = vxor.u32 %v9175, 2147483648
        %v9193 = vmul.f32 %v9192, 1.442695
        %v9194 = vpow.pop %v9193
        %v9195 = vadd.f32 %v9194, 1.0
        %v9196 = vrcp.pop %v9195
        %v9197 = vmul.f32 1.0, %v9196
        %v9198 = vmul.f32 %v9190, %v8139
        %v9199 = vmul.f32 %v9184, %v9191
        %v9200 = vadd.f32 %v9198, %v9199
        %v9201 = vtanh.pop %v9200
        %v9202 = vmul.f32 %v9197, %v9201
        %v9203 = vsub.f32 %v9202, %v8136
        %9205 = vset.pattern.permute.xlu0 0
        %9206 = vperm.xlu0 %9205, %v8679
        %v9207 = vpop.permute.xlu0 %9206
        %v9209 = vmul.f32 %v9207, %v9203
        %v9210 = vadd.f32 %v8136, %v9209
        %v9211 = vsub.f32 %v9200, %v8139
        %v9212 = vmul.f32 %v9207, %v9211
        %v9213 = vadd.f32 %v8139, %v9212
        %9214 = vst [vmem:[#allocation2] sm:$0xff] %v8674
        %9215 = vst [vmem:[#allocation3] sm:$0xff] %v8677
        %9216 = vst [vmem:[#allocation4] sm:$0xff] %v9210
        %9217 = vst [vmem:[#allocation5] sm:$0xff] %v9213
        %p9218 = scmp.eq.s32.totalorder %s30, 1
        // Predicated region
        $region81: #{tpu_custom_call.1} parent=67 // pred_check
          %p9219 = pneg %p9218
        $region82: #{tpu_custom_call.1} parent=67 // pred_check_branch
          %9221 = sbr.rel (%p9219) target = $region84
        $region83: #{tpu_custom_call.1} parent=67 // pred_region
          %v9222 = vld [vmem:[%s592] sm:$0xff]
          %9224 = vset.pattern.permute.xlu0 0
          %9225 = vperm.xlu0 %9224, %v9222
          %v9226 = vpop.permute.xlu0 %9225
          %v9228 = vmul.f32 %v8674, %v9226
          %v9229 = vpack.c.bf16 %v9228, %v9228
          %v9230 = vld [vmem:[%s9] sm:$0xf]
          %v9231 = vld [vmem:[%s9 + $0x4] sm:$0xf]
          %v9232 = vld [vmem:[%s9 + $0x8] sm:$0xf]
          %v9233 = vld [vmem:[%s9 + $0xc] sm:$0xf]
          %v9234 = vld [vmem:[%s9 + $0x10] sm:$0xf]
          %v9235 = vld [vmem:[%s9 + $0x14] sm:$0xf]
          %v9236 = vld [vmem:[%s9 + $0x18] sm:$0xf]
          %v9237 = vld [vmem:[%s9 + $0x1c] sm:$0xf]
          %v9238 = vld [vmem:[%s9 + $0x20] sm:$0xf]
          %v9239 = vld [vmem:[%s9 + $0x24] sm:$0xf]
          %v9240 = vld [vmem:[%s9 + $0x28] sm:$0xf]
          %v9241 = vld [vmem:[%s9 + $0x2c] sm:$0xf]
          %v9242 = vld [vmem:[%s9 + $0x30] sm:$0xf]
          %v9243 = vld [vmem:[%s9 + $0x34] sm:$0xf]
          %v9244 = vld [vmem:[%s9 + $0x38] sm:$0xf]
          %v9245 = vld [vmem:[%s9 + $0x3c] sm:$0xf]
          %v9246 = vpack.c.bf16 %v9210, %v9210
          %v9247 = vld [vmem:[%s10] sm:$0xf]
          %v9248 = vld [vmem:[%s10 + $0x4] sm:$0xf]
          %v9249 = vld [vmem:[%s10 + $0x8] sm:$0xf]
          %v9250 = vld [vmem:[%s10 + $0xc] sm:$0xf]
          %v9251 = vld [vmem:[%s10 + $0x10] sm:$0xf]
          %v9252 = vld [vmem:[%s10 + $0x14] sm:$0xf]
          %v9253 = vld [vmem:[%s10 + $0x18] sm:$0xf]
          %v9254 = vld [vmem:[%s10 + $0x1c] sm:$0xf]
          %v9255 = vld [vmem:[%s10 + $0x20] sm:$0xf]
          %v9256 = vld [vmem:[%s10 + $0x24] sm:$0xf]
          %v9257 = vld [vmem:[%s10 + $0x28] sm:$0xf]
          %v9258 = vld [vmem:[%s10 + $0x2c] sm:$0xf]
          %v9259 = vld [vmem:[%s10 + $0x30] sm:$0xf]
          %v9260 = vld [vmem:[%s10 + $0x34] sm:$0xf]
          %v9261 = vld [vmem:[%s10 + $0x38] sm:$0xf]
          %v9262 = vld [vmem:[%s10 + $0x3c] sm:$0xf]
          %v9279 = vunpack.c.l.b16 %v9247
          %v9280 = vunpack.c.l.b16 %v9248
          %v9281 = vunpack.c.l.b16 %v9249
          %v9282 = vunpack.c.l.b16 %v9250
          %v9283 = vunpack.c.l.b16 %v9251
          %v9284 = vunpack.c.l.b16 %v9252
          %v9285 = vunpack.c.l.b16 %v9253
          %v9286 = vunpack.c.l.b16 %v9254
          %v9287 = vunpack.c.l.b16 %v9255
          %v9288 = vunpack.c.l.b16 %v9256
          %v9289 = vunpack.c.l.b16 %v9257
          %v9290 = vunpack.c.l.b16 %v9258
          %v9291 = vunpack.c.l.b16 %v9259
          %v9292 = vunpack.c.l.b16 %v9260
          %v9293 = vunpack.c.l.b16 %v9261
          %v9294 = vunpack.c.l.b16 %v9262
          %v9295 = vpack.c.b16 %v9280, %v9279
          %v9296 = vpack.c.b16 %v9282, %v9281
          %v9297 = vpack.c.b16 %v9284, %v9283
          %v9298 = vpack.c.b16 %v9286, %v9285
          %v9299 = vpack.c.b16 %v9288, %v9287
          %v9300 = vpack.c.b16 %v9290, %v9289
          %v9301 = vpack.c.b16 %v9292, %v9291
          %v9302 = vpack.c.b16 %v9294, %v9293
          %9311 = vmatprep.subr.bf16.mxu0 0
          %9312 = vmatpush1.bf16.msra.mxu0 %v9295
          %9313 = vmatprep.subr.bf16.mxu0 0
          %9314 = vmatpush1.bf16.msra.mxu0 %v9296
          %9315 = vmatprep.subr.bf16.mxu0 0
          %9316 = vmatpush1.bf16.msra.mxu0 %v9297
          %9317 = vmatprep.subr.bf16.mxu0 0
          %9318 = vmatpush1.bf16.msra.mxu0 %v9298
          %9319 = vmatprep.subr.bf16.mxu0 0
          %9320 = vmatpush1.bf16.msra.mxu0 %v9299
          %9321 = vmatprep.subr.bf16.mxu0 0
          %9322 = vmatpush1.bf16.msra.mxu0 %v9300
          %9323 = vmatprep.subr.bf16.mxu0 0
          %9324 = vmatpush1.bf16.msra.mxu0 %v9301
          %9325 = vmatprep.subr.bf16.mxu0 0
          %9326 = vmatpush1.bf16.msra.mxu0 %v9302
          %9327 = vmatprep.subr.bf16.mxu0 0
          %9328 = vmatpush1.bf16.msra.mxu0 0
          %9329 = vmatprep.subr.bf16.mxu0 0
          %9330 = vmatpush1.bf16.msra.mxu0 0
          %9331 = vmatprep.subr.bf16.mxu0 0
          %9332 = vmatpush1.bf16.msra.mxu0 0
          %9333 = vmatprep.subr.bf16.mxu0 0
          %9334 = vmatpush1.bf16.msra.mxu0 0
          %9335 = vmatprep.subr.bf16.mxu0 0
          %9336 = vmatpush1.bf16.msra.mxu0 0
          %9337 = vmatprep.subr.bf16.mxu0 0
          %9338 = vmatpush1.bf16.msra.mxu0 0
          %9339 = vmatprep.subr.bf16.mxu0 0
          %9340 = vmatpush1.bf16.msra.mxu0 0
          %9341 = vmatprep.subr.bf16.mxu0 0
          %9342 = vmatpush1.bf16.msra.mxu0 0
          %9343 = vmatprep.mubr.bf16.mxu0 0
          %9344 = vmatmul.mubr.bf16.gmra.mrb[0].mxu0 %v9246
          %v9345 = vpop.f32.mrb[0].mxu0
          %v9346 = vadd.f32 0.0, %v9345
          %v9347 = vpop.f32.mrb[0].mxu0
          %v9348 = vpop.f32.mrb[0].mxu0
          %v9349 = vpop.f32.mrb[0].mxu0
          %9350 = vdwg.mxu0
          %v9367 = vunpack.c.l.b16 %v9230
          %v9368 = vunpack.c.l.b16 %v9231
          %v9369 = vunpack.c.l.b16 %v9232
          %v9370 = vunpack.c.l.b16 %v9233
          %v9371 = vunpack.c.l.b16 %v9234
          %v9372 = vunpack.c.l.b16 %v9235
          %v9373 = vunpack.c.l.b16 %v9236
          %v9374 = vunpack.c.l.b16 %v9237
          %v9375 = vunpack.c.l.b16 %v9238
          %v9376 = vunpack.c.l.b16 %v9239
          %v9377 = vunpack.c.l.b16 %v9240
          %v9378 = vunpack.c.l.b16 %v9241
          %v9379 = vunpack.c.l.b16 %v9242
          %v9380 = vunpack.c.l.b16 %v9243
          %v9381 = vunpack.c.l.b16 %v9244
          %v9382 = vunpack.c.l.b16 %v9245
          %v9383 = vpack.c.b16 %v9368, %v9367
          %v9384 = vpack.c.b16 %v9370, %v9369
          %v9385 = vpack.c.b16 %v9372, %v9371
          %v9386 = vpack.c.b16 %v9374, %v9373
          %v9387 = vpack.c.b16 %v9376, %v9375
          %v9388 = vpack.c.b16 %v9378, %v9377
          %v9389 = vpack.c.b16 %v9380, %v9379
          %v9390 = vpack.c.b16 %v9382, %v9381
          %9399 = vmatprep.subr.bf16.mxu0 0
          %9400 = vmatpush1.bf16.msra.mxu0 %v9383
          %9401 = vmatprep.subr.bf16.mxu0 0
          %9402 = vmatpush1.bf16.msra.mxu0 %v9384
          %9403 = vmatprep.subr.bf16.mxu0 0
          %9404 = vmatpush1.bf16.msra.mxu0 %v9385
          %9405 = vmatprep.subr.bf16.mxu0 0
          %9406 = vmatpush1.bf16.msra.mxu0 %v9386
          %9407 = vmatprep.subr.bf16.mxu0 0
          %9408 = vmatpush1.bf16.msra.mxu0 %v9387
          %9409 = vmatprep.subr.bf16.mxu0 0
          %9410 = vmatpush1.bf16.msra.mxu0 %v9388
          %9411 = vmatprep.subr.bf16.mxu0 0
          %9412 = vmatpush1.bf16.msra.mxu0 %v9389
          %9413 = vmatprep.subr.bf16.mxu0 0
          %9414 = vmatpush1.bf16.msra.mxu0 %v9390
          %9415 = vmatprep.subr.bf16.mxu0 0
          %9416 = vmatpush1.bf16.msra.mxu0 0
          %9417 = vmatprep.subr.bf16.mxu0 0
          %9418 = vmatpush1.bf16.msra.mxu0 0
          %9419 = vmatprep.subr.bf16.mxu0 0
          %9420 = vmatpush1.bf16.msra.mxu0 0
          %9421 = vmatprep.subr.bf16.mxu0 0
          %9422 = vmatpush1.bf16.msra.mxu0 0
          %9423 = vmatprep.subr.bf16.mxu0 0
          %9424 = vmatpush1.bf16.msra.mxu0 0
          %9425 = vmatprep.subr.bf16.mxu0 0
          %9426 = vmatpush1.bf16.msra.mxu0 0
          %9427 = vmatprep.subr.bf16.mxu0 0
          %9428 = vmatpush1.bf16.msra.mxu0 0
          %9429 = vmatprep.subr.bf16.mxu0 0
          %9430 = vmatpush1.bf16.msra.mxu0 0
          %9431 = vmatprep.mubr.bf16.mxu0 0
          %9432 = vmatmul.mubr.bf16.gmra.mrb[0].mxu0 %v9229
          %v9433 = vpop.f32.mrb[0].mxu0
          %v9434 = vadd.f32 %v9346, %v9433
          %v9435 = vpop.f32.mrb[0].mxu0
          %v9436 = vpop.f32.mrb[0].mxu0
          %v9437 = vpop.f32.mrb[0].mxu0
          %9438 = vdwg.mxu0
          %v9439 = vld [vmem:[%s11] sm:$0x1]
          %v9441 = vlaneseq
          %v9442 = vshrl.u32 %v9441, 7
          %v9443 = vsub.s32 0, %v9442
          %v9444 = vrot.slane %v9439, %v9443
          %v9446 = vadd.f32 %v9434, %v9444
          %vm9447 = vcmask 31744
          %9448 = vst.msk [vmem:[%s596] sm:$0xff] %vm9447, %v9446
        $region84: #{tpu_custom_call.1} parent=67 // pred_fallthru
          _
        %p9449 = scmp.lt.s32.totalorder %s29, 0
        %s9450 = scalar_select %p9449, %s29, 0
        %s9451 = smul.addr %s9450, 8
        %s9452 = scalar_lea.vmem %s12, %s9451
        // Predicated region
        $region85: #{tpu_custom_call.1} parent=67 // pred_check
          %p9453 = pneg %p344
        $region86: #{tpu_custom_call.1} parent=67 // pred_check_branch
          %9455 = sbr.rel (%p9453) target = $region88
        $region87: #{tpu_custom_call.1} parent=67 // pred_region
          _
        $region88: #{tpu_custom_call.1} parent=67 // pred_fallthru
          _
        // Predicated region
        $region89: #{tpu_custom_call.1} parent=67 // pred_check
          %p9456 = pneg %p344
        $region90: #{tpu_custom_call.1} parent=67 // pred_check_branch
          %9458 = sbr.rel (%p9456) target = $region92
        $region91: #{tpu_custom_call.1} parent=67 // pred_region
          %p9459 = scmp.lt.s32.totalorder %s29, 0
          %s9460 = scalar_select %p9459, %s29, 0
          %s9461 = smul.addr %s9460, 8
          %s9462 = scalar_lea.vmem %s12, %s9461
        $region92: #{tpu_custom_call.1} parent=67 // pred_fallthru
          _
      $region68: #{tpu_custom_call.1} parent=5 // pred_fallthru
        _
      %p9463 = scmp.le.s32.totalorder 2, %s20
      // Predicated region
      $region93: #{tpu_custom_call.1} parent=5 // pred_check
        %p9464 = pneg %p9463
      $region94: #{tpu_custom_call.1} parent=5 // pred_check_branch
        %9466 = sbr.rel (%p9464) target = $region96
      $region95: #{tpu_custom_call.1} parent=5 // pred_region
        %s9467 = ssub.s32 %s20, 2
      $region96: #{tpu_custom_call.1} parent=5 // pred_fallthru
        _
    $region6: #{tpu_custom_call.1} parent=1 // loop_footer
      %s24 = sadd.s32 1, %s20
    $region7: #{tpu_custom_call.1} parent=1 // loop_footer_branch
      %19 = sbr.rel target = $region3
    $region8: #{tpu_custom_call.1} parent=1 // loop_exit
      _
    %9468 = vsyncpa [#allocation9], 1
    %s9469 = scalar_lea.sflag [#allocation9], 1
    %9470 = vsyncpa %s9469, 1
    %9471 = vsyncpa [#allocation11], 1

</llo_original>
